<compile_context>
chip_gen: v5e
topology: v5e:2x2
jax: 0.10.0
libtpu: 0.0.40
codegen_flags: <defaults>
</compile_context>

<pallas_src>
import numpy as np
import jax
import jax.numpy as jnp
from jax.experimental import pallas as pl
from jax.experimental.pallas import tpu as pltpu

_LANE = 128
_BN_EPS = 1e-5
_VMEM_LIMIT = 48 * 1024 * 1024   # < v7x 64 MiB physical, > 16/32 MiB scoped defaults


def _round_up(x, m):
    return (x + m - 1) // m * m


def _pad_axis(x, size, axis):
    if x.shape[axis] == size:
        return x
    pad = [(0, 0)] * x.ndim
    pad[axis] = (0, size - x.shape[axis])
    return jnp.pad(x, pad)


# ----------------------------------------------------------------------------
# Gather-free bilinear 2x upsample (align_corners=True) with F.pad folded into
# constant interpolation matrices (zero rows for the padding).
# ----------------------------------------------------------------------------
def _interp_matrix(n_in, n_up, pad_before, n_total):
    # Guard the negative-pad (crop) case: F.pad with negative values is unsupported here.
    assert 0 <= pad_before and pad_before + n_up <= n_total, \
        "negative padding (cropping) not supported by _interp_matrix"
    u = np.zeros((n_total, n_in), np.float32)
    if n_up == 1:
        u[pad_before, 0] = 1.0
    else:
        c = np.arange(n_up, dtype=np.float64) * (n_in - 1) / (n_up - 1)
        i0 = np.clip(np.floor(c).astype(np.int64), 0, n_in - 1)
        i1 = np.minimum(i0 + 1, n_in - 1)
        f = (c - i0).astype(np.float32)
        rows = pad_before + np.arange(n_up)
        np.add.at(u, (rows, i0), 1.0 - f)
        np.add.at(u, (rows, i1), f)
    return jnp.asarray(u)


def _upsample2x_bilinear_pad(x_nhwc, h_out, w_out, precision=None):
    n, h, w, c = x_nhwc.shape
    dy, dx = h_out - 2 * h, w_out - 2 * w
    uh = _interp_matrix(h, 2 * h, dy // 2, h_out)
    uw = _interp_matrix(w, 2 * w, dx // 2, w_out)
    t = jnp.einsum('oh,nhwc->nowc', uh, x_nhwc, precision=precision)
    return jnp.einsum('pw,nowc->nopc', uw, t, precision=precision)


# ----------------------------------------------------------------------------
# Shared conv core: bf16 im2col over the zero-ring VMEM tile, ONE fused MXU
# contraction (bf16 operands, f32 accumulation, DEFAULT precision).
# ----------------------------------------------------------------------------
def _conv3x3_accumulate(xpad_ref, w_ref, b_ref, H, W):
    cin = xpad_ref.shape[-1]
    cols = [xpad_ref[dy:dy + H, dx:dx + W, :].reshape(H * W, cin)
            for dy in range(3) for dx in range(3)]
    patches = jnp.concatenate(cols, axis=-1)                      # bf16 (H*W, 9*cin)
    # TODO(synk): on v7x use 9 per-tap matmuls accumulated in the MRB instead of the
    #             fused K=9*cin contraction (drops the patches buffer entirely).
    acc = jnp.dot(patches, w_ref[...], preferred_element_type=jnp.float32)
    return acc + b_ref[...]                                       # f32 (H*W, cout_p)


def _zero_halo_ring(xpad_ref, H, W):
    # Only the "same"-padding ring needs zeros; the interior (all lane-aligned channel
    # blocks) is fully overwritten every step.  Done per step (not once) so it is
    # correct when the grid is sharded across TensorCores ("parallel" semantics).
    c = xpad_ref.shape[-1]
    zrow = jnp.zeros((1, W + 2, c), dtype=xpad_ref.dtype)
    zcol = jnp.zeros((H + 2, 1, c), dtype=xpad_ref.dtype)
    xpad_ref[0:1, :, :] = zrow
    xpad_ref[H + 1:H + 2, :, :] = zrow
    xpad_ref[0:H + 2, 0:1, :] = zcol
    xpad_ref[0:H + 2, W + 1:W + 2, :] = zcol


# conv1: torch.cat([x2, x1_up]) fused in-VMEM (lane-aligned offsets) + conv3x3 + bias
#        + BN1 partial batch stats; bf16 activation out, f32 stats out.
def _conv1_kernel(xa_ref, xb_ref, w_ref, b_ref, o_ref, sum_ref, ssq_ref, xpad_ref):
    _, H, W, cout = o_ref.shape
    ca = xa_ref.shape[-1]                                   # ca_p (multiple of 128)
    cb = xb_ref.shape[-1]                                   # cb_p (multiple of 128)
    _zero_halo_ring(xpad_ref, H, W)
    xpad_ref[1:H + 1, 1:W + 1, 0:ca] = xa_ref[0]            # x2 channels   (offset 0)
    xpad_ref[1:H + 1, 1:W + 1, ca:ca + cb] = xb_ref[0]      # x1_up channels(offset ca_p)
    acc = _conv3x3_accumulate(xpad_ref, w_ref, b_ref, H, W)
    o_ref[0] = acc.reshape(H, W, cout).astype(o_ref.dtype)  # bf16 to HBM
    sum_ref[0] = jnp.sum(acc, axis=0, keepdims=True)        # f32 BN stats
    ssq_ref[0] = jnp.sum(acc * acc, axis=0, keepdims=True)


# conv2: previous layer's BatchNorm+ReLU fused into the input stage (f32 math), then conv.
def _conv2_kernel(x_ref, sc_ref, sh_ref, w_ref, b_ref, o_ref, sum_ref, ssq_ref, xpad_ref):
    _, H, W, cout = o_ref.shape
    _zero_halo_ring(xpad_ref, H, W)
    h = jnp.maximum(x_ref[0].astype(jnp.float32) * sc_ref[...] + sh_ref[...], 0.0)
    xpad_ref[1:H + 1, 1:W + 1, :] = h.astype(xpad_ref.dtype)
    acc = _conv3x3_accumulate(xpad_ref, w_ref, b_ref, H, W)
    o_ref[0] = acc.reshape(H, W, cout).astype(o_ref.dtype)
    sum_ref[0] = jnp.sum(acc, axis=0, keepdims=True)
    ssq_ref[0] = jnp.sum(acc * acc, axis=0, keepdims=True)


# final BN2 affine + ReLU (reads bf16, writes the module's f32 output).
def _affine_relu_kernel(x_ref, sc_ref, sh_ref, o_ref):
    o_ref[...] = jnp.maximum(
        x_ref[...].astype(jnp.float32) * sc_ref[...] + sh_ref[...], 0.0)


# ----------------------------------------------------------------------------
# pallas_call wrappers
# TODO(synk): add spatial row tiling (grid=(N, cdiv(H,TH)), 1-row halo) for large H,W
#             so per-step VMEM fits v7x's 64 MiB / v5e's 16 MiB scoped default.
# ----------------------------------------------------------------------------
_CPARAMS = pltpu.CompilerParams(dimension_semantics=("parallel",),
                                vmem_limit_bytes=_VMEM_LIMIT)


def _conv1(x2p, x1u, w, b):
    N, H, W, ca_p = x2p.shape
    cb_p = x1u.shape[-1]
    cin_p = ca_p + cb_p
    cout_p = w.shape[1]
    return pl.pallas_call(
        _conv1_kernel,
        out_shape=(jax.ShapeDtypeStruct((N, H, W, cout_p), jnp.bfloat16),
                   jax.ShapeDtypeStruct((N, 1, cout_p), jnp.float32),
                   jax.ShapeDtypeStruct((N, 1, cout_p), jnp.float32)),
        grid=(N,),
        in_specs=[
            pl.BlockSpec((1, H, W, ca_p), lambda n: (n, 0, 0, 0)),
            pl.BlockSpec((1, H, W, cb_p), lambda n: (n, 0, 0, 0)),
            # TODO(synk): pipeline_mode=pl.Buffered(1) for these grid-invariant operands.
            pl.BlockSpec((9 * cin_p, cout_p), lambda n: (0, 0)),
            pl.BlockSpec((1, cout_p), lambda n: (0, 0)),
        ],
        out_specs=(
            pl.BlockSpec((1, H, W, cout_p), lambda n: (n, 0, 0, 0)),
            pl.BlockSpec((1, 1, cout_p), lambda n: (n, 0, 0)),
            pl.BlockSpec((1, 1, cout_p), lambda n: (n, 0, 0)),
        ),
        scratch_shapes=[pltpu.VMEM((H + 2, W + 2, cin_p), jnp.bfloat16)],
        compiler_params=_CPARAMS,
    )(x2p, x1u, w, b)


def _conv2(x, scale, shift, w, b):
    N, H, W, cin_p = x.shape
    cout_p = w.shape[1]
    return pl.pallas_call(
        _conv2_kernel,
        out_shape=(jax.ShapeDtypeStruct((N, H, W, cout_p), jnp.bfloat16),
                   jax.ShapeDtypeStruct((N, 1, cout_p), jnp.float32),
                   jax.ShapeDtypeStruct((N, 1, cout_p), jnp.float32)),
        grid=(N,),
        in_specs=[
            pl.BlockSpec((1, H, W, cin_p), lambda n: (n, 0, 0, 0)),
            pl.BlockSpec((1, cin_p), lambda n: (0, 0)),
            pl.BlockSpec((1, cin_p), lambda n: (0, 0)),
            pl.BlockSpec((9 * cin_p, cout_p), lambda n: (0, 0)),
            pl.BlockSpec((1, cout_p), lambda n: (0, 0)),
        ],
        out_specs=(
            pl.BlockSpec((1, H, W, cout_p), lambda n: (n, 0, 0, 0)),
            pl.BlockSpec((1, 1, cout_p), lambda n: (n, 0, 0)),
            pl.BlockSpec((1, 1, cout_p), lambda n: (n, 0, 0)),
        ),
        scratch_shapes=[pltpu.VMEM((H + 2, W + 2, cin_p), jnp.bfloat16)],
        compiler_params=_CPARAMS,
    )(x, scale, shift, w, b)


def _affine_relu(x, scale, shift):
    N, H, W, C = x.shape
    return pl.pallas_call(
        _affine_relu_kernel,
        out_shape=jax.ShapeDtypeStruct((N, H, W, C), jnp.float32),
        grid=(N,),
        in_specs=[
            pl.BlockSpec((1, H, W, C), lambda n: (n, 0, 0, 0)),
            pl.BlockSpec((1, C), lambda n: (0, 0)),
            pl.BlockSpec((1, C), lambda n: (0, 0)),
        ],
        out_specs=pl.BlockSpec((1, H, W, C), lambda n: (n, 0, 0, 0)),
        compiler_params=_CPARAMS,
    )(x, scale, shift)


# ----------------------------------------------------------------------------
# Full `up.forward` (bilinear=True branch): NCHW in, NCHW out.
# Weights are HWIO; BN uses biased batch statistics (PyTorch training mode).
# ----------------------------------------------------------------------------
def up_forward(x1_nchw, x2_nchw, p, eps=_BN_EPS):
    x1 = jnp.transpose(x1_nchw, (0, 2, 3, 1))
    x2 = jnp.transpose(x2_nchw, (0, 2, 3, 1))
    n, h, w, ca = x2.shape
    cb = x1.shape[-1]
    cout = p['w1'].shape[-1]
    ca_p = _round_up(ca, _LANE)
    cb_p = _round_up(cb, _LANE)
    cin_p = ca_p + cb_p
    cout_p = _round_up(cout, _LANE)

    # 1) upsample + F.pad (gather-free, DEFAULT precision); lane-pad channels, bf16 HBM.
    # TODO(synk): fold these two interpolation contractions into the conv1 kernel.
    x1u = _pad_axis(_upsample2x_bilinear_pad(x1, h, w).astype(jnp.bfloat16), cb_p, 3)
    x2p = _pad_axis(x2.astype(jnp.bfloat16), ca_p, 3)

    # lane-dense weights, im2col layout.  conv1's K dim is laid out per-tap as
    # [ca_p (x2) | cb_p (x1_up)] blocks so the in-kernel concat offsets are lane-aligned.
    w1a = _pad_axis(_pad_axis(p['w1'][:, :, :ca, :], ca_p, 2), cout_p, 3)
    w1b = _pad_axis(_pad_axis(p['w1'][:, :, ca:, :], cb_p, 2), cout_p, 3)
    w1 = jnp.concatenate([w1a, w1b], axis=2).reshape(9 * cin_p, cout_p).astype(jnp.bfloat16)
    b1 = _pad_axis(p['b1'], cout_p, 0).reshape(1, cout_p).astype(jnp.float32)
    w2 = _pad_axis(_pad_axis(p['w2'], cout_p, 2), cout_p, 3)
    w2 = w2.reshape(9 * cout_p, cout_p).astype(jnp.bfloat16)
    b2 = _pad_axis(p['b2'], cout_p, 0).reshape(1, cout_p).astype(jnp.float32)
    # gamma/beta are zero-padded => padded channels stay exactly 0 after BN+ReLU.
    g1, be1 = _pad_axis(p['g1'], cout_p, 0), _pad_axis(p['be1'], cout_p, 0)
    g2, be2 = _pad_axis(p['g2'], cout_p, 0), _pad_axis(p['be2'], cout_p, 0)

    npix = n * h * w

    # 2) conv1 (concat fused in-kernel, bf16 output) + BN1 batch stats (f32).
    h1, s1, q1 = _conv1(x2p, x1u, w1, b1)
    # NOTE: var via E[x^2]-E[x]^2 in f32, clamped at 0 (fine at post-conv scales).
    mean1 = jnp.sum(s1[:, 0, :], axis=0) / npix
    var1 = jnp.maximum(jnp.sum(q1[:, 0, :], axis=0) / npix - mean1 * mean1, 0.0)
    inv1 = g1 / jnp.sqrt(var1 + eps)
    shift1 = be1 - mean1 * inv1

    # 3) conv2 with BN1+ReLU fused into its input stage, + BN2 batch stats.
    h2, s2, q2 = _conv2(h1, inv1.reshape(1, -1), shift1.reshape(1, -1), w2, b2)
    mean2 = jnp.sum(s2[:, 0, :], axis=0) / npix
    var2 = jnp.maximum(jnp.sum(q2[:, 0, :], axis=0) / npix - mean2 * mean2, 0.0)
    inv2 = g2 / jnp.sqrt(var2 + eps)
    shift2 = be2 - mean2 * inv2

    # 4) final BN2 + ReLU (reads bf16 h2, writes f32), drop channel padding, back to NCHW.
    y = _affine_relu(h2, inv2.reshape(1, -1), shift2.reshape(1, -1))
    return jnp.transpose(y[..., :cout], (0, 3, 1, 2))


# Pure-JAX reference (lax.conv, f32 HIGHEST precision) for correctness checking.
def up_forward_ref(x1_nchw, x2_nchw, p, eps=_BN_EPS):
    x1 = jnp.transpose(x1_nchw, (0, 2, 3, 1))
    x2 = jnp.transpose(x2_nchw, (0, 2, 3, 1))
    n, h, w, _ = x2.shape
    x1u = _upsample2x_bilinear_pad(x1, h, w, precision=jax.lax.Precision.HIGHEST)
    x = jnp.concatenate([x2, x1u], axis=-1)

    def conv(z, wgt, b):
        return jax.lax.conv_general_dilated(
            z, wgt, (1, 1), 'SAME',
            dimension_numbers=('NHWC', 'HWIO', 'NHWC'),
            precision=jax.lax.Precision.HIGHEST) + b

    def bnrelu(z, g, be):
        m = jnp.mean(z, axis=(0, 1, 2))
        v = jnp.var(z, axis=(0, 1, 2))
        return jnp.maximum((z - m) / jnp.sqrt(v + eps) * g + be, 0.0)

    hh = bnrelu(conv(x, p['w1'], p['b1']), p['g1'], p['be1'])
    hh = bnrelu(conv(hh, p['w2'], p['b2']), p['g2'], p['be2'])
    return jnp.transpose(hh, (0, 3, 1, 2))


if __name__ == "__main__":
    N, in_ch, out_ch = 2, 8, 8
    H1, W1 = 8, 8                     # x1 spatial; x2 is 2x larger (UNet skip)
    ks = jax.random.split(jax.random.PRNGKey(0), 10)

    x1 = jax.random.normal(ks[0], (N, in_ch // 2, H1, W1), jnp.float32)
    x2 = jax.random.normal(ks[1], (N, in_ch // 2, 2 * H1, 2 * W1), jnp.float32)

    params = {
        'w1':  0.1 * jax.random.normal(ks[2], (3, 3, in_ch, out_ch), jnp.float32),
        'b1':  0.1 * jax.random.normal(ks[3], (out_ch,), jnp.float32),
        'g1':  1.0 + 0.1 * jax.random.normal(ks[4], (out_ch,), jnp.float32),
        'be1': 0.1 * jax.random.normal(ks[5], (out_ch,), jnp.float32),
        'w2':  0.1 * jax.random.normal(ks[6], (3, 3, out_ch, out_ch), jnp.float32),
        'b2':  0.1 * jax.random.normal(ks[7], (out_ch,), jnp.float32),
        'g2':  1.0 + 0.1 * jax.random.normal(ks[8], (out_ch,), jnp.float32),
        'be2': 0.1 * jax.random.normal(ks[9], (out_ch,), jnp.float32),
    }

    out = jax.block_until_ready(jax.jit(up_forward)(x1, x2, params))
    assert out.shape == (N, out_ch, 2 * H1, 2 * W1), out.shape

    ref = jax.block_until_ready(up_forward_ref(x1, x2, params))
    # bf16 activations / intermediates throughout the Pallas path vs. f32-HIGHEST ref.
    np.testing.assert_allclose(np.asarray(out), np.asarray(ref),
                               atol=5e-2, rtol=5e-2)
    print("KERNEL_OK")
</pallas_src>

<mosaic_0001>
module attributes {stable_mosaic.version = 11 : i64} {
  func.func @_conv2_kernel(%arg0: i32, %arg1: memref<1x16x16x128xbf16, #tpu.memory_space<vmem>>, %arg2: memref<1x128xf32, #tpu.memory_space<vmem>>, %arg3: memref<1x128xf32, #tpu.memory_space<vmem>>, %arg4: memref<1152x128xbf16, #tpu.memory_space<vmem>>, %arg5: memref<1x128xf32, #tpu.memory_space<vmem>>, %arg6: memref<1x16x16x128xbf16, #tpu.memory_space<vmem>>, %arg7: memref<1x1x128xf32, #tpu.memory_space<vmem>>, %arg8: memref<1x1x128xf32, #tpu.memory_space<vmem>>, %arg9: memref<18x18x128xbf16, #tpu.memory_space<vmem>>) attributes {dimension_semantics = [#tpu.dimension_semantics<parallel>], iteration_bounds = array<i64: 2>, scalar_prefetch = 0 : i64, scratch_operands = 1 : i64, tpu.core_type = #tpu.core_type<tc>, window_params = [{transform_indices = @transform_0, window_bounds = array<i64: 1, 16, 16, 128>}, {pipeline_mode = #tpu.pipeline_mode<synchronous>, transform_indices = @transform_1, window_bounds = array<i64: 1, 128>}, {pipeline_mode = #tpu.pipeline_mode<synchronous>, transform_indices = @transform_2, window_bounds = array<i64: 1, 128>}, {pipeline_mode = #tpu.pipeline_mode<synchronous>, transform_indices = @transform_3, window_bounds = array<i64: 1152, 128>}, {pipeline_mode = #tpu.pipeline_mode<synchronous>, transform_indices = @transform_4, window_bounds = array<i64: 1, 128>}, {transform_indices = @transform_5, window_bounds = array<i64: 1, 16, 16, 128>}, {transform_indices = @transform_6, window_bounds = array<i64: 1, 1, 128>}, {transform_indices = @transform_7, window_bounds = array<i64: 1, 1, 128>}]} {
    %cst = arith.constant 0.000000e+00 : bf16
    %0 = vector.broadcast %cst : bf16 to vector<1x18x128xbf16>
    %cst_0 = arith.constant 0.000000e+00 : bf16
    %1 = vector.broadcast %cst_0 : bf16 to vector<18x1x128xbf16>
    %c0 = arith.constant 0 : index
    %c0_1 = arith.constant 0 : index
    %c0_2 = arith.constant 0 : index
    %2 = vector.load %arg9[%c0, %c0_1, %c0_2] : memref<18x18x128xbf16, #tpu.memory_space<vmem>>, vector<1x18x128xbf16>
    tpu.vector_store %arg9[%c0, %c0_1, %c0_2], %0 {strides = array<i32>} : memref<18x18x128xbf16, #tpu.memory_space<vmem>>, vector<1x18x128xbf16>,
    %c17 = arith.constant 17 : index
    %c0_3 = arith.constant 0 : index
    %c0_4 = arith.constant 0 : index
    %3 = vector.load %arg9[%c17, %c0_3, %c0_4] : memref<18x18x128xbf16, #tpu.memory_space<vmem>>, vector<1x18x128xbf16>
    tpu.vector_store %arg9[%c17, %c0_3, %c0_4], %0 {strides = array<i32>} : memref<18x18x128xbf16, #tpu.memory_space<vmem>>, vector<1x18x128xbf16>,
    %c0_5 = arith.constant 0 : index
    %c0_6 = arith.constant 0 : index
    %c0_7 = arith.constant 0 : index
    %4 = vector.load %arg9[%c0_5, %c0_6, %c0_7] : memref<18x18x128xbf16, #tpu.memory_space<vmem>>, vector<18x1x128xbf16>
    tpu.vector_store %arg9[%c0_5, %c0_6, %c0_7], %1 {strides = array<i32>} : memref<18x18x128xbf16, #tpu.memory_space<vmem>>, vector<18x1x128xbf16>,
    %c0_8 = arith.constant 0 : index
    %c17_9 = arith.constant 17 : index
    %c0_10 = arith.constant 0 : index
    %5 = vector.load %arg9[%c0_8, %c17_9, %c0_10] : memref<18x18x128xbf16, #tpu.memory_space<vmem>>, vector<18x1x128xbf16>
    tpu.vector_store %arg9[%c0_8, %c17_9, %c0_10], %1 {strides = array<i32>} : memref<18x18x128xbf16, #tpu.memory_space<vmem>>, vector<18x1x128xbf16>,
    %c0_11 = arith.constant 0 : index
    %c0_12 = arith.constant 0 : index
    %c0_13 = arith.constant 0 : index
    %c0_14 = arith.constant 0 : index
    %6 = vector.load %arg1[%c0_11, %c0_12, %c0_13, %c0_14] : memref<1x16x16x128xbf16, #tpu.memory_space<vmem>>, vector<1x16x16x128xbf16>
    %7 = vector.shape_cast %6 : vector<1x16x16x128xbf16> to vector<16x16x128xbf16>
    %8 = arith.extf %7 : vector<16x16x128xbf16> to vector<16x16x128xf32>
    %c0_15 = arith.constant 0 : index
    %c0_16 = arith.constant 0 : index
    %9 = vector.load %arg2[%c0_15, %c0_16] : memref<1x128xf32, #tpu.memory_space<vmem>>, vector<1x128xf32>
    %10 = vector.shape_cast %9 : vector<1x128xf32> to vector<1x1x128xf32>
    %11 = vector.broadcast %10 : vector<1x1x128xf32> to vector<16x16x128xf32>
    %12 = arith.mulf %8, %11 : vector<16x16x128xf32>
    %c0_17 = arith.constant 0 : index
    %c0_18 = arith.constant 0 : index
    %13 = vector.load %arg3[%c0_17, %c0_18] : memref<1x128xf32, #tpu.memory_space<vmem>>, vector<1x128xf32>
    %14 = vector.shape_cast %13 : vector<1x128xf32> to vector<1x1x128xf32>
    %15 = vector.broadcast %14 : vector<1x1x128xf32> to vector<16x16x128xf32>
    %16 = arith.addf %12, %15 : vector<16x16x128xf32>
    %cst_19 = arith.constant 0.000000e+00 : f32
    %17 = vector.broadcast %cst_19 : f32 to vector<16x16x128xf32>
    %18 = arith.maximumf %16, %17 : vector<16x16x128xf32>
    %19 = arith.truncf %18 : vector<16x16x128xf32> to vector<16x16x128xbf16>
    %c1 = arith.constant 1 : index
    %c1_20 = arith.constant 1 : index
    %c0_21 = arith.constant 0 : index
    %20 = vector.load %arg9[%c1, %c1_20, %c0_21] : memref<18x18x128xbf16, #tpu.memory_space<vmem>>, vector<16x16x128xbf16>
    tpu.vector_store %arg9[%c1, %c1_20, %c0_21], %19 {strides = array<i32>} : memref<18x18x128xbf16, #tpu.memory_space<vmem>>, vector<16x16x128xbf16>,
    %c0_22 = arith.constant 0 : index
    %c0_23 = arith.constant 0 : index
    %c0_24 = arith.constant 0 : index
    %21 = vector.load %arg9[%c0_22, %c0_23, %c0_24] : memref<18x18x128xbf16, #tpu.memory_space<vmem>>, vector<16x16x128xbf16>
    %22 = vector.shape_cast %21 : vector<16x16x128xbf16> to vector<256x128xbf16>
    %c0_25 = arith.constant 0 : index
    %c1_26 = arith.constant 1 : index
    %c0_27 = arith.constant 0 : index
    %23 = vector.load %arg9[%c0_25, %c1_26, %c0_27] : memref<18x18x128xbf16, #tpu.memory_space<vmem>>, vector<16x16x128xbf16>
    %24 = vector.shape_cast %23 : vector<16x16x128xbf16> to vector<256x128xbf16>
    %c0_28 = arith.constant 0 : index
    %c2 = arith.constant 2 : index
    %c0_29 = arith.constant 0 : index
    %25 = vector.load %arg9[%c0_28, %c2, %c0_29] : memref<18x18x128xbf16, #tpu.memory_space<vmem>>, vector<16x16x128xbf16>
    %26 = vector.shape_cast %25 : vector<16x16x128xbf16> to vector<256x128xbf16>
    %c1_30 = arith.constant 1 : index
    %c0_31 = arith.constant 0 : index
    %c0_32 = arith.constant 0 : index
    %27 = vector.load %arg9[%c1_30, %c0_31, %c0_32] : memref<18x18x128xbf16, #tpu.memory_space<vmem>>, vector<16x16x128xbf16>
    %28 = vector.shape_cast %27 : vector<16x16x128xbf16> to vector<256x128xbf16>
    %c1_33 = arith.constant 1 : index
    %c1_34 = arith.constant 1 : index
    %c0_35 = arith.constant 0 : index
    %29 = vector.load %arg9[%c1_33, %c1_34, %c0_35] : memref<18x18x128xbf16, #tpu.memory_space<vmem>>, vector<16x16x128xbf16>
    %30 = vector.shape_cast %29 : vector<16x16x128xbf16> to vector<256x128xbf16>
    %c1_36 = arith.constant 1 : index
    %c2_37 = arith.constant 2 : index
    %c0_38 = arith.constant 0 : index
    %31 = vector.load %arg9[%c1_36, %c2_37, %c0_38] : memref<18x18x128xbf16, #tpu.memory_space<vmem>>, vector<16x16x128xbf16>
    %32 = vector.shape_cast %31 : vector<16x16x128xbf16> to vector<256x128xbf16>
    %c2_39 = arith.constant 2 : index
    %c0_40 = arith.constant 0 : index
    %c0_41 = arith.constant 0 : index
    %33 = vector.load %arg9[%c2_39, %c0_40, %c0_41] : memref<18x18x128xbf16, #tpu.memory_space<vmem>>, vector<16x16x128xbf16>
    %34 = vector.shape_cast %33 : vector<16x16x128xbf16> to vector<256x128xbf16>
    %c2_42 = arith.constant 2 : index
    %c1_43 = arith.constant 1 : index
    %c0_44 = arith.constant 0 : index
    %35 = vector.load %arg9[%c2_42, %c1_43, %c0_44] : memref<18x18x128xbf16, #tpu.memory_space<vmem>>, vector<16x16x128xbf16>
    %36 = vector.shape_cast %35 : vector<16x16x128xbf16> to vector<256x128xbf16>
    %c2_45 = arith.constant 2 : index
    %c2_46 = arith.constant 2 : index
    %c0_47 = arith.constant 0 : index
    %37 = vector.load %arg9[%c2_45, %c2_46, %c0_47] : memref<18x18x128xbf16, #tpu.memory_space<vmem>>, vector<16x16x128xbf16>
    %38 = vector.shape_cast %37 : vector<16x16x128xbf16> to vector<256x128xbf16>
    %39 = tpu.concatenate %22, %24, %26, %28, %30, %32, %34, %36, %38 in 1 : vector<256x128xbf16>, vector<256x128xbf16>, vector<256x128xbf16>, vector<256x128xbf16>, vector<256x128xbf16>, vector<256x128xbf16>, vector<256x128xbf16>, vector<256x128xbf16>, vector<256x128xbf16> -> vector<256x1152xbf16>
    %c0_48 = arith.constant 0 : index
    %c0_49 = arith.constant 0 : index
    %40 = vector.load %arg4[%c0_48, %c0_49] : memref<1152x128xbf16, #tpu.memory_space<vmem>>, vector<1152x128xbf16>
    %cst_50 = arith.constant dense<0.000000e+00> : vector<256x128xf32>
    %41 = tpu.matmul %39, %40, %cst_50 {dimension_numbers = #tpu.dot_dimension_numbers<[1], [0], [0], [1], [0, 0, 1, 1], [], []>} : vector<256x1152xbf16>, vector<1152x128xbf16>, vector<256x128xf32> -> vector<256x128xf32>
    %c0_51 = arith.constant 0 : index
    %c0_52 = arith.constant 0 : index
    %42 = vector.load %arg5[%c0_51, %c0_52] : memref<1x128xf32, #tpu.memory_space<vmem>>, vector<1x128xf32>
    %43 = vector.broadcast %42 : vector<1x128xf32> to vector<256x128xf32>
    %44 = arith.addf %41, %43 : vector<256x128xf32>
    %45 = vector.shape_cast %44 : vector<256x128xf32> to vector<16x16x128xf32>
    %46 = arith.truncf %45 : vector<16x16x128xf32> to vector<16x16x128xbf16>
    %c0_53 = arith.constant 0 : index
    %c0_54 = arith.constant 0 : index
    %c0_55 = arith.constant 0 : index
    %c0_56 = arith.constant 0 : index
    %47 = vector.load %arg6[%c0_53, %c0_54, %c0_55, %c0_56] : memref<1x16x16x128xbf16, #tpu.memory_space<vmem>>, vector<1x16x16x128xbf16>
    %48 = vector.shape_cast %47 : vector<1x16x16x128xbf16> to vector<16x16x128xbf16>
    %49 = vector.shape_cast %46 : vector<16x16x128xbf16> to vector<1x16x16x128xbf16>
    tpu.vector_store %arg6[%c0_53, %c0_54, %c0_55, %c0_56], %49 {strides = array<i32>} : memref<1x16x16x128xbf16, #tpu.memory_space<vmem>>, vector<1x16x16x128xbf16>,
    %cst_57 = arith.constant dense<0.000000e+00> : vector<128xf32>
    %50 = vector.multi_reduction <add>, %44, %cst_57 [0] : vector<256x128xf32> to vector<128xf32>
    %51 = vector.shape_cast %50 : vector<128xf32> to vector<1x128xf32>
    %c0_58 = arith.constant 0 : index
    %c0_59 = arith.constant 0 : index
    %c0_60 = arith.constant 0 : index
    %52 = vector.load %arg7[%c0_58, %c0_59, %c0_60] : memref<1x1x128xf32, #tpu.memory_space<vmem>>, vector<1x1x128xf32>
    %53 = vector.shape_cast %52 : vector<1x1x128xf32> to vector<1x128xf32>
    %54 = vector.shape_cast %51 : vector<1x128xf32> to vector<1x1x128xf32>
    tpu.vector_store %arg7[%c0_58, %c0_59, %c0_60], %54 {strides = array<i32>} : memref<1x1x128xf32, #tpu.memory_space<vmem>>, vector<1x1x128xf32>,
    %55 = arith.mulf %44, %44 : vector<256x128xf32>
    %cst_61 = arith.constant dense<0.000000e+00> : vector<128xf32>
    %56 = vector.multi_reduction <add>, %55, %cst_61 [0] : vector<256x128xf32> to vector<128xf32>
    %57 = vector.shape_cast %56 : vector<128xf32> to vector<1x128xf32>
    %c0_62 = arith.constant 0 : index
    %c0_63 = arith.constant 0 : index
    %c0_64 = arith.constant 0 : index
    %58 = vector.load %arg8[%c0_62, %c0_63, %c0_64] : memref<1x1x128xf32, #tpu.memory_space<vmem>>, vector<1x1x128xf32>
    %59 = vector.shape_cast %58 : vector<1x1x128xf32> to vector<1x128xf32>
    %60 = vector.shape_cast %57 : vector<1x128xf32> to vector<1x1x128xf32>
    tpu.vector_store %arg8[%c0_62, %c0_63, %c0_64], %60 {strides = array<i32>} : memref<1x1x128xf32, #tpu.memory_space<vmem>>, vector<1x1x128xf32>,
    return
  }
  func.func @transform_0(%arg0: i32) -> (i32, i32, i32, i32) {
    %c0_i32 = arith.constant 0 : i32
    %c0_i32_0 = arith.constant 0 : i32
    %c0_i32_1 = arith.constant 0 : i32
    %c0_i32_2 = arith.constant 0 : i32
    return %arg0, %c0_i32, %c0_i32_0, %c0_i32_1 : i32, i32, i32, i32
  }
  func.func @transform_1(%arg0: i32) -> (i32, i32) {
    %c0_i32 = arith.constant 0 : i32
    %c0_i32_0 = arith.constant 0 : i32
    %c0_i32_1 = arith.constant 0 : i32
    return %c0_i32, %c0_i32_0 : i32, i32
  }
  func.func @transform_2(%arg0: i32) -> (i32, i32) {
    %c0_i32 = arith.constant 0 : i32
    %c0_i32_0 = arith.constant 0 : i32
    %c0_i32_1 = arith.constant 0 : i32
    return %c0_i32, %c0_i32_0 : i32, i32
  }
  func.func @transform_3(%arg0: i32) -> (i32, i32) {
    %c0_i32 = arith.constant 0 : i32
    %c0_i32_0 = arith.constant 0 : i32
    %c0_i32_1 = arith.constant 0 : i32
    return %c0_i32, %c0_i32_0 : i32, i32
  }
  func.func @transform_4(%arg0: i32) -> (i32, i32) {
    %c0_i32 = arith.constant 0 : i32
    %c0_i32_0 = arith.constant 0 : i32
    %c0_i32_1 = arith.constant 0 : i32
    return %c0_i32, %c0_i32_0 : i32, i32
  }
  func.func @transform_5(%arg0: i32) -> (i32, i32, i32, i32) {
    %c0_i32 = arith.constant 0 : i32
    %c0_i32_0 = arith.constant 0 : i32
    %c0_i32_1 = arith.constant 0 : i32
    %c0_i32_2 = arith.constant 0 : i32
    return %arg0, %c0_i32, %c0_i32_0, %c0_i32_1 : i32, i32, i32, i32
  }
  func.func @transform_6(%arg0: i32) -> (i32, i32, i32) {
    %c0_i32 = arith.constant 0 : i32
    %c0_i32_0 = arith.constant 0 : i32
    %c0_i32_1 = arith.constant 0 : i32
    return %arg0, %c0_i32, %c0_i32_0 : i32, i32, i32
  }
  func.func @transform_7(%arg0: i32) -> (i32, i32, i32) {
    %c0_i32 = arith.constant 0 : i32
    %c0_i32_0 = arith.constant 0 : i32
    %c0_i32_1 = arith.constant 0 : i32
    return %arg0, %c0_i32, %c0_i32_0 : i32, i32, i32
  }
}

module attributes {stable_mosaic.version = 11 : i64} {
  func.func @_conv1_kernel(%arg0: i32, %arg1: memref<1x16x16x128xbf16, #tpu.memory_space<vmem>>, %arg2: memref<1x16x16x128xbf16, #tpu.memory_space<vmem>>, %arg3: memref<2304x128xbf16, #tpu.memory_space<vmem>>, %arg4: memref<1x128xf32, #tpu.memory_space<vmem>>, %arg5: memref<1x16x16x128xbf16, #tpu.memory_space<vmem>>, %arg6: memref<1x1x128xf32, #tpu.memory_space<vmem>>, %arg7: memref<1x1x128xf32, #tpu.memory_space<vmem>>, %arg8: memref<18x18x256xbf16, #tpu.memory_space<vmem>>) attributes {dimension_semantics = [#tpu.dimension_semantics<parallel>], iteration_bounds = array<i64: 2>, scalar_prefetch = 0 : i64, scratch_operands = 1 : i64, tpu.core_type = #tpu.core_type<tc>, window_params = [{transform_indices = @transform_0, window_bounds = array<i64: 1, 16, 16, 128>}, {transform_indices = @transform_1, window_bounds = array<i64: 1, 16, 16, 128>}, {pipeline_mode = #tpu.pipeline_mode<synchronous>, transform_indices = @transform_2, window_bounds = array<i64: 2304, 128>}, {pipeline_mode = #tpu.pipeline_mode<synchronous>, transform_indices = @transform_3, window_bounds = array<i64: 1, 128>}, {transform_indices = @transform_4, window_bounds = array<i64: 1, 16, 16, 128>}, {transform_indices = @transform_5, window_bounds = array<i64: 1, 1, 128>}, {transform_indices = @transform_6, window_bounds = array<i64: 1, 1, 128>}]} {
    %cst = arith.constant 0.000000e+00 : bf16
    %0 = vector.broadcast %cst : bf16 to vector<1x18x256xbf16>
    %cst_0 = arith.constant 0.000000e+00 : bf16
    %1 = vector.broadcast %cst_0 : bf16 to vector<18x1x256xbf16>
    %c0 = arith.constant 0 : index
    %c0_1 = arith.constant 0 : index
    %c0_2 = arith.constant 0 : index
    %2 = vector.load %arg8[%c0, %c0_1, %c0_2] : memref<18x18x256xbf16, #tpu.memory_space<vmem>>, vector<1x18x256xbf16>
    tpu.vector_store %arg8[%c0, %c0_1, %c0_2], %0 {strides = array<i32>} : memref<18x18x256xbf16, #tpu.memory_space<vmem>>, vector<1x18x256xbf16>,
    %c17 = arith.constant 17 : index
    %c0_3 = arith.constant 0 : index
    %c0_4 = arith.constant 0 : index
    %3 = vector.load %arg8[%c17, %c0_3, %c0_4] : memref<18x18x256xbf16, #tpu.memory_space<vmem>>, vector<1x18x256xbf16>
    tpu.vector_store %arg8[%c17, %c0_3, %c0_4], %0 {strides = array<i32>} : memref<18x18x256xbf16, #tpu.memory_space<vmem>>, vector<1x18x256xbf16>,
    %c0_5 = arith.constant 0 : index
    %c0_6 = arith.constant 0 : index
    %c0_7 = arith.constant 0 : index
    %4 = vector.load %arg8[%c0_5, %c0_6, %c0_7] : memref<18x18x256xbf16, #tpu.memory_space<vmem>>, vector<18x1x256xbf16>
    tpu.vector_store %arg8[%c0_5, %c0_6, %c0_7], %1 {strides = array<i32>} : memref<18x18x256xbf16, #tpu.memory_space<vmem>>, vector<18x1x256xbf16>,
    %c0_8 = arith.constant 0 : index
    %c17_9 = arith.constant 17 : index
    %c0_10 = arith.constant 0 : index
    %5 = vector.load %arg8[%c0_8, %c17_9, %c0_10] : memref<18x18x256xbf16, #tpu.memory_space<vmem>>, vector<18x1x256xbf16>
    tpu.vector_store %arg8[%c0_8, %c17_9, %c0_10], %1 {strides = array<i32>} : memref<18x18x256xbf16, #tpu.memory_space<vmem>>, vector<18x1x256xbf16>,
    %c0_11 = arith.constant 0 : index
    %c0_12 = arith.constant 0 : index
    %c0_13 = arith.constant 0 : index
    %c0_14 = arith.constant 0 : index
    %6 = vector.load %arg1[%c0_11, %c0_12, %c0_13, %c0_14] : memref<1x16x16x128xbf16, #tpu.memory_space<vmem>>, vector<1x16x16x128xbf16>
    %7 = vector.shape_cast %6 : vector<1x16x16x128xbf16> to vector<16x16x128xbf16>
    %c1 = arith.constant 1 : index
    %c1_15 = arith.constant 1 : index
    %c0_16 = arith.constant 0 : index
    %8 = vector.load %arg8[%c1, %c1_15, %c0_16] : memref<18x18x256xbf16, #tpu.memory_space<vmem>>, vector<16x16x128xbf16>
    tpu.vector_store %arg8[%c1, %c1_15, %c0_16], %7 {strides = array<i32>} : memref<18x18x256xbf16, #tpu.memory_space<vmem>>, vector<16x16x128xbf16>,
    %c0_17 = arith.constant 0 : index
    %c0_18 = arith.constant 0 : index
    %c0_19 = arith.constant 0 : index
    %c0_20 = arith.constant 0 : index
    %9 = vector.load %arg2[%c0_17, %c0_18, %c0_19, %c0_20] : memref<1x16x16x128xbf16, #tpu.memory_space<vmem>>, vector<1x16x16x128xbf16>
    %10 = vector.shape_cast %9 : vector<1x16x16x128xbf16> to vector<16x16x128xbf16>
    %c1_21 = arith.constant 1 : index
    %c1_22 = arith.constant 1 : index
    %c128 = arith.constant 128 : index
    %11 = vector.load %arg8[%c1_21, %c1_22, %c128] : memref<18x18x256xbf16, #tpu.memory_space<vmem>>, vector<16x16x128xbf16>
    tpu.vector_store %arg8[%c1_21, %c1_22, %c128], %10 {strides = array<i32>} : memref<18x18x256xbf16, #tpu.memory_space<vmem>>, vector<16x16x128xbf16>,
    %c0_23 = arith.constant 0 : index
    %c0_24 = arith.constant 0 : index
    %c0_25 = arith.constant 0 : index
    %12 = vector.load %arg8[%c0_23, %c0_24, %c0_25] : memref<18x18x256xbf16, #tpu.memory_space<vmem>>, vector<16x16x256xbf16>
    %13 = vector.shape_cast %12 : vector<16x16x256xbf16> to vector<256x256xbf16>
    %c0_26 = arith.constant 0 : index
    %c1_27 = arith.constant 1 : index
    %c0_28 = arith.constant 0 : index
    %14 = vector.load %arg8[%c0_26, %c1_27, %c0_28] : memref<18x18x256xbf16, #tpu.memory_space<vmem>>, vector<16x16x256xbf16>
    %15 = vector.shape_cast %14 : vector<16x16x256xbf16> to vector<256x256xbf16>
    %c0_29 = arith.constant 0 : index
    %c2 = arith.constant 2 : index
    %c0_30 = arith.constant 0 : index
    %16 = vector.load %arg8[%c0_29, %c2, %c0_30] : memref<18x18x256xbf16, #tpu.memory_space<vmem>>, vector<16x16x256xbf16>
    %17 = vector.shape_cast %16 : vector<16x16x256xbf16> to vector<256x256xbf16>
    %c1_31 = arith.constant 1 : index
    %c0_32 = arith.constant 0 : index
    %c0_33 = arith.constant 0 : index
    %18 = vector.load %arg8[%c1_31, %c0_32, %c0_33] : memref<18x18x256xbf16, #tpu.memory_space<vmem>>, vector<16x16x256xbf16>
    %19 = vector.shape_cast %18 : vector<16x16x256xbf16> to vector<256x256xbf16>
    %c1_34 = arith.constant 1 : index
    %c1_35 = arith.constant 1 : index
    %c0_36 = arith.constant 0 : index
    %20 = vector.load %arg8[%c1_34, %c1_35, %c0_36] : memref<18x18x256xbf16, #tpu.memory_space<vmem>>, vector<16x16x256xbf16>
    %21 = vector.shape_cast %20 : vector<16x16x256xbf16> to vector<256x256xbf16>
    %c1_37 = arith.constant 1 : index
    %c2_38 = arith.constant 2 : index
    %c0_39 = arith.constant 0 : index
    %22 = vector.load %arg8[%c1_37, %c2_38, %c0_39] : memref<18x18x256xbf16, #tpu.memory_space<vmem>>, vector<16x16x256xbf16>
    %23 = vector.shape_cast %22 : vector<16x16x256xbf16> to vector<256x256xbf16>
    %c2_40 = arith.constant 2 : index
    %c0_41 = arith.constant 0 : index
    %c0_42 = arith.constant 0 : index
    %24 = vector.load %arg8[%c2_40, %c0_41, %c0_42] : memref<18x18x256xbf16, #tpu.memory_space<vmem>>, vector<16x16x256xbf16>
    %25 = vector.shape_cast %24 : vector<16x16x256xbf16> to vector<256x256xbf16>
    %c2_43 = arith.constant 2 : index
    %c1_44 = arith.constant 1 : index
    %c0_45 = arith.constant 0 : index
    %26 = vector.load %arg8[%c2_43, %c1_44, %c0_45] : memref<18x18x256xbf16, #tpu.memory_space<vmem>>, vector<16x16x256xbf16>
    %27 = vector.shape_cast %26 : vector<16x16x256xbf16> to vector<256x256xbf16>
    %c2_46 = arith.constant 2 : index
    %c2_47 = arith.constant 2 : index
    %c0_48 = arith.constant 0 : index
    %28 = vector.load %arg8[%c2_46, %c2_47, %c0_48] : memref<18x18x256xbf16, #tpu.memory_space<vmem>>, vector<16x16x256xbf16>
    %29 = vector.shape_cast %28 : vector<16x16x256xbf16> to vector<256x256xbf16>
    %30 = tpu.concatenate %13, %15, %17, %19, %21, %23, %25, %27, %29 in 1 : vector<256x256xbf16>, vector<256x256xbf16>, vector<256x256xbf16>, vector<256x256xbf16>, vector<256x256xbf16>, vector<256x256xbf16>, vector<256x256xbf16>, vector<256x256xbf16>, vector<256x256xbf16> -> vector<256x2304xbf16>
    %c0_49 = arith.constant 0 : index
    %c0_50 = arith.constant 0 : index
    %31 = vector.load %arg3[%c0_49, %c0_50] : memref<2304x128xbf16, #tpu.memory_space<vmem>>, vector<2304x128xbf16>
    %cst_51 = arith.constant dense<0.000000e+00> : vector<256x128xf32>
    %32 = tpu.matmul %30, %31, %cst_51 {dimension_numbers = #tpu.dot_dimension_numbers<[1], [0], [0], [1], [0, 0, 1, 1], [], []>} : vector<256x2304xbf16>, vector<2304x128xbf16>, vector<256x128xf32> -> vector<256x128xf32>
    %c0_52 = arith.constant 0 : index
    %c0_53 = arith.constant 0 : index
    %33 = vector.load %arg4[%c0_52, %c0_53] : memref<1x128xf32, #tpu.memory_space<vmem>>, vector<1x128xf32>
    %34 = vector.broadcast %33 : vector<1x128xf32> to vector<256x128xf32>
    %35 = arith.addf %32, %34 : vector<256x128xf32>
    %36 = vector.shape_cast %35 : vector<256x128xf32> to vector<16x16x128xf32>
    %37 = arith.truncf %36 : vector<16x16x128xf32> to vector<16x16x128xbf16>
    %c0_54 = arith.constant 0 : index
    %c0_55 = arith.constant 0 : index
    %c0_56 = arith.constant 0 : index
    %c0_57 = arith.constant 0 : index
    %38 = vector.load %arg5[%c0_54, %c0_55, %c0_56, %c0_57] : memref<1x16x16x128xbf16, #tpu.memory_space<vmem>>, vector<1x16x16x128xbf16>
    %39 = vector.shape_cast %38 : vector<1x16x16x128xbf16> to vector<16x16x128xbf16>
    %40 = vector.shape_cast %37 : vector<16x16x128xbf16> to vector<1x16x16x128xbf16>
    tpu.vector_store %arg5[%c0_54, %c0_55, %c0_56, %c0_57], %40 {strides = array<i32>} : memref<1x16x16x128xbf16, #tpu.memory_space<vmem>>, vector<1x16x16x128xbf16>,
    %cst_58 = arith.constant dense<0.000000e+00> : vector<128xf32>
    %41 = vector.multi_reduction <add>, %35, %cst_58 [0] : vector<256x128xf32> to vector<128xf32>
    %42 = vector.shape_cast %41 : vector<128xf32> to vector<1x128xf32>
    %c0_59 = arith.constant 0 : index
    %c0_60 = arith.constant 0 : index
    %c0_61 = arith.constant 0 : index
    %43 = vector.load %arg6[%c0_59, %c0_60, %c0_61] : memref<1x1x128xf32, #tpu.memory_space<vmem>>, vector<1x1x128xf32>
    %44 = vector.shape_cast %43 : vector<1x1x128xf32> to vector<1x128xf32>
    %45 = vector.shape_cast %42 : vector<1x128xf32> to vector<1x1x128xf32>
    tpu.vector_store %arg6[%c0_59, %c0_60, %c0_61], %45 {strides = array<i32>} : memref<1x1x128xf32, #tpu.memory_space<vmem>>, vector<1x1x128xf32>,
    %46 = arith.mulf %35, %35 : vector<256x128xf32>
    %cst_62 = arith.constant dense<0.000000e+00> : vector<128xf32>
    %47 = vector.multi_reduction <add>, %46, %cst_62 [0] : vector<256x128xf32> to vector<128xf32>
    %48 = vector.shape_cast %47 : vector<128xf32> to vector<1x128xf32>
    %c0_63 = arith.constant 0 : index
    %c0_64 = arith.constant 0 : index
    %c0_65 = arith.constant 0 : index
    %49 = vector.load %arg7[%c0_63, %c0_64, %c0_65] : memref<1x1x128xf32, #tpu.memory_space<vmem>>, vector<1x1x128xf32>
    %50 = vector.shape_cast %49 : vector<1x1x128xf32> to vector<1x128xf32>
    %51 = vector.shape_cast %48 : vector<1x128xf32> to vector<1x1x128xf32>
    tpu.vector_store %arg7[%c0_63, %c0_64, %c0_65], %51 {strides = array<i32>} : memref<1x1x128xf32, #tpu.memory_space<vmem>>, vector<1x1x128xf32>,
    return
  }
  func.func @transform_0(%arg0: i32) -> (i32, i32, i32, i32) {
    %c0_i32 = arith.constant 0 : i32
    %c0_i32_0 = arith.constant 0 : i32
    %c0_i32_1 = arith.constant 0 : i32
    %c0_i32_2 = arith.constant 0 : i32
    return %arg0, %c0_i32, %c0_i32_0, %c0_i32_1 : i32, i32, i32, i32
  }
  func.func @transform_1(%arg0: i32) -> (i32, i32, i32, i32) {
    %c0_i32 = arith.constant 0 : i32
    %c0_i32_0 = arith.constant 0 : i32
    %c0_i32_1 = arith.constant 0 : i32
    %c0_i32_2 = arith.constant 0 : i32
    return %arg0, %c0_i32, %c0_i32_0, %c0_i32_1 : i32, i32, i32, i32
  }
  func.func @transform_2(%arg0: i32) -> (i32, i32) {
    %c0_i32 = arith.constant 0 : i32
    %c0_i32_0 = arith.constant 0 : i32
    %c0_i32_1 = arith.constant 0 : i32
    return %c0_i32, %c0_i32_0 : i32, i32
  }
  func.func @transform_3(%arg0: i32) -> (i32, i32) {
    %c0_i32 = arith.constant 0 : i32
    %c0_i32_0 = arith.constant 0 : i32
    %c0_i32_1 = arith.constant 0 : i32
    return %c0_i32, %c0_i32_0 : i32, i32
  }
  func.func @transform_4(%arg0: i32) -> (i32, i32, i32, i32) {
    %c0_i32 = arith.constant 0 : i32
    %c0_i32_0 = arith.constant 0 : i32
    %c0_i32_1 = arith.constant 0 : i32
    %c0_i32_2 = arith.constant 0 : i32
    return %arg0, %c0_i32, %c0_i32_0, %c0_i32_1 : i32, i32, i32, i32
  }
  func.func @transform_5(%arg0: i32) -> (i32, i32, i32) {
    %c0_i32 = arith.constant 0 : i32
    %c0_i32_0 = arith.constant 0 : i32
    %c0_i32_1 = arith.constant 0 : i32
    return %arg0, %c0_i32, %c0_i32_0 : i32, i32, i32
  }
  func.func @transform_6(%arg0: i32) -> (i32, i32, i32) {
    %c0_i32 = arith.constant 0 : i32
    %c0_i32_0 = arith.constant 0 : i32
    %c0_i32_1 = arith.constant 0 : i32
    return %arg0, %c0_i32, %c0_i32_0 : i32, i32, i32
  }
}

module attributes {stable_mosaic.version = 11 : i64} {
  func.func @_affine_relu_kernel(%arg0: i32, %arg1: memref<1x16x16x128xbf16, #tpu.memory_space<vmem>>, %arg2: memref<1x128xf32, #tpu.memory_space<vmem>>, %arg3: memref<1x128xf32, #tpu.memory_space<vmem>>, %arg4: memref<1x16x16x128xf32, #tpu.memory_space<vmem>>) attributes {dimension_semantics = [#tpu.dimension_semantics<parallel>], iteration_bounds = array<i64: 2>, scalar_prefetch = 0 : i64, scratch_operands = 0 : i64, tpu.core_type = #tpu.core_type<tc>, window_params = [{transform_indices = @transform_0, window_bounds = array<i64: 1, 16, 16, 128>}, {pipeline_mode = #tpu.pipeline_mode<synchronous>, transform_indices = @transform_1, window_bounds = array<i64: 1, 128>}, {pipeline_mode = #tpu.pipeline_mode<synchronous>, transform_indices = @transform_2, window_bounds = array<i64: 1, 128>}, {transform_indices = @transform_3, window_bounds = array<i64: 1, 16, 16, 128>}]} {
    %c0 = arith.constant 0 : index
    %c0_0 = arith.constant 0 : index
    %c0_1 = arith.constant 0 : index
    %c0_2 = arith.constant 0 : index
    %0 = vector.load %arg1[%c0, %c0_0, %c0_1, %c0_2] : memref<1x16x16x128xbf16, #tpu.memory_space<vmem>>, vector<1x16x16x128xbf16>
    %1 = arith.extf %0 : vector<1x16x16x128xbf16> to vector<1x16x16x128xf32>
    %c0_3 = arith.constant 0 : index
    %c0_4 = arith.constant 0 : index
    %2 = vector.load %arg2[%c0_3, %c0_4] : memref<1x128xf32, #tpu.memory_space<vmem>>, vector<1x128xf32>
    %3 = vector.shape_cast %2 : vector<1x128xf32> to vector<1x1x1x128xf32>
    %4 = vector.broadcast %3 : vector<1x1x1x128xf32> to vector<1x16x16x128xf32>
    %5 = arith.mulf %1, %4 : vector<1x16x16x128xf32>
    %c0_5 = arith.constant 0 : index
    %c0_6 = arith.constant 0 : index
    %6 = vector.load %arg3[%c0_5, %c0_6] : memref<1x128xf32, #tpu.memory_space<vmem>>, vector<1x128xf32>
    %7 = vector.shape_cast %6 : vector<1x128xf32> to vector<1x1x1x128xf32>
    %8 = vector.broadcast %7 : vector<1x1x1x128xf32> to vector<1x16x16x128xf32>
    %9 = arith.addf %5, %8 : vector<1x16x16x128xf32>
    %cst = arith.constant 0.000000e+00 : f32
    %10 = vector.broadcast %cst : f32 to vector<1x16x16x128xf32>
    %11 = arith.maximumf %9, %10 : vector<1x16x16x128xf32>
    %c0_7 = arith.constant 0 : index
    %c0_8 = arith.constant 0 : index
    %c0_9 = arith.constant 0 : index
    %c0_10 = arith.constant 0 : index
    %12 = vector.load %arg4[%c0_7, %c0_8, %c0_9, %c0_10] : memref<1x16x16x128xf32, #tpu.memory_space<vmem>>, vector<1x16x16x128xf32>
    tpu.vector_store %arg4[%c0_7, %c0_8, %c0_9, %c0_10], %11 {strides = array<i32>} : memref<1x16x16x128xf32, #tpu.memory_space<vmem>>, vector<1x16x16x128xf32>,
    return
  }
  func.func @transform_0(%arg0: i32) -> (i32, i32, i32, i32) {
    %c0_i32 = arith.constant 0 : i32
    %c0_i32_0 = arith.constant 0 : i32
    %c0_i32_1 = arith.constant 0 : i32
    %c0_i32_2 = arith.constant 0 : i32
    return %arg0, %c0_i32, %c0_i32_0, %c0_i32_1 : i32, i32, i32, i32
  }
  func.func @transform_1(%arg0: i32) -> (i32, i32) {
    %c0_i32 = arith.constant 0 : i32
    %c0_i32_0 = arith.constant 0 : i32
    %c0_i32_1 = arith.constant 0 : i32
    return %c0_i32, %c0_i32_0 : i32, i32
  }
  func.func @transform_2(%arg0: i32) -> (i32, i32) {
    %c0_i32 = arith.constant 0 : i32
    %c0_i32_0 = arith.constant 0 : i32
    %c0_i32_1 = arith.constant 0 : i32
    return %c0_i32, %c0_i32_0 : i32, i32
  }
  func.func @transform_3(%arg0: i32) -> (i32, i32, i32, i32) {
    %c0_i32 = arith.constant 0 : i32
    %c0_i32_0 = arith.constant 0 : i32
    %c0_i32_1 = arith.constant 0 : i32
    %c0_i32_2 = arith.constant 0 : i32
    return %arg0, %c0_i32, %c0_i32_0, %c0_i32_1 : i32, i32, i32, i32
  }
}

</mosaic_0001>

<llo_original>
// kernel: up_forward.5
$region0: #{up_forward.5}
  #allocation0 [shape = 'u32[]', space=smem, size = 0x4, offset = 0x4, fixed_abs, tag = 'smem constant byte address 0x4 - core index']
  #allocation1 [shape = 'u32[72,128]{1,0:T(1,128)}', space=vmem, size = 0x9000, scoped, tag = 'internal scratch']
  %s0 = inlined_call_operand.vmem [shape: bf16[2,16,16,128], index: 0, kind: input, shape index: {}]
  %s1 = inlined_call_operand.vmem [shape: f32[1,128], index: 1, kind: input, shape index: {}]
  %s2 = inlined_call_operand.vmem [shape: f32[1,128], index: 2, kind: input, shape index: {}]
  %s3 = inlined_call_operand.vmem [shape: f32[2,16,16,128], index: 3, kind: output, shape index: {}]
  %s4 = sld [smem:[#allocation0]]
  $region45: #{up_forward.5} parent=0
    _
  %s6 = ssub.s32 1, %s4
  %s7 = scalar_select 0, %s6, %s4
  loop: start=0, step=1, limit=4
  $region2: #{up_forward.5} parent=0 // loop_pre_header
    _
  $region3: #{up_forward.5} parent=0 // loop_header
    %s9 = sphi 0, %s13
    %p10 = scmp.ge.s32.totalorder %s9, 4
    %s19 = sphi 0, %s21
    %s22 = sphi 0, %s19
    %s23 = sphi 0, %s22
    %s39 = sphi 0, %s23
    %s43 = sphi 0, %s43
    %s45 = sphi 0, %s43
    %s46 = sphi 0, %s45
    %s60 = sphi 0, %s46
    %s64 = sphi 0, %s64
    %s66 = sphi 0, %s64
    %s67 = sphi 0, %s66
    %s81 = sphi 0, %s67
    %s87 = sphi 0, %s89
    %s90 = sphi 0, %s87
    %s91 = sphi 0, %s90
    %s107 = sphi 0, %s91
  $region4: #{up_forward.5} parent=0 // loop_header_branch
    %12 = sbr.rel (%p10) target = $region8
  $region5: #{up_forward.5} parent=0 // loop_body
    %s14 = ssub.s32 %s9, 1
    %s15 = ssub.s32 %s9, 2
    %s16 = sadd.s32 %s9, 1
    %s17 = ssub.s32 %s9, %s16
    %p18 = scmp.eq.s32.totalorder %s17, 0
    %s20 = sadd.s32 %s19, 1
    %s21 = scalar_select %p18, %s19, %s20
    %p24 = pneg %p18
    %p25 = scmp.eq.s32.totalorder %s9, 1
    %p26 = por %p24, %p25
    %p27 = scmp.ne.s32.totalorder %s19, %s22
    %p28 = scmp.eq.s32.totalorder %s9, 0
    %p29 = por %p27, %p28
    %p30 = scmp.ne.s32.totalorder %s19, %s22
    %p31 = scmp.eq.s32.totalorder %s14, 1
    %p32 = por %p30, %p31
    %p33 = scmp.ne.s32.totalorder %s22, %s23
    %p34 = scmp.eq.s32.totalorder %s14, 0
    %p35 = por %p33, %p34
    %p36 = scmp.ne.s32.totalorder %s22, %s23
    %p37 = scmp.eq.s32.totalorder %s15, 1
    %p38 = por %p36, %p37
    %p40 = scmp.ne.s32.totalorder %s23, %s39
    %p41 = scmp.eq.s32.totalorder %s15, 0
    %p42 = por %p40, %p41
    %s44 = sadd.s32 %s43, 1
    %p47 = scmp.eq.s32.totalorder %s9, 1
    %p48 = scmp.ne.s32.totalorder %s43, %s45
    %p49 = scmp.eq.s32.totalorder %s9, 0
    %p50 = por %p48, %p49
    %p51 = scmp.ne.s32.totalorder %s43, %s45
    %p52 = scmp.eq.s32.totalorder %s14, 1
    %p53 = por %p51, %p52
    %p54 = scmp.ne.s32.totalorder %s45, %s46
    %p55 = scmp.eq.s32.totalorder %s14, 0
    %p56 = por %p54, %p55
    %p57 = scmp.ne.s32.totalorder %s45, %s46
    %p58 = scmp.eq.s32.totalorder %s15, 1
    %p59 = por %p57, %p58
    %p61 = scmp.ne.s32.totalorder %s46, %s60
    %p62 = scmp.eq.s32.totalorder %s15, 0
    %p63 = por %p61, %p62
    %s65 = sadd.s32 %s64, 1
    %p68 = scmp.eq.s32.totalorder %s9, 1
    %p69 = scmp.ne.s32.totalorder %s64, %s66
    %p70 = scmp.eq.s32.totalorder %s9, 0
    %p71 = por %p69, %p70
    %p72 = scmp.ne.s32.totalorder %s64, %s66
    %p73 = scmp.eq.s32.totalorder %s14, 1
    %p74 = por %p72, %p73
    %p75 = scmp.ne.s32.totalorder %s66, %s67
    %p76 = scmp.eq.s32.totalorder %s14, 0
    %p77 = por %p75, %p76
    %p78 = scmp.ne.s32.totalorder %s66, %s67
    %p79 = scmp.eq.s32.totalorder %s15, 1
    %p80 = por %p78, %p79
    %p82 = scmp.ne.s32.totalorder %s67, %s81
    %p83 = scmp.eq.s32.totalorder %s15, 0
    %p84 = por %p82, %p83
    %s85 = ssub.s32 %s9, %s16
    %p86 = scmp.eq.s32.totalorder %s85, 0
    %s88 = sadd.s32 %s87, 1
    %s89 = scalar_select %p86, %s87, %s88
    %p92 = pneg %p86
    %p93 = scmp.eq.s32.totalorder %s9, 1
    %p94 = por %p92, %p93
    %p95 = scmp.ne.s32.totalorder %s87, %s90
    %p96 = scmp.eq.s32.totalorder %s9, 0
    %p97 = por %p95, %p96
    %p98 = scmp.ne.s32.totalorder %s87, %s90
    %p99 = scmp.eq.s32.totalorder %s14, 1
    %p100 = por %p98, %p99
    %p101 = scmp.ne.s32.totalorder %s90, %s91
    %p102 = scmp.eq.s32.totalorder %s14, 0
    %p103 = por %p101, %p102
    %p104 = scmp.ne.s32.totalorder %s90, %s91
    %p105 = scmp.eq.s32.totalorder %s15, 1
    %p106 = por %p104, %p105
    %p108 = scmp.ne.s32.totalorder %s91, %s107
    %p109 = scmp.eq.s32.totalorder %s15, 0
    %p110 = por %p108, %p109
    %p111 = scmp.le.s32.totalorder 1, %s9
    %p112 = scmp.lt.s32.totalorder %s9, 3
    %p113 = pnand %p111, %p112
    %p114 = pneg %p113
    // Predicated region
    $region9: #{up_forward.5} parent=5 // pred_check
      _
    $region10: #{up_forward.5} parent=5 // pred_check_branch
      %116 = sbr.rel (%p113) target = $region12
    $region11: #{up_forward.5} parent=5 // pred_region
      %s117 = ssub.s32 %s9, 1
      // Predicated region
      $region13: #{up_forward.5} parent=11 // pred_check
        %p118 = pneg %p56
      $region14: #{up_forward.5} parent=11 // pred_check_branch
        %120 = sbr.rel (%p118) target = $region16
      $region15: #{up_forward.5} parent=11 // pred_region
        _
      $region16: #{up_forward.5} parent=11 // pred_fallthru
        _
      // Predicated region
      $region17: #{up_forward.5} parent=11 // pred_check
        %p121 = pneg %p77
      $region18: #{up_forward.5} parent=11 // pred_check_branch
        %123 = sbr.rel (%p121) target = $region20
      $region19: #{up_forward.5} parent=11 // pred_region
        _
      $region20: #{up_forward.5} parent=11 // pred_fallthru
        _
    $region12: #{up_forward.5} parent=5 // pred_fallthru
      _
    %p124 = scmp.lt.s32.totalorder %s9, 2
    // Predicated region
    $region21: #{up_forward.5} parent=5 // pred_check
      %p125 = pneg %p124
    $region22: #{up_forward.5} parent=5 // pred_check_branch
      %127 = sbr.rel (%p125) target = $region24
    $region23: #{up_forward.5} parent=5 // pred_region
      // Predicated region
      $region25: #{up_forward.5} parent=23 // pred_check
        %p128 = pneg %p29
      $region26: #{up_forward.5} parent=23 // pred_check_branch
        %130 = sbr.rel (%p128) target = $region28
      $region27: #{up_forward.5} parent=23 // pred_region
        %p131 = scmp.lt.s32.totalorder %s9, 1
        %s132 = scalar_select %p131, %s9, 1
        %s133 = smul.addr %s132, 32
        %s134 = smul.addr %s133, 4
        %s135 = scalar_lea.vmem %s0, %s134
      $region28: #{up_forward.5} parent=23 // pred_fallthru
        _
    $region24: #{up_forward.5} parent=5 // pred_fallthru
      _
    %p136 = scmp.le.s32.totalorder 1, %s9
    %p137 = scmp.lt.s32.totalorder %s9, 3
    %p138 = pnand %p136, %p137
    %p139 = pneg %p138
    // Predicated region
    $region29: #{up_forward.5} parent=5 // pred_check
      _
    $region30: #{up_forward.5} parent=5 // pred_check_branch
      %141 = sbr.rel (%p138) target = $region32
    $region31: #{up_forward.5} parent=5 // pred_region
      %s142 = ssub.s32 %s9, 1
      %p143 = scmp.lt.s32.totalorder %s14, 1
      %s144 = scalar_select %p143, %s14, 1
      %s145 = smul.addr %s144, 32
      %s146 = smul.addr %s145, 4
      %s147 = scalar_lea.vmem %s0, %s146
      %p148 = pneg %p35
      %p149 = pneg %p32
      %p150 = pneg %p56
      %p151 = pneg %p53
      %p152 = pneg %p77
      %p153 = pneg %p74
      %p154 = pneg %p103
      %p155 = pneg %p100
      %p156 = scmp.lt.s32.totalorder %s14, 1
      %s157 = scalar_select %p156, %s14, 1
      %s158 = smul.addr %s157, 32
      %s159 = smul.addr %s158, 8
      %s160 = scalar_lea.vmem %s3, %s159
      %p161 = scmp.lt.s32.totalorder %s14, 1
      %s162 = scalar_select %p161, %s14, 1
      %s163 = smul.addr %s162, 32
      %s164 = smul.addr %s163, 4
      %s165 = scalar_lea.vmem %s0, %s164
      %p166 = scmp.lt.s32.totalorder %s14, 1
      %s167 = scalar_select %p166, %s14, 1
      %s168 = smul.addr %s167, 32
      %s169 = smul.addr %s168, 8
      %s170 = scalar_lea.vmem %s3, %s169
      %v171 = vld [vmem:[%s165] sm:$0xf]
      %v172 = vld [vmem:[%s165 + $0x4] sm:$0xf]
      %v173 = vld [vmem:[%s165 + $0x8] sm:$0xf]
      %v174 = vld [vmem:[%s165 + $0xc] sm:$0xf]
      %v175 = vld [vmem:[%s165 + $0x10] sm:$0xf]
      %v176 = vld [vmem:[%s165 + $0x14] sm:$0xf]
      %v177 = vld [vmem:[%s165 + $0x18] sm:$0xf]
      %v178 = vld [vmem:[%s165 + $0x1c] sm:$0xf]
      %v179 = vld [vmem:[%s165 + $0x20] sm:$0xf]
      %v180 = vld [vmem:[%s165 + $0x24] sm:$0xf]
      %v181 = vld [vmem:[%s165 + $0x28] sm:$0xf]
      %v182 = vld [vmem:[%s165 + $0x2c] sm:$0xf]
      %v183 = vld [vmem:[%s165 + $0x30] sm:$0xf]
      %v184 = vld [vmem:[%s165 + $0x34] sm:$0xf]
      %v185 = vld [vmem:[%s165 + $0x38] sm:$0xf]
      %v186 = vld [vmem:[%s165 + $0x3c] sm:$0xf]
      %v187 = vld [vmem:[%s165 + $0x40] sm:$0xf]
      %v188 = vld [vmem:[%s165 + $0x44] sm:$0xf]
      %v189 = vld [vmem:[%s165 + $0x48] sm:$0xf]
      %v190 = vld [vmem:[%s165 + $0x4c] sm:$0xf]
      %v191 = vld [vmem:[%s165 + $0x50] sm:$0xf]
      %v192 = vld [vmem:[%s165 + $0x54] sm:$0xf]
      %v193 = vld [vmem:[%s165 + $0x58] sm:$0xf]
      %v194 = vld [vmem:[%s165 + $0x5c] sm:$0xf]
      %v195 = vld [vmem:[%s165 + $0x60] sm:$0xf]
      %v196 = vld [vmem:[%s165 + $0x64] sm:$0xf]
      %v197 = vld [vmem:[%s165 + $0x68] sm:$0xf]
      %v198 = vld [vmem:[%s165 + $0x6c] sm:$0xf]
      %v199 = vld [vmem:[%s165 + $0x70] sm:$0xf]
      %v200 = vld [vmem:[%s165 + $0x74] sm:$0xf]
      %v201 = vld [vmem:[%s165 + $0x78] sm:$0xf]
      %v202 = vld [vmem:[%s165 + $0x7c] sm:$0xf]
      %v203 = vunpack.c.l.bf16 %v171
      %v204 = vunpack.c.l.bf16 %v172
      %v205 = vunpack.c.l.bf16 %v173
      %v206 = vunpack.c.l.bf16 %v174
      %v207 = vunpack.c.l.bf16 %v175
      %v208 = vunpack.c.l.bf16 %v176
      %v209 = vunpack.c.l.bf16 %v177
      %v210 = vunpack.c.l.bf16 %v178
      %v211 = vunpack.c.l.bf16 %v179
      %v212 = vunpack.c.l.bf16 %v180
      %v213 = vunpack.c.l.bf16 %v181
      %v214 = vunpack.c.l.bf16 %v182
      %v215 = vunpack.c.l.bf16 %v183
      %v216 = vunpack.c.l.bf16 %v184
      %v217 = vunpack.c.l.bf16 %v185
      %v218 = vunpack.c.l.bf16 %v186
      %v219 = vunpack.c.l.bf16 %v187
      %v220 = vunpack.c.l.bf16 %v188
      %v221 = vunpack.c.l.bf16 %v189
      %v222 = vunpack.c.l.bf16 %v190
      %v223 = vunpack.c.l.bf16 %v191
      %v224 = vunpack.c.l.bf16 %v192
      %v225 = vunpack.c.l.bf16 %v193
      %v226 = vunpack.c.l.bf16 %v194
      %v227 = vunpack.c.l.bf16 %v195
      %v228 = vunpack.c.l.bf16 %v196
      %v229 = vunpack.c.l.bf16 %v197
      %v230 = vunpack.c.l.bf16 %v198
      %v231 = vunpack.c.l.bf16 %v199
      %v232 = vunpack.c.l.bf16 %v200
      %v233 = vunpack.c.l.bf16 %v201
      %v234 = vunpack.c.l.bf16 %v202
      %v235 = vld [vmem:[%s1] sm:$0x1]
      %v237 = vperm.slane %v235, 0
      %v239 = vmul.f32 %v203, %v237
      %v240 = vmul.f32 %v204, %v237
      %v241 = vmul.f32 %v205, %v237
      %v242 = vmul.f32 %v206, %v237
      %v243 = vmul.f32 %v207, %v237
      %v244 = vmul.f32 %v208, %v237
      %v245 = vmul.f32 %v209, %v237
      %v246 = vmul.f32 %v210, %v237
      %v247 = vmul.f32 %v211, %v237
      %v248 = vmul.f32 %v212, %v237
      %v249 = vmul.f32 %v213, %v237
      %v250 = vmul.f32 %v214, %v237
      %v251 = vmul.f32 %v215, %v237
      %v252 = vmul.f32 %v216, %v237
      %v253 = vmul.f32 %v217, %v237
      %v254 = vmul.f32 %v218, %v237
      %v255 = vmul.f32 %v219, %v237
      %v256 = vmul.f32 %v220, %v237
      %v257 = vmul.f32 %v221, %v237
      %v258 = vmul.f32 %v222, %v237
      %v259 = vmul.f32 %v223, %v237
      %v260 = vmul.f32 %v224, %v237
      %v261 = vmul.f32 %v225, %v237
      %v262 = vmul.f32 %v226, %v237
      %v263 = vmul.f32 %v227, %v237
      %v264 = vmul.f32 %v228, %v237
      %v265 = vmul.f32 %v229, %v237
      %v266 = vmul.f32 %v230, %v237
      %v267 = vmul.f32 %v231, %v237
      %v268 = vmul.f32 %v232, %v237
      %v269 = vmul.f32 %v233, %v237
      %v270 = vmul.f32 %v234, %v237
      %v271 = vld [vmem:[%s2] sm:$0x1]
      %v273 = vperm.slane %v271, 0
      %v275 = vadd.f32 %v239, %v273
      %v276 = vadd.f32 %v240, %v273
      %v277 = vadd.f32 %v241, %v273
      %v278 = vadd.f32 %v242, %v273
      %v279 = vadd.f32 %v243, %v273
      %v280 = vadd.f32 %v244, %v273
      %v281 = vadd.f32 %v245, %v273
      %v282 = vadd.f32 %v246, %v273
      %v283 = vadd.f32 %v247, %v273
      %v284 = vadd.f32 %v248, %v273
      %v285 = vadd.f32 %v249, %v273
      %v286 = vadd.f32 %v250, %v273
      %v287 = vadd.f32 %v251, %v273
      %v288 = vadd.f32 %v252, %v273
      %v289 = vadd.f32 %v253, %v273
      %v290 = vadd.f32 %v254, %v273
      %v291 = vadd.f32 %v255, %v273
      %v292 = vadd.f32 %v256, %v273
      %v293 = vadd.f32 %v257, %v273
      %v294 = vadd.f32 %v258, %v273
      %v295 = vadd.f32 %v259, %v273
      %v296 = vadd.f32 %v260, %v273
      %v297 = vadd.f32 %v261, %v273
      %v298 = vadd.f32 %v262, %v273
      %v299 = vadd.f32 %v263, %v273
      %v300 = vadd.f32 %v264, %v273
      %v301 = vadd.f32 %v265, %v273
      %v302 = vadd.f32 %v266, %v273
      %v303 = vadd.f32 %v267, %v273
      %v304 = vadd.f32 %v268, %v273
      %v305 = vadd.f32 %v269, %v273
      %v306 = vadd.f32 %v270, %v273
      %v307 = vmax.f32 %v275, 0.0
      %v308 = vmax.f32 %v276, 0.0
      %v309 = vmax.f32 %v277, 0.0
      %v310 = vmax.f32 %v278, 0.0
      %v311 = vmax.f32 %v279, 0.0
      %v312 = vmax.f32 %v280, 0.0
      %v313 = vmax.f32 %v281, 0.0
      %v314 = vmax.f32 %v282, 0.0
      %v315 = vmax.f32 %v283, 0.0
      %v316 = vmax.f32 %v284, 0.0
      %v317 = vmax.f32 %v285, 0.0
      %v318 = vmax.f32 %v286, 0.0
      %v319 = vmax.f32 %v287, 0.0
      %v320 = vmax.f32 %v288, 0.0
      %v321 = vmax.f32 %v289, 0.0
      %v322 = vmax.f32 %v290, 0.0
      %v323 = vmax.f32 %v291, 0.0
      %v324 = vmax.f32 %v292, 0.0
      %v325 = vmax.f32 %v293, 0.0
      %v326 = vmax.f32 %v294, 0.0
      %v327 = vmax.f32 %v295, 0.0
      %v328 = vmax.f32 %v296, 0.0
      %v329 = vmax.f32 %v297, 0.0
      %v330 = vmax.f32 %v298, 0.0
      %v331 = vmax.f32 %v299, 0.0
      %v332 = vmax.f32 %v300, 0.0
      %v333 = vmax.f32 %v301, 0.0
      %v334 = vmax.f32 %v302, 0.0
      %v335 = vmax.f32 %v303, 0.0
      %v336 = vmax.f32 %v304, 0.0
      %v337 = vmax.f32 %v305, 0.0
      %v338 = vmax.f32 %v306, 0.0
      %339 = vst [vmem:[%s170] sm:$0xff] %v307
      %340 = vst [vmem:[%s170 + $0x8] sm:$0xff] %v308
      %341 = vst [vmem:[%s170 + $0x10] sm:$0xff] %v309
      %342 = vst [vmem:[%s170 + $0x18] sm:$0xff] %v310
      %343 = vst [vmem:[%s170 + $0x20] sm:$0xff] %v311
      %344 = vst [vmem:[%s170 + $0x28] sm:$0xff] %v312
      %345 = vst [vmem:[%s170 + $0x30] sm:$0xff] %v313
      %346 = vst [vmem:[%s170 + $0x38] sm:$0xff] %v314
      %347 = vst [vmem:[%s170 + $0x40] sm:$0xff] %v315
      %348 = vst [vmem:[%s170 + $0x48] sm:$0xff] %v316
      %349 = vst [vmem:[%s170 + $0x50] sm:$0xff] %v317
      %350 = vst [vmem:[%s170 + $0x58] sm:$0xff] %v318
      %351 = vst [vmem:[%s170 + $0x60] sm:$0xff] %v319
      %352 = vst [vmem:[%s170 + $0x68] sm:$0xff] %v320
      %353 = vst [vmem:[%s170 + $0x70] sm:$0xff] %v321
      %354 = vst [vmem:[%s170 + $0x78] sm:$0xff] %v322
      %355 = vst [vmem:[%s170 + $0x80] sm:$0xff] %v323
      %356 = vst [vmem:[%s170 + $0x88] sm:$0xff] %v324
      %357 = vst [vmem:[%s170 + $0x90] sm:$0xff] %v325
      %358 = vst [vmem:[%s170 + $0x98] sm:$0xff] %v326
      %359 = vst [vmem:[%s170 + $0xa0] sm:$0xff] %v327
      %360 = vst [vmem:[%s170 + $0xa8] sm:$0xff] %v328
      %361 = vst [vmem:[%s170 + $0xb0] sm:$0xff] %v329
      %362 = vst [vmem:[%s170 + $0xb8] sm:$0xff] %v330
      %363 = vst [vmem:[%s170 + $0xc0] sm:$0xff] %v331
      %364 = vst [vmem:[%s170 + $0xc8] sm:$0xff] %v332
      %365 = vst [vmem:[%s170 + $0xd0] sm:$0xff] %v333
      %366 = vst [vmem:[%s170 + $0xd8] sm:$0xff] %v334
      %367 = vst [vmem:[%s170 + $0xe0] sm:$0xff] %v335
      %368 = vst [vmem:[%s170 + $0xe8] sm:$0xff] %v336
      %369 = vst [vmem:[%s170 + $0xf0] sm:$0xff] %v337
      %370 = vst [vmem:[%s170 + $0xf8] sm:$0xff] %v338
      %p371 = scmp.lt.s32.totalorder %s14, 1
      %s372 = scalar_select %p371, %s14, 1
      %s373 = smul.addr %s372, 32
      %s374 = smul.addr %s373, 8
      %s375 = scalar_lea.vmem %s3, %s374
      // Predicated region
      $region33: #{up_forward.5} parent=31 // pred_check
        %p376 = pneg %p100
      $region34: #{up_forward.5} parent=31 // pred_check_branch
        %378 = sbr.rel (%p376) target = $region36
      $region35: #{up_forward.5} parent=31 // pred_region
        _
      $region36: #{up_forward.5} parent=31 // pred_fallthru
        _
    $region32: #{up_forward.5} parent=5 // pred_fallthru
      _
    %p379 = scmp.le.s32.totalorder 2, %s9
    // Predicated region
    $region37: #{up_forward.5} parent=5 // pred_check
      %p380 = pneg %p379
    $region38: #{up_forward.5} parent=5 // pred_check_branch
      %382 = sbr.rel (%p380) target = $region40
    $region39: #{up_forward.5} parent=5 // pred_region
      %s383 = ssub.s32 %s9, 2
      // Predicated region
      $region41: #{up_forward.5} parent=39 // pred_check
        %p384 = pneg %p106
      $region42: #{up_forward.5} parent=39 // pred_check_branch
        %386 = sbr.rel (%p384) target = $region44
      $region43: #{up_forward.5} parent=39 // pred_region
        %p387 = scmp.lt.s32.totalorder %s15, 1
        %s388 = scalar_select %p387, %s15, 1
        %s389 = smul.addr %s388, 32
        %s390 = smul.addr %s389, 8
        %s391 = scalar_lea.vmem %s3, %s390
      $region44: #{up_forward.5} parent=39 // pred_fallthru
        _
    $region40: #{up_forward.5} parent=5 // pred_fallthru
      _
  $region6: #{up_forward.5} parent=0 // loop_footer
    %s13 = sadd.s32 1, %s9
  $region7: #{up_forward.5} parent=0 // loop_footer_branch
    %8 = sbr.rel target = $region3
  $region8: #{up_forward.5} parent=0 // loop_exit
    _

// kernel: up_forward.4
$region0: #{up_forward.4}
  #allocation0 [shape = 'u32[]', space=smem, size = 0x4, offset = 0x4, fixed_abs, tag = 'smem constant byte address 0x4 - core index']
  #allocation1 [shape = 'u32[72,128]{1,0:T(1,128)}', space=vmem, size = 0x9000, scoped, tag = 'internal scratch']
  #allocation2 [shape = 'bf16[18,18,128]{2,1,0:T(8,128)(2,1)}', space=vmem, size = 0x1b000, scoped, tag = 'scratch operand']
  %s0 = inlined_call_operand.vmem [shape: bf16[2,16,16,128], index: 0, kind: input, shape index: {}]
  %s1 = inlined_call_operand.vmem [shape: f32[1,128], index: 1, kind: input, shape index: {}]
  %s2 = inlined_call_operand.vmem [shape: f32[1,128], index: 2, kind: input, shape index: {}]
  %s3 = inlined_call_operand.vmem [shape: bf16[1152,128], index: 3, kind: input, shape index: {}]
  %s4 = inlined_call_operand.vmem [shape: f32[1,128], index: 4, kind: input, shape index: {}]
  %s5 = inlined_call_operand.vmem [shape: bf16[2,16,16,128], index: 5, kind: output, shape index: {0}]
  %s6 = inlined_call_operand.vmem [shape: f32[2,1,128], index: 6, kind: output, shape index: {1}]
  %s7 = inlined_call_operand.vmem [shape: f32[2,1,128], index: 7, kind: output, shape index: {2}]
  %8 = xla_tuple %s5, %s6, %s7
  %s9 = sld [smem:[#allocation0]]
  $region69: #{up_forward.4} parent=0
    _
  %s11 = ssub.s32 1, %s9
  %s12 = scalar_select 0, %s11, %s9
  loop: start=0, step=1, limit=4
  $region2: #{up_forward.4} parent=0 // loop_pre_header
    _
  $region3: #{up_forward.4} parent=0 // loop_header
    %s14 = sphi 0, %s18
    %p15 = scmp.ge.s32.totalorder %s14, 4
    %s24 = sphi 0, %s26
    %s27 = sphi 0, %s24
    %s28 = sphi 0, %s27
    %s44 = sphi 0, %s28
    %s48 = sphi 0, %s48
    %s50 = sphi 0, %s48
    %s51 = sphi 0, %s50
    %s65 = sphi 0, %s51
    %s69 = sphi 0, %s69
    %s71 = sphi 0, %s69
    %s72 = sphi 0, %s71
    %s86 = sphi 0, %s72
    %s90 = sphi 0, %s90
    %s92 = sphi 0, %s90
    %s93 = sphi 0, %s92
    %s107 = sphi 0, %s93
    %s111 = sphi 0, %s111
    %s113 = sphi 0, %s111
    %s114 = sphi 0, %s113
    %s128 = sphi 0, %s114
    %s134 = sphi 0, %s136
    %s137 = sphi 0, %s134
    %s138 = sphi 0, %s137
    %s154 = sphi 0, %s138
    %s160 = sphi 0, %s162
    %s163 = sphi 0, %s160
    %s164 = sphi 0, %s163
    %s180 = sphi 0, %s164
    %s186 = sphi 0, %s188
    %s189 = sphi 0, %s186
    %s190 = sphi 0, %s189
    %s206 = sphi 0, %s190
  $region4: #{up_forward.4} parent=0 // loop_header_branch
    %17 = sbr.rel (%p15) target = $region8
  $region5: #{up_forward.4} parent=0 // loop_body
    %s19 = ssub.s32 %s14, 1
    %s20 = ssub.s32 %s14, 2
    %s21 = sadd.s32 %s14, 1
    %s22 = ssub.s32 %s14, %s21
    %p23 = scmp.eq.s32.totalorder %s22, 0
    %s25 = sadd.s32 %s24, 1
    %s26 = scalar_select %p23, %s24, %s25
    %p29 = pneg %p23
    %p30 = scmp.eq.s32.totalorder %s14, 1
    %p31 = por %p29, %p30
    %p32 = scmp.ne.s32.totalorder %s24, %s27
    %p33 = scmp.eq.s32.totalorder %s14, 0
    %p34 = por %p32, %p33
    %p35 = scmp.ne.s32.totalorder %s24, %s27
    %p36 = scmp.eq.s32.totalorder %s19, 1
    %p37 = por %p35, %p36
    %p38 = scmp.ne.s32.totalorder %s27, %s28
    %p39 = scmp.eq.s32.totalorder %s19, 0
    %p40 = por %p38, %p39
    %p41 = scmp.ne.s32.totalorder %s27, %s28
    %p42 = scmp.eq.s32.totalorder %s20, 1
    %p43 = por %p41, %p42
    %p45 = scmp.ne.s32.totalorder %s28, %s44
    %p46 = scmp.eq.s32.totalorder %s20, 0
    %p47 = por %p45, %p46
    %s49 = sadd.s32 %s48, 1
    %p52 = scmp.eq.s32.totalorder %s14, 1
    %p53 = scmp.ne.s32.totalorder %s48, %s50
    %p54 = scmp.eq.s32.totalorder %s14, 0
    %p55 = por %p53, %p54
    %p56 = scmp.ne.s32.totalorder %s48, %s50
    %p57 = scmp.eq.s32.totalorder %s19, 1
    %p58 = por %p56, %p57
    %p59 = scmp.ne.s32.totalorder %s50, %s51
    %p60 = scmp.eq.s32.totalorder %s19, 0
    %p61 = por %p59, %p60
    %p62 = scmp.ne.s32.totalorder %s50, %s51
    %p63 = scmp.eq.s32.totalorder %s20, 1
    %p64 = por %p62, %p63
    %p66 = scmp.ne.s32.totalorder %s51, %s65
    %p67 = scmp.eq.s32.totalorder %s20, 0
    %p68 = por %p66, %p67
    %s70 = sadd.s32 %s69, 1
    %p73 = scmp.eq.s32.totalorder %s14, 1
    %p74 = scmp.ne.s32.totalorder %s69, %s71
    %p75 = scmp.eq.s32.totalorder %s14, 0
    %p76 = por %p74, %p75
    %p77 = scmp.ne.s32.totalorder %s69, %s71
    %p78 = scmp.eq.s32.totalorder %s19, 1
    %p79 = por %p77, %p78
    %p80 = scmp.ne.s32.totalorder %s71, %s72
    %p81 = scmp.eq.s32.totalorder %s19, 0
    %p82 = por %p80, %p81
    %p83 = scmp.ne.s32.totalorder %s71, %s72
    %p84 = scmp.eq.s32.totalorder %s20, 1
    %p85 = por %p83, %p84
    %p87 = scmp.ne.s32.totalorder %s72, %s86
    %p88 = scmp.eq.s32.totalorder %s20, 0
    %p89 = por %p87, %p88
    %s91 = sadd.s32 %s90, 1
    %p94 = scmp.eq.s32.totalorder %s14, 1
    %p95 = scmp.ne.s32.totalorder %s90, %s92
    %p96 = scmp.eq.s32.totalorder %s14, 0
    %p97 = por %p95, %p96
    %p98 = scmp.ne.s32.totalorder %s90, %s92
    %p99 = scmp.eq.s32.totalorder %s19, 1
    %p100 = por %p98, %p99
    %p101 = scmp.ne.s32.totalorder %s92, %s93
    %p102 = scmp.eq.s32.totalorder %s19, 0
    %p103 = por %p101, %p102
    %p104 = scmp.ne.s32.totalorder %s92, %s93
    %p105 = scmp.eq.s32.totalorder %s20, 1
    %p106 = por %p104, %p105
    %p108 = scmp.ne.s32.totalorder %s93, %s107
    %p109 = scmp.eq.s32.totalorder %s20, 0
    %p110 = por %p108, %p109
    %s112 = sadd.s32 %s111, 1
    %p115 = scmp.eq.s32.totalorder %s14, 1
    %p116 = scmp.ne.s32.totalorder %s111, %s113
    %p117 = scmp.eq.s32.totalorder %s14, 0
    %p118 = por %p116, %p117
    %p119 = scmp.ne.s32.totalorder %s111, %s113
    %p120 = scmp.eq.s32.totalorder %s19, 1
    %p121 = por %p119, %p120
    %p122 = scmp.ne.s32.totalorder %s113, %s114
    %p123 = scmp.eq.s32.totalorder %s19, 0
    %p124 = por %p122, %p123
    %p125 = scmp.ne.s32.totalorder %s113, %s114
    %p126 = scmp.eq.s32.totalorder %s20, 1
    %p127 = por %p125, %p126
    %p129 = scmp.ne.s32.totalorder %s114, %s128
    %p130 = scmp.eq.s32.totalorder %s20, 0
    %p131 = por %p129, %p130
    %s132 = ssub.s32 %s14, %s21
    %p133 = scmp.eq.s32.totalorder %s132, 0
    %s135 = sadd.s32 %s134, 1
    %s136 = scalar_select %p133, %s134, %s135
    %p139 = pneg %p133
    %p140 = scmp.eq.s32.totalorder %s14, 1
    %p141 = por %p139, %p140
    %p142 = scmp.ne.s32.totalorder %s134, %s137
    %p143 = scmp.eq.s32.totalorder %s14, 0
    %p144 = por %p142, %p143
    %p145 = scmp.ne.s32.totalorder %s134, %s137
    %p146 = scmp.eq.s32.totalorder %s19, 1
    %p147 = por %p145, %p146
    %p148 = scmp.ne.s32.totalorder %s137, %s138
    %p149 = scmp.eq.s32.totalorder %s19, 0
    %p150 = por %p148, %p149
    %p151 = scmp.ne.s32.totalorder %s137, %s138
    %p152 = scmp.eq.s32.totalorder %s20, 1
    %p153 = por %p151, %p152
    %p155 = scmp.ne.s32.totalorder %s138, %s154
    %p156 = scmp.eq.s32.totalorder %s20, 0
    %p157 = por %p155, %p156
    %s158 = ssub.s32 %s14, %s21
    %p159 = scmp.eq.s32.totalorder %s158, 0
    %s161 = sadd.s32 %s160, 1
    %s162 = scalar_select %p159, %s160, %s161
    %p165 = pneg %p159
    %p166 = scmp.eq.s32.totalorder %s14, 1
    %p167 = por %p165, %p166
    %p168 = scmp.ne.s32.totalorder %s160, %s163
    %p169 = scmp.eq.s32.totalorder %s14, 0
    %p170 = por %p168, %p169
    %p171 = scmp.ne.s32.totalorder %s160, %s163
    %p172 = scmp.eq.s32.totalorder %s19, 1
    %p173 = por %p171, %p172
    %p174 = scmp.ne.s32.totalorder %s163, %s164
    %p175 = scmp.eq.s32.totalorder %s19, 0
    %p176 = por %p174, %p175
    %p177 = scmp.ne.s32.totalorder %s163, %s164
    %p178 = scmp.eq.s32.totalorder %s20, 1
    %p179 = por %p177, %p178
    %p181 = scmp.ne.s32.totalorder %s164, %s180
    %p182 = scmp.eq.s32.totalorder %s20, 0
    %p183 = por %p181, %p182
    %s184 = ssub.s32 %s14, %s21
    %p185 = scmp.eq.s32.totalorder %s184, 0
    %s187 = sadd.s32 %s186, 1
    %s188 = scalar_select %p185, %s186, %s187
    %p191 = pneg %p185
    %p192 = scmp.eq.s32.totalorder %s14, 1
    %p193 = por %p191, %p192
    %p194 = scmp.ne.s32.totalorder %s186, %s189
    %p195 = scmp.eq.s32.totalorder %s14, 0
    %p196 = por %p194, %p195
    %p197 = scmp.ne.s32.totalorder %s186, %s189
    %p198 = scmp.eq.s32.totalorder %s19, 1
    %p199 = por %p197, %p198
    %p200 = scmp.ne.s32.totalorder %s189, %s190
    %p201 = scmp.eq.s32.totalorder %s19, 0
    %p202 = por %p200, %p201
    %p203 = scmp.ne.s32.totalorder %s189, %s190
    %p204 = scmp.eq.s32.totalorder %s20, 1
    %p205 = por %p203, %p204
    %p207 = scmp.ne.s32.totalorder %s190, %s206
    %p208 = scmp.eq.s32.totalorder %s20, 0
    %p209 = por %p207, %p208
    %p210 = scmp.le.s32.totalorder 1, %s14
    %p211 = scmp.lt.s32.totalorder %s14, 3
    %p212 = pnand %p210, %p211
    %p213 = pneg %p212
    // Predicated region
    $region9: #{up_forward.4} parent=5 // pred_check
      _
    $region10: #{up_forward.4} parent=5 // pred_check_branch
      %215 = sbr.rel (%p212) target = $region12
    $region11: #{up_forward.4} parent=5 // pred_region
      %s216 = ssub.s32 %s14, 1
      // Predicated region
      $region13: #{up_forward.4} parent=11 // pred_check
        %p217 = pneg %p61
      $region14: #{up_forward.4} parent=11 // pred_check_branch
        %219 = sbr.rel (%p217) target = $region16
      $region15: #{up_forward.4} parent=11 // pred_region
        _
      $region16: #{up_forward.4} parent=11 // pred_fallthru
        _
      // Predicated region
      $region17: #{up_forward.4} parent=11 // pred_check
        %p220 = pneg %p82
      $region18: #{up_forward.4} parent=11 // pred_check_branch
        %222 = sbr.rel (%p220) target = $region20
      $region19: #{up_forward.4} parent=11 // pred_region
        _
      $region20: #{up_forward.4} parent=11 // pred_fallthru
        _
      // Predicated region
      $region21: #{up_forward.4} parent=11 // pred_check
        %p223 = pneg %p103
      $region22: #{up_forward.4} parent=11 // pred_check_branch
        %225 = sbr.rel (%p223) target = $region24
      $region23: #{up_forward.4} parent=11 // pred_region
        _
      $region24: #{up_forward.4} parent=11 // pred_fallthru
        _
      // Predicated region
      $region25: #{up_forward.4} parent=11 // pred_check
        %p226 = pneg %p124
      $region26: #{up_forward.4} parent=11 // pred_check_branch
        %228 = sbr.rel (%p226) target = $region28
      $region27: #{up_forward.4} parent=11 // pred_region
        _
      $region28: #{up_forward.4} parent=11 // pred_fallthru
        _
    $region12: #{up_forward.4} parent=5 // pred_fallthru
      _
    %p229 = scmp.lt.s32.totalorder %s14, 2
    // Predicated region
    $region29: #{up_forward.4} parent=5 // pred_check
      %p230 = pneg %p229
    $region30: #{up_forward.4} parent=5 // pred_check_branch
      %232 = sbr.rel (%p230) target = $region32
    $region31: #{up_forward.4} parent=5 // pred_region
      // Predicated region
      $region33: #{up_forward.4} parent=31 // pred_check
        %p233 = pneg %p34
      $region34: #{up_forward.4} parent=31 // pred_check_branch
        %235 = sbr.rel (%p233) target = $region36
      $region35: #{up_forward.4} parent=31 // pred_region
        %p236 = scmp.lt.s32.totalorder %s14, 1
        %s237 = scalar_select %p236, %s14, 1
        %s238 = smul.addr %s237, 32
        %s239 = smul.addr %s238, 4
        %s240 = scalar_lea.vmem %s0, %s239
      $region36: #{up_forward.4} parent=31 // pred_fallthru
        _
    $region32: #{up_forward.4} parent=5 // pred_fallthru
      _
    %p241 = scmp.le.s32.totalorder 1, %s14
    %p242 = scmp.lt.s32.totalorder %s14, 3
    %p243 = pnand %p241, %p242
    %p244 = pneg %p243
    // Predicated region
    $region37: #{up_forward.4} parent=5 // pred_check
      _
    $region38: #{up_forward.4} parent=5 // pred_check_branch
      %246 = sbr.rel (%p243) target = $region40
    $region39: #{up_forward.4} parent=5 // pred_region
      %s247 = ssub.s32 %s14, 1
      %p248 = scmp.lt.s32.totalorder %s19, 1
      %s249 = scalar_select %p248, %s19, 1
      %s250 = smul.addr %s249, 32
      %s251 = smul.addr %s250, 4
      %s252 = scalar_lea.vmem %s0, %s251
      %p253 = pneg %p40
      %p254 = pneg %p37
      %p255 = pneg %p61
      %p256 = pneg %p58
      %p257 = pneg %p82
      %p258 = pneg %p79
      %p259 = pneg %p103
      %p260 = pneg %p100
      %p261 = pneg %p124
      %p262 = pneg %p121
      %p263 = pneg %p150
      %p264 = pneg %p147
      %p265 = scmp.lt.s32.totalorder %s19, 1
      %s266 = scalar_select %p265, %s19, 1
      %s267 = smul.addr %s266, 32
      %s268 = smul.addr %s267, 4
      %s269 = scalar_lea.vmem %s5, %s268
      %p270 = pneg %p176
      %p271 = pneg %p173
      %p272 = scmp.lt.s32.totalorder %s19, 1
      %s273 = scalar_select %p272, %s19, 1
      %s274 = scalar_lea.vmem %s6, %s273
      %p275 = pneg %p202
      %p276 = pneg %p199
      %p277 = scmp.lt.s32.totalorder %s19, 1
      %s278 = scalar_select %p277, %s19, 1
      %s279 = scalar_lea.vmem %s7, %s278
      %p280 = scmp.lt.s32.totalorder %s19, 1
      %s281 = scalar_select %p280, %s19, 1
      %s282 = smul.addr %s281, 32
      %s283 = smul.addr %s282, 4
      %s284 = scalar_lea.vmem %s0, %s283
      %p285 = scmp.lt.s32.totalorder %s19, 1
      %s286 = scalar_select %p285, %s19, 1
      %s287 = smul.addr %s286, 32
      %s288 = smul.addr %s287, 4
      %s289 = scalar_lea.vmem %s5, %s288
      %p290 = scmp.lt.s32.totalorder %s19, 1
      %s291 = scalar_select %p290, %s19, 1
      %s292 = scalar_lea.vmem %s6, %s291
      %p293 = scmp.lt.s32.totalorder %s19, 1
      %s294 = scalar_select %p293, %s19, 1
      %s295 = scalar_lea.vmem %s7, %s294
      %297 = vst [vmem:[#allocation2] sm:$0xf] 0
      %298 = vst [vmem:[#allocation2 + $0x4] sm:$0xf] 0
      %299 = vst [vmem:[#allocation2 + $0x8] sm:$0x1] 0
      %s300 = scalar_lea.vmem [#allocation2], 204
      %301 = vst [vmem:[%s300] sm:$0xf] 0
      %302 = vst [vmem:[%s300 + $0x4] sm:$0xf] 0
      %303 = vst [vmem:[%s300 + $0x8] sm:$0x1] 0
      %vm304 = vcmask 1040384
      %vm305 = vsmask.f32 256
      %vm306 = vmand %vm304, %vm305
      %v307 = vld [vmem:[#allocation2] sm:$0x1]
      %v308 = vsel %vm306, 0, %v307
      %309 = vst [vmem:[#allocation2] sm:$0x1] %v308
      %v310 = vld [vmem:[#allocation2 + $0xc] sm:$0x1]
      %v311 = vsel %vm306, 0, %v310
      %312 = vst [vmem:[#allocation2 + $0xc] sm:$0x1] %v311
      %v313 = vld [vmem:[#allocation2 + $0x18] sm:$0x1]
      %v314 = vsel %vm306, 0, %v313
      %315 = vst [vmem:[#allocation2 + $0x18] sm:$0x1] %v314
      %v316 = vld [vmem:[#allocation2 + $0x24] sm:$0x1]
      %v317 = vsel %vm306, 0, %v316
      %318 = vst [vmem:[#allocation2 + $0x24] sm:$0x1] %v317
      %v319 = vld [vmem:[#allocation2 + $0x30] sm:$0x1]
      %v320 = vsel %vm306, 0, %v319
      %321 = vst [vmem:[#allocation2 + $0x30] sm:$0x1] %v320
      %v322 = vld [vmem:[#allocation2 + $0x3c] sm:$0x1]
      %v323 = vsel %vm306, 0, %v322
      %324 = vst [vmem:[#allocation2 + $0x3c] sm:$0x1] %v323
      %v325 = vld [vmem:[#allocation2 + $0x48] sm:$0x1]
      %v326 = vsel %vm306, 0, %v325
      %327 = vst [vmem:[#allocation2 + $0x48] sm:$0x1] %v326
      %v328 = vld [vmem:[#allocation2 + $0x54] sm:$0x1]
      %v329 = vsel %vm306, 0, %v328
      %330 = vst [vmem:[#allocation2 + $0x54] sm:$0x1] %v329
      %v331 = vld [vmem:[#allocation2 + $0x60] sm:$0x1]
      %v332 = vsel %vm306, 0, %v331
      %333 = vst [vmem:[#allocation2 + $0x60] sm:$0x1] %v332
      %v334 = vld [vmem:[#allocation2 + $0x6c] sm:$0x1]
      %v335 = vsel %vm306, 0, %v334
      %336 = vst [vmem:[#allocation2 + $0x6c] sm:$0x1] %v335
      %v337 = vld [vmem:[#allocation2 + $0x78] sm:$0x1]
      %v338 = vsel %vm306, 0, %v337
      %339 = vst [vmem:[#allocation2 + $0x78] sm:$0x1] %v338
      %v340 = vld [vmem:[#allocation2 + $0x84] sm:$0x1]
      %v341 = vsel %vm306, 0, %v340
      %342 = vst [vmem:[#allocation2 + $0x84] sm:$0x1] %v341
      %v343 = vld [vmem:[#allocation2 + $0x90] sm:$0x1]
      %v344 = vsel %vm306, 0, %v343
      %345 = vst [vmem:[#allocation2 + $0x90] sm:$0x1] %v344
      %v346 = vld [vmem:[#allocation2 + $0x9c] sm:$0x1]
      %v347 = vsel %vm306, 0, %v346
      %348 = vst [vmem:[#allocation2 + $0x9c] sm:$0x1] %v347
      %v349 = vld [vmem:[#allocation2 + $0xa8] sm:$0x1]
      %v350 = vsel %vm306, 0, %v349
      %351 = vst [vmem:[#allocation2 + $0xa8] sm:$0x1] %v350
      %v352 = vld [vmem:[#allocation2 + $0xb4] sm:$0x1]
      %v353 = vsel %vm306, 0, %v352
      %354 = vst [vmem:[#allocation2 + $0xb4] sm:$0x1] %v353
      %v355 = vld [vmem:[#allocation2 + $0xc0] sm:$0x1]
      %v356 = vsel %vm306, 0, %v355
      %357 = vst [vmem:[#allocation2 + $0xc0] sm:$0x1] %v356
      %v358 = vld [vmem:[#allocation2 + $0xcc] sm:$0x1]
      %v359 = vsel %vm306, 0, %v358
      %360 = vst [vmem:[#allocation2 + $0xcc] sm:$0x1] %v359
      %vm361 = vsmask.f32 7938
      %vm362 = vmand %vm304, %vm361
      %v363 = vld [vmem:[#allocation2 + $0x8] sm:$0x1]
      %v364 = vsel %vm362, 0, %v363
      %365 = vst [vmem:[#allocation2 + $0x8] sm:$0x1] %v364
      %v366 = vld [vmem:[#allocation2 + $0x14] sm:$0x1]
      %v367 = vsel %vm362, 0, %v366
      %368 = vst [vmem:[#allocation2 + $0x14] sm:$0x1] %v367
      %v369 = vld [vmem:[#allocation2 + $0x20] sm:$0x1]
      %v370 = vsel %vm362, 0, %v369
      %371 = vst [vmem:[#allocation2 + $0x20] sm:$0x1] %v370
      %v372 = vld [vmem:[#allocation2 + $0x2c] sm:$0x1]
      %v373 = vsel %vm362, 0, %v372
      %374 = vst [vmem:[#allocation2 + $0x2c] sm:$0x1] %v373
      %v375 = vld [vmem:[#allocation2 + $0x38] sm:$0x1]
      %v376 = vsel %vm362, 0, %v375
      %377 = vst [vmem:[#allocation2 + $0x38] sm:$0x1] %v376
      %v378 = vld [vmem:[#allocation2 + $0x44] sm:$0x1]
      %v379 = vsel %vm362, 0, %v378
      %380 = vst [vmem:[#allocation2 + $0x44] sm:$0x1] %v379
      %v381 = vld [vmem:[#allocation2 + $0x50] sm:$0x1]
      %v382 = vsel %vm362, 0, %v381
      %383 = vst [vmem:[#allocation2 + $0x50] sm:$0x1] %v382
      %v384 = vld [vmem:[#allocation2 + $0x5c] sm:$0x1]
      %v385 = vsel %vm362, 0, %v384
      %386 = vst [vmem:[#allocation2 + $0x5c] sm:$0x1] %v385
      %v387 = vld [vmem:[#allocation2 + $0x68] sm:$0x1]
      %v388 = vsel %vm362, 0, %v387
      %389 = vst [vmem:[#allocation2 + $0x68] sm:$0x1] %v388
      %v390 = vld [vmem:[#allocation2 + $0x74] sm:$0x1]
      %v391 = vsel %vm362, 0, %v390
      %392 = vst [vmem:[#allocation2 + $0x74] sm:$0x1] %v391
      %v393 = vld [vmem:[#allocation2 + $0x80] sm:$0x1]
      %v394 = vsel %vm362, 0, %v393
      %395 = vst [vmem:[#allocation2 + $0x80] sm:$0x1] %v394
      %v396 = vld [vmem:[#allocation2 + $0x8c] sm:$0x1]
      %v397 = vsel %vm362, 0, %v396
      %398 = vst [vmem:[#allocation2 + $0x8c] sm:$0x1] %v397
      %v399 = vld [vmem:[#allocation2 + $0x98] sm:$0x1]
      %v400 = vsel %vm362, 0, %v399
      %401 = vst [vmem:[#allocation2 + $0x98] sm:$0x1] %v400
      %v402 = vld [vmem:[#allocation2 + $0xa4] sm:$0x1]
      %v403 = vsel %vm362, 0, %v402
      %404 = vst [vmem:[#allocation2 + $0xa4] sm:$0x1] %v403
      %v405 = vld [vmem:[#allocation2 + $0xb0] sm:$0x1]
      %v406 = vsel %vm362, 0, %v405
      %407 = vst [vmem:[#allocation2 + $0xb0] sm:$0x1] %v406
      %v408 = vld [vmem:[#allocation2 + $0xbc] sm:$0x1]
      %v409 = vsel %vm362, 0, %v408
      %410 = vst [vmem:[#allocation2 + $0xbc] sm:$0x1] %v409
      %v411 = vld [vmem:[#allocation2 + $0xc8] sm:$0x1]
      %v412 = vsel %vm362, 0, %v411
      %413 = vst [vmem:[#allocation2 + $0xc8] sm:$0x1] %v412
      %v414 = vld [vmem:[#allocation2 + $0xd4] sm:$0x1]
      %v415 = vsel %vm362, 0, %v414
      %416 = vst [vmem:[#allocation2 + $0xd4] sm:$0x1] %v415
      %v417 = vld [vmem:[%s284] sm:$0xf]
      %v418 = vld [vmem:[%s284 + $0x4] sm:$0xf]
      %v419 = vld [vmem:[%s284 + $0x8] sm:$0xf]
      %v420 = vld [vmem:[%s284 + $0xc] sm:$0xf]
      %v421 = vld [vmem:[%s284 + $0x10] sm:$0xf]
      %v422 = vld [vmem:[%s284 + $0x14] sm:$0xf]
      %v423 = vld [vmem:[%s284 + $0x18] sm:$0xf]
      %v424 = vld [vmem:[%s284 + $0x1c] sm:$0xf]
      %v425 = vld [vmem:[%s284 + $0x20] sm:$0xf]
      %v426 = vld [vmem:[%s284 + $0x24] sm:$0xf]
      %v427 = vld [vmem:[%s284 + $0x28] sm:$0xf]
      %v428 = vld [vmem:[%s284 + $0x2c] sm:$0xf]
      %v429 = vld [vmem:[%s284 + $0x30] sm:$0xf]
      %v430 = vld [vmem:[%s284 + $0x34] sm:$0xf]
      %v431 = vld [vmem:[%s284 + $0x38] sm:$0xf]
      %v432 = vld [vmem:[%s284 + $0x3c] sm:$0xf]
      %v433 = vld [vmem:[%s284 + $0x40] sm:$0xf]
      %v434 = vld [vmem:[%s284 + $0x44] sm:$0xf]
      %v435 = vld [vmem:[%s284 + $0x48] sm:$0xf]
      %v436 = vld [vmem:[%s284 + $0x4c] sm:$0xf]
      %v437 = vld [vmem:[%s284 + $0x50] sm:$0xf]
      %v438 = vld [vmem:[%s284 + $0x54] sm:$0xf]
      %v439 = vld [vmem:[%s284 + $0x58] sm:$0xf]
      %v440 = vld [vmem:[%s284 + $0x5c] sm:$0xf]
      %v441 = vld [vmem:[%s284 + $0x60] sm:$0xf]
      %v442 = vld [vmem:[%s284 + $0x64] sm:$0xf]
      %v443 = vld [vmem:[%s284 + $0x68] sm:$0xf]
      %v444 = vld [vmem:[%s284 + $0x6c] sm:$0xf]
      %v445 = vld [vmem:[%s284 + $0x70] sm:$0xf]
      %v446 = vld [vmem:[%s284 + $0x74] sm:$0xf]
      %v447 = vld [vmem:[%s284 + $0x78] sm:$0xf]
      %v448 = vld [vmem:[%s284 + $0x7c] sm:$0xf]
      %v449 = vunpack.c.l.bf16 %v417
      %v450 = vunpack.c.l.bf16 %v418
      %v451 = vunpack.c.l.bf16 %v419
      %v452 = vunpack.c.l.bf16 %v420
      %v453 = vunpack.c.l.bf16 %v421
      %v454 = vunpack.c.l.bf16 %v422
      %v455 = vunpack.c.l.bf16 %v423
      %v456 = vunpack.c.l.bf16 %v424
      %v457 = vunpack.c.l.bf16 %v425
      %v458 = vunpack.c.l.bf16 %v426
      %v459 = vunpack.c.l.bf16 %v427
      %v460 = vunpack.c.l.bf16 %v428
      %v461 = vunpack.c.l.bf16 %v429
      %v462 = vunpack.c.l.bf16 %v430
      %v463 = vunpack.c.l.bf16 %v431
      %v464 = vunpack.c.l.bf16 %v432
      %v465 = vunpack.c.l.bf16 %v433
      %v466 = vunpack.c.l.bf16 %v434
      %v467 = vunpack.c.l.bf16 %v435
      %v468 = vunpack.c.l.bf16 %v436
      %v469 = vunpack.c.l.bf16 %v437
      %v470 = vunpack.c.l.bf16 %v438
      %v471 = vunpack.c.l.bf16 %v439
      %v472 = vunpack.c.l.bf16 %v440
      %v473 = vunpack.c.l.bf16 %v441
      %v474 = vunpack.c.l.bf16 %v442
      %v475 = vunpack.c.l.bf16 %v443
      %v476 = vunpack.c.l.bf16 %v444
      %v477 = vunpack.c.l.bf16 %v445
      %v478 = vunpack.c.l.bf16 %v446
      %v479 = vunpack.c.l.bf16 %v447
      %v480 = vunpack.c.l.bf16 %v448
      %v481 = vld [vmem:[%s1] sm:$0x1]
      %v483 = vperm.slane %v481, 0
      %v485 = vmul.f32 %v449, %v483
      %v486 = vmul.f32 %v450, %v483
      %v487 = vmul.f32 %v451, %v483
      %v488 = vmul.f32 %v452, %v483
      %v489 = vmul.f32 %v453, %v483
      %v490 = vmul.f32 %v454, %v483
      %v491 = vmul.f32 %v455, %v483
      %v492 = vmul.f32 %v456, %v483
      %v493 = vmul.f32 %v457, %v483
      %v494 = vmul.f32 %v458, %v483
      %v495 = vmul.f32 %v459, %v483
      %v496 = vmul.f32 %v460, %v483
      %v497 = vmul.f32 %v461, %v483
      %v498 = vmul.f32 %v462, %v483
      %v499 = vmul.f32 %v463, %v483
      %v500 = vmul.f32 %v464, %v483
      %v501 = vmul.f32 %v465, %v483
      %v502 = vmul.f32 %v466, %v483
      %v503 = vmul.f32 %v467, %v483
      %v504 = vmul.f32 %v468, %v483
      %v505 = vmul.f32 %v469, %v483
      %v506 = vmul.f32 %v470, %v483
      %v507 = vmul.f32 %v471, %v483
      %v508 = vmul.f32 %v472, %v483
      %v509 = vmul.f32 %v473, %v483
      %v510 = vmul.f32 %v474, %v483
      %v511 = vmul.f32 %v475, %v483
      %v512 = vmul.f32 %v476, %v483
      %v513 = vmul.f32 %v477, %v483
      %v514 = vmul.f32 %v478, %v483
      %v515 = vmul.f32 %v479, %v483
      %v516 = vmul.f32 %v480, %v483
      %v517 = vld [vmem:[%s2] sm:$0x1]
      %v519 = vperm.slane %v517, 0
      %v521 = vadd.f32 %v485, %v519
      %v522 = vadd.f32 %v486, %v519
      %v523 = vadd.f32 %v487, %v519
      %v524 = vadd.f32 %v488, %v519
      %v525 = vadd.f32 %v489, %v519
      %v526 = vadd.f32 %v490, %v519
      %v527 = vadd.f32 %v491, %v519
      %v528 = vadd.f32 %v492, %v519
      %v529 = vadd.f32 %v493, %v519
      %v530 = vadd.f32 %v494, %v519
      %v531 = vadd.f32 %v495, %v519
      %v532 = vadd.f32 %v496, %v519
      %v533 = vadd.f32 %v497, %v519
      %v534 = vadd.f32 %v498, %v519
      %v535 = vadd.f32 %v499, %v519
      %v536 = vadd.f32 %v500, %v519
      %v537 = vadd.f32 %v501, %v519
      %v538 = vadd.f32 %v502, %v519
      %v539 = vadd.f32 %v503, %v519
      %v540 = vadd.f32 %v504, %v519
      %v541 = vadd.f32 %v505, %v519
      %v542 = vadd.f32 %v506, %v519
      %v543 = vadd.f32 %v507, %v519
      %v544 = vadd.f32 %v508, %v519
      %v545 = vadd.f32 %v509, %v519
      %v546 = vadd.f32 %v510, %v519
      %v547 = vadd.f32 %v511, %v519
      %v548 = vadd.f32 %v512, %v519
      %v549 = vadd.f32 %v513, %v519
      %v550 = vadd.f32 %v514, %v519
      %v551 = vadd.f32 %v515, %v519
      %v552 = vadd.f32 %v516, %v519
      %v553 = vmax.f32 %v521, 0.0
      %v554 = vmax.f32 %v522, 0.0
      %v555 = vmax.f32 %v523, 0.0
      %v556 = vmax.f32 %v524, 0.0
      %v557 = vmax.f32 %v525, 0.0
      %v558 = vmax.f32 %v526, 0.0
      %v559 = vmax.f32 %v527, 0.0
      %v560 = vmax.f32 %v528, 0.0
      %v561 = vmax.f32 %v529, 0.0
      %v562 = vmax.f32 %v530, 0.0
      %v563 = vmax.f32 %v531, 0.0
      %v564 = vmax.f32 %v532, 0.0
      %v565 = vmax.f32 %v533, 0.0
      %v566 = vmax.f32 %v534, 0.0
      %v567 = vmax.f32 %v535, 0.0
      %v568 = vmax.f32 %v536, 0.0
      %v569 = vmax.f32 %v537, 0.0
      %v570 = vmax.f32 %v538, 0.0
      %v571 = vmax.f32 %v539, 0.0
      %v572 = vmax.f32 %v540, 0.0
      %v573 = vmax.f32 %v541, 0.0
      %v574 = vmax.f32 %v542, 0.0
      %v575 = vmax.f32 %v543, 0.0
      %v576 = vmax.f32 %v544, 0.0
      %v577 = vmax.f32 %v545, 0.0
      %v578 = vmax.f32 %v546, 0.0
      %v579 = vmax.f32 %v547, 0.0
      %v580 = vmax.f32 %v548, 0.0
      %v581 = vmax.f32 %v549, 0.0
      %v582 = vmax.f32 %v550, 0.0
      %v583 = vmax.f32 %v551, 0.0
      %v584 = vmax.f32 %v552, 0.0
      %v585 = vpack.c.bf16 %v553, %v553
      %v586 = vpack.c.bf16 %v554, %v554
      %v587 = vpack.c.bf16 %v555, %v555
      %v588 = vpack.c.bf16 %v556, %v556
      %v589 = vpack.c.bf16 %v557, %v557
      %v590 = vpack.c.bf16 %v558, %v558
      %v591 = vpack.c.bf16 %v559, %v559
      %v592 = vpack.c.bf16 %v560, %v560
      %v593 = vpack.c.bf16 %v561, %v561
      %v594 = vpack.c.bf16 %v562, %v562
      %v595 = vpack.c.bf16 %v563, %v563
      %v596 = vpack.c.bf16 %v564, %v564
      %v597 = vpack.c.bf16 %v565, %v565
      %v598 = vpack.c.bf16 %v566, %v566
      %v599 = vpack.c.bf16 %v567, %v567
      %v600 = vpack.c.bf16 %v568, %v568
      %v601 = vpack.c.bf16 %v569, %v569
      %v602 = vpack.c.bf16 %v570, %v570
      %v603 = vpack.c.bf16 %v571, %v571
      %v604 = vpack.c.bf16 %v572, %v572
      %v605 = vpack.c.bf16 %v573, %v573
      %v606 = vpack.c.bf16 %v574, %v574
      %v607 = vpack.c.bf16 %v575, %v575
      %v608 = vpack.c.bf16 %v576, %v576
      %v609 = vpack.c.bf16 %v577, %v577
      %v610 = vpack.c.bf16 %v578, %v578
      %v611 = vpack.c.bf16 %v579, %v579
      %v612 = vpack.c.bf16 %v580, %v580
      %v613 = vpack.c.bf16 %v581, %v581
      %v614 = vpack.c.bf16 %v582, %v582
      %v615 = vpack.c.bf16 %v583, %v583
      %v616 = vpack.c.bf16 %v584, %v584
      %vm617 = vsmask.f32 4368
      %vm618 = vmor %vm305, %vm617
      %v620 = vshrl.u32 %v585, 16
      %v622 = vrot.slane %v620, 7
      %v623 = vshll.u32 %v585, 16
      %v625 = vor.u32 %v622, %v623
      %v626 = vrot.slane %v622, 4
      %v628 = vshrl.u32 %v586, 16
      %v630 = vrot.slane %v628, 7
      %v631 = vshll.u32 %v586, 16
      %v633 = vor.u32 %v630, %v631
      %v634 = vsel %vm618, %v626, %v633
      %v635 = vrot.slane %v630, 4
      %v637 = vshrl.u32 %v587, 16
      %v639 = vrot.slane %v637, 7
      %v640 = vshll.u32 %v587, 16
      %v642 = vor.u32 %v639, %v640
      %v643 = vrot.slane %v639, 4
      %v645 = vshrl.u32 %v588, 16
      %v647 = vrot.slane %v645, 7
      %v648 = vshll.u32 %v588, 16
      %v650 = vor.u32 %v647, %v648
      %v651 = vsel %vm618, %v643, %v650
      %v652 = vrot.slane %v647, 4
      %v654 = vshrl.u32 %v589, 16
      %v656 = vrot.slane %v654, 7
      %v657 = vshll.u32 %v589, 16
      %v659 = vor.u32 %v656, %v657
      %v660 = vrot.slane %v656, 4
      %v662 = vshrl.u32 %v590, 16
      %v664 = vrot.slane %v662, 7
      %v665 = vshll.u32 %v590, 16
      %v667 = vor.u32 %v664, %v665
      %v668 = vsel %vm618, %v660, %v667
      %v669 = vrot.slane %v664, 4
      %v671 = vshrl.u32 %v591, 16
      %v673 = vrot.slane %v671, 7
      %v674 = vshll.u32 %v591, 16
      %v676 = vor.u32 %v673, %v674
      %v677 = vrot.slane %v673, 4
      %v679 = vshrl.u32 %v592, 16
      %v681 = vrot.slane %v679, 7
      %v682 = vshll.u32 %v592, 16
      %v684 = vor.u32 %v681, %v682
      %v685 = vsel %vm618, %v677, %v684
      %v686 = vrot.slane %v681, 4
      %v688 = vshrl.u32 %v593, 16
      %v690 = vrot.slane %v688, 7
      %v691 = vshll.u32 %v593, 16
      %v693 = vor.u32 %v690, %v691
      %v694 = vrot.slane %v690, 4
      %v696 = vshrl.u32 %v594, 16
      %v698 = vrot.slane %v696, 7
      %v699 = vshll.u32 %v594, 16
      %v701 = vor.u32 %v698, %v699
      %v702 = vsel %vm618, %v694, %v701
      %v703 = vrot.slane %v698, 4
      %v705 = vshrl.u32 %v595, 16
      %v707 = vrot.slane %v705, 7
      %v708 = vshll.u32 %v595, 16
      %v710 = vor.u32 %v707, %v708
      %v711 = vrot.slane %v707, 4
      %v713 = vshrl.u32 %v596, 16
      %v715 = vrot.slane %v713, 7
      %v716 = vshll.u32 %v596, 16
      %v718 = vor.u32 %v715, %v716
      %v719 = vsel %vm618, %v711, %v718
      %v720 = vrot.slane %v715, 4
      %v722 = vshrl.u32 %v597, 16
      %v724 = vrot.slane %v722, 7
      %v725 = vshll.u32 %v597, 16
      %v727 = vor.u32 %v724, %v725
      %v728 = vrot.slane %v724, 4
      %v730 = vshrl.u32 %v598, 16
      %v732 = vrot.slane %v730, 7
      %v733 = vshll.u32 %v598, 16
      %v735 = vor.u32 %v732, %v733
      %v736 = vsel %vm618, %v728, %v735
      %v737 = vrot.slane %v732, 4
      %v739 = vshrl.u32 %v599, 16
      %v741 = vrot.slane %v739, 7
      %v742 = vshll.u32 %v599, 16
      %v744 = vor.u32 %v741, %v742
      %v745 = vrot.slane %v741, 4
      %v747 = vshrl.u32 %v600, 16
      %v749 = vrot.slane %v747, 7
      %v750 = vshll.u32 %v600, 16
      %v752 = vor.u32 %v749, %v750
      %v753 = vsel %vm618, %v745, %v752
      %v754 = vrot.slane %v749, 4
      %v756 = vshrl.u32 %v601, 16
      %v758 = vrot.slane %v756, 7
      %v759 = vshll.u32 %v601, 16
      %v761 = vor.u32 %v758, %v759
      %v762 = vrot.slane %v758, 4
      %v764 = vshrl.u32 %v602, 16
      %v766 = vrot.slane %v764, 7
      %v767 = vshll.u32 %v602, 16
      %v769 = vor.u32 %v766, %v767
      %v770 = vsel %vm618, %v762, %v769
      %v771 = vrot.slane %v766, 4
      %v773 = vshrl.u32 %v603, 16
      %v775 = vrot.slane %v773, 7
      %v776 = vshll.u32 %v603, 16
      %v778 = vor.u32 %v775, %v776
      %v779 = vrot.slane %v775, 4
      %v781 = vshrl.u32 %v604, 16
      %v783 = vrot.slane %v781, 7
      %v784 = vshll.u32 %v604, 16
      %v786 = vor.u32 %v783, %v784
      %v787 = vsel %vm618, %v779, %v786
      %v788 = vrot.slane %v783, 4
      %v790 = vshrl.u32 %v605, 16
      %v792 = vrot.slane %v790, 7
      %v793 = vshll.u32 %v605, 16
      %v795 = vor.u32 %v792, %v793
      %v796 = vrot.slane %v792, 4
      %v798 = vshrl.u32 %v606, 16
      %v800 = vrot.slane %v798, 7
      %v801 = vshll.u32 %v606, 16
      %v803 = vor.u32 %v800, %v801
      %v804 = vsel %vm618, %v796, %v803
      %v805 = vrot.slane %v800, 4
      %v807 = vshrl.u32 %v607, 16
      %v809 = vrot.slane %v807, 7
      %v810 = vshll.u32 %v607, 16
      %v812 = vor.u32 %v809, %v810
      %v813 = vrot.slane %v809, 4
      %v815 = vshrl.u32 %v608, 16
      %v817 = vrot.slane %v815, 7
      %v818 = vshll.u32 %v608, 16
      %v820 = vor.u32 %v817, %v818
      %v821 = vsel %vm618, %v813, %v820
      %v822 = vrot.slane %v817, 4
      %v824 = vshrl.u32 %v609, 16
      %v826 = vrot.slane %v824, 7
      %v827 = vshll.u32 %v609, 16
      %v829 = vor.u32 %v826, %v827
      %v830 = vrot.slane %v826, 4
      %v832 = vshrl.u32 %v610, 16
      %v834 = vrot.slane %v832, 7
      %v835 = vshll.u32 %v610, 16
      %v837 = vor.u32 %v834, %v835
      %v838 = vsel %vm618, %v830, %v837
      %v839 = vrot.slane %v834, 4
      %v841 = vshrl.u32 %v611, 16
      %v843 = vrot.slane %v841, 7
      %v844 = vshll.u32 %v611, 16
      %v846 = vor.u32 %v843, %v844
      %v847 = vrot.slane %v843, 4
      %v849 = vshrl.u32 %v612, 16
      %v851 = vrot.slane %v849, 7
      %v852 = vshll.u32 %v612, 16
      %v854 = vor.u32 %v851, %v852
      %v855 = vsel %vm618, %v847, %v854
      %v856 = vrot.slane %v851, 4
      %v858 = vshrl.u32 %v613, 16
      %v860 = vrot.slane %v858, 7
      %v861 = vshll.u32 %v613, 16
      %v863 = vor.u32 %v860, %v861
      %v864 = vrot.slane %v860, 4
      %v866 = vshrl.u32 %v614, 16
      %v868 = vrot.slane %v866, 7
      %v869 = vshll.u32 %v614, 16
      %v871 = vor.u32 %v868, %v869
      %v872 = vsel %vm618, %v864, %v871
      %v873 = vrot.slane %v868, 4
      %v875 = vshrl.u32 %v615, 16
      %v877 = vrot.slane %v875, 7
      %v878 = vshll.u32 %v615, 16
      %v880 = vor.u32 %v877, %v878
      %v881 = vrot.slane %v877, 4
      %v883 = vshrl.u32 %v616, 16
      %v885 = vrot.slane %v883, 7
      %v886 = vshll.u32 %v616, 16
      %v888 = vor.u32 %v885, %v886
      %v889 = vsel %vm618, %v881, %v888
      %v890 = vrot.slane %v885, 4
      %s939 = scalar_lea.vmem [#allocation2], 12
      %vm940 = vcmask 1043456
      %vm941 = vmand %vm940, %vm361
      %v942 = vld [vmem:[%s939] sm:$0xf]
      %v943 = vsel %vm941, %v625, %v942
      %944 = vst [vmem:[%s939] sm:$0xf] %v943
      %945 = vst [vmem:[%s939 + $0x4] sm:$0xf] %v634
      %v946 = vld [vmem:[%s939 + $0x8] sm:$0x1]
      %v947 = vsel %vm306, %v635, %v946
      %948 = vst [vmem:[%s939 + $0x8] sm:$0x1] %v947
      %v949 = vld [vmem:[%s939 + $0xc] sm:$0xf]
      %v950 = vsel %vm941, %v642, %v949
      %951 = vst [vmem:[%s939 + $0xc] sm:$0xf] %v950
      %952 = vst [vmem:[%s939 + $0x10] sm:$0xf] %v651
      %v953 = vld [vmem:[%s939 + $0x14] sm:$0x1]
      %v954 = vsel %vm306, %v652, %v953
      %955 = vst [vmem:[%s939 + $0x14] sm:$0x1] %v954
      %v956 = vld [vmem:[%s939 + $0x18] sm:$0xf]
      %v957 = vsel %vm941, %v659, %v956
      %958 = vst [vmem:[%s939 + $0x18] sm:$0xf] %v957
      %959 = vst [vmem:[%s939 + $0x1c] sm:$0xf] %v668
      %v960 = vld [vmem:[%s939 + $0x20] sm:$0x1]
      %v961 = vsel %vm306, %v669, %v960
      %962 = vst [vmem:[%s939 + $0x20] sm:$0x1] %v961
      %v963 = vld [vmem:[%s939 + $0x24] sm:$0xf]
      %v964 = vsel %vm941, %v676, %v963
      %965 = vst [vmem:[%s939 + $0x24] sm:$0xf] %v964
      %966 = vst [vmem:[%s939 + $0x28] sm:$0xf] %v685
      %v967 = vld [vmem:[%s939 + $0x2c] sm:$0x1]
      %v968 = vsel %vm306, %v686, %v967
      %969 = vst [vmem:[%s939 + $0x2c] sm:$0x1] %v968
      %v970 = vld [vmem:[%s939 + $0x30] sm:$0xf]
      %v971 = vsel %vm941, %v693, %v970
      %972 = vst [vmem:[%s939 + $0x30] sm:$0xf] %v971
      %973 = vst [vmem:[%s939 + $0x34] sm:$0xf] %v702
      %v974 = vld [vmem:[%s939 + $0x38] sm:$0x1]
      %v975 = vsel %vm306, %v703, %v974
      %976 = vst [vmem:[%s939 + $0x38] sm:$0x1] %v975
      %v977 = vld [vmem:[%s939 + $0x3c] sm:$0xf]
      %v978 = vsel %vm941, %v710, %v977
      %979 = vst [vmem:[%s939 + $0x3c] sm:$0xf] %v978
      %980 = vst [vmem:[%s939 + $0x40] sm:$0xf] %v719
      %v981 = vld [vmem:[%s939 + $0x44] sm:$0x1]
      %v982 = vsel %vm306, %v720, %v981
      %983 = vst [vmem:[%s939 + $0x44] sm:$0x1] %v982
      %v984 = vld [vmem:[%s939 + $0x48] sm:$0xf]
      %v985 = vsel %vm941, %v727, %v984
      %986 = vst [vmem:[%s939 + $0x48] sm:$0xf] %v985
      %987 = vst [vmem:[%s939 + $0x4c] sm:$0xf] %v736
      %v988 = vld [vmem:[%s939 + $0x50] sm:$0x1]
      %v989 = vsel %vm306, %v737, %v988
      %990 = vst [vmem:[%s939 + $0x50] sm:$0x1] %v989
      %v991 = vld [vmem:[%s939 + $0x54] sm:$0xf]
      %v992 = vsel %vm941, %v744, %v991
      %993 = vst [vmem:[%s939 + $0x54] sm:$0xf] %v992
      %994 = vst [vmem:[%s939 + $0x58] sm:$0xf] %v753
      %v995 = vld [vmem:[%s939 + $0x5c] sm:$0x1]
      %v996 = vsel %vm306, %v754, %v995
      %997 = vst [vmem:[%s939 + $0x5c] sm:$0x1] %v996
      %v998 = vld [vmem:[%s939 + $0x60] sm:$0xf]
      %v999 = vsel %vm941, %v761, %v998
      %1000 = vst [vmem:[%s939 + $0x60] sm:$0xf] %v999
      %1001 = vst [vmem:[%s939 + $0x64] sm:$0xf] %v770
      %v1002 = vld [vmem:[%s939 + $0x68] sm:$0x1]
      %v1003 = vsel %vm306, %v771, %v1002
      %1004 = vst [vmem:[%s939 + $0x68] sm:$0x1] %v1003
      %v1005 = vld [vmem:[%s939 + $0x6c] sm:$0xf]
      %v1006 = vsel %vm941, %v778, %v1005
      %1007 = vst [vmem:[%s939 + $0x6c] sm:$0xf] %v1006
      %1008 = vst [vmem:[%s939 + $0x70] sm:$0xf] %v787
      %v1009 = vld [vmem:[%s939 + $0x74] sm:$0x1]
      %v1010 = vsel %vm306, %v788, %v1009
      %1011 = vst [vmem:[%s939 + $0x74] sm:$0x1] %v1010
      %v1012 = vld [vmem:[%s939 + $0x78] sm:$0xf]
      %v1013 = vsel %vm941, %v795, %v1012
      %1014 = vst [vmem:[%s939 + $0x78] sm:$0xf] %v1013
      %1015 = vst [vmem:[%s939 + $0x7c] sm:$0xf] %v804
      %v1016 = vld [vmem:[%s939 + $0x80] sm:$0x1]
      %v1017 = vsel %vm306, %v805, %v1016
      %1018 = vst [vmem:[%s939 + $0x80] sm:$0x1] %v1017
      %v1019 = vld [vmem:[%s939 + $0x84] sm:$0xf]
      %v1020 = vsel %vm941, %v812, %v1019
      %1021 = vst [vmem:[%s939 + $0x84] sm:$0xf] %v1020
      %1022 = vst [vmem:[%s939 + $0x88] sm:$0xf] %v821
      %v1023 = vld [vmem:[%s939 + $0x8c] sm:$0x1]
      %v1024 = vsel %vm306, %v822, %v1023
      %1025 = vst [vmem:[%s939 + $0x8c] sm:$0x1] %v1024
      %v1026 = vld [vmem:[%s939 + $0x90] sm:$0xf]
      %v1027 = vsel %vm941, %v829, %v1026
      %1028 = vst [vmem:[%s939 + $0x90] sm:$0xf] %v1027
      %1029 = vst [vmem:[%s939 + $0x94] sm:$0xf] %v838
      %v1030 = vld [vmem:[%s939 + $0x98] sm:$0x1]
      %v1031 = vsel %vm306, %v839, %v1030
      %1032 = vst [vmem:[%s939 + $0x98] sm:$0x1] %v1031
      %v1033 = vld [vmem:[%s939 + $0x9c] sm:$0xf]
      %v1034 = vsel %vm941, %v846, %v1033
      %1035 = vst [vmem:[%s939 + $0x9c] sm:$0xf] %v1034
      %1036 = vst [vmem:[%s939 + $0xa0] sm:$0xf] %v855
      %v1037 = vld [vmem:[%s939 + $0xa4] sm:$0x1]
      %v1038 = vsel %vm306, %v856, %v1037
      %1039 = vst [vmem:[%s939 + $0xa4] sm:$0x1] %v1038
      %v1040 = vld [vmem:[%s939 + $0xa8] sm:$0xf]
      %v1041 = vsel %vm941, %v863, %v1040
      %1042 = vst [vmem:[%s939 + $0xa8] sm:$0xf] %v1041
      %1043 = vst [vmem:[%s939 + $0xac] sm:$0xf] %v872
      %v1044 = vld [vmem:[%s939 + $0xb0] sm:$0x1]
      %v1045 = vsel %vm306, %v873, %v1044
      %1046 = vst [vmem:[%s939 + $0xb0] sm:$0x1] %v1045
      %v1047 = vld [vmem:[%s939 + $0xb4] sm:$0xf]
      %v1048 = vsel %vm941, %v880, %v1047
      %1049 = vst [vmem:[%s939 + $0xb4] sm:$0xf] %v1048
      %1050 = vst [vmem:[%s939 + $0xb8] sm:$0xf] %v889
      %v1051 = vld [vmem:[%s939 + $0xbc] sm:$0x1]
      %v1052 = vsel %vm306, %v890, %v1051
      %1053 = vst [vmem:[%s939 + $0xbc] sm:$0x1] %v1052
      %v1054 = vld [vmem:[#allocation2] sm:$0xf]
      %v1055 = vld [vmem:[#allocation2 + $0x4] sm:$0xf]
      %v1056 = vld [vmem:[#allocation2 + $0xc] sm:$0xf]
      %v1057 = vld [vmem:[#allocation2 + $0x10] sm:$0xf]
      %v1058 = vld [vmem:[#allocation2 + $0x18] sm:$0xf]
      %v1059 = vld [vmem:[#allocation2 + $0x1c] sm:$0xf]
      %v1060 = vld [vmem:[#allocation2 + $0x24] sm:$0xf]
      %v1061 = vld [vmem:[#allocation2 + $0x28] sm:$0xf]
      %v1062 = vld [vmem:[#allocation2 + $0x30] sm:$0xf]
      %v1063 = vld [vmem:[#allocation2 + $0x34] sm:$0xf]
      %v1064 = vld [vmem:[#allocation2 + $0x3c] sm:$0xf]
      %v1065 = vld [vmem:[#allocation2 + $0x40] sm:$0xf]
      %v1066 = vld [vmem:[#allocation2 + $0x48] sm:$0xf]
      %v1067 = vld [vmem:[#allocation2 + $0x4c] sm:$0xf]
      %v1068 = vld [vmem:[#allocation2 + $0x54] sm:$0xf]
      %v1069 = vld [vmem:[#allocation2 + $0x58] sm:$0xf]
      %v1070 = vld [vmem:[#allocation2 + $0x60] sm:$0xf]
      %v1071 = vld [vmem:[#allocation2 + $0x64] sm:$0xf]
      %v1072 = vld [vmem:[#allocation2 + $0x6c] sm:$0xf]
      %v1073 = vld [vmem:[#allocation2 + $0x70] sm:$0xf]
      %v1074 = vld [vmem:[#allocation2 + $0x78] sm:$0xf]
      %v1075 = vld [vmem:[#allocation2 + $0x7c] sm:$0xf]
      %v1076 = vld [vmem:[#allocation2 + $0x84] sm:$0xf]
      %v1077 = vld [vmem:[#allocation2 + $0x88] sm:$0xf]
      %v1078 = vld [vmem:[#allocation2 + $0x90] sm:$0xf]
      %v1079 = vld [vmem:[#allocation2 + $0x94] sm:$0xf]
      %v1080 = vld [vmem:[#allocation2 + $0x9c] sm:$0xf]
      %v1081 = vld [vmem:[#allocation2 + $0xa0] sm:$0xf]
      %v1082 = vld [vmem:[#allocation2 + $0xa8] sm:$0xf]
      %v1083 = vld [vmem:[#allocation2 + $0xac] sm:$0xf]
      %v1084 = vld [vmem:[#allocation2 + $0xb4] sm:$0xf]
      %v1085 = vld [vmem:[#allocation2 + $0xb8] sm:$0xf]
      %v1086 = vld [vmem:[#allocation2 + $0x8] sm:$0x1]
      %v1087 = vld [vmem:[#allocation2 + $0x14] sm:$0x1]
      %v1088 = vld [vmem:[#allocation2 + $0x20] sm:$0x1]
      %v1089 = vld [vmem:[#allocation2 + $0x2c] sm:$0x1]
      %v1090 = vld [vmem:[#allocation2 + $0x38] sm:$0x1]
      %v1091 = vld [vmem:[#allocation2 + $0x44] sm:$0x1]
      %v1092 = vld [vmem:[#allocation2 + $0x50] sm:$0x1]
      %v1093 = vld [vmem:[#allocation2 + $0x5c] sm:$0x1]
      %v1094 = vld [vmem:[#allocation2 + $0x68] sm:$0x1]
      %v1095 = vld [vmem:[#allocation2 + $0x74] sm:$0x1]
      %v1096 = vld [vmem:[#allocation2 + $0x80] sm:$0x1]
      %v1097 = vld [vmem:[#allocation2 + $0x8c] sm:$0x1]
      %v1098 = vld [vmem:[#allocation2 + $0x98] sm:$0x1]
      %v1099 = vld [vmem:[#allocation2 + $0xa4] sm:$0x1]
      %v1100 = vld [vmem:[#allocation2 + $0xb0] sm:$0x1]
      %v1101 = vld [vmem:[#allocation2 + $0xbc] sm:$0x1]
      %vm1102 = vsmask.f32 3328
      %vm1103 = vsmask.f32 7440
      %vm1104 = vmor %vm1102, %vm1103
      %v1106 = vshrl.u32 %v1054, 16
      %v1108 = vrot.slane %v1106, 4
      %v1109 = vshll.u32 %v1054, 16
      %v1111 = vrot.slane %v1109, 5
      %v1112 = vor.u32 %v1108, %v1111
      %v1113 = vrot.slane %v1112, 4
      %v1115 = vshll.u32 %v1055, 16
      %v1117 = vrot.slane %v1115, 5
      %v1118 = vsel %vm1104, %v1113, %v1117
      %v1119 = vshrl.u32 %v1055, 16
      %v1121 = vrot.slane %v1119, 4
      %v1122 = vor.u32 %v1121, %v1117
      %v1123 = vrot.slane %v1122, 4
      %v1125 = vshll.u32 %v1086, 16
      %v1127 = vrot.slane %v1125, 5
      %v1128 = vsel %vm1104, %v1123, %v1127
      %v1130 = vshrl.u32 %v1056, 16
      %v1132 = vrot.slane %v1130, 4
      %v1133 = vshll.u32 %v1056, 16
      %v1135 = vrot.slane %v1133, 5
      %v1136 = vor.u32 %v1132, %v1135
      %v1137 = vrot.slane %v1136, 4
      %v1139 = vshll.u32 %v1057, 16
      %v1141 = vrot.slane %v1139, 5
      %v1142 = vsel %vm1104, %v1137, %v1141
      %v1143 = vshrl.u32 %v1057, 16
      %v1145 = vrot.slane %v1143, 4
      %v1146 = vor.u32 %v1145, %v1141
      %v1147 = vrot.slane %v1146, 4
      %v1149 = vshll.u32 %v1087, 16
      %v1151 = vrot.slane %v1149, 5
      %v1152 = vsel %vm1104, %v1147, %v1151
      %v1154 = vshrl.u32 %v1058, 16
      %v1156 = vrot.slane %v1154, 4
      %v1157 = vshll.u32 %v1058, 16
      %v1159 = vrot.slane %v1157, 5
      %v1160 = vor.u32 %v1156, %v1159
      %v1161 = vrot.slane %v1160, 4
      %v1163 = vshll.u32 %v1059, 16
      %v1165 = vrot.slane %v1163, 5
      %v1166 = vsel %vm1104, %v1161, %v1165
      %v1167 = vshrl.u32 %v1059, 16
      %v1169 = vrot.slane %v1167, 4
      %v1170 = vor.u32 %v1169, %v1165
      %v1171 = vrot.slane %v1170, 4
      %v1173 = vshll.u32 %v1088, 16
      %v1175 = vrot.slane %v1173, 5
      %v1176 = vsel %vm1104, %v1171, %v1175
      %v1178 = vshrl.u32 %v1060, 16
      %v1180 = vrot.slane %v1178, 4
      %v1181 = vshll.u32 %v1060, 16
      %v1183 = vrot.slane %v1181, 5
      %v1184 = vor.u32 %v1180, %v1183
      %v1185 = vrot.slane %v1184, 4
      %v1187 = vshll.u32 %v1061, 16
      %v1189 = vrot.slane %v1187, 5
      %v1190 = vsel %vm1104, %v1185, %v1189
      %v1191 = vshrl.u32 %v1061, 16
      %v1193 = vrot.slane %v1191, 4
      %v1194 = vor.u32 %v1193, %v1189
      %v1195 = vrot.slane %v1194, 4
      %v1197 = vshll.u32 %v1089, 16
      %v1199 = vrot.slane %v1197, 5
      %v1200 = vsel %vm1104, %v1195, %v1199
      %v1202 = vshrl.u32 %v1062, 16
      %v1204 = vrot.slane %v1202, 4
      %v1205 = vshll.u32 %v1062, 16
      %v1207 = vrot.slane %v1205, 5
      %v1208 = vor.u32 %v1204, %v1207
      %v1209 = vrot.slane %v1208, 4
      %v1211 = vshll.u32 %v1063, 16
      %v1213 = vrot.slane %v1211, 5
      %v1214 = vsel %vm1104, %v1209, %v1213
      %v1215 = vshrl.u32 %v1063, 16
      %v1217 = vrot.slane %v1215, 4
      %v1218 = vor.u32 %v1217, %v1213
      %v1219 = vrot.slane %v1218, 4
      %v1221 = vshll.u32 %v1090, 16
      %v1223 = vrot.slane %v1221, 5
      %v1224 = vsel %vm1104, %v1219, %v1223
      %v1226 = vshrl.u32 %v1064, 16
      %v1228 = vrot.slane %v1226, 4
      %v1229 = vshll.u32 %v1064, 16
      %v1231 = vrot.slane %v1229, 5
      %v1232 = vor.u32 %v1228, %v1231
      %v1233 = vrot.slane %v1232, 4
      %v1235 = vshll.u32 %v1065, 16
      %v1237 = vrot.slane %v1235, 5
      %v1238 = vsel %vm1104, %v1233, %v1237
      %v1239 = vshrl.u32 %v1065, 16
      %v1241 = vrot.slane %v1239, 4
      %v1242 = vor.u32 %v1241, %v1237
      %v1243 = vrot.slane %v1242, 4
      %v1245 = vshll.u32 %v1091, 16
      %v1247 = vrot.slane %v1245, 5
      %v1248 = vsel %vm1104, %v1243, %v1247
      %v1250 = vshrl.u32 %v1066, 16
      %v1252 = vrot.slane %v1250, 4
      %v1253 = vshll.u32 %v1066, 16
      %v1255 = vrot.slane %v1253, 5
      %v1256 = vor.u32 %v1252, %v1255
      %v1257 = vrot.slane %v1256, 4
      %v1259 = vshll.u32 %v1067, 16
      %v1261 = vrot.slane %v1259, 5
      %v1262 = vsel %vm1104, %v1257, %v1261
      %v1263 = vshrl.u32 %v1067, 16
      %v1265 = vrot.slane %v1263, 4
      %v1266 = vor.u32 %v1265, %v1261
      %v1267 = vrot.slane %v1266, 4
      %v1269 = vshll.u32 %v1092, 16
      %v1271 = vrot.slane %v1269, 5
      %v1272 = vsel %vm1104, %v1267, %v1271
      %v1274 = vshrl.u32 %v1068, 16
      %v1276 = vrot.slane %v1274, 4
      %v1277 = vshll.u32 %v1068, 16
      %v1279 = vrot.slane %v1277, 5
      %v1280 = vor.u32 %v1276, %v1279
      %v1281 = vrot.slane %v1280, 4
      %v1283 = vshll.u32 %v1069, 16
      %v1285 = vrot.slane %v1283, 5
      %v1286 = vsel %vm1104, %v1281, %v1285
      %v1287 = vshrl.u32 %v1069, 16
      %v1289 = vrot.slane %v1287, 4
      %v1290 = vor.u32 %v1289, %v1285
      %v1291 = vrot.slane %v1290, 4
      %v1293 = vshll.u32 %v1093, 16
      %v1295 = vrot.slane %v1293, 5
      %v1296 = vsel %vm1104, %v1291, %v1295
      %v1298 = vshrl.u32 %v1070, 16
      %v1300 = vrot.slane %v1298, 4
      %v1301 = vshll.u32 %v1070, 16
      %v1303 = vrot.slane %v1301, 5
      %v1304 = vor.u32 %v1300, %v1303
      %v1305 = vrot.slane %v1304, 4
      %v1307 = vshll.u32 %v1071, 16
      %v1309 = vrot.slane %v1307, 5
      %v1310 = vsel %vm1104, %v1305, %v1309
      %v1311 = vshrl.u32 %v1071, 16
      %v1313 = vrot.slane %v1311, 4
      %v1314 = vor.u32 %v1313, %v1309
      %v1315 = vrot.slane %v1314, 4
      %v1317 = vshll.u32 %v1094, 16
      %v1319 = vrot.slane %v1317, 5
      %v1320 = vsel %vm1104, %v1315, %v1319
      %v1322 = vshrl.u32 %v1072, 16
      %v1324 = vrot.slane %v1322, 4
      %v1325 = vshll.u32 %v1072, 16
      %v1327 = vrot.slane %v1325, 5
      %v1328 = vor.u32 %v1324, %v1327
      %v1329 = vrot.slane %v1328, 4
      %v1331 = vshll.u32 %v1073, 16
      %v1333 = vrot.slane %v1331, 5
      %v1334 = vsel %vm1104, %v1329, %v1333
      %v1335 = vshrl.u32 %v1073, 16
      %v1337 = vrot.slane %v1335, 4
      %v1338 = vor.u32 %v1337, %v1333
      %v1339 = vrot.slane %v1338, 4
      %v1341 = vshll.u32 %v1095, 16
      %v1343 = vrot.slane %v1341, 5
      %v1344 = vsel %vm1104, %v1339, %v1343
      %v1346 = vshrl.u32 %v1074, 16
      %v1348 = vrot.slane %v1346, 4
      %v1349 = vshll.u32 %v1074, 16
      %v1351 = vrot.slane %v1349, 5
      %v1352 = vor.u32 %v1348, %v1351
      %v1353 = vrot.slane %v1352, 4
      %v1355 = vshll.u32 %v1075, 16
      %v1357 = vrot.slane %v1355, 5
      %v1358 = vsel %vm1104, %v1353, %v1357
      %v1359 = vshrl.u32 %v1075, 16
      %v1361 = vrot.slane %v1359, 4
      %v1362 = vor.u32 %v1361, %v1357
      %v1363 = vrot.slane %v1362, 4
      %v1365 = vshll.u32 %v1096, 16
      %v1367 = vrot.slane %v1365, 5
      %v1368 = vsel %vm1104, %v1363, %v1367
      %v1370 = vshrl.u32 %v1076, 16
      %v1372 = vrot.slane %v1370, 4
      %v1373 = vshll.u32 %v1076, 16
      %v1375 = vrot.slane %v1373, 5
      %v1376 = vor.u32 %v1372, %v1375
      %v1377 = vrot.slane %v1376, 4
      %v1379 = vshll.u32 %v1077, 16
      %v1381 = vrot.slane %v1379, 5
      %v1382 = vsel %vm1104, %v1377, %v1381
      %v1383 = vshrl.u32 %v1077, 16
      %v1385 = vrot.slane %v1383, 4
      %v1386 = vor.u32 %v1385, %v1381
      %v1387 = vrot.slane %v1386, 4
      %v1389 = vshll.u32 %v1097, 16
      %v1391 = vrot.slane %v1389, 5
      %v1392 = vsel %vm1104, %v1387, %v1391
      %v1394 = vshrl.u32 %v1078, 16
      %v1396 = vrot.slane %v1394, 4
      %v1397 = vshll.u32 %v1078, 16
      %v1399 = vrot.slane %v1397, 5
      %v1400 = vor.u32 %v1396, %v1399
      %v1401 = vrot.slane %v1400, 4
      %v1403 = vshll.u32 %v1079, 16
      %v1405 = vrot.slane %v1403, 5
      %v1406 = vsel %vm1104, %v1401, %v1405
      %v1407 = vshrl.u32 %v1079, 16
      %v1409 = vrot.slane %v1407, 4
      %v1410 = vor.u32 %v1409, %v1405
      %v1411 = vrot.slane %v1410, 4
      %v1413 = vshll.u32 %v1098, 16
      %v1415 = vrot.slane %v1413, 5
      %v1416 = vsel %vm1104, %v1411, %v1415
      %v1418 = vshrl.u32 %v1080, 16
      %v1420 = vrot.slane %v1418, 4
      %v1421 = vshll.u32 %v1080, 16
      %v1423 = vrot.slane %v1421, 5
      %v1424 = vor.u32 %v1420, %v1423
      %v1425 = vrot.slane %v1424, 4
      %v1427 = vshll.u32 %v1081, 16
      %v1429 = vrot.slane %v1427, 5
      %v1430 = vsel %vm1104, %v1425, %v1429
      %v1431 = vshrl.u32 %v1081, 16
      %v1433 = vrot.slane %v1431, 4
      %v1434 = vor.u32 %v1433, %v1429
      %v1435 = vrot.slane %v1434, 4
      %v1437 = vshll.u32 %v1099, 16
      %v1439 = vrot.slane %v1437, 5
      %v1440 = vsel %vm1104, %v1435, %v1439
      %v1442 = vshrl.u32 %v1082, 16
      %v1444 = vrot.slane %v1442, 4
      %v1445 = vshll.u32 %v1082, 16
      %v1447 = vrot.slane %v1445, 5
      %v1448 = vor.u32 %v1444, %v1447
      %v1449 = vrot.slane %v1448, 4
      %v1451 = vshll.u32 %v1083, 16
      %v1453 = vrot.slane %v1451, 5
      %v1454 = vsel %vm1104, %v1449, %v1453
      %v1455 = vshrl.u32 %v1083, 16
      %v1457 = vrot.slane %v1455, 4
      %v1458 = vor.u32 %v1457, %v1453
      %v1459 = vrot.slane %v1458, 4
      %v1461 = vshll.u32 %v1100, 16
      %v1463 = vrot.slane %v1461, 5
      %v1464 = vsel %vm1104, %v1459, %v1463
      %v1466 = vshrl.u32 %v1084, 16
      %v1468 = vrot.slane %v1466, 4
      %v1469 = vshll.u32 %v1084, 16
      %v1471 = vrot.slane %v1469, 5
      %v1472 = vor.u32 %v1468, %v1471
      %v1473 = vrot.slane %v1472, 4
      %v1475 = vshll.u32 %v1085, 16
      %v1477 = vrot.slane %v1475, 5
      %v1478 = vsel %vm1104, %v1473, %v1477
      %v1479 = vshrl.u32 %v1085, 16
      %v1481 = vrot.slane %v1479, 4
      %v1482 = vor.u32 %v1481, %v1477
      %v1483 = vrot.slane %v1482, 4
      %v1485 = vshll.u32 %v1101, 16
      %v1487 = vrot.slane %v1485, 5
      %v1488 = vsel %vm1104, %v1483, %v1487
      %v1489 = vld [vmem:[#allocation2] sm:$0xe]
      %v1490 = vld [vmem:[#allocation2 + $0xc] sm:$0xe]
      %v1491 = vld [vmem:[#allocation2 + $0x18] sm:$0xe]
      %v1492 = vld [vmem:[#allocation2 + $0x24] sm:$0xe]
      %v1493 = vld [vmem:[#allocation2 + $0x30] sm:$0xe]
      %v1494 = vld [vmem:[#allocation2 + $0x3c] sm:$0xe]
      %v1495 = vld [vmem:[#allocation2 + $0x48] sm:$0xe]
      %v1496 = vld [vmem:[#allocation2 + $0x54] sm:$0xe]
      %v1497 = vld [vmem:[#allocation2 + $0x60] sm:$0xe]
      %v1498 = vld [vmem:[#allocation2 + $0x6c] sm:$0xe]
      %v1499 = vld [vmem:[#allocation2 + $0x78] sm:$0xe]
      %v1500 = vld [vmem:[#allocation2 + $0x84] sm:$0xe]
      %v1501 = vld [vmem:[#allocation2 + $0x90] sm:$0xe]
      %v1502 = vld [vmem:[#allocation2 + $0x9c] sm:$0xe]
      %v1503 = vld [vmem:[#allocation2 + $0xa8] sm:$0xe]
      %v1504 = vld [vmem:[#allocation2 + $0xb4] sm:$0xe]
      %vm1553 = vcmask 1042432
      %vm1554 = vcmask 1046532
      %vm1555 = vmor %vm1553, %vm1554
      %v1556 = vrot.slane %v1489, 5
      %v1557 = vrot.slane %v1556, 4
      %v1558 = vrot.slane %v1055, 5
      %v1559 = vsel %vm1555, %v1557, %v1558
      %v1560 = vrot.slane %v1558, 4
      %v1561 = vrot.slane %v1086, 5
      %v1562 = vsel %vm1555, %v1560, %v1561
      %v1563 = vrot.slane %v1490, 5
      %v1564 = vrot.slane %v1563, 4
      %v1565 = vrot.slane %v1057, 5
      %v1566 = vsel %vm1555, %v1564, %v1565
      %v1567 = vrot.slane %v1565, 4
      %v1568 = vrot.slane %v1087, 5
      %v1569 = vsel %vm1555, %v1567, %v1568
      %v1570 = vrot.slane %v1491, 5
      %v1571 = vrot.slane %v1570, 4
      %v1572 = vrot.slane %v1059, 5
      %v1573 = vsel %vm1555, %v1571, %v1572
      %v1574 = vrot.slane %v1572, 4
      %v1575 = vrot.slane %v1088, 5
      %v1576 = vsel %vm1555, %v1574, %v1575
      %v1577 = vrot.slane %v1492, 5
      %v1578 = vrot.slane %v1577, 4
      %v1579 = vrot.slane %v1061, 5
      %v1580 = vsel %vm1555, %v1578, %v1579
      %v1581 = vrot.slane %v1579, 4
      %v1582 = vrot.slane %v1089, 5
      %v1583 = vsel %vm1555, %v1581, %v1582
      %v1584 = vrot.slane %v1493, 5
      %v1585 = vrot.slane %v1584, 4
      %v1586 = vrot.slane %v1063, 5
      %v1587 = vsel %vm1555, %v1585, %v1586
      %v1588 = vrot.slane %v1586, 4
      %v1589 = vrot.slane %v1090, 5
      %v1590 = vsel %vm1555, %v1588, %v1589
      %v1591 = vrot.slane %v1494, 5
      %v1592 = vrot.slane %v1591, 4
      %v1593 = vrot.slane %v1065, 5
      %v1594 = vsel %vm1555, %v1592, %v1593
      %v1595 = vrot.slane %v1593, 4
      %v1596 = vrot.slane %v1091, 5
      %v1597 = vsel %vm1555, %v1595, %v1596
      %v1598 = vrot.slane %v1495, 5
      %v1599 = vrot.slane %v1598, 4
      %v1600 = vrot.slane %v1067, 5
      %v1601 = vsel %vm1555, %v1599, %v1600
      %v1602 = vrot.slane %v1600, 4
      %v1603 = vrot.slane %v1092, 5
      %v1604 = vsel %vm1555, %v1602, %v1603
      %v1605 = vrot.slane %v1496, 5
      %v1606 = vrot.slane %v1605, 4
      %v1607 = vrot.slane %v1069, 5
      %v1608 = vsel %vm1555, %v1606, %v1607
      %v1609 = vrot.slane %v1607, 4
      %v1610 = vrot.slane %v1093, 5
      %v1611 = vsel %vm1555, %v1609, %v1610
      %v1612 = vrot.slane %v1497, 5
      %v1613 = vrot.slane %v1612, 4
      %v1614 = vrot.slane %v1071, 5
      %v1615 = vsel %vm1555, %v1613, %v1614
      %v1616 = vrot.slane %v1614, 4
      %v1617 = vrot.slane %v1094, 5
      %v1618 = vsel %vm1555, %v1616, %v1617
      %v1619 = vrot.slane %v1498, 5
      %v1620 = vrot.slane %v1619, 4
      %v1621 = vrot.slane %v1073, 5
      %v1622 = vsel %vm1555, %v1620, %v1621
      %v1623 = vrot.slane %v1621, 4
      %v1624 = vrot.slane %v1095, 5
      %v1625 = vsel %vm1555, %v1623, %v1624
      %v1626 = vrot.slane %v1499, 5
      %v1627 = vrot.slane %v1626, 4
      %v1628 = vrot.slane %v1075, 5
      %v1629 = vsel %vm1555, %v1627, %v1628
      %v1630 = vrot.slane %v1628, 4
      %v1631 = vrot.slane %v1096, 5
      %v1632 = vsel %vm1555, %v1630, %v1631
      %v1633 = vrot.slane %v1500, 5
      %v1634 = vrot.slane %v1633, 4
      %v1635 = vrot.slane %v1077, 5
      %v1636 = vsel %vm1555, %v1634, %v1635
      %v1637 = vrot.slane %v1635, 4
      %v1638 = vrot.slane %v1097, 5
      %v1639 = vsel %vm1555, %v1637, %v1638
      %v1640 = vrot.slane %v1501, 5
      %v1641 = vrot.slane %v1640, 4
      %v1642 = vrot.slane %v1079, 5
      %v1643 = vsel %vm1555, %v1641, %v1642
      %v1644 = vrot.slane %v1642, 4
      %v1645 = vrot.slane %v1098, 5
      %v1646 = vsel %vm1555, %v1644, %v1645
      %v1647 = vrot.slane %v1502, 5
      %v1648 = vrot.slane %v1647, 4
      %v1649 = vrot.slane %v1081, 5
      %v1650 = vsel %vm1555, %v1648, %v1649
      %v1651 = vrot.slane %v1649, 4
      %v1652 = vrot.slane %v1099, 5
      %v1653 = vsel %vm1555, %v1651, %v1652
      %v1654 = vrot.slane %v1503, 5
      %v1655 = vrot.slane %v1654, 4
      %v1656 = vrot.slane %v1083, 5
      %v1657 = vsel %vm1555, %v1655, %v1656
      %v1658 = vrot.slane %v1656, 4
      %v1659 = vrot.slane %v1100, 5
      %v1660 = vsel %vm1555, %v1658, %v1659
      %v1661 = vrot.slane %v1504, 5
      %v1662 = vrot.slane %v1661, 4
      %v1663 = vrot.slane %v1085, 5
      %v1664 = vsel %vm1555, %v1662, %v1663
      %v1665 = vrot.slane %v1663, 4
      %v1666 = vrot.slane %v1101, 5
      %v1667 = vsel %vm1555, %v1665, %v1666
      %v1668 = vld [vmem:[%s939] sm:$0xf]
      %v1669 = vld [vmem:[%s939 + $0x4] sm:$0xf]
      %v1670 = vld [vmem:[%s939 + $0xc] sm:$0xf]
      %v1671 = vld [vmem:[%s939 + $0x10] sm:$0xf]
      %v1672 = vld [vmem:[%s939 + $0x18] sm:$0xf]
      %v1673 = vld [vmem:[%s939 + $0x1c] sm:$0xf]
      %v1674 = vld [vmem:[%s939 + $0x24] sm:$0xf]
      %v1675 = vld [vmem:[%s939 + $0x28] sm:$0xf]
      %v1676 = vld [vmem:[%s939 + $0x30] sm:$0xf]
      %v1677 = vld [vmem:[%s939 + $0x34] sm:$0xf]
      %v1678 = vld [vmem:[%s939 + $0x3c] sm:$0xf]
      %v1679 = vld [vmem:[%s939 + $0x40] sm:$0xf]
      %v1680 = vld [vmem:[%s939 + $0x48] sm:$0xf]
      %v1681 = vld [vmem:[%s939 + $0x4c] sm:$0xf]
      %v1682 = vld [vmem:[%s939 + $0x54] sm:$0xf]
      %v1683 = vld [vmem:[%s939 + $0x58] sm:$0xf]
      %v1684 = vld [vmem:[%s939 + $0x60] sm:$0xf]
      %v1685 = vld [vmem:[%s939 + $0x64] sm:$0xf]
      %v1686 = vld [vmem:[%s939 + $0x6c] sm:$0xf]
      %v1687 = vld [vmem:[%s939 + $0x70] sm:$0xf]
      %v1688 = vld [vmem:[%s939 + $0x78] sm:$0xf]
      %v1689 = vld [vmem:[%s939 + $0x7c] sm:$0xf]
      %v1690 = vld [vmem:[%s939 + $0x84] sm:$0xf]
      %v1691 = vld [vmem:[%s939 + $0x88] sm:$0xf]
      %v1692 = vld [vmem:[%s939 + $0x90] sm:$0xf]
      %v1693 = vld [vmem:[%s939 + $0x94] sm:$0xf]
      %v1694 = vld [vmem:[%s939 + $0x9c] sm:$0xf]
      %v1695 = vld [vmem:[%s939 + $0xa0] sm:$0xf]
      %v1696 = vld [vmem:[%s939 + $0xa8] sm:$0xf]
      %v1697 = vld [vmem:[%s939 + $0xac] sm:$0xf]
      %v1698 = vld [vmem:[%s939 + $0xb4] sm:$0xf]
      %v1699 = vld [vmem:[%s939 + $0xb8] sm:$0xf]
      %v1700 = vld [vmem:[%s939 + $0x8] sm:$0x1]
      %v1701 = vld [vmem:[%s939 + $0x14] sm:$0x1]
      %v1702 = vld [vmem:[%s939 + $0x20] sm:$0x1]
      %v1703 = vld [vmem:[%s939 + $0x2c] sm:$0x1]
      %v1704 = vld [vmem:[%s939 + $0x38] sm:$0x1]
      %v1705 = vld [vmem:[%s939 + $0x44] sm:$0x1]
      %v1706 = vld [vmem:[%s939 + $0x50] sm:$0x1]
      %v1707 = vld [vmem:[%s939 + $0x5c] sm:$0x1]
      %v1708 = vld [vmem:[%s939 + $0x68] sm:$0x1]
      %v1709 = vld [vmem:[%s939 + $0x74] sm:$0x1]
      %v1710 = vld [vmem:[%s939 + $0x80] sm:$0x1]
      %v1711 = vld [vmem:[%s939 + $0x8c] sm:$0x1]
      %v1712 = vld [vmem:[%s939 + $0x98] sm:$0x1]
      %v1713 = vld [vmem:[%s939 + $0xa4] sm:$0x1]
      %v1714 = vld [vmem:[%s939 + $0xb0] sm:$0x1]
      %v1715 = vld [vmem:[%s939 + $0xbc] sm:$0x1]
      %v1717 = vshrl.u32 %v1668, 16
      %v1719 = vrot.slane %v1717, 4
      %v1720 = vshll.u32 %v1668, 16
      %v1722 = vrot.slane %v1720, 5
      %v1723 = vor.u32 %v1719, %v1722
      %v1724 = vrot.slane %v1723, 4
      %v1726 = vshll.u32 %v1669, 16
      %v1728 = vrot.slane %v1726, 5
      %v1729 = vsel %vm1104, %v1724, %v1728
      %v1730 = vshrl.u32 %v1669, 16
      %v1732 = vrot.slane %v1730, 4
      %v1733 = vor.u32 %v1732, %v1728
      %v1734 = vrot.slane %v1733, 4
      %v1736 = vshll.u32 %v1700, 16
      %v1738 = vrot.slane %v1736, 5
      %v1739 = vsel %vm1104, %v1734, %v1738
      %v1741 = vshrl.u32 %v1670, 16
      %v1743 = vrot.slane %v1741, 4
      %v1744 = vshll.u32 %v1670, 16
      %v1746 = vrot.slane %v1744, 5
      %v1747 = vor.u32 %v1743, %v1746
      %v1748 = vrot.slane %v1747, 4
      %v1750 = vshll.u32 %v1671, 16
      %v1752 = vrot.slane %v1750, 5
      %v1753 = vsel %vm1104, %v1748, %v1752
      %v1754 = vshrl.u32 %v1671, 16
      %v1756 = vrot.slane %v1754, 4
      %v1757 = vor.u32 %v1756, %v1752
      %v1758 = vrot.slane %v1757, 4
      %v1760 = vshll.u32 %v1701, 16
      %v1762 = vrot.slane %v1760, 5
      %v1763 = vsel %vm1104, %v1758, %v1762
      %v1765 = vshrl.u32 %v1672, 16
      %v1767 = vrot.slane %v1765, 4
      %v1768 = vshll.u32 %v1672, 16
      %v1770 = vrot.slane %v1768, 5
      %v1771 = vor.u32 %v1767, %v1770
      %v1772 = vrot.slane %v1771, 4
      %v1774 = vshll.u32 %v1673, 16
      %v1776 = vrot.slane %v1774, 5
      %v1777 = vsel %vm1104, %v1772, %v1776
      %v1778 = vshrl.u32 %v1673, 16
      %v1780 = vrot.slane %v1778, 4
      %v1781 = vor.u32 %v1780, %v1776
      %v1782 = vrot.slane %v1781, 4
      %v1784 = vshll.u32 %v1702, 16
      %v1786 = vrot.slane %v1784, 5
      %v1787 = vsel %vm1104, %v1782, %v1786
      %v1789 = vshrl.u32 %v1674, 16
      %v1791 = vrot.slane %v1789, 4
      %v1792 = vshll.u32 %v1674, 16
      %v1794 = vrot.slane %v1792, 5
      %v1795 = vor.u32 %v1791, %v1794
      %v1796 = vrot.slane %v1795, 4
      %v1798 = vshll.u32 %v1675, 16
      %v1800 = vrot.slane %v1798, 5
      %v1801 = vsel %vm1104, %v1796, %v1800
      %v1802 = vshrl.u32 %v1675, 16
      %v1804 = vrot.slane %v1802, 4
      %v1805 = vor.u32 %v1804, %v1800
      %v1806 = vrot.slane %v1805, 4
      %v1808 = vshll.u32 %v1703, 16
      %v1810 = vrot.slane %v1808, 5
      %v1811 = vsel %vm1104, %v1806, %v1810
      %v1813 = vshrl.u32 %v1676, 16
      %v1815 = vrot.slane %v1813, 4
      %v1816 = vshll.u32 %v1676, 16
      %v1818 = vrot.slane %v1816, 5
      %v1819 = vor.u32 %v1815, %v1818
      %v1820 = vrot.slane %v1819, 4
      %v1822 = vshll.u32 %v1677, 16
      %v1824 = vrot.slane %v1822, 5
      %v1825 = vsel %vm1104, %v1820, %v1824
      %v1826 = vshrl.u32 %v1677, 16
      %v1828 = vrot.slane %v1826, 4
      %v1829 = vor.u32 %v1828, %v1824
      %v1830 = vrot.slane %v1829, 4
      %v1832 = vshll.u32 %v1704, 16
      %v1834 = vrot.slane %v1832, 5
      %v1835 = vsel %vm1104, %v1830, %v1834
      %v1837 = vshrl.u32 %v1678, 16
      %v1839 = vrot.slane %v1837, 4
      %v1840 = vshll.u32 %v1678, 16
      %v1842 = vrot.slane %v1840, 5
      %v1843 = vor.u32 %v1839, %v1842
      %v1844 = vrot.slane %v1843, 4
      %v1846 = vshll.u32 %v1679, 16
      %v1848 = vrot.slane %v1846, 5
      %v1849 = vsel %vm1104, %v1844, %v1848
      %v1850 = vshrl.u32 %v1679, 16
      %v1852 = vrot.slane %v1850, 4
      %v1853 = vor.u32 %v1852, %v1848
      %v1854 = vrot.slane %v1853, 4
      %v1856 = vshll.u32 %v1705, 16
      %v1858 = vrot.slane %v1856, 5
      %v1859 = vsel %vm1104, %v1854, %v1858
      %v1861 = vshrl.u32 %v1680, 16
      %v1863 = vrot.slane %v1861, 4
      %v1864 = vshll.u32 %v1680, 16
      %v1866 = vrot.slane %v1864, 5
      %v1867 = vor.u32 %v1863, %v1866
      %v1868 = vrot.slane %v1867, 4
      %v1870 = vshll.u32 %v1681, 16
      %v1872 = vrot.slane %v1870, 5
      %v1873 = vsel %vm1104, %v1868, %v1872
      %v1874 = vshrl.u32 %v1681, 16
      %v1876 = vrot.slane %v1874, 4
      %v1877 = vor.u32 %v1876, %v1872
      %v1878 = vrot.slane %v1877, 4
      %v1880 = vshll.u32 %v1706, 16
      %v1882 = vrot.slane %v1880, 5
      %v1883 = vsel %vm1104, %v1878, %v1882
      %v1885 = vshrl.u32 %v1682, 16
      %v1887 = vrot.slane %v1885, 4
      %v1888 = vshll.u32 %v1682, 16
      %v1890 = vrot.slane %v1888, 5
      %v1891 = vor.u32 %v1887, %v1890
      %v1892 = vrot.slane %v1891, 4
      %v1894 = vshll.u32 %v1683, 16
      %v1896 = vrot.slane %v1894, 5
      %v1897 = vsel %vm1104, %v1892, %v1896
      %v1898 = vshrl.u32 %v1683, 16
      %v1900 = vrot.slane %v1898, 4
      %v1901 = vor.u32 %v1900, %v1896
      %v1902 = vrot.slane %v1901, 4
      %v1904 = vshll.u32 %v1707, 16
      %v1906 = vrot.slane %v1904, 5
      %v1907 = vsel %vm1104, %v1902, %v1906
      %v1909 = vshrl.u32 %v1684, 16
      %v1911 = vrot.slane %v1909, 4
      %v1912 = vshll.u32 %v1684, 16
      %v1914 = vrot.slane %v1912, 5
      %v1915 = vor.u32 %v1911, %v1914
      %v1916 = vrot.slane %v1915, 4
      %v1918 = vshll.u32 %v1685, 16
      %v1920 = vrot.slane %v1918, 5
      %v1921 = vsel %vm1104, %v1916, %v1920
      %v1922 = vshrl.u32 %v1685, 16
      %v1924 = vrot.slane %v1922, 4
      %v1925 = vor.u32 %v1924, %v1920
      %v1926 = vrot.slane %v1925, 4
      %v1928 = vshll.u32 %v1708, 16
      %v1930 = vrot.slane %v1928, 5
      %v1931 = vsel %vm1104, %v1926, %v1930
      %v1933 = vshrl.u32 %v1686, 16
      %v1935 = vrot.slane %v1933, 4
      %v1936 = vshll.u32 %v1686, 16
      %v1938 = vrot.slane %v1936, 5
      %v1939 = vor.u32 %v1935, %v1938
      %v1940 = vrot.slane %v1939, 4
      %v1942 = vshll.u32 %v1687, 16
      %v1944 = vrot.slane %v1942, 5
      %v1945 = vsel %vm1104, %v1940, %v1944
      %v1946 = vshrl.u32 %v1687, 16
      %v1948 = vrot.slane %v1946, 4
      %v1949 = vor.u32 %v1948, %v1944
      %v1950 = vrot.slane %v1949, 4
      %v1952 = vshll.u32 %v1709, 16
      %v1954 = vrot.slane %v1952, 5
      %v1955 = vsel %vm1104, %v1950, %v1954
      %v1957 = vshrl.u32 %v1688, 16
      %v1959 = vrot.slane %v1957, 4
      %v1960 = vshll.u32 %v1688, 16
      %v1962 = vrot.slane %v1960, 5
      %v1963 = vor.u32 %v1959, %v1962
      %v1964 = vrot.slane %v1963, 4
      %v1966 = vshll.u32 %v1689, 16
      %v1968 = vrot.slane %v1966, 5
      %v1969 = vsel %vm1104, %v1964, %v1968
      %v1970 = vshrl.u32 %v1689, 16
      %v1972 = vrot.slane %v1970, 4
      %v1973 = vor.u32 %v1972, %v1968
      %v1974 = vrot.slane %v1973, 4
      %v1976 = vshll.u32 %v1710, 16
      %v1978 = vrot.slane %v1976, 5
      %v1979 = vsel %vm1104, %v1974, %v1978
      %v1981 = vshrl.u32 %v1690, 16
      %v1983 = vrot.slane %v1981, 4
      %v1984 = vshll.u32 %v1690, 16
      %v1986 = vrot.slane %v1984, 5
      %v1987 = vor.u32 %v1983, %v1986
      %v1988 = vrot.slane %v1987, 4
      %v1990 = vshll.u32 %v1691, 16
      %v1992 = vrot.slane %v1990, 5
      %v1993 = vsel %vm1104, %v1988, %v1992
      %v1994 = vshrl.u32 %v1691, 16
      %v1996 = vrot.slane %v1994, 4
      %v1997 = vor.u32 %v1996, %v1992
      %v1998 = vrot.slane %v1997, 4
      %v2000 = vshll.u32 %v1711, 16
      %v2002 = vrot.slane %v2000, 5
      %v2003 = vsel %vm1104, %v1998, %v2002
      %v2005 = vshrl.u32 %v1692, 16
      %v2007 = vrot.slane %v2005, 4
      %v2008 = vshll.u32 %v1692, 16
      %v2010 = vrot.slane %v2008, 5
      %v2011 = vor.u32 %v2007, %v2010
      %v2012 = vrot.slane %v2011, 4
      %v2014 = vshll.u32 %v1693, 16
      %v2016 = vrot.slane %v2014, 5
      %v2017 = vsel %vm1104, %v2012, %v2016
      %v2018 = vshrl.u32 %v1693, 16
      %v2020 = vrot.slane %v2018, 4
      %v2021 = vor.u32 %v2020, %v2016
      %v2022 = vrot.slane %v2021, 4
      %v2024 = vshll.u32 %v1712, 16
      %v2026 = vrot.slane %v2024, 5
      %v2027 = vsel %vm1104, %v2022, %v2026
      %v2029 = vshrl.u32 %v1694, 16
      %v2031 = vrot.slane %v2029, 4
      %v2032 = vshll.u32 %v1694, 16
      %v2034 = vrot.slane %v2032, 5
      %v2035 = vor.u32 %v2031, %v2034
      %v2036 = vrot.slane %v2035, 4
      %v2038 = vshll.u32 %v1695, 16
      %v2040 = vrot.slane %v2038, 5
      %v2041 = vsel %vm1104, %v2036, %v2040
      %v2042 = vshrl.u32 %v1695, 16
      %v2044 = vrot.slane %v2042, 4
      %v2045 = vor.u32 %v2044, %v2040
      %v2046 = vrot.slane %v2045, 4
      %v2048 = vshll.u32 %v1713, 16
      %v2050 = vrot.slane %v2048, 5
      %v2051 = vsel %vm1104, %v2046, %v2050
      %v2053 = vshrl.u32 %v1696, 16
      %v2055 = vrot.slane %v2053, 4
      %v2056 = vshll.u32 %v1696, 16
      %v2058 = vrot.slane %v2056, 5
      %v2059 = vor.u32 %v2055, %v2058
      %v2060 = vrot.slane %v2059, 4
      %v2062 = vshll.u32 %v1697, 16
      %v2064 = vrot.slane %v2062, 5
      %v2065 = vsel %vm1104, %v2060, %v2064
      %v2066 = vshrl.u32 %v1697, 16
      %v2068 = vrot.slane %v2066, 4
      %v2069 = vor.u32 %v2068, %v2064
      %v2070 = vrot.slane %v2069, 4
      %v2072 = vshll.u32 %v1714, 16
      %v2074 = vrot.slane %v2072, 5
      %v2075 = vsel %vm1104, %v2070, %v2074
      %v2077 = vshrl.u32 %v1698, 16
      %v2079 = vrot.slane %v2077, 4
      %v2080 = vshll.u32 %v1698, 16
      %v2082 = vrot.slane %v2080, 5
      %v2083 = vor.u32 %v2079, %v2082
      %v2084 = vrot.slane %v2083, 4
      %v2086 = vshll.u32 %v1699, 16
      %v2088 = vrot.slane %v2086, 5
      %v2089 = vsel %vm1104, %v2084, %v2088
      %v2090 = vshrl.u32 %v1699, 16
      %v2092 = vrot.slane %v2090, 4
      %v2093 = vor.u32 %v2092, %v2088
      %v2094 = vrot.slane %v2093, 4
      %v2096 = vshll.u32 %v1715, 16
      %v2098 = vrot.slane %v2096, 5
      %v2099 = vsel %vm1104, %v2094, %v2098
      %v2100 = vld [vmem:[%s939] sm:$0xe]
      %v2101 = vld [vmem:[%s939 + $0xc] sm:$0xe]
      %v2102 = vld [vmem:[%s939 + $0x18] sm:$0xe]
      %v2103 = vld [vmem:[%s939 + $0x24] sm:$0xe]
      %v2104 = vld [vmem:[%s939 + $0x30] sm:$0xe]
      %v2105 = vld [vmem:[%s939 + $0x3c] sm:$0xe]
      %v2106 = vld [vmem:[%s939 + $0x48] sm:$0xe]
      %v2107 = vld [vmem:[%s939 + $0x54] sm:$0xe]
      %v2108 = vld [vmem:[%s939 + $0x60] sm:$0xe]
      %v2109 = vld [vmem:[%s939 + $0x6c] sm:$0xe]
      %v2110 = vld [vmem:[%s939 + $0x78] sm:$0xe]
      %v2111 = vld [vmem:[%s939 + $0x84] sm:$0xe]
      %v2112 = vld [vmem:[%s939 + $0x90] sm:$0xe]
      %v2113 = vld [vmem:[%s939 + $0x9c] sm:$0xe]
      %v2114 = vld [vmem:[%s939 + $0xa8] sm:$0xe]
      %v2115 = vld [vmem:[%s939 + $0xb4] sm:$0xe]
      %v2164 = vrot.slane %v2100, 5
      %v2165 = vrot.slane %v2164, 4
      %v2166 = vrot.slane %v1669, 5
      %v2167 = vsel %vm1555, %v2165, %v2166
      %v2168 = vrot.slane %v2166, 4
      %v2169 = vrot.slane %v1700, 5
      %v2170 = vsel %vm1555, %v2168, %v2169
      %v2171 = vrot.slane %v2101, 5
      %v2172 = vrot.slane %v2171, 4
      %v2173 = vrot.slane %v1671, 5
      %v2174 = vsel %vm1555, %v2172, %v2173
      %v2175 = vrot.slane %v2173, 4
      %v2176 = vrot.slane %v1701, 5
      %v2177 = vsel %vm1555, %v2175, %v2176
      %v2178 = vrot.slane %v2102, 5
      %v2179 = vrot.slane %v2178, 4
      %v2180 = vrot.slane %v1673, 5
      %v2181 = vsel %vm1555, %v2179, %v2180
      %v2182 = vrot.slane %v2180, 4
      %v2183 = vrot.slane %v1702, 5
      %v2184 = vsel %vm1555, %v2182, %v2183
      %v2185 = vrot.slane %v2103, 5
      %v2186 = vrot.slane %v2185, 4
      %v2187 = vrot.slane %v1675, 5
      %v2188 = vsel %vm1555, %v2186, %v2187
      %v2189 = vrot.slane %v2187, 4
      %v2190 = vrot.slane %v1703, 5
      %v2191 = vsel %vm1555, %v2189, %v2190
      %v2192 = vrot.slane %v2104, 5
      %v2193 = vrot.slane %v2192, 4
      %v2194 = vrot.slane %v1677, 5
      %v2195 = vsel %vm1555, %v2193, %v2194
      %v2196 = vrot.slane %v2194, 4
      %v2197 = vrot.slane %v1704, 5
      %v2198 = vsel %vm1555, %v2196, %v2197
      %v2199 = vrot.slane %v2105, 5
      %v2200 = vrot.slane %v2199, 4
      %v2201 = vrot.slane %v1679, 5
      %v2202 = vsel %vm1555, %v2200, %v2201
      %v2203 = vrot.slane %v2201, 4
      %v2204 = vrot.slane %v1705, 5
      %v2205 = vsel %vm1555, %v2203, %v2204
      %v2206 = vrot.slane %v2106, 5
      %v2207 = vrot.slane %v2206, 4
      %v2208 = vrot.slane %v1681, 5
      %v2209 = vsel %vm1555, %v2207, %v2208
      %v2210 = vrot.slane %v2208, 4
      %v2211 = vrot.slane %v1706, 5
      %v2212 = vsel %vm1555, %v2210, %v2211
      %v2213 = vrot.slane %v2107, 5
      %v2214 = vrot.slane %v2213, 4
      %v2215 = vrot.slane %v1683, 5
      %v2216 = vsel %vm1555, %v2214, %v2215
      %v2217 = vrot.slane %v2215, 4
      %v2218 = vrot.slane %v1707, 5
      %v2219 = vsel %vm1555, %v2217, %v2218
      %v2220 = vrot.slane %v2108, 5
      %v2221 = vrot.slane %v2220, 4
      %v2222 = vrot.slane %v1685, 5
      %v2223 = vsel %vm1555, %v2221, %v2222
      %v2224 = vrot.slane %v2222, 4
      %v2225 = vrot.slane %v1708, 5
      %v2226 = vsel %vm1555, %v2224, %v2225
      %v2227 = vrot.slane %v2109, 5
      %v2228 = vrot.slane %v2227, 4
      %v2229 = vrot.slane %v1687, 5
      %v2230 = vsel %vm1555, %v2228, %v2229
      %v2231 = vrot.slane %v2229, 4
      %v2232 = vrot.slane %v1709, 5
      %v2233 = vsel %vm1555, %v2231, %v2232
      %v2234 = vrot.slane %v2110, 5
      %v2235 = vrot.slane %v2234, 4
      %v2236 = vrot.slane %v1689, 5
      %v2237 = vsel %vm1555, %v2235, %v2236
      %v2238 = vrot.slane %v2236, 4
      %v2239 = vrot.slane %v1710, 5
      %v2240 = vsel %vm1555, %v2238, %v2239
      %v2241 = vrot.slane %v2111, 5
      %v2242 = vrot.slane %v2241, 4
      %v2243 = vrot.slane %v1691, 5
      %v2244 = vsel %vm1555, %v2242, %v2243
      %v2245 = vrot.slane %v2243, 4
      %v2246 = vrot.slane %v1711, 5
      %v2247 = vsel %vm1555, %v2245, %v2246
      %v2248 = vrot.slane %v2112, 5
      %v2249 = vrot.slane %v2248, 4
      %v2250 = vrot.slane %v1693, 5
      %v2251 = vsel %vm1555, %v2249, %v2250
      %v2252 = vrot.slane %v2250, 4
      %v2253 = vrot.slane %v1712, 5
      %v2254 = vsel %vm1555, %v2252, %v2253
      %v2255 = vrot.slane %v2113, 5
      %v2256 = vrot.slane %v2255, 4
      %v2257 = vrot.slane %v1695, 5
      %v2258 = vsel %vm1555, %v2256, %v2257
      %v2259 = vrot.slane %v2257, 4
      %v2260 = vrot.slane %v1713, 5
      %v2261 = vsel %vm1555, %v2259, %v2260
      %v2262 = vrot.slane %v2114, 5
      %v2263 = vrot.slane %v2262, 4
      %v2264 = vrot.slane %v1697, 5
      %v2265 = vsel %vm1555, %v2263, %v2264
      %v2266 = vrot.slane %v2264, 4
      %v2267 = vrot.slane %v1714, 5
      %v2268 = vsel %vm1555, %v2266, %v2267
      %v2269 = vrot.slane %v2115, 5
      %v2270 = vrot.slane %v2269, 4
      %v2271 = vrot.slane %v1699, 5
      %v2272 = vsel %vm1555, %v2270, %v2271
      %v2273 = vrot.slane %v2271, 4
      %v2274 = vrot.slane %v1715, 5
      %v2275 = vsel %vm1555, %v2273, %v2274
      %s2276 = scalar_lea.vmem [#allocation2], 24
      %v2277 = vld [vmem:[%s2276] sm:$0xf]
      %v2278 = vld [vmem:[%s2276 + $0x4] sm:$0xf]
      %v2279 = vld [vmem:[%s2276 + $0xc] sm:$0xf]
      %v2280 = vld [vmem:[%s2276 + $0x10] sm:$0xf]
      %v2281 = vld [vmem:[%s2276 + $0x18] sm:$0xf]
      %v2282 = vld [vmem:[%s2276 + $0x1c] sm:$0xf]
      %v2283 = vld [vmem:[%s2276 + $0x24] sm:$0xf]
      %v2284 = vld [vmem:[%s2276 + $0x28] sm:$0xf]
      %v2285 = vld [vmem:[%s2276 + $0x30] sm:$0xf]
      %v2286 = vld [vmem:[%s2276 + $0x34] sm:$0xf]
      %v2287 = vld [vmem:[%s2276 + $0x3c] sm:$0xf]
      %v2288 = vld [vmem:[%s2276 + $0x40] sm:$0xf]
      %v2289 = vld [vmem:[%s2276 + $0x48] sm:$0xf]
      %v2290 = vld [vmem:[%s2276 + $0x4c] sm:$0xf]
      %v2291 = vld [vmem:[%s2276 + $0x54] sm:$0xf]
      %v2292 = vld [vmem:[%s2276 + $0x58] sm:$0xf]
      %v2293 = vld [vmem:[%s2276 + $0x60] sm:$0xf]
      %v2294 = vld [vmem:[%s2276 + $0x64] sm:$0xf]
      %v2295 = vld [vmem:[%s2276 + $0x6c] sm:$0xf]
      %v2296 = vld [vmem:[%s2276 + $0x70] sm:$0xf]
      %v2297 = vld [vmem:[%s2276 + $0x78] sm:$0xf]
      %v2298 = vld [vmem:[%s2276 + $0x7c] sm:$0xf]
      %v2299 = vld [vmem:[%s2276 + $0x84] sm:$0xf]
      %v2300 = vld [vmem:[%s2276 + $0x88] sm:$0xf]
      %v2301 = vld [vmem:[%s2276 + $0x90] sm:$0xf]
      %v2302 = vld [vmem:[%s2276 + $0x94] sm:$0xf]
      %v2303 = vld [vmem:[%s2276 + $0x9c] sm:$0xf]
      %v2304 = vld [vmem:[%s2276 + $0xa0] sm:$0xf]
      %v2305 = vld [vmem:[%s2276 + $0xa8] sm:$0xf]
      %v2306 = vld [vmem:[%s2276 + $0xac] sm:$0xf]
      %v2307 = vld [vmem:[%s2276 + $0xb4] sm:$0xf]
      %v2308 = vld [vmem:[%s2276 + $0xb8] sm:$0xf]
      %v2309 = vld [vmem:[%s2276 + $0x8] sm:$0x1]
      %v2310 = vld [vmem:[%s2276 + $0x14] sm:$0x1]
      %v2311 = vld [vmem:[%s2276 + $0x20] sm:$0x1]
      %v2312 = vld [vmem:[%s2276 + $0x2c] sm:$0x1]
      %v2313 = vld [vmem:[%s2276 + $0x38] sm:$0x1]
      %v2314 = vld [vmem:[%s2276 + $0x44] sm:$0x1]
      %v2315 = vld [vmem:[%s2276 + $0x50] sm:$0x1]
      %v2316 = vld [vmem:[%s2276 + $0x5c] sm:$0x1]
      %v2317 = vld [vmem:[%s2276 + $0x68] sm:$0x1]
      %v2318 = vld [vmem:[%s2276 + $0x74] sm:$0x1]
      %v2319 = vld [vmem:[%s2276 + $0x80] sm:$0x1]
      %v2320 = vld [vmem:[%s2276 + $0x8c] sm:$0x1]
      %v2321 = vld [vmem:[%s2276 + $0x98] sm:$0x1]
      %v2322 = vld [vmem:[%s2276 + $0xa4] sm:$0x1]
      %v2323 = vld [vmem:[%s2276 + $0xb0] sm:$0x1]
      %v2324 = vld [vmem:[%s2276 + $0xbc] sm:$0x1]
      %v2326 = vshrl.u32 %v2277, 16
      %v2328 = vrot.slane %v2326, 4
      %v2329 = vshll.u32 %v2277, 16
      %v2331 = vrot.slane %v2329, 5
      %v2332 = vor.u32 %v2328, %v2331
      %v2333 = vrot.slane %v2332, 4
      %v2335 = vshll.u32 %v2278, 16
      %v2337 = vrot.slane %v2335, 5
      %v2338 = vsel %vm1104, %v2333, %v2337
      %v2339 = vshrl.u32 %v2278, 16
      %v2341 = vrot.slane %v2339, 4
      %v2342 = vor.u32 %v2341, %v2337
      %v2343 = vrot.slane %v2342, 4
      %v2345 = vshll.u32 %v2309, 16
      %v2347 = vrot.slane %v2345, 5
      %v2348 = vsel %vm1104, %v2343, %v2347
      %v2350 = vshrl.u32 %v2279, 16
      %v2352 = vrot.slane %v2350, 4
      %v2353 = vshll.u32 %v2279, 16
      %v2355 = vrot.slane %v2353, 5
      %v2356 = vor.u32 %v2352, %v2355
      %v2357 = vrot.slane %v2356, 4
      %v2359 = vshll.u32 %v2280, 16
      %v2361 = vrot.slane %v2359, 5
      %v2362 = vsel %vm1104, %v2357, %v2361
      %v2363 = vshrl.u32 %v2280, 16
      %v2365 = vrot.slane %v2363, 4
      %v2366 = vor.u32 %v2365, %v2361
      %v2367 = vrot.slane %v2366, 4
      %v2369 = vshll.u32 %v2310, 16
      %v2371 = vrot.slane %v2369, 5
      %v2372 = vsel %vm1104, %v2367, %v2371
      %v2374 = vshrl.u32 %v2281, 16
      %v2376 = vrot.slane %v2374, 4
      %v2377 = vshll.u32 %v2281, 16
      %v2379 = vrot.slane %v2377, 5
      %v2380 = vor.u32 %v2376, %v2379
      %v2381 = vrot.slane %v2380, 4
      %v2383 = vshll.u32 %v2282, 16
      %v2385 = vrot.slane %v2383, 5
      %v2386 = vsel %vm1104, %v2381, %v2385
      %v2387 = vshrl.u32 %v2282, 16
      %v2389 = vrot.slane %v2387, 4
      %v2390 = vor.u32 %v2389, %v2385
      %v2391 = vrot.slane %v2390, 4
      %v2393 = vshll.u32 %v2311, 16
      %v2395 = vrot.slane %v2393, 5
      %v2396 = vsel %vm1104, %v2391, %v2395
      %v2398 = vshrl.u32 %v2283, 16
      %v2400 = vrot.slane %v2398, 4
      %v2401 = vshll.u32 %v2283, 16
      %v2403 = vrot.slane %v2401, 5
      %v2404 = vor.u32 %v2400, %v2403
      %v2405 = vrot.slane %v2404, 4
      %v2407 = vshll.u32 %v2284, 16
      %v2409 = vrot.slane %v2407, 5
      %v2410 = vsel %vm1104, %v2405, %v2409
      %v2411 = vshrl.u32 %v2284, 16
      %v2413 = vrot.slane %v2411, 4
      %v2414 = vor.u32 %v2413, %v2409
      %v2415 = vrot.slane %v2414, 4
      %v2417 = vshll.u32 %v2312, 16
      %v2419 = vrot.slane %v2417, 5
      %v2420 = vsel %vm1104, %v2415, %v2419
      %v2422 = vshrl.u32 %v2285, 16
      %v2424 = vrot.slane %v2422, 4
      %v2425 = vshll.u32 %v2285, 16
      %v2427 = vrot.slane %v2425, 5
      %v2428 = vor.u32 %v2424, %v2427
      %v2429 = vrot.slane %v2428, 4
      %v2431 = vshll.u32 %v2286, 16
      %v2433 = vrot.slane %v2431, 5
      %v2434 = vsel %vm1104, %v2429, %v2433
      %v2435 = vshrl.u32 %v2286, 16
      %v2437 = vrot.slane %v2435, 4
      %v2438 = vor.u32 %v2437, %v2433
      %v2439 = vrot.slane %v2438, 4
      %v2441 = vshll.u32 %v2313, 16
      %v2443 = vrot.slane %v2441, 5
      %v2444 = vsel %vm1104, %v2439, %v2443
      %v2446 = vshrl.u32 %v2287, 16
      %v2448 = vrot.slane %v2446, 4
      %v2449 = vshll.u32 %v2287, 16
      %v2451 = vrot.slane %v2449, 5
      %v2452 = vor.u32 %v2448, %v2451
      %v2453 = vrot.slane %v2452, 4
      %v2455 = vshll.u32 %v2288, 16
      %v2457 = vrot.slane %v2455, 5
      %v2458 = vsel %vm1104, %v2453, %v2457
      %v2459 = vshrl.u32 %v2288, 16
      %v2461 = vrot.slane %v2459, 4
      %v2462 = vor.u32 %v2461, %v2457
      %v2463 = vrot.slane %v2462, 4
      %v2465 = vshll.u32 %v2314, 16
      %v2467 = vrot.slane %v2465, 5
      %v2468 = vsel %vm1104, %v2463, %v2467
      %v2470 = vshrl.u32 %v2289, 16
      %v2472 = vrot.slane %v2470, 4
      %v2473 = vshll.u32 %v2289, 16
      %v2475 = vrot.slane %v2473, 5
      %v2476 = vor.u32 %v2472, %v2475
      %v2477 = vrot.slane %v2476, 4
      %v2479 = vshll.u32 %v2290, 16
      %v2481 = vrot.slane %v2479, 5
      %v2482 = vsel %vm1104, %v2477, %v2481
      %v2483 = vshrl.u32 %v2290, 16
      %v2485 = vrot.slane %v2483, 4
      %v2486 = vor.u32 %v2485, %v2481
      %v2487 = vrot.slane %v2486, 4
      %v2489 = vshll.u32 %v2315, 16
      %v2491 = vrot.slane %v2489, 5
      %v2492 = vsel %vm1104, %v2487, %v2491
      %v2494 = vshrl.u32 %v2291, 16
      %v2496 = vrot.slane %v2494, 4
      %v2497 = vshll.u32 %v2291, 16
      %v2499 = vrot.slane %v2497, 5
      %v2500 = vor.u32 %v2496, %v2499
      %v2501 = vrot.slane %v2500, 4
      %v2503 = vshll.u32 %v2292, 16
      %v2505 = vrot.slane %v2503, 5
      %v2506 = vsel %vm1104, %v2501, %v2505
      %v2507 = vshrl.u32 %v2292, 16
      %v2509 = vrot.slane %v2507, 4
      %v2510 = vor.u32 %v2509, %v2505
      %v2511 = vrot.slane %v2510, 4
      %v2513 = vshll.u32 %v2316, 16
      %v2515 = vrot.slane %v2513, 5
      %v2516 = vsel %vm1104, %v2511, %v2515
      %v2518 = vshrl.u32 %v2293, 16
      %v2520 = vrot.slane %v2518, 4
      %v2521 = vshll.u32 %v2293, 16
      %v2523 = vrot.slane %v2521, 5
      %v2524 = vor.u32 %v2520, %v2523
      %v2525 = vrot.slane %v2524, 4
      %v2527 = vshll.u32 %v2294, 16
      %v2529 = vrot.slane %v2527, 5
      %v2530 = vsel %vm1104, %v2525, %v2529
      %v2531 = vshrl.u32 %v2294, 16
      %v2533 = vrot.slane %v2531, 4
      %v2534 = vor.u32 %v2533, %v2529
      %v2535 = vrot.slane %v2534, 4
      %v2537 = vshll.u32 %v2317, 16
      %v2539 = vrot.slane %v2537, 5
      %v2540 = vsel %vm1104, %v2535, %v2539
      %v2542 = vshrl.u32 %v2295, 16
      %v2544 = vrot.slane %v2542, 4
      %v2545 = vshll.u32 %v2295, 16
      %v2547 = vrot.slane %v2545, 5
      %v2548 = vor.u32 %v2544, %v2547
      %v2549 = vrot.slane %v2548, 4
      %v2551 = vshll.u32 %v2296, 16
      %v2553 = vrot.slane %v2551, 5
      %v2554 = vsel %vm1104, %v2549, %v2553
      %v2555 = vshrl.u32 %v2296, 16
      %v2557 = vrot.slane %v2555, 4
      %v2558 = vor.u32 %v2557, %v2553
      %v2559 = vrot.slane %v2558, 4
      %v2561 = vshll.u32 %v2318, 16
      %v2563 = vrot.slane %v2561, 5
      %v2564 = vsel %vm1104, %v2559, %v2563
      %v2566 = vshrl.u32 %v2297, 16
      %v2568 = vrot.slane %v2566, 4
      %v2569 = vshll.u32 %v2297, 16
      %v2571 = vrot.slane %v2569, 5
      %v2572 = vor.u32 %v2568, %v2571
      %v2573 = vrot.slane %v2572, 4
      %v2575 = vshll.u32 %v2298, 16
      %v2577 = vrot.slane %v2575, 5
      %v2578 = vsel %vm1104, %v2573, %v2577
      %v2579 = vshrl.u32 %v2298, 16
      %v2581 = vrot.slane %v2579, 4
      %v2582 = vor.u32 %v2581, %v2577
      %v2583 = vrot.slane %v2582, 4
      %v2585 = vshll.u32 %v2319, 16
      %v2587 = vrot.slane %v2585, 5
      %v2588 = vsel %vm1104, %v2583, %v2587
      %v2590 = vshrl.u32 %v2299, 16
      %v2592 = vrot.slane %v2590, 4
      %v2593 = vshll.u32 %v2299, 16
      %v2595 = vrot.slane %v2593, 5
      %v2596 = vor.u32 %v2592, %v2595
      %v2597 = vrot.slane %v2596, 4
      %v2599 = vshll.u32 %v2300, 16
      %v2601 = vrot.slane %v2599, 5
      %v2602 = vsel %vm1104, %v2597, %v2601
      %v2603 = vshrl.u32 %v2300, 16
      %v2605 = vrot.slane %v2603, 4
      %v2606 = vor.u32 %v2605, %v2601
      %v2607 = vrot.slane %v2606, 4
      %v2609 = vshll.u32 %v2320, 16
      %v2611 = vrot.slane %v2609, 5
      %v2612 = vsel %vm1104, %v2607, %v2611
      %v2614 = vshrl.u32 %v2301, 16
      %v2616 = vrot.slane %v2614, 4
      %v2617 = vshll.u32 %v2301, 16
      %v2619 = vrot.slane %v2617, 5
      %v2620 = vor.u32 %v2616, %v2619
      %v2621 = vrot.slane %v2620, 4
      %v2623 = vshll.u32 %v2302, 16
      %v2625 = vrot.slane %v2623, 5
      %v2626 = vsel %vm1104, %v2621, %v2625
      %v2627 = vshrl.u32 %v2302, 16
      %v2629 = vrot.slane %v2627, 4
      %v2630 = vor.u32 %v2629, %v2625
      %v2631 = vrot.slane %v2630, 4
      %v2633 = vshll.u32 %v2321, 16
      %v2635 = vrot.slane %v2633, 5
      %v2636 = vsel %vm1104, %v2631, %v2635
      %v2638 = vshrl.u32 %v2303, 16
      %v2640 = vrot.slane %v2638, 4
      %v2641 = vshll.u32 %v2303, 16
      %v2643 = vrot.slane %v2641, 5
      %v2644 = vor.u32 %v2640, %v2643
      %v2645 = vrot.slane %v2644, 4
      %v2647 = vshll.u32 %v2304, 16
      %v2649 = vrot.slane %v2647, 5
      %v2650 = vsel %vm1104, %v2645, %v2649
      %v2651 = vshrl.u32 %v2304, 16
      %v2653 = vrot.slane %v2651, 4
      %v2654 = vor.u32 %v2653, %v2649
      %v2655 = vrot.slane %v2654, 4
      %v2657 = vshll.u32 %v2322, 16
      %v2659 = vrot.slane %v2657, 5
      %v2660 = vsel %vm1104, %v2655, %v2659
      %v2662 = vshrl.u32 %v2305, 16
      %v2664 = vrot.slane %v2662, 4
      %v2665 = vshll.u32 %v2305, 16
      %v2667 = vrot.slane %v2665, 5
      %v2668 = vor.u32 %v2664, %v2667
      %v2669 = vrot.slane %v2668, 4
      %v2671 = vshll.u32 %v2306, 16
      %v2673 = vrot.slane %v2671, 5
      %v2674 = vsel %vm1104, %v2669, %v2673
      %v2675 = vshrl.u32 %v2306, 16
      %v2677 = vrot.slane %v2675, 4
      %v2678 = vor.u32 %v2677, %v2673
      %v2679 = vrot.slane %v2678, 4
      %v2681 = vshll.u32 %v2323, 16
      %v2683 = vrot.slane %v2681, 5
      %v2684 = vsel %vm1104, %v2679, %v2683
      %v2686 = vshrl.u32 %v2307, 16
      %v2688 = vrot.slane %v2686, 4
      %v2689 = vshll.u32 %v2307, 16
      %v2691 = vrot.slane %v2689, 5
      %v2692 = vor.u32 %v2688, %v2691
      %v2693 = vrot.slane %v2692, 4
      %v2695 = vshll.u32 %v2308, 16
      %v2697 = vrot.slane %v2695, 5
      %v2698 = vsel %vm1104, %v2693, %v2697
      %v2699 = vshrl.u32 %v2308, 16
      %v2701 = vrot.slane %v2699, 4
      %v2702 = vor.u32 %v2701, %v2697
      %v2703 = vrot.slane %v2702, 4
      %v2705 = vshll.u32 %v2324, 16
      %v2707 = vrot.slane %v2705, 5
      %v2708 = vsel %vm1104, %v2703, %v2707
      %v2709 = vld [vmem:[%s2276] sm:$0xe]
      %v2710 = vld [vmem:[%s2276 + $0xc] sm:$0xe]
      %v2711 = vld [vmem:[%s2276 + $0x18] sm:$0xe]
      %v2712 = vld [vmem:[%s2276 + $0x24] sm:$0xe]
      %v2713 = vld [vmem:[%s2276 + $0x30] sm:$0xe]
      %v2714 = vld [vmem:[%s2276 + $0x3c] sm:$0xe]
      %v2715 = vld [vmem:[%s2276 + $0x48] sm:$0xe]
      %v2716 = vld [vmem:[%s2276 + $0x54] sm:$0xe]
      %v2717 = vld [vmem:[%s2276 + $0x60] sm:$0xe]
      %v2718 = vld [vmem:[%s2276 + $0x6c] sm:$0xe]
      %v2719 = vld [vmem:[%s2276 + $0x78] sm:$0xe]
      %v2720 = vld [vmem:[%s2276 + $0x84] sm:$0xe]
      %v2721 = vld [vmem:[%s2276 + $0x90] sm:$0xe]
      %v2722 = vld [vmem:[%s2276 + $0x9c] sm:$0xe]
      %v2723 = vld [vmem:[%s2276 + $0xa8] sm:$0xe]
      %v2724 = vld [vmem:[%s2276 + $0xb4] sm:$0xe]
      %v2773 = vrot.slane %v2709, 5
      %v2774 = vrot.slane %v2773, 4
      %v2775 = vrot.slane %v2278, 5
      %v2776 = vsel %vm1555, %v2774, %v2775
      %v2777 = vrot.slane %v2775, 4
      %v2778 = vrot.slane %v2309, 5
      %v2779 = vsel %vm1555, %v2777, %v2778
      %v2780 = vrot.slane %v2710, 5
      %v2781 = vrot.slane %v2780, 4
      %v2782 = vrot.slane %v2280, 5
      %v2783 = vsel %vm1555, %v2781, %v2782
      %v2784 = vrot.slane %v2782, 4
      %v2785 = vrot.slane %v2310, 5
      %v2786 = vsel %vm1555, %v2784, %v2785
      %v2787 = vrot.slane %v2711, 5
      %v2788 = vrot.slane %v2787, 4
      %v2789 = vrot.slane %v2282, 5
      %v2790 = vsel %vm1555, %v2788, %v2789
      %v2791 = vrot.slane %v2789, 4
      %v2792 = vrot.slane %v2311, 5
      %v2793 = vsel %vm1555, %v2791, %v2792
      %v2794 = vrot.slane %v2712, 5
      %v2795 = vrot.slane %v2794, 4
      %v2796 = vrot.slane %v2284, 5
      %v2797 = vsel %vm1555, %v2795, %v2796
      %v2798 = vrot.slane %v2796, 4
      %v2799 = vrot.slane %v2312, 5
      %v2800 = vsel %vm1555, %v2798, %v2799
      %v2801 = vrot.slane %v2713, 5
      %v2802 = vrot.slane %v2801, 4
      %v2803 = vrot.slane %v2286, 5
      %v2804 = vsel %vm1555, %v2802, %v2803
      %v2805 = vrot.slane %v2803, 4
      %v2806 = vrot.slane %v2313, 5
      %v2807 = vsel %vm1555, %v2805, %v2806
      %v2808 = vrot.slane %v2714, 5
      %v2809 = vrot.slane %v2808, 4
      %v2810 = vrot.slane %v2288, 5
      %v2811 = vsel %vm1555, %v2809, %v2810
      %v2812 = vrot.slane %v2810, 4
      %v2813 = vrot.slane %v2314, 5
      %v2814 = vsel %vm1555, %v2812, %v2813
      %v2815 = vrot.slane %v2715, 5
      %v2816 = vrot.slane %v2815, 4
      %v2817 = vrot.slane %v2290, 5
      %v2818 = vsel %vm1555, %v2816, %v2817
      %v2819 = vrot.slane %v2817, 4
      %v2820 = vrot.slane %v2315, 5
      %v2821 = vsel %vm1555, %v2819, %v2820
      %v2822 = vrot.slane %v2716, 5
      %v2823 = vrot.slane %v2822, 4
      %v2824 = vrot.slane %v2292, 5
      %v2825 = vsel %vm1555, %v2823, %v2824
      %v2826 = vrot.slane %v2824, 4
      %v2827 = vrot.slane %v2316, 5
      %v2828 = vsel %vm1555, %v2826, %v2827
      %v2829 = vrot.slane %v2717, 5
      %v2830 = vrot.slane %v2829, 4
      %v2831 = vrot.slane %v2294, 5
      %v2832 = vsel %vm1555, %v2830, %v2831
      %v2833 = vrot.slane %v2831, 4
      %v2834 = vrot.slane %v2317, 5
      %v2835 = vsel %vm1555, %v2833, %v2834
      %v2836 = vrot.slane %v2718, 5
      %v2837 = vrot.slane %v2836, 4
      %v2838 = vrot.slane %v2296, 5
      %v2839 = vsel %vm1555, %v2837, %v2838
      %v2840 = vrot.slane %v2838, 4
      %v2841 = vrot.slane %v2318, 5
      %v2842 = vsel %vm1555, %v2840, %v2841
      %v2843 = vrot.slane %v2719, 5
      %v2844 = vrot.slane %v2843, 4
      %v2845 = vrot.slane %v2298, 5
      %v2846 = vsel %vm1555, %v2844, %v2845
      %v2847 = vrot.slane %v2845, 4
      %v2848 = vrot.slane %v2319, 5
      %v2849 = vsel %vm1555, %v2847, %v2848
      %v2850 = vrot.slane %v2720, 5
      %v2851 = vrot.slane %v2850, 4
      %v2852 = vrot.slane %v2300, 5
      %v2853 = vsel %vm1555, %v2851, %v2852
      %v2854 = vrot.slane %v2852, 4
      %v2855 = vrot.slane %v2320, 5
      %v2856 = vsel %vm1555, %v2854, %v2855
      %v2857 = vrot.slane %v2721, 5
      %v2858 = vrot.slane %v2857, 4
      %v2859 = vrot.slane %v2302, 5
      %v2860 = vsel %vm1555, %v2858, %v2859
      %v2861 = vrot.slane %v2859, 4
      %v2862 = vrot.slane %v2321, 5
      %v2863 = vsel %vm1555, %v2861, %v2862
      %v2864 = vrot.slane %v2722, 5
      %v2865 = vrot.slane %v2864, 4
      %v2866 = vrot.slane %v2304, 5
      %v2867 = vsel %vm1555, %v2865, %v2866
      %v2868 = vrot.slane %v2866, 4
      %v2869 = vrot.slane %v2322, 5
      %v2870 = vsel %vm1555, %v2868, %v2869
      %v2871 = vrot.slane %v2723, 5
      %v2872 = vrot.slane %v2871, 4
      %v2873 = vrot.slane %v2306, 5
      %v2874 = vsel %vm1555, %v2872, %v2873
      %v2875 = vrot.slane %v2873, 4
      %v2876 = vrot.slane %v2323, 5
      %v2877 = vsel %vm1555, %v2875, %v2876
      %v2878 = vrot.slane %v2724, 5
      %v2879 = vrot.slane %v2878, 4
      %v2880 = vrot.slane %v2308, 5
      %v2881 = vsel %vm1555, %v2879, %v2880
      %v2882 = vrot.slane %v2880, 4
      %v2883 = vrot.slane %v2324, 5
      %v2884 = vsel %vm1555, %v2882, %v2883
      %v2901 = vunpack.c.l.b16 %v1054
      %v2902 = vunpack.c.l.b16 %v1055
      %v2903 = vunpack.c.l.b16 %v1056
      %v2904 = vunpack.c.l.b16 %v1057
      %v2905 = vunpack.c.l.b16 %v1058
      %v2906 = vunpack.c.l.b16 %v1059
      %v2907 = vunpack.c.l.b16 %v1060
      %v2908 = vunpack.c.l.b16 %v1061
      %v2909 = vunpack.c.l.b16 %v1062
      %v2910 = vunpack.c.l.b16 %v1063
      %v2911 = vunpack.c.l.b16 %v1064
      %v2912 = vunpack.c.l.b16 %v1065
      %v2913 = vunpack.c.l.b16 %v1066
      %v2914 = vunpack.c.l.b16 %v1067
      %v2915 = vunpack.c.l.b16 %v1068
      %v2916 = vunpack.c.l.b16 %v1069
      %v2917 = vunpack.c.l.b16 %v1070
      %v2918 = vunpack.c.l.b16 %v1071
      %v2919 = vunpack.c.l.b16 %v1072
      %v2920 = vunpack.c.l.b16 %v1073
      %v2921 = vunpack.c.l.b16 %v1074
      %v2922 = vunpack.c.l.b16 %v1075
      %v2923 = vunpack.c.l.b16 %v1076
      %v2924 = vunpack.c.l.b16 %v1077
      %v2925 = vunpack.c.l.b16 %v1078
      %v2926 = vunpack.c.l.b16 %v1079
      %v2927 = vunpack.c.l.b16 %v1080
      %v2928 = vunpack.c.l.b16 %v1081
      %v2929 = vunpack.c.l.b16 %v1082
      %v2930 = vunpack.c.l.b16 %v1083
      %v2931 = vunpack.c.l.b16 %v1084
      %v2932 = vunpack.c.l.b16 %v1085
      %v2933 = vpack.c.b16 %v2902, %v2901
      %v2934 = vpack.c.b16 %v2904, %v2903
      %v2935 = vpack.c.b16 %v2906, %v2905
      %v2936 = vpack.c.b16 %v2908, %v2907
      %v2937 = vpack.c.b16 %v2910, %v2909
      %v2938 = vpack.c.b16 %v2912, %v2911
      %v2939 = vpack.c.b16 %v2914, %v2913
      %v2940 = vpack.c.b16 %v2916, %v2915
      %v2941 = vpack.c.b16 %v2918, %v2917
      %v2942 = vpack.c.b16 %v2920, %v2919
      %v2943 = vpack.c.b16 %v2922, %v2921
      %v2944 = vpack.c.b16 %v2924, %v2923
      %v2945 = vpack.c.b16 %v2926, %v2925
      %v2946 = vpack.c.b16 %v2928, %v2927
      %v2947 = vpack.c.b16 %v2930, %v2929
      %v2948 = vpack.c.b16 %v2932, %v2931
      %v2965 = vunpack.c.l.b16 %v1118
      %v2966 = vunpack.c.l.b16 %v1128
      %v2967 = vunpack.c.l.b16 %v1142
      %v2968 = vunpack.c.l.b16 %v1152
      %v2969 = vunpack.c.l.b16 %v1166
      %v2970 = vunpack.c.l.b16 %v1176
      %v2971 = vunpack.c.l.b16 %v1190
      %v2972 = vunpack.c.l.b16 %v1200
      %v2973 = vunpack.c.l.b16 %v1214
      %v2974 = vunpack.c.l.b16 %v1224
      %v2975 = vunpack.c.l.b16 %v1238
      %v2976 = vunpack.c.l.b16 %v1248
      %v2977 = vunpack.c.l.b16 %v1262
      %v2978 = vunpack.c.l.b16 %v1272
      %v2979 = vunpack.c.l.b16 %v1286
      %v2980 = vunpack.c.l.b16 %v1296
      %v2981 = vunpack.c.l.b16 %v1310
      %v2982 = vunpack.c.l.b16 %v1320
      %v2983 = vunpack.c.l.b16 %v1334
      %v2984 = vunpack.c.l.b16 %v1344
      %v2985 = vunpack.c.l.b16 %v1358
      %v2986 = vunpack.c.l.b16 %v1368
      %v2987 = vunpack.c.l.b16 %v1382
      %v2988 = vunpack.c.l.b16 %v1392
      %v2989 = vunpack.c.l.b16 %v1406
      %v2990 = vunpack.c.l.b16 %v1416
      %v2991 = vunpack.c.l.b16 %v1430
      %v2992 = vunpack.c.l.b16 %v1440
      %v2993 = vunpack.c.l.b16 %v1454
      %v2994 = vunpack.c.l.b16 %v1464
      %v2995 = vunpack.c.l.b16 %v1478
      %v2996 = vunpack.c.l.b16 %v1488
      %v2997 = vpack.c.b16 %v2966, %v2965
      %v2998 = vpack.c.b16 %v2968, %v2967
      %v2999 = vpack.c.b16 %v2970, %v2969
      %v3000 = vpack.c.b16 %v2972, %v2971
      %v3001 = vpack.c.b16 %v2974, %v2973
      %v3002 = vpack.c.b16 %v2976, %v2975
      %v3003 = vpack.c.b16 %v2978, %v2977
      %v3004 = vpack.c.b16 %v2980, %v2979
      %v3005 = vpack.c.b16 %v2982, %v2981
      %v3006 = vpack.c.b16 %v2984, %v2983
      %v3007 = vpack.c.b16 %v2986, %v2985
      %v3008 = vpack.c.b16 %v2988, %v2987
      %v3009 = vpack.c.b16 %v2990, %v2989
      %v3010 = vpack.c.b16 %v2992, %v2991
      %v3011 = vpack.c.b16 %v2994, %v2993
      %v3012 = vpack.c.b16 %v2996, %v2995
      %v3029 = vunpack.c.l.b16 %v1559
      %v3030 = vunpack.c.l.b16 %v1562
      %v3031 = vunpack.c.l.b16 %v1566
      %v3032 = vunpack.c.l.b16 %v1569
      %v3033 = vunpack.c.l.b16 %v1573
      %v3034 = vunpack.c.l.b16 %v1576
      %v3035 = vunpack.c.l.b16 %v1580
      %v3036 = vunpack.c.l.b16 %v1583
      %v3037 = vunpack.c.l.b16 %v1587
      %v3038 = vunpack.c.l.b16 %v1590
      %v3039 = vunpack.c.l.b16 %v1594
      %v3040 = vunpack.c.l.b16 %v1597
      %v3041 = vunpack.c.l.b16 %v1601
      %v3042 = vunpack.c.l.b16 %v1604
      %v3043 = vunpack.c.l.b16 %v1608
      %v3044 = vunpack.c.l.b16 %v1611
      %v3045 = vunpack.c.l.b16 %v1615
      %v3046 = vunpack.c.l.b16 %v1618
      %v3047 = vunpack.c.l.b16 %v1622
      %v3048 = vunpack.c.l.b16 %v1625
      %v3049 = vunpack.c.l.b16 %v1629
      %v3050 = vunpack.c.l.b16 %v1632
      %v3051 = vunpack.c.l.b16 %v1636
      %v3052 = vunpack.c.l.b16 %v1639
      %v3053 = vunpack.c.l.b16 %v1643
      %v3054 = vunpack.c.l.b16 %v1646
      %v3055 = vunpack.c.l.b16 %v1650
      %v3056 = vunpack.c.l.b16 %v1653
      %v3057 = vunpack.c.l.b16 %v1657
      %v3058 = vunpack.c.l.b16 %v1660
      %v3059 = vunpack.c.l.b16 %v1664
      %v3060 = vunpack.c.l.b16 %v1667
      %v3061 = vpack.c.b16 %v3030, %v3029
      %v3062 = vpack.c.b16 %v3032, %v3031
      %v3063 = vpack.c.b16 %v3034, %v3033
      %v3064 = vpack.c.b16 %v3036, %v3035
      %v3065 = vpack.c.b16 %v3038, %v3037
      %v3066 = vpack.c.b16 %v3040, %v3039
      %v3067 = vpack.c.b16 %v3042, %v3041
      %v3068 = vpack.c.b16 %v3044, %v3043
      %v3069 = vpack.c.b16 %v3046, %v3045
      %v3070 = vpack.c.b16 %v3048, %v3047
      %v3071 = vpack.c.b16 %v3050, %v3049
      %v3072 = vpack.c.b16 %v3052, %v3051
      %v3073 = vpack.c.b16 %v3054, %v3053
      %v3074 = vpack.c.b16 %v3056, %v3055
      %v3075 = vpack.c.b16 %v3058, %v3057
      %v3076 = vpack.c.b16 %v3060, %v3059
      %v3109 = vunpack.c.l.b16 %v1668
      %v3110 = vunpack.c.l.b16 %v1669
      %v3111 = vunpack.c.l.b16 %v1670
      %v3112 = vunpack.c.l.b16 %v1671
      %v3113 = vunpack.c.l.b16 %v1672
      %v3114 = vunpack.c.l.b16 %v1673
      %v3115 = vunpack.c.l.b16 %v1674
      %v3116 = vunpack.c.l.b16 %v1675
      %v3117 = vunpack.c.l.b16 %v1676
      %v3118 = vunpack.c.l.b16 %v1677
      %v3119 = vunpack.c.l.b16 %v1678
      %v3120 = vunpack.c.l.b16 %v1679
      %v3121 = vunpack.c.l.b16 %v1680
      %v3122 = vunpack.c.l.b16 %v1681
      %v3123 = vunpack.c.l.b16 %v1682
      %v3124 = vunpack.c.l.b16 %v1683
      %v3125 = vunpack.c.l.b16 %v1684
      %v3126 = vunpack.c.l.b16 %v1685
      %v3127 = vunpack.c.l.b16 %v1686
      %v3128 = vunpack.c.l.b16 %v1687
      %v3129 = vunpack.c.l.b16 %v1688
      %v3130 = vunpack.c.l.b16 %v1689
      %v3131 = vunpack.c.l.b16 %v1690
      %v3132 = vunpack.c.l.b16 %v1691
      %v3133 = vunpack.c.l.b16 %v1692
      %v3134 = vunpack.c.l.b16 %v1693
      %v3135 = vunpack.c.l.b16 %v1694
      %v3136 = vunpack.c.l.b16 %v1695
      %v3137 = vunpack.c.l.b16 %v1696
      %v3138 = vunpack.c.l.b16 %v1697
      %v3139 = vunpack.c.l.b16 %v1698
      %v3140 = vunpack.c.l.b16 %v1699
      %v3141 = vpack.c.b16 %v3110, %v3109
      %v3142 = vpack.c.b16 %v3112, %v3111
      %v3143 = vpack.c.b16 %v3114, %v3113
      %v3144 = vpack.c.b16 %v3116, %v3115
      %v3145 = vpack.c.b16 %v3118, %v3117
      %v3146 = vpack.c.b16 %v3120, %v3119
      %v3147 = vpack.c.b16 %v3122, %v3121
      %v3148 = vpack.c.b16 %v3124, %v3123
      %v3149 = vpack.c.b16 %v3126, %v3125
      %v3150 = vpack.c.b16 %v3128, %v3127
      %v3151 = vpack.c.b16 %v3130, %v3129
      %v3152 = vpack.c.b16 %v3132, %v3131
      %v3153 = vpack.c.b16 %v3134, %v3133
      %v3154 = vpack.c.b16 %v3136, %v3135
      %v3155 = vpack.c.b16 %v3138, %v3137
      %v3156 = vpack.c.b16 %v3140, %v3139
      %v3173 = vunpack.c.l.b16 %v1729
      %v3174 = vunpack.c.l.b16 %v1739
      %v3175 = vunpack.c.l.b16 %v1753
      %v3176 = vunpack.c.l.b16 %v1763
      %v3177 = vunpack.c.l.b16 %v1777
      %v3178 = vunpack.c.l.b16 %v1787
      %v3179 = vunpack.c.l.b16 %v1801
      %v3180 = vunpack.c.l.b16 %v1811
      %v3181 = vunpack.c.l.b16 %v1825
      %v3182 = vunpack.c.l.b16 %v1835
      %v3183 = vunpack.c.l.b16 %v1849
      %v3184 = vunpack.c.l.b16 %v1859
      %v3185 = vunpack.c.l.b16 %v1873
      %v3186 = vunpack.c.l.b16 %v1883
      %v3187 = vunpack.c.l.b16 %v1897
      %v3188 = vunpack.c.l.b16 %v1907
      %v3189 = vunpack.c.l.b16 %v1921
      %v3190 = vunpack.c.l.b16 %v1931
      %v3191 = vunpack.c.l.b16 %v1945
      %v3192 = vunpack.c.l.b16 %v1955
      %v3193 = vunpack.c.l.b16 %v1969
      %v3194 = vunpack.c.l.b16 %v1979
      %v3195 = vunpack.c.l.b16 %v1993
      %v3196 = vunpack.c.l.b16 %v2003
      %v3197 = vunpack.c.l.b16 %v2017
      %v3198 = vunpack.c.l.b16 %v2027
      %v3199 = vunpack.c.l.b16 %v2041
      %v3200 = vunpack.c.l.b16 %v2051
      %v3201 = vunpack.c.l.b16 %v2065
      %v3202 = vunpack.c.l.b16 %v2075
      %v3203 = vunpack.c.l.b16 %v2089
      %v3204 = vunpack.c.l.b16 %v2099
      %v3205 = vpack.c.b16 %v3174, %v3173
      %v3206 = vpack.c.b16 %v3176, %v3175
      %v3207 = vpack.c.b16 %v3178, %v3177
      %v3208 = vpack.c.b16 %v3180, %v3179
      %v3209 = vpack.c.b16 %v3182, %v3181
      %v3210 = vpack.c.b16 %v3184, %v3183
      %v3211 = vpack.c.b16 %v3186, %v3185
      %v3212 = vpack.c.b16 %v3188, %v3187
      %v3213 = vpack.c.b16 %v3190, %v3189
      %v3214 = vpack.c.b16 %v3192, %v3191
      %v3215 = vpack.c.b16 %v3194, %v3193
      %v3216 = vpack.c.b16 %v3196, %v3195
      %v3217 = vpack.c.b16 %v3198, %v3197
      %v3218 = vpack.c.b16 %v3200, %v3199
      %v3219 = vpack.c.b16 %v3202, %v3201
      %v3220 = vpack.c.b16 %v3204, %v3203
      %v3237 = vunpack.c.l.b16 %v2167
      %v3238 = vunpack.c.l.b16 %v2170
      %v3239 = vunpack.c.l.b16 %v2174
      %v3240 = vunpack.c.l.b16 %v2177
      %v3241 = vunpack.c.l.b16 %v2181
      %v3242 = vunpack.c.l.b16 %v2184
      %v3243 = vunpack.c.l.b16 %v2188
      %v3244 = vunpack.c.l.b16 %v2191
      %v3245 = vunpack.c.l.b16 %v2195
      %v3246 = vunpack.c.l.b16 %v2198
      %v3247 = vunpack.c.l.b16 %v2202
      %v3248 = vunpack.c.l.b16 %v2205
      %v3249 = vunpack.c.l.b16 %v2209
      %v3250 = vunpack.c.l.b16 %v2212
      %v3251 = vunpack.c.l.b16 %v2216
      %v3252 = vunpack.c.l.b16 %v2219
      %v3253 = vunpack.c.l.b16 %v2223
      %v3254 = vunpack.c.l.b16 %v2226
      %v3255 = vunpack.c.l.b16 %v2230
      %v3256 = vunpack.c.l.b16 %v2233
      %v3257 = vunpack.c.l.b16 %v2237
      %v3258 = vunpack.c.l.b16 %v2240
      %v3259 = vunpack.c.l.b16 %v2244
      %v3260 = vunpack.c.l.b16 %v2247
      %v3261 = vunpack.c.l.b16 %v2251
      %v3262 = vunpack.c.l.b16 %v2254
      %v3263 = vunpack.c.l.b16 %v2258
      %v3264 = vunpack.c.l.b16 %v2261
      %v3265 = vunpack.c.l.b16 %v2265
      %v3266 = vunpack.c.l.b16 %v2268
      %v3267 = vunpack.c.l.b16 %v2272
      %v3268 = vunpack.c.l.b16 %v2275
      %v3269 = vpack.c.b16 %v3238, %v3237
      %v3270 = vpack.c.b16 %v3240, %v3239
      %v3271 = vpack.c.b16 %v3242, %v3241
      %v3272 = vpack.c.b16 %v3244, %v3243
      %v3273 = vpack.c.b16 %v3246, %v3245
      %v3274 = vpack.c.b16 %v3248, %v3247
      %v3275 = vpack.c.b16 %v3250, %v3249
      %v3276 = vpack.c.b16 %v3252, %v3251
      %v3277 = vpack.c.b16 %v3254, %v3253
      %v3278 = vpack.c.b16 %v3256, %v3255
      %v3279 = vpack.c.b16 %v3258, %v3257
      %v3280 = vpack.c.b16 %v3260, %v3259
      %v3281 = vpack.c.b16 %v3262, %v3261
      %v3282 = vpack.c.b16 %v3264, %v3263
      %v3283 = vpack.c.b16 %v3266, %v3265
      %v3284 = vpack.c.b16 %v3268, %v3267
      %v3317 = vunpack.c.l.b16 %v2277
      %v3318 = vunpack.c.l.b16 %v2278
      %v3319 = vunpack.c.l.b16 %v2279
      %v3320 = vunpack.c.l.b16 %v2280
      %v3321 = vunpack.c.l.b16 %v2281
      %v3322 = vunpack.c.l.b16 %v2282
      %v3323 = vunpack.c.l.b16 %v2283
      %v3324 = vunpack.c.l.b16 %v2284
      %v3325 = vunpack.c.l.b16 %v2285
      %v3326 = vunpack.c.l.b16 %v2286
      %v3327 = vunpack.c.l.b16 %v2287
      %v3328 = vunpack.c.l.b16 %v2288
      %v3329 = vunpack.c.l.b16 %v2289
      %v3330 = vunpack.c.l.b16 %v2290
      %v3331 = vunpack.c.l.b16 %v2291
      %v3332 = vunpack.c.l.b16 %v2292
      %v3333 = vunpack.c.l.b16 %v2293
      %v3334 = vunpack.c.l.b16 %v2294
      %v3335 = vunpack.c.l.b16 %v2295
      %v3336 = vunpack.c.l.b16 %v2296
      %v3337 = vunpack.c.l.b16 %v2297
      %v3338 = vunpack.c.l.b16 %v2298
      %v3339 = vunpack.c.l.b16 %v2299
      %v3340 = vunpack.c.l.b16 %v2300
      %v3341 = vunpack.c.l.b16 %v2301
      %v3342 = vunpack.c.l.b16 %v2302
      %v3343 = vunpack.c.l.b16 %v2303
      %v3344 = vunpack.c.l.b16 %v2304
      %v3345 = vunpack.c.l.b16 %v2305
      %v3346 = vunpack.c.l.b16 %v2306
      %v3347 = vunpack.c.l.b16 %v2307
      %v3348 = vunpack.c.l.b16 %v2308
      %v3349 = vpack.c.b16 %v3318, %v3317
      %v3350 = vpack.c.b16 %v3320, %v3319
      %v3351 = vpack.c.b16 %v3322, %v3321
      %v3352 = vpack.c.b16 %v3324, %v3323
      %v3353 = vpack.c.b16 %v3326, %v3325
      %v3354 = vpack.c.b16 %v3328, %v3327
      %v3355 = vpack.c.b16 %v3330, %v3329
      %v3356 = vpack.c.b16 %v3332, %v3331
      %v3357 = vpack.c.b16 %v3334, %v3333
      %v3358 = vpack.c.b16 %v3336, %v3335
      %v3359 = vpack.c.b16 %v3338, %v3337
      %v3360 = vpack.c.b16 %v3340, %v3339
      %v3361 = vpack.c.b16 %v3342, %v3341
      %v3362 = vpack.c.b16 %v3344, %v3343
      %v3363 = vpack.c.b16 %v3346, %v3345
      %v3364 = vpack.c.b16 %v3348, %v3347
      %v3381 = vunpack.c.l.b16 %v2338
      %v3382 = vunpack.c.l.b16 %v2348
      %v3383 = vunpack.c.l.b16 %v2362
      %v3384 = vunpack.c.l.b16 %v2372
      %v3385 = vunpack.c.l.b16 %v2386
      %v3386 = vunpack.c.l.b16 %v2396
      %v3387 = vunpack.c.l.b16 %v2410
      %v3388 = vunpack.c.l.b16 %v2420
      %v3389 = vunpack.c.l.b16 %v2434
      %v3390 = vunpack.c.l.b16 %v2444
      %v3391 = vunpack.c.l.b16 %v2458
      %v3392 = vunpack.c.l.b16 %v2468
      %v3393 = vunpack.c.l.b16 %v2482
      %v3394 = vunpack.c.l.b16 %v2492
      %v3395 = vunpack.c.l.b16 %v2506
      %v3396 = vunpack.c.l.b16 %v2516
      %v3397 = vunpack.c.l.b16 %v2530
      %v3398 = vunpack.c.l.b16 %v2540
      %v3399 = vunpack.c.l.b16 %v2554
      %v3400 = vunpack.c.l.b16 %v2564
      %v3401 = vunpack.c.l.b16 %v2578
      %v3402 = vunpack.c.l.b16 %v2588
      %v3403 = vunpack.c.l.b16 %v2602
      %v3404 = vunpack.c.l.b16 %v2612
      %v3405 = vunpack.c.l.b16 %v2626
      %v3406 = vunpack.c.l.b16 %v2636
      %v3407 = vunpack.c.l.b16 %v2650
      %v3408 = vunpack.c.l.b16 %v2660
      %v3409 = vunpack.c.l.b16 %v2674
      %v3410 = vunpack.c.l.b16 %v2684
      %v3411 = vunpack.c.l.b16 %v2698
      %v3412 = vunpack.c.l.b16 %v2708
      %v3413 = vpack.c.b16 %v3382, %v3381
      %v3414 = vpack.c.b16 %v3384, %v3383
      %v3415 = vpack.c.b16 %v3386, %v3385
      %v3416 = vpack.c.b16 %v3388, %v3387
      %v3417 = vpack.c.b16 %v3390, %v3389
      %v3418 = vpack.c.b16 %v3392, %v3391
      %v3419 = vpack.c.b16 %v3394, %v3393
      %v3420 = vpack.c.b16 %v3396, %v3395
      %v3421 = vpack.c.b16 %v3398, %v3397
      %v3422 = vpack.c.b16 %v3400, %v3399
      %v3423 = vpack.c.b16 %v3402, %v3401
      %v3424 = vpack.c.b16 %v3404, %v3403
      %v3425 = vpack.c.b16 %v3406, %v3405
      %v3426 = vpack.c.b16 %v3408, %v3407
      %v3427 = vpack.c.b16 %v3410, %v3409
      %v3428 = vpack.c.b16 %v3412, %v3411
      %v3445 = vunpack.c.l.b16 %v2776
      %v3446 = vunpack.c.l.b16 %v2779
      %v3447 = vunpack.c.l.b16 %v2783
      %v3448 = vunpack.c.l.b16 %v2786
      %v3449 = vunpack.c.l.b16 %v2790
      %v3450 = vunpack.c.l.b16 %v2793
      %v3451 = vunpack.c.l.b16 %v2797
      %v3452 = vunpack.c.l.b16 %v2800
      %v3453 = vunpack.c.l.b16 %v2804
      %v3454 = vunpack.c.l.b16 %v2807
      %v3455 = vunpack.c.l.b16 %v2811
      %v3456 = vunpack.c.l.b16 %v2814
      %v3457 = vunpack.c.l.b16 %v2818
      %v3458 = vunpack.c.l.b16 %v2821
      %v3459 = vunpack.c.l.b16 %v2825
      %v3460 = vunpack.c.l.b16 %v2828
      %v3461 = vunpack.c.l.b16 %v2832
      %v3462 = vunpack.c.l.b16 %v2835
      %v3463 = vunpack.c.l.b16 %v2839
      %v3464 = vunpack.c.l.b16 %v2842
      %v3465 = vunpack.c.l.b16 %v2846
      %v3466 = vunpack.c.l.b16 %v2849
      %v3467 = vunpack.c.l.b16 %v2853
      %v3468 = vunpack.c.l.b16 %v2856
      %v3469 = vunpack.c.l.b16 %v2860
      %v3470 = vunpack.c.l.b16 %v2863
      %v3471 = vunpack.c.l.b16 %v2867
      %v3472 = vunpack.c.l.b16 %v2870
      %v3473 = vunpack.c.l.b16 %v2874
      %v3474 = vunpack.c.l.b16 %v2877
      %v3475 = vunpack.c.l.b16 %v2881
      %v3476 = vunpack.c.l.b16 %v2884
      %v3477 = vpack.c.b16 %v3446, %v3445
      %v3478 = vpack.c.b16 %v3448, %v3447
      %v3479 = vpack.c.b16 %v3450, %v3449
      %v3480 = vpack.c.b16 %v3452, %v3451
      %v3481 = vpack.c.b16 %v3454, %v3453
      %v3482 = vpack.c.b16 %v3456, %v3455
      %v3483 = vpack.c.b16 %v3458, %v3457
      %v3484 = vpack.c.b16 %v3460, %v3459
      %v3485 = vpack.c.b16 %v3462, %v3461
      %v3486 = vpack.c.b16 %v3464, %v3463
      %v3487 = vpack.c.b16 %v3466, %v3465
      %v3488 = vpack.c.b16 %v3468, %v3467
      %v3489 = vpack.c.b16 %v3470, %v3469
      %v3490 = vpack.c.b16 %v3472, %v3471
      %v3491 = vpack.c.b16 %v3474, %v3473
      %v3492 = vpack.c.b16 %v3476, %v3475
      %v3509 = vld [vmem:[%s3] sm:$0xf]
      %v3510 = vld [vmem:[%s3 + $0x4] sm:$0xf]
      %v3511 = vld [vmem:[%s3 + $0x8] sm:$0xf]
      %v3512 = vld [vmem:[%s3 + $0xc] sm:$0xf]
      %v3513 = vld [vmem:[%s3 + $0x10] sm:$0xf]
      %v3514 = vld [vmem:[%s3 + $0x14] sm:$0xf]
      %v3515 = vld [vmem:[%s3 + $0x18] sm:$0xf]
      %v3516 = vld [vmem:[%s3 + $0x1c] sm:$0xf]
      %v3517 = vld [vmem:[%s3 + $0x20] sm:$0xf]
      %v3518 = vld [vmem:[%s3 + $0x24] sm:$0xf]
      %v3519 = vld [vmem:[%s3 + $0x28] sm:$0xf]
      %v3520 = vld [vmem:[%s3 + $0x2c] sm:$0xf]
      %v3521 = vld [vmem:[%s3 + $0x30] sm:$0xf]
      %v3522 = vld [vmem:[%s3 + $0x34] sm:$0xf]
      %v3523 = vld [vmem:[%s3 + $0x38] sm:$0xf]
      %v3524 = vld [vmem:[%s3 + $0x3c] sm:$0xf]
      %v3525 = vld [vmem:[%s3 + $0x40] sm:$0xf]
      %v3526 = vld [vmem:[%s3 + $0x44] sm:$0xf]
      %v3527 = vld [vmem:[%s3 + $0x48] sm:$0xf]
      %v3528 = vld [vmem:[%s3 + $0x4c] sm:$0xf]
      %v3529 = vld [vmem:[%s3 + $0x50] sm:$0xf]
      %v3530 = vld [vmem:[%s3 + $0x54] sm:$0xf]
      %v3531 = vld [vmem:[%s3 + $0x58] sm:$0xf]
      %v3532 = vld [vmem:[%s3 + $0x5c] sm:$0xf]
      %v3533 = vld [vmem:[%s3 + $0x60] sm:$0xf]
      %v3534 = vld [vmem:[%s3 + $0x64] sm:$0xf]
      %v3535 = vld [vmem:[%s3 + $0x68] sm:$0xf]
      %v3536 = vld [vmem:[%s3 + $0x6c] sm:$0xf]
      %v3537 = vld [vmem:[%s3 + $0x70] sm:$0xf]
      %v3538 = vld [vmem:[%s3 + $0x74] sm:$0xf]
      %v3539 = vld [vmem:[%s3 + $0x78] sm:$0xf]
      %v3540 = vld [vmem:[%s3 + $0x7c] sm:$0xf]
      %v3541 = vld [vmem:[%s3 + $0x80] sm:$0xf]
      %v3542 = vld [vmem:[%s3 + $0x84] sm:$0xf]
      %v3543 = vld [vmem:[%s3 + $0x88] sm:$0xf]
      %v3544 = vld [vmem:[%s3 + $0x8c] sm:$0xf]
      %v3545 = vld [vmem:[%s3 + $0x90] sm:$0xf]
      %v3546 = vld [vmem:[%s3 + $0x94] sm:$0xf]
      %v3547 = vld [vmem:[%s3 + $0x98] sm:$0xf]
      %v3548 = vld [vmem:[%s3 + $0x9c] sm:$0xf]
      %v3549 = vld [vmem:[%s3 + $0xa0] sm:$0xf]
      %v3550 = vld [vmem:[%s3 + $0xa4] sm:$0xf]
      %v3551 = vld [vmem:[%s3 + $0xa8] sm:$0xf]
      %v3552 = vld [vmem:[%s3 + $0xac] sm:$0xf]
      %v3553 = vld [vmem:[%s3 + $0xb0] sm:$0xf]
      %v3554 = vld [vmem:[%s3 + $0xb4] sm:$0xf]
      %v3555 = vld [vmem:[%s3 + $0xb8] sm:$0xf]
      %v3556 = vld [vmem:[%s3 + $0xbc] sm:$0xf]
      %v3557 = vld [vmem:[%s3 + $0xc0] sm:$0xf]
      %v3558 = vld [vmem:[%s3 + $0xc4] sm:$0xf]
      %v3559 = vld [vmem:[%s3 + $0xc8] sm:$0xf]
      %v3560 = vld [vmem:[%s3 + $0xcc] sm:$0xf]
      %v3561 = vld [vmem:[%s3 + $0xd0] sm:$0xf]
      %v3562 = vld [vmem:[%s3 + $0xd4] sm:$0xf]
      %v3563 = vld [vmem:[%s3 + $0xd8] sm:$0xf]
      %v3564 = vld [vmem:[%s3 + $0xdc] sm:$0xf]
      %v3565 = vld [vmem:[%s3 + $0xe0] sm:$0xf]
      %v3566 = vld [vmem:[%s3 + $0xe4] sm:$0xf]
      %v3567 = vld [vmem:[%s3 + $0xe8] sm:$0xf]
      %v3568 = vld [vmem:[%s3 + $0xec] sm:$0xf]
      %v3569 = vld [vmem:[%s3 + $0xf0] sm:$0xf]
      %v3570 = vld [vmem:[%s3 + $0xf4] sm:$0xf]
      %v3571 = vld [vmem:[%s3 + $0xf8] sm:$0xf]
      %v3572 = vld [vmem:[%s3 + $0xfc] sm:$0xf]
      %v3573 = vld [vmem:[%s3 + $0x100] sm:$0xf]
      %v3574 = vld [vmem:[%s3 + $0x104] sm:$0xf]
      %v3575 = vld [vmem:[%s3 + $0x108] sm:$0xf]
      %v3576 = vld [vmem:[%s3 + $0x10c] sm:$0xf]
      %v3577 = vld [vmem:[%s3 + $0x110] sm:$0xf]
      %v3578 = vld [vmem:[%s3 + $0x114] sm:$0xf]
      %v3579 = vld [vmem:[%s3 + $0x118] sm:$0xf]
      %v3580 = vld [vmem:[%s3 + $0x11c] sm:$0xf]
      %v3581 = vld [vmem:[%s3 + $0x120] sm:$0xf]
      %v3582 = vld [vmem:[%s3 + $0x124] sm:$0xf]
      %v3583 = vld [vmem:[%s3 + $0x128] sm:$0xf]
      %v3584 = vld [vmem:[%s3 + $0x12c] sm:$0xf]
      %v3585 = vld [vmem:[%s3 + $0x130] sm:$0xf]
      %v3586 = vld [vmem:[%s3 + $0x134] sm:$0xf]
      %v3587 = vld [vmem:[%s3 + $0x138] sm:$0xf]
      %v3588 = vld [vmem:[%s3 + $0x13c] sm:$0xf]
      %v3589 = vld [vmem:[%s3 + $0x140] sm:$0xf]
      %v3590 = vld [vmem:[%s3 + $0x144] sm:$0xf]
      %v3591 = vld [vmem:[%s3 + $0x148] sm:$0xf]
      %v3592 = vld [vmem:[%s3 + $0x14c] sm:$0xf]
      %v3593 = vld [vmem:[%s3 + $0x150] sm:$0xf]
      %v3594 = vld [vmem:[%s3 + $0x154] sm:$0xf]
      %v3595 = vld [vmem:[%s3 + $0x158] sm:$0xf]
      %v3596 = vld [vmem:[%s3 + $0x15c] sm:$0xf]
      %v3597 = vld [vmem:[%s3 + $0x160] sm:$0xf]
      %v3598 = vld [vmem:[%s3 + $0x164] sm:$0xf]
      %v3599 = vld [vmem:[%s3 + $0x168] sm:$0xf]
      %v3600 = vld [vmem:[%s3 + $0x16c] sm:$0xf]
      %v3601 = vld [vmem:[%s3 + $0x170] sm:$0xf]
      %v3602 = vld [vmem:[%s3 + $0x174] sm:$0xf]
      %v3603 = vld [vmem:[%s3 + $0x178] sm:$0xf]
      %v3604 = vld [vmem:[%s3 + $0x17c] sm:$0xf]
      %v3605 = vld [vmem:[%s3 + $0x180] sm:$0xf]
      %v3606 = vld [vmem:[%s3 + $0x184] sm:$0xf]
      %v3607 = vld [vmem:[%s3 + $0x188] sm:$0xf]
      %v3608 = vld [vmem:[%s3 + $0x18c] sm:$0xf]
      %v3609 = vld [vmem:[%s3 + $0x190] sm:$0xf]
      %v3610 = vld [vmem:[%s3 + $0x194] sm:$0xf]
      %v3611 = vld [vmem:[%s3 + $0x198] sm:$0xf]
      %v3612 = vld [vmem:[%s3 + $0x19c] sm:$0xf]
      %v3613 = vld [vmem:[%s3 + $0x1a0] sm:$0xf]
      %v3614 = vld [vmem:[%s3 + $0x1a4] sm:$0xf]
      %v3615 = vld [vmem:[%s3 + $0x1a8] sm:$0xf]
      %v3616 = vld [vmem:[%s3 + $0x1ac] sm:$0xf]
      %v3617 = vld [vmem:[%s3 + $0x1b0] sm:$0xf]
      %v3618 = vld [vmem:[%s3 + $0x1b4] sm:$0xf]
      %v3619 = vld [vmem:[%s3 + $0x1b8] sm:$0xf]
      %v3620 = vld [vmem:[%s3 + $0x1bc] sm:$0xf]
      %v3621 = vld [vmem:[%s3 + $0x1c0] sm:$0xf]
      %v3622 = vld [vmem:[%s3 + $0x1c4] sm:$0xf]
      %v3623 = vld [vmem:[%s3 + $0x1c8] sm:$0xf]
      %v3624 = vld [vmem:[%s3 + $0x1cc] sm:$0xf]
      %v3625 = vld [vmem:[%s3 + $0x1d0] sm:$0xf]
      %v3626 = vld [vmem:[%s3 + $0x1d4] sm:$0xf]
      %v3627 = vld [vmem:[%s3 + $0x1d8] sm:$0xf]
      %v3628 = vld [vmem:[%s3 + $0x1dc] sm:$0xf]
      %v3629 = vld [vmem:[%s3 + $0x1e0] sm:$0xf]
      %v3630 = vld [vmem:[%s3 + $0x1e4] sm:$0xf]
      %v3631 = vld [vmem:[%s3 + $0x1e8] sm:$0xf]
      %v3632 = vld [vmem:[%s3 + $0x1ec] sm:$0xf]
      %v3633 = vld [vmem:[%s3 + $0x1f0] sm:$0xf]
      %v3634 = vld [vmem:[%s3 + $0x1f4] sm:$0xf]
      %v3635 = vld [vmem:[%s3 + $0x1f8] sm:$0xf]
      %v3636 = vld [vmem:[%s3 + $0x1fc] sm:$0xf]
      %v3637 = vld [vmem:[%s3 + $0x200] sm:$0xf]
      %v3638 = vld [vmem:[%s3 + $0x204] sm:$0xf]
      %v3639 = vld [vmem:[%s3 + $0x208] sm:$0xf]
      %v3640 = vld [vmem:[%s3 + $0x20c] sm:$0xf]
      %v3641 = vld [vmem:[%s3 + $0x210] sm:$0xf]
      %v3642 = vld [vmem:[%s3 + $0x214] sm:$0xf]
      %v3643 = vld [vmem:[%s3 + $0x218] sm:$0xf]
      %v3644 = vld [vmem:[%s3 + $0x21c] sm:$0xf]
      %v3645 = vld [vmem:[%s3 + $0x220] sm:$0xf]
      %v3646 = vld [vmem:[%s3 + $0x224] sm:$0xf]
      %v3647 = vld [vmem:[%s3 + $0x228] sm:$0xf]
      %v3648 = vld [vmem:[%s3 + $0x22c] sm:$0xf]
      %v3649 = vld [vmem:[%s3 + $0x230] sm:$0xf]
      %v3650 = vld [vmem:[%s3 + $0x234] sm:$0xf]
      %v3651 = vld [vmem:[%s3 + $0x238] sm:$0xf]
      %v3652 = vld [vmem:[%s3 + $0x23c] sm:$0xf]
      %v3653 = vld [vmem:[%s4] sm:$0x1]
      %v3655 = vperm.slane %v3653, 0
      %v3801 = vunpack.c.l.b16 %v3509
      %v3802 = vunpack.c.l.b16 %v3510
      %v3803 = vunpack.c.l.b16 %v3511
      %v3804 = vunpack.c.l.b16 %v3512
      %v3805 = vunpack.c.l.b16 %v3513
      %v3806 = vunpack.c.l.b16 %v3514
      %v3807 = vunpack.c.l.b16 %v3515
      %v3808 = vunpack.c.l.b16 %v3516
      %v3809 = vunpack.c.l.b16 %v3517
      %v3810 = vunpack.c.l.b16 %v3518
      %v3811 = vunpack.c.l.b16 %v3519
      %v3812 = vunpack.c.l.b16 %v3520
      %v3813 = vunpack.c.l.b16 %v3521
      %v3814 = vunpack.c.l.b16 %v3522
      %v3815 = vunpack.c.l.b16 %v3523
      %v3816 = vunpack.c.l.b16 %v3524
      %v3817 = vunpack.c.l.b16 %v3525
      %v3818 = vunpack.c.l.b16 %v3526
      %v3819 = vunpack.c.l.b16 %v3527
      %v3820 = vunpack.c.l.b16 %v3528
      %v3821 = vunpack.c.l.b16 %v3529
      %v3822 = vunpack.c.l.b16 %v3530
      %v3823 = vunpack.c.l.b16 %v3531
      %v3824 = vunpack.c.l.b16 %v3532
      %v3825 = vunpack.c.l.b16 %v3533
      %v3826 = vunpack.c.l.b16 %v3534
      %v3827 = vunpack.c.l.b16 %v3535
      %v3828 = vunpack.c.l.b16 %v3536
      %v3829 = vunpack.c.l.b16 %v3537
      %v3830 = vunpack.c.l.b16 %v3538
      %v3831 = vunpack.c.l.b16 %v3539
      %v3832 = vunpack.c.l.b16 %v3540
      %v3833 = vunpack.c.l.b16 %v3541
      %v3834 = vunpack.c.l.b16 %v3542
      %v3835 = vunpack.c.l.b16 %v3543
      %v3836 = vunpack.c.l.b16 %v3544
      %v3837 = vunpack.c.l.b16 %v3545
      %v3838 = vunpack.c.l.b16 %v3546
      %v3839 = vunpack.c.l.b16 %v3547
      %v3840 = vunpack.c.l.b16 %v3548
      %v3841 = vunpack.c.l.b16 %v3549
      %v3842 = vunpack.c.l.b16 %v3550
      %v3843 = vunpack.c.l.b16 %v3551
      %v3844 = vunpack.c.l.b16 %v3552
      %v3845 = vunpack.c.l.b16 %v3553
      %v3846 = vunpack.c.l.b16 %v3554
      %v3847 = vunpack.c.l.b16 %v3555
      %v3848 = vunpack.c.l.b16 %v3556
      %v3849 = vunpack.c.l.b16 %v3557
      %v3850 = vunpack.c.l.b16 %v3558
      %v3851 = vunpack.c.l.b16 %v3559
      %v3852 = vunpack.c.l.b16 %v3560
      %v3853 = vunpack.c.l.b16 %v3561
      %v3854 = vunpack.c.l.b16 %v3562
      %v3855 = vunpack.c.l.b16 %v3563
      %v3856 = vunpack.c.l.b16 %v3564
      %v3857 = vunpack.c.l.b16 %v3565
      %v3858 = vunpack.c.l.b16 %v3566
      %v3859 = vunpack.c.l.b16 %v3567
      %v3860 = vunpack.c.l.b16 %v3568
      %v3861 = vunpack.c.l.b16 %v3569
      %v3862 = vunpack.c.l.b16 %v3570
      %v3863 = vunpack.c.l.b16 %v3571
      %v3864 = vunpack.c.l.b16 %v3572
      %v3865 = vunpack.c.l.b16 %v3573
      %v3866 = vunpack.c.l.b16 %v3574
      %v3867 = vunpack.c.l.b16 %v3575
      %v3868 = vunpack.c.l.b16 %v3576
      %v3869 = vunpack.c.l.b16 %v3577
      %v3870 = vunpack.c.l.b16 %v3578
      %v3871 = vunpack.c.l.b16 %v3579
      %v3872 = vunpack.c.l.b16 %v3580
      %v3873 = vunpack.c.l.b16 %v3581
      %v3874 = vunpack.c.l.b16 %v3582
      %v3875 = vunpack.c.l.b16 %v3583
      %v3876 = vunpack.c.l.b16 %v3584
      %v3877 = vunpack.c.l.b16 %v3585
      %v3878 = vunpack.c.l.b16 %v3586
      %v3879 = vunpack.c.l.b16 %v3587
      %v3880 = vunpack.c.l.b16 %v3588
      %v3881 = vunpack.c.l.b16 %v3589
      %v3882 = vunpack.c.l.b16 %v3590
      %v3883 = vunpack.c.l.b16 %v3591
      %v3884 = vunpack.c.l.b16 %v3592
      %v3885 = vunpack.c.l.b16 %v3593
      %v3886 = vunpack.c.l.b16 %v3594
      %v3887 = vunpack.c.l.b16 %v3595
      %v3888 = vunpack.c.l.b16 %v3596
      %v3889 = vunpack.c.l.b16 %v3597
      %v3890 = vunpack.c.l.b16 %v3598
      %v3891 = vunpack.c.l.b16 %v3599
      %v3892 = vunpack.c.l.b16 %v3600
      %v3893 = vunpack.c.l.b16 %v3601
      %v3894 = vunpack.c.l.b16 %v3602
      %v3895 = vunpack.c.l.b16 %v3603
      %v3896 = vunpack.c.l.b16 %v3604
      %v3897 = vunpack.c.l.b16 %v3605
      %v3898 = vunpack.c.l.b16 %v3606
      %v3899 = vunpack.c.l.b16 %v3607
      %v3900 = vunpack.c.l.b16 %v3608
      %v3901 = vunpack.c.l.b16 %v3609
      %v3902 = vunpack.c.l.b16 %v3610
      %v3903 = vunpack.c.l.b16 %v3611
      %v3904 = vunpack.c.l.b16 %v3612
      %v3905 = vunpack.c.l.b16 %v3613
      %v3906 = vunpack.c.l.b16 %v3614
      %v3907 = vunpack.c.l.b16 %v3615
      %v3908 = vunpack.c.l.b16 %v3616
      %v3909 = vunpack.c.l.b16 %v3617
      %v3910 = vunpack.c.l.b16 %v3618
      %v3911 = vunpack.c.l.b16 %v3619
      %v3912 = vunpack.c.l.b16 %v3620
      %v3913 = vunpack.c.l.b16 %v3621
      %v3914 = vunpack.c.l.b16 %v3622
      %v3915 = vunpack.c.l.b16 %v3623
      %v3916 = vunpack.c.l.b16 %v3624
      %v3917 = vunpack.c.l.b16 %v3625
      %v3918 = vunpack.c.l.b16 %v3626
      %v3919 = vunpack.c.l.b16 %v3627
      %v3920 = vunpack.c.l.b16 %v3628
      %v3921 = vunpack.c.l.b16 %v3629
      %v3922 = vunpack.c.l.b16 %v3630
      %v3923 = vunpack.c.l.b16 %v3631
      %v3924 = vunpack.c.l.b16 %v3632
      %v3925 = vunpack.c.l.b16 %v3633
      %v3926 = vunpack.c.l.b16 %v3634
      %v3927 = vunpack.c.l.b16 %v3635
      %v3928 = vunpack.c.l.b16 %v3636
      %v3929 = vunpack.c.l.b16 %v3637
      %v3930 = vunpack.c.l.b16 %v3638
      %v3931 = vunpack.c.l.b16 %v3639
      %v3932 = vunpack.c.l.b16 %v3640
      %v3933 = vunpack.c.l.b16 %v3641
      %v3934 = vunpack.c.l.b16 %v3642
      %v3935 = vunpack.c.l.b16 %v3643
      %v3936 = vunpack.c.l.b16 %v3644
      %v3937 = vunpack.c.l.b16 %v3645
      %v3938 = vunpack.c.l.b16 %v3646
      %v3939 = vunpack.c.l.b16 %v3647
      %v3940 = vunpack.c.l.b16 %v3648
      %v3941 = vunpack.c.l.b16 %v3649
      %v3942 = vunpack.c.l.b16 %v3650
      %v3943 = vunpack.c.l.b16 %v3651
      %v3944 = vunpack.c.l.b16 %v3652
      %v3945 = vpack.c.b16 %v3802, %v3801
      %v3946 = vpack.c.b16 %v3804, %v3803
      %v3947 = vpack.c.b16 %v3806, %v3805
      %v3948 = vpack.c.b16 %v3808, %v3807
      %v3949 = vpack.c.b16 %v3810, %v3809
      %v3950 = vpack.c.b16 %v3812, %v3811
      %v3951 = vpack.c.b16 %v3814, %v3813
      %v3952 = vpack.c.b16 %v3816, %v3815
      %v3953 = vpack.c.b16 %v3818, %v3817
      %v3954 = vpack.c.b16 %v3820, %v3819
      %v3955 = vpack.c.b16 %v3822, %v3821
      %v3956 = vpack.c.b16 %v3824, %v3823
      %v3957 = vpack.c.b16 %v3826, %v3825
      %v3958 = vpack.c.b16 %v3828, %v3827
      %v3959 = vpack.c.b16 %v3830, %v3829
      %v3960 = vpack.c.b16 %v3832, %v3831
      %v3961 = vpack.c.b16 %v3834, %v3833
      %v3962 = vpack.c.b16 %v3836, %v3835
      %v3963 = vpack.c.b16 %v3838, %v3837
      %v3964 = vpack.c.b16 %v3840, %v3839
      %v3965 = vpack.c.b16 %v3842, %v3841
      %v3966 = vpack.c.b16 %v3844, %v3843
      %v3967 = vpack.c.b16 %v3846, %v3845
      %v3968 = vpack.c.b16 %v3848, %v3847
      %v3969 = vpack.c.b16 %v3850, %v3849
      %v3970 = vpack.c.b16 %v3852, %v3851
      %v3971 = vpack.c.b16 %v3854, %v3853
      %v3972 = vpack.c.b16 %v3856, %v3855
      %v3973 = vpack.c.b16 %v3858, %v3857
      %v3974 = vpack.c.b16 %v3860, %v3859
      %v3975 = vpack.c.b16 %v3862, %v3861
      %v3976 = vpack.c.b16 %v3864, %v3863
      %v3977 = vpack.c.b16 %v3866, %v3865
      %v3978 = vpack.c.b16 %v3868, %v3867
      %v3979 = vpack.c.b16 %v3870, %v3869
      %v3980 = vpack.c.b16 %v3872, %v3871
      %v3981 = vpack.c.b16 %v3874, %v3873
      %v3982 = vpack.c.b16 %v3876, %v3875
      %v3983 = vpack.c.b16 %v3878, %v3877
      %v3984 = vpack.c.b16 %v3880, %v3879
      %v3985 = vpack.c.b16 %v3882, %v3881
      %v3986 = vpack.c.b16 %v3884, %v3883
      %v3987 = vpack.c.b16 %v3886, %v3885
      %v3988 = vpack.c.b16 %v3888, %v3887
      %v3989 = vpack.c.b16 %v3890, %v3889
      %v3990 = vpack.c.b16 %v3892, %v3891
      %v3991 = vpack.c.b16 %v3894, %v3893
      %v3992 = vpack.c.b16 %v3896, %v3895
      %v3993 = vpack.c.b16 %v3898, %v3897
      %v3994 = vpack.c.b16 %v3900, %v3899
      %v3995 = vpack.c.b16 %v3902, %v3901
      %v3996 = vpack.c.b16 %v3904, %v3903
      %v3997 = vpack.c.b16 %v3906, %v3905
      %v3998 = vpack.c.b16 %v3908, %v3907
      %v3999 = vpack.c.b16 %v3910, %v3909
      %v4000 = vpack.c.b16 %v3912, %v3911
      %v4001 = vpack.c.b16 %v3914, %v3913
      %v4002 = vpack.c.b16 %v3916, %v3915
      %v4003 = vpack.c.b16 %v3918, %v3917
      %v4004 = vpack.c.b16 %v3920, %v3919
      %v4005 = vpack.c.b16 %v3922, %v3921
      %v4006 = vpack.c.b16 %v3924, %v3923
      %v4007 = vpack.c.b16 %v3926, %v3925
      %v4008 = vpack.c.b16 %v3928, %v3927
      %v4009 = vpack.c.b16 %v3930, %v3929
      %v4010 = vpack.c.b16 %v3932, %v3931
      %v4011 = vpack.c.b16 %v3934, %v3933
      %v4012 = vpack.c.b16 %v3936, %v3935
      %v4013 = vpack.c.b16 %v3938, %v3937
      %v4014 = vpack.c.b16 %v3940, %v3939
      %v4015 = vpack.c.b16 %v3942, %v3941
      %v4016 = vpack.c.b16 %v3944, %v3943
      %4089 = vmatpush.bf16.msra.mxu0 %v3952
      %4090 = vmatpush.bf16.msra.mxu0 %v3951
      %4091 = vmatpush.bf16.msra.mxu0 %v3950
      %4092 = vmatpush.bf16.msra.mxu0 %v3949
      %4093 = vmatpush.bf16.msra.mxu0 %v3948
      %4094 = vmatpush.bf16.msra.mxu0 %v3947
      %4095 = vmatpush.bf16.msra.mxu0 %v3946
      %4096 = vmatpush.bf16.msra.mxu0 %v3945
      %4097 = vmatmul.bf16.gmra.mxu0 %v2933
      %v4098 = vpop.f32.mrf.mxu0
      %v4099 = vadd.f32 %v3655, %v4098
      %v4100 = vpop.f32.mrf.mxu0
      %v4101 = vadd.f32 %v3655, %v4100
      %4102 = vmatmul.bf16.gmra.mxu0 %v2934
      %v4103 = vpop.f32.mrf.mxu0
      %v4104 = vadd.f32 %v3655, %v4103
      %v4105 = vpop.f32.mrf.mxu0
      %v4106 = vadd.f32 %v3655, %v4105
      %4107 = vmatmul.bf16.gmra.mxu0 %v2935
      %v4108 = vpop.f32.mrf.mxu0
      %v4109 = vadd.f32 %v3655, %v4108
      %v4110 = vpop.f32.mrf.mxu0
      %v4111 = vadd.f32 %v3655, %v4110
      %4112 = vmatmul.bf16.gmra.mxu0 %v2936
      %v4113 = vpop.f32.mrf.mxu0
      %v4114 = vadd.f32 %v3655, %v4113
      %v4115 = vpop.f32.mrf.mxu0
      %v4116 = vadd.f32 %v3655, %v4115
      %4117 = vmatmul.bf16.gmra.mxu0 %v2937
      %v4118 = vpop.f32.mrf.mxu0
      %v4119 = vadd.f32 %v3655, %v4118
      %v4120 = vpop.f32.mrf.mxu0
      %v4121 = vadd.f32 %v3655, %v4120
      %4122 = vmatmul.bf16.gmra.mxu0 %v2938
      %v4123 = vpop.f32.mrf.mxu0
      %v4124 = vadd.f32 %v3655, %v4123
      %v4125 = vpop.f32.mrf.mxu0
      %v4126 = vadd.f32 %v3655, %v4125
      %4127 = vmatmul.bf16.gmra.mxu0 %v2939
      %v4128 = vpop.f32.mrf.mxu0
      %v4129 = vadd.f32 %v3655, %v4128
      %v4130 = vpop.f32.mrf.mxu0
      %v4131 = vadd.f32 %v3655, %v4130
      %4132 = vmatmul.bf16.gmra.mxu0 %v2940
      %v4133 = vpop.f32.mrf.mxu0
      %v4134 = vadd.f32 %v3655, %v4133
      %v4135 = vpop.f32.mrf.mxu0
      %v4136 = vadd.f32 %v3655, %v4135
      %4137 = vmatmul.bf16.gmra.mxu0 %v2941
      %v4138 = vpop.f32.mrf.mxu0
      %v4139 = vadd.f32 %v3655, %v4138
      %v4140 = vpop.f32.mrf.mxu0
      %v4141 = vadd.f32 %v3655, %v4140
      %4142 = vmatmul.bf16.gmra.mxu0 %v2942
      %v4143 = vpop.f32.mrf.mxu0
      %v4144 = vadd.f32 %v3655, %v4143
      %v4145 = vpop.f32.mrf.mxu0
      %v4146 = vadd.f32 %v3655, %v4145
      %4147 = vmatmul.bf16.gmra.mxu0 %v2943
      %v4148 = vpop.f32.mrf.mxu0
      %v4149 = vadd.f32 %v3655, %v4148
      %v4150 = vpop.f32.mrf.mxu0
      %v4151 = vadd.f32 %v3655, %v4150
      %4152 = vmatmul.bf16.gmra.mxu0 %v2944
      %v4153 = vpop.f32.mrf.mxu0
      %v4154 = vadd.f32 %v3655, %v4153
      %v4155 = vpop.f32.mrf.mxu0
      %v4156 = vadd.f32 %v3655, %v4155
      %4157 = vmatmul.bf16.gmra.mxu0 %v2945
      %v4158 = vpop.f32.mrf.mxu0
      %v4159 = vadd.f32 %v3655, %v4158
      %v4160 = vpop.f32.mrf.mxu0
      %v4161 = vadd.f32 %v3655, %v4160
      %4162 = vmatmul.bf16.gmra.mxu0 %v2946
      %v4163 = vpop.f32.mrf.mxu0
      %v4164 = vadd.f32 %v3655, %v4163
      %v4165 = vpop.f32.mrf.mxu0
      %v4166 = vadd.f32 %v3655, %v4165
      %4167 = vmatmul.bf16.gmra.mxu0 %v2947
      %v4168 = vpop.f32.mrf.mxu0
      %v4169 = vadd.f32 %v3655, %v4168
      %v4170 = vpop.f32.mrf.mxu0
      %v4171 = vadd.f32 %v3655, %v4170
      %4172 = vmatmul.bf16.gmra.mxu0 %v2948
      %v4173 = vpop.f32.mrf.mxu0
      %v4174 = vadd.f32 %v3655, %v4173
      %v4175 = vpop.f32.mrf.mxu0
      %v4176 = vadd.f32 %v3655, %v4175
      %4177 = vdwg.mxu0
      %4178 = vmatpush.bf16.msra.mxu0 %v3960
      %4179 = vmatpush.bf16.msra.mxu0 %v3959
      %4180 = vmatpush.bf16.msra.mxu0 %v3958
      %4181 = vmatpush.bf16.msra.mxu0 %v3957
      %4182 = vmatpush.bf16.msra.mxu0 %v3956
      %4183 = vmatpush.bf16.msra.mxu0 %v3955
      %4184 = vmatpush.bf16.msra.mxu0 %v3954
      %4185 = vmatpush.bf16.msra.mxu0 %v3953
      %4186 = vmatmul.bf16.gmra.mxu0 %v2997
      %v4187 = vpop.f32.mrf.mxu0
      %v4188 = vadd.f32 %v4099, %v4187
      %v4189 = vpop.f32.mrf.mxu0
      %v4190 = vadd.f32 %v4101, %v4189
      %4191 = vmatmul.bf16.gmra.mxu0 %v2998
      %v4192 = vpop.f32.mrf.mxu0
      %v4193 = vadd.f32 %v4104, %v4192
      %v4194 = vpop.f32.mrf.mxu0
      %v4195 = vadd.f32 %v4106, %v4194
      %4196 = vmatmul.bf16.gmra.mxu0 %v2999
      %v4197 = vpop.f32.mrf.mxu0
      %v4198 = vadd.f32 %v4109, %v4197
      %v4199 = vpop.f32.mrf.mxu0
      %v4200 = vadd.f32 %v4111, %v4199
      %4201 = vmatmul.bf16.gmra.mxu0 %v3000
      %v4202 = vpop.f32.mrf.mxu0
      %v4203 = vadd.f32 %v4114, %v4202
      %v4204 = vpop.f32.mrf.mxu0
      %v4205 = vadd.f32 %v4116, %v4204
      %4206 = vmatmul.bf16.gmra.mxu0 %v3001
      %v4207 = vpop.f32.mrf.mxu0
      %v4208 = vadd.f32 %v4119, %v4207
      %v4209 = vpop.f32.mrf.mxu0
      %v4210 = vadd.f32 %v4121, %v4209
      %4211 = vmatmul.bf16.gmra.mxu0 %v3002
      %v4212 = vpop.f32.mrf.mxu0
      %v4213 = vadd.f32 %v4124, %v4212
      %v4214 = vpop.f32.mrf.mxu0
      %v4215 = vadd.f32 %v4126, %v4214
      %4216 = vmatmul.bf16.gmra.mxu0 %v3003
      %v4217 = vpop.f32.mrf.mxu0
      %v4218 = vadd.f32 %v4129, %v4217
      %v4219 = vpop.f32.mrf.mxu0
      %v4220 = vadd.f32 %v4131, %v4219
      %4221 = vmatmul.bf16.gmra.mxu0 %v3004
      %v4222 = vpop.f32.mrf.mxu0
      %v4223 = vadd.f32 %v4134, %v4222
      %v4224 = vpop.f32.mrf.mxu0
      %v4225 = vadd.f32 %v4136, %v4224
      %4226 = vmatmul.bf16.gmra.mxu0 %v3005
      %v4227 = vpop.f32.mrf.mxu0
      %v4228 = vadd.f32 %v4139, %v4227
      %v4229 = vpop.f32.mrf.mxu0
      %v4230 = vadd.f32 %v4141, %v4229
      %4231 = vmatmul.bf16.gmra.mxu0 %v3006
      %v4232 = vpop.f32.mrf.mxu0
      %v4233 = vadd.f32 %v4144, %v4232
      %v4234 = vpop.f32.mrf.mxu0
      %v4235 = vadd.f32 %v4146, %v4234
      %4236 = vmatmul.bf16.gmra.mxu0 %v3007
      %v4237 = vpop.f32.mrf.mxu0
      %v4238 = vadd.f32 %v4149, %v4237
      %v4239 = vpop.f32.mrf.mxu0
      %v4240 = vadd.f32 %v4151, %v4239
      %4241 = vmatmul.bf16.gmra.mxu0 %v3008
      %v4242 = vpop.f32.mrf.mxu0
      %v4243 = vadd.f32 %v4154, %v4242
      %v4244 = vpop.f32.mrf.mxu0
      %v4245 = vadd.f32 %v4156, %v4244
      %4246 = vmatmul.bf16.gmra.mxu0 %v3009
      %v4247 = vpop.f32.mrf.mxu0
      %v4248 = vadd.f32 %v4159, %v4247
      %v4249 = vpop.f32.mrf.mxu0
      %v4250 = vadd.f32 %v4161, %v4249
      %4251 = vmatmul.bf16.gmra.mxu0 %v3010
      %v4252 = vpop.f32.mrf.mxu0
      %v4253 = vadd.f32 %v4164, %v4252
      %v4254 = vpop.f32.mrf.mxu0
      %v4255 = vadd.f32 %v4166, %v4254
      %4256 = vmatmul.bf16.gmra.mxu0 %v3011
      %v4257 = vpop.f32.mrf.mxu0
      %v4258 = vadd.f32 %v4169, %v4257
      %v4259 = vpop.f32.mrf.mxu0
      %v4260 = vadd.f32 %v4171, %v4259
      %4261 = vmatmul.bf16.gmra.mxu0 %v3012
      %v4262 = vpop.f32.mrf.mxu0
      %v4263 = vadd.f32 %v4174, %v4262
      %v4264 = vpop.f32.mrf.mxu0
      %v4265 = vadd.f32 %v4176, %v4264
      %4266 = vdwg.mxu0
      %4267 = vmatpush.bf16.msra.mxu0 %v3968
      %4268 = vmatpush.bf16.msra.mxu0 %v3967
      %4269 = vmatpush.bf16.msra.mxu0 %v3966
      %4270 = vmatpush.bf16.msra.mxu0 %v3965
      %4271 = vmatpush.bf16.msra.mxu0 %v3964
      %4272 = vmatpush.bf16.msra.mxu0 %v3963
      %4273 = vmatpush.bf16.msra.mxu0 %v3962
      %4274 = vmatpush.bf16.msra.mxu0 %v3961
      %4275 = vmatmul.bf16.gmra.mxu0 %v3061
      %v4276 = vpop.f32.mrf.mxu0
      %v4277 = vadd.f32 %v4188, %v4276
      %v4278 = vpop.f32.mrf.mxu0
      %v4279 = vadd.f32 %v4190, %v4278
      %4280 = vmatmul.bf16.gmra.mxu0 %v3062
      %v4281 = vpop.f32.mrf.mxu0
      %v4282 = vadd.f32 %v4193, %v4281
      %v4283 = vpop.f32.mrf.mxu0
      %v4284 = vadd.f32 %v4195, %v4283
      %4285 = vmatmul.bf16.gmra.mxu0 %v3063
      %v4286 = vpop.f32.mrf.mxu0
      %v4287 = vadd.f32 %v4198, %v4286
      %v4288 = vpop.f32.mrf.mxu0
      %v4289 = vadd.f32 %v4200, %v4288
      %4290 = vmatmul.bf16.gmra.mxu0 %v3064
      %v4291 = vpop.f32.mrf.mxu0
      %v4292 = vadd.f32 %v4203, %v4291
      %v4293 = vpop.f32.mrf.mxu0
      %v4294 = vadd.f32 %v4205, %v4293
      %4295 = vmatmul.bf16.gmra.mxu0 %v3065
      %v4296 = vpop.f32.mrf.mxu0
      %v4297 = vadd.f32 %v4208, %v4296
      %v4298 = vpop.f32.mrf.mxu0
      %v4299 = vadd.f32 %v4210, %v4298
      %4300 = vmatmul.bf16.gmra.mxu0 %v3066
      %v4301 = vpop.f32.mrf.mxu0
      %v4302 = vadd.f32 %v4213, %v4301
      %v4303 = vpop.f32.mrf.mxu0
      %v4304 = vadd.f32 %v4215, %v4303
      %4305 = vmatmul.bf16.gmra.mxu0 %v3067
      %v4306 = vpop.f32.mrf.mxu0
      %v4307 = vadd.f32 %v4218, %v4306
      %v4308 = vpop.f32.mrf.mxu0
      %v4309 = vadd.f32 %v4220, %v4308
      %4310 = vmatmul.bf16.gmra.mxu0 %v3068
      %v4311 = vpop.f32.mrf.mxu0
      %v4312 = vadd.f32 %v4223, %v4311
      %v4313 = vpop.f32.mrf.mxu0
      %v4314 = vadd.f32 %v4225, %v4313
      %4315 = vmatmul.bf16.gmra.mxu0 %v3069
      %v4316 = vpop.f32.mrf.mxu0
      %v4317 = vadd.f32 %v4228, %v4316
      %v4318 = vpop.f32.mrf.mxu0
      %v4319 = vadd.f32 %v4230, %v4318
      %4320 = vmatmul.bf16.gmra.mxu0 %v3070
      %v4321 = vpop.f32.mrf.mxu0
      %v4322 = vadd.f32 %v4233, %v4321
      %v4323 = vpop.f32.mrf.mxu0
      %v4324 = vadd.f32 %v4235, %v4323
      %4325 = vmatmul.bf16.gmra.mxu0 %v3071
      %v4326 = vpop.f32.mrf.mxu0
      %v4327 = vadd.f32 %v4238, %v4326
      %v4328 = vpop.f32.mrf.mxu0
      %v4329 = vadd.f32 %v4240, %v4328
      %4330 = vmatmul.bf16.gmra.mxu0 %v3072
      %v4331 = vpop.f32.mrf.mxu0
      %v4332 = vadd.f32 %v4243, %v4331
      %v4333 = vpop.f32.mrf.mxu0
      %v4334 = vadd.f32 %v4245, %v4333
      %4335 = vmatmul.bf16.gmra.mxu0 %v3073
      %v4336 = vpop.f32.mrf.mxu0
      %v4337 = vadd.f32 %v4248, %v4336
      %v4338 = vpop.f32.mrf.mxu0
      %v4339 = vadd.f32 %v4250, %v4338
      %4340 = vmatmul.bf16.gmra.mxu0 %v3074
      %v4341 = vpop.f32.mrf.mxu0
      %v4342 = vadd.f32 %v4253, %v4341
      %v4343 = vpop.f32.mrf.mxu0
      %v4344 = vadd.f32 %v4255, %v4343
      %4345 = vmatmul.bf16.gmra.mxu0 %v3075
      %v4346 = vpop.f32.mrf.mxu0
      %v4347 = vadd.f32 %v4258, %v4346
      %v4348 = vpop.f32.mrf.mxu0
      %v4349 = vadd.f32 %v4260, %v4348
      %4350 = vmatmul.bf16.gmra.mxu0 %v3076
      %v4351 = vpop.f32.mrf.mxu0
      %v4352 = vadd.f32 %v4263, %v4351
      %v4353 = vpop.f32.mrf.mxu0
      %v4354 = vadd.f32 %v4265, %v4353
      %4355 = vdwg.mxu0
      %4356 = vmatpush.bf16.msra.mxu0 %v3976
      %4357 = vmatpush.bf16.msra.mxu0 %v3975
      %4358 = vmatpush.bf16.msra.mxu0 %v3974
      %4359 = vmatpush.bf16.msra.mxu0 %v3973
      %4360 = vmatpush.bf16.msra.mxu0 %v3972
      %4361 = vmatpush.bf16.msra.mxu0 %v3971
      %4362 = vmatpush.bf16.msra.mxu0 %v3970
      %4363 = vmatpush.bf16.msra.mxu0 %v3969
      %4364 = vmatmul.bf16.gmra.mxu0 %v3141
      %v4365 = vpop.f32.mrf.mxu0
      %v4366 = vadd.f32 %v4277, %v4365
      %v4367 = vpop.f32.mrf.mxu0
      %v4368 = vadd.f32 %v4279, %v4367
      %4369 = vmatmul.bf16.gmra.mxu0 %v3142
      %v4370 = vpop.f32.mrf.mxu0
      %v4371 = vadd.f32 %v4282, %v4370
      %v4372 = vpop.f32.mrf.mxu0
      %v4373 = vadd.f32 %v4284, %v4372
      %4374 = vmatmul.bf16.gmra.mxu0 %v3143
      %v4375 = vpop.f32.mrf.mxu0
      %v4376 = vadd.f32 %v4287, %v4375
      %v4377 = vpop.f32.mrf.mxu0
      %v4378 = vadd.f32 %v4289, %v4377
      %4379 = vmatmul.bf16.gmra.mxu0 %v3144
      %v4380 = vpop.f32.mrf.mxu0
      %v4381 = vadd.f32 %v4292, %v4380
      %v4382 = vpop.f32.mrf.mxu0
      %v4383 = vadd.f32 %v4294, %v4382
      %4384 = vmatmul.bf16.gmra.mxu0 %v3145
      %v4385 = vpop.f32.mrf.mxu0
      %v4386 = vadd.f32 %v4297, %v4385
      %v4387 = vpop.f32.mrf.mxu0
      %v4388 = vadd.f32 %v4299, %v4387
      %4389 = vmatmul.bf16.gmra.mxu0 %v3146
      %v4390 = vpop.f32.mrf.mxu0
      %v4391 = vadd.f32 %v4302, %v4390
      %v4392 = vpop.f32.mrf.mxu0
      %v4393 = vadd.f32 %v4304, %v4392
      %4394 = vmatmul.bf16.gmra.mxu0 %v3147
      %v4395 = vpop.f32.mrf.mxu0
      %v4396 = vadd.f32 %v4307, %v4395
      %v4397 = vpop.f32.mrf.mxu0
      %v4398 = vadd.f32 %v4309, %v4397
      %4399 = vmatmul.bf16.gmra.mxu0 %v3148
      %v4400 = vpop.f32.mrf.mxu0
      %v4401 = vadd.f32 %v4312, %v4400
      %v4402 = vpop.f32.mrf.mxu0
      %v4403 = vadd.f32 %v4314, %v4402
      %4404 = vmatmul.bf16.gmra.mxu0 %v3149
      %v4405 = vpop.f32.mrf.mxu0
      %v4406 = vadd.f32 %v4317, %v4405
      %v4407 = vpop.f32.mrf.mxu0
      %v4408 = vadd.f32 %v4319, %v4407
      %4409 = vmatmul.bf16.gmra.mxu0 %v3150
      %v4410 = vpop.f32.mrf.mxu0
      %v4411 = vadd.f32 %v4322, %v4410
      %v4412 = vpop.f32.mrf.mxu0
      %v4413 = vadd.f32 %v4324, %v4412
      %4414 = vmatmul.bf16.gmra.mxu0 %v3151
      %v4415 = vpop.f32.mrf.mxu0
      %v4416 = vadd.f32 %v4327, %v4415
      %v4417 = vpop.f32.mrf.mxu0
      %v4418 = vadd.f32 %v4329, %v4417
      %4419 = vmatmul.bf16.gmra.mxu0 %v3152
      %v4420 = vpop.f32.mrf.mxu0
      %v4421 = vadd.f32 %v4332, %v4420
      %v4422 = vpop.f32.mrf.mxu0
      %v4423 = vadd.f32 %v4334, %v4422
      %4424 = vmatmul.bf16.gmra.mxu0 %v3153
      %v4425 = vpop.f32.mrf.mxu0
      %v4426 = vadd.f32 %v4337, %v4425
      %v4427 = vpop.f32.mrf.mxu0
      %v4428 = vadd.f32 %v4339, %v4427
      %4429 = vmatmul.bf16.gmra.mxu0 %v3154
      %v4430 = vpop.f32.mrf.mxu0
      %v4431 = vadd.f32 %v4342, %v4430
      %v4432 = vpop.f32.mrf.mxu0
      %v4433 = vadd.f32 %v4344, %v4432
      %4434 = vmatmul.bf16.gmra.mxu0 %v3155
      %v4435 = vpop.f32.mrf.mxu0
      %v4436 = vadd.f32 %v4347, %v4435
      %v4437 = vpop.f32.mrf.mxu0
      %v4438 = vadd.f32 %v4349, %v4437
      %4439 = vmatmul.bf16.gmra.mxu0 %v3156
      %v4440 = vpop.f32.mrf.mxu0
      %v4441 = vadd.f32 %v4352, %v4440
      %v4442 = vpop.f32.mrf.mxu0
      %v4443 = vadd.f32 %v4354, %v4442
      %4444 = vdwg.mxu0
      %4445 = vmatpush.bf16.msra.mxu0 %v3984
      %4446 = vmatpush.bf16.msra.mxu0 %v3983
      %4447 = vmatpush.bf16.msra.mxu0 %v3982
      %4448 = vmatpush.bf16.msra.mxu0 %v3981
      %4449 = vmatpush.bf16.msra.mxu0 %v3980
      %4450 = vmatpush.bf16.msra.mxu0 %v3979
      %4451 = vmatpush.bf16.msra.mxu0 %v3978
      %4452 = vmatpush.bf16.msra.mxu0 %v3977
      %4453 = vmatmul.bf16.gmra.mxu0 %v3205
      %v4454 = vpop.f32.mrf.mxu0
      %v4455 = vadd.f32 %v4366, %v4454
      %v4456 = vpop.f32.mrf.mxu0
      %v4457 = vadd.f32 %v4368, %v4456
      %4458 = vmatmul.bf16.gmra.mxu0 %v3206
      %v4459 = vpop.f32.mrf.mxu0
      %v4460 = vadd.f32 %v4371, %v4459
      %v4461 = vpop.f32.mrf.mxu0
      %v4462 = vadd.f32 %v4373, %v4461
      %4463 = vmatmul.bf16.gmra.mxu0 %v3207
      %v4464 = vpop.f32.mrf.mxu0
      %v4465 = vadd.f32 %v4376, %v4464
      %v4466 = vpop.f32.mrf.mxu0
      %v4467 = vadd.f32 %v4378, %v4466
      %4468 = vmatmul.bf16.gmra.mxu0 %v3208
      %v4469 = vpop.f32.mrf.mxu0
      %v4470 = vadd.f32 %v4381, %v4469
      %v4471 = vpop.f32.mrf.mxu0
      %v4472 = vadd.f32 %v4383, %v4471
      %4473 = vmatmul.bf16.gmra.mxu0 %v3209
      %v4474 = vpop.f32.mrf.mxu0
      %v4475 = vadd.f32 %v4386, %v4474
      %v4476 = vpop.f32.mrf.mxu0
      %v4477 = vadd.f32 %v4388, %v4476
      %4478 = vmatmul.bf16.gmra.mxu0 %v3210
      %v4479 = vpop.f32.mrf.mxu0
      %v4480 = vadd.f32 %v4391, %v4479
      %v4481 = vpop.f32.mrf.mxu0
      %v4482 = vadd.f32 %v4393, %v4481
      %4483 = vmatmul.bf16.gmra.mxu0 %v3211
      %v4484 = vpop.f32.mrf.mxu0
      %v4485 = vadd.f32 %v4396, %v4484
      %v4486 = vpop.f32.mrf.mxu0
      %v4487 = vadd.f32 %v4398, %v4486
      %4488 = vmatmul.bf16.gmra.mxu0 %v3212
      %v4489 = vpop.f32.mrf.mxu0
      %v4490 = vadd.f32 %v4401, %v4489
      %v4491 = vpop.f32.mrf.mxu0
      %v4492 = vadd.f32 %v4403, %v4491
      %4493 = vmatmul.bf16.gmra.mxu0 %v3213
      %v4494 = vpop.f32.mrf.mxu0
      %v4495 = vadd.f32 %v4406, %v4494
      %v4496 = vpop.f32.mrf.mxu0
      %v4497 = vadd.f32 %v4408, %v4496
      %4498 = vmatmul.bf16.gmra.mxu0 %v3214
      %v4499 = vpop.f32.mrf.mxu0
      %v4500 = vadd.f32 %v4411, %v4499
      %v4501 = vpop.f32.mrf.mxu0
      %v4502 = vadd.f32 %v4413, %v4501
      %4503 = vmatmul.bf16.gmra.mxu0 %v3215
      %v4504 = vpop.f32.mrf.mxu0
      %v4505 = vadd.f32 %v4416, %v4504
      %v4506 = vpop.f32.mrf.mxu0
      %v4507 = vadd.f32 %v4418, %v4506
      %4508 = vmatmul.bf16.gmra.mxu0 %v3216
      %v4509 = vpop.f32.mrf.mxu0
      %v4510 = vadd.f32 %v4421, %v4509
      %v4511 = vpop.f32.mrf.mxu0
      %v4512 = vadd.f32 %v4423, %v4511
      %4513 = vmatmul.bf16.gmra.mxu0 %v3217
      %v4514 = vpop.f32.mrf.mxu0
      %v4515 = vadd.f32 %v4426, %v4514
      %v4516 = vpop.f32.mrf.mxu0
      %v4517 = vadd.f32 %v4428, %v4516
      %4518 = vmatmul.bf16.gmra.mxu0 %v3218
      %v4519 = vpop.f32.mrf.mxu0
      %v4520 = vadd.f32 %v4431, %v4519
      %v4521 = vpop.f32.mrf.mxu0
      %v4522 = vadd.f32 %v4433, %v4521
      %4523 = vmatmul.bf16.gmra.mxu0 %v3219
      %v4524 = vpop.f32.mrf.mxu0
      %v4525 = vadd.f32 %v4436, %v4524
      %v4526 = vpop.f32.mrf.mxu0
      %v4527 = vadd.f32 %v4438, %v4526
      %4528 = vmatmul.bf16.gmra.mxu0 %v3220
      %v4529 = vpop.f32.mrf.mxu0
      %v4530 = vadd.f32 %v4441, %v4529
      %v4531 = vpop.f32.mrf.mxu0
      %v4532 = vadd.f32 %v4443, %v4531
      %4533 = vdwg.mxu0
      %4534 = vmatpush.bf16.msra.mxu0 %v3992
      %4535 = vmatpush.bf16.msra.mxu0 %v3991
      %4536 = vmatpush.bf16.msra.mxu0 %v3990
      %4537 = vmatpush.bf16.msra.mxu0 %v3989
      %4538 = vmatpush.bf16.msra.mxu0 %v3988
      %4539 = vmatpush.bf16.msra.mxu0 %v3987
      %4540 = vmatpush.bf16.msra.mxu0 %v3986
      %4541 = vmatpush.bf16.msra.mxu0 %v3985
      %4542 = vmatmul.bf16.gmra.mxu0 %v3269
      %v4543 = vpop.f32.mrf.mxu0
      %v4544 = vadd.f32 %v4455, %v4543
      %v4545 = vpop.f32.mrf.mxu0
      %v4546 = vadd.f32 %v4457, %v4545
      %4547 = vmatmul.bf16.gmra.mxu0 %v3270
      %v4548 = vpop.f32.mrf.mxu0
      %v4549 = vadd.f32 %v4460, %v4548
      %v4550 = vpop.f32.mrf.mxu0
      %v4551 = vadd.f32 %v4462, %v4550
      %4552 = vmatmul.bf16.gmra.mxu0 %v3271
      %v4553 = vpop.f32.mrf.mxu0
      %v4554 = vadd.f32 %v4465, %v4553
      %v4555 = vpop.f32.mrf.mxu0
      %v4556 = vadd.f32 %v4467, %v4555
      %4557 = vmatmul.bf16.gmra.mxu0 %v3272
      %v4558 = vpop.f32.mrf.mxu0
      %v4559 = vadd.f32 %v4470, %v4558
      %v4560 = vpop.f32.mrf.mxu0
      %v4561 = vadd.f32 %v4472, %v4560
      %4562 = vmatmul.bf16.gmra.mxu0 %v3273
      %v4563 = vpop.f32.mrf.mxu0
      %v4564 = vadd.f32 %v4475, %v4563
      %v4565 = vpop.f32.mrf.mxu0
      %v4566 = vadd.f32 %v4477, %v4565
      %4567 = vmatmul.bf16.gmra.mxu0 %v3274
      %v4568 = vpop.f32.mrf.mxu0
      %v4569 = vadd.f32 %v4480, %v4568
      %v4570 = vpop.f32.mrf.mxu0
      %v4571 = vadd.f32 %v4482, %v4570
      %4572 = vmatmul.bf16.gmra.mxu0 %v3275
      %v4573 = vpop.f32.mrf.mxu0
      %v4574 = vadd.f32 %v4485, %v4573
      %v4575 = vpop.f32.mrf.mxu0
      %v4576 = vadd.f32 %v4487, %v4575
      %4577 = vmatmul.bf16.gmra.mxu0 %v3276
      %v4578 = vpop.f32.mrf.mxu0
      %v4579 = vadd.f32 %v4490, %v4578
      %v4580 = vpop.f32.mrf.mxu0
      %v4581 = vadd.f32 %v4492, %v4580
      %4582 = vmatmul.bf16.gmra.mxu0 %v3277
      %v4583 = vpop.f32.mrf.mxu0
      %v4584 = vadd.f32 %v4495, %v4583
      %v4585 = vpop.f32.mrf.mxu0
      %v4586 = vadd.f32 %v4497, %v4585
      %4587 = vmatmul.bf16.gmra.mxu0 %v3278
      %v4588 = vpop.f32.mrf.mxu0
      %v4589 = vadd.f32 %v4500, %v4588
      %v4590 = vpop.f32.mrf.mxu0
      %v4591 = vadd.f32 %v4502, %v4590
      %4592 = vmatmul.bf16.gmra.mxu0 %v3279
      %v4593 = vpop.f32.mrf.mxu0
      %v4594 = vadd.f32 %v4505, %v4593
      %v4595 = vpop.f32.mrf.mxu0
      %v4596 = vadd.f32 %v4507, %v4595
      %4597 = vmatmul.bf16.gmra.mxu0 %v3280
      %v4598 = vpop.f32.mrf.mxu0
      %v4599 = vadd.f32 %v4510, %v4598
      %v4600 = vpop.f32.mrf.mxu0
      %v4601 = vadd.f32 %v4512, %v4600
      %4602 = vmatmul.bf16.gmra.mxu0 %v3281
      %v4603 = vpop.f32.mrf.mxu0
      %v4604 = vadd.f32 %v4515, %v4603
      %v4605 = vpop.f32.mrf.mxu0
      %v4606 = vadd.f32 %v4517, %v4605
      %4607 = vmatmul.bf16.gmra.mxu0 %v3282
      %v4608 = vpop.f32.mrf.mxu0
      %v4609 = vadd.f32 %v4520, %v4608
      %v4610 = vpop.f32.mrf.mxu0
      %v4611 = vadd.f32 %v4522, %v4610
      %4612 = vmatmul.bf16.gmra.mxu0 %v3283
      %v4613 = vpop.f32.mrf.mxu0
      %v4614 = vadd.f32 %v4525, %v4613
      %v4615 = vpop.f32.mrf.mxu0
      %v4616 = vadd.f32 %v4527, %v4615
      %4617 = vmatmul.bf16.gmra.mxu0 %v3284
      %v4618 = vpop.f32.mrf.mxu0
      %v4619 = vadd.f32 %v4530, %v4618
      %v4620 = vpop.f32.mrf.mxu0
      %v4621 = vadd.f32 %v4532, %v4620
      %4622 = vdwg.mxu0
      %4623 = vmatpush.bf16.msra.mxu0 %v4000
      %4624 = vmatpush.bf16.msra.mxu0 %v3999
      %4625 = vmatpush.bf16.msra.mxu0 %v3998
      %4626 = vmatpush.bf16.msra.mxu0 %v3997
      %4627 = vmatpush.bf16.msra.mxu0 %v3996
      %4628 = vmatpush.bf16.msra.mxu0 %v3995
      %4629 = vmatpush.bf16.msra.mxu0 %v3994
      %4630 = vmatpush.bf16.msra.mxu0 %v3993
      %4631 = vmatmul.bf16.gmra.mxu0 %v3349
      %v4632 = vpop.f32.mrf.mxu0
      %v4633 = vadd.f32 %v4544, %v4632
      %v4634 = vpop.f32.mrf.mxu0
      %v4635 = vadd.f32 %v4546, %v4634
      %4636 = vmatmul.bf16.gmra.mxu0 %v3350
      %v4637 = vpop.f32.mrf.mxu0
      %v4638 = vadd.f32 %v4549, %v4637
      %v4639 = vpop.f32.mrf.mxu0
      %v4640 = vadd.f32 %v4551, %v4639
      %4641 = vmatmul.bf16.gmra.mxu0 %v3351
      %v4642 = vpop.f32.mrf.mxu0
      %v4643 = vadd.f32 %v4554, %v4642
      %v4644 = vpop.f32.mrf.mxu0
      %v4645 = vadd.f32 %v4556, %v4644
      %4646 = vmatmul.bf16.gmra.mxu0 %v3352
      %v4647 = vpop.f32.mrf.mxu0
      %v4648 = vadd.f32 %v4559, %v4647
      %v4649 = vpop.f32.mrf.mxu0
      %v4650 = vadd.f32 %v4561, %v4649
      %4651 = vmatmul.bf16.gmra.mxu0 %v3353
      %v4652 = vpop.f32.mrf.mxu0
      %v4653 = vadd.f32 %v4564, %v4652
      %v4654 = vpop.f32.mrf.mxu0
      %v4655 = vadd.f32 %v4566, %v4654
      %4656 = vmatmul.bf16.gmra.mxu0 %v3354
      %v4657 = vpop.f32.mrf.mxu0
      %v4658 = vadd.f32 %v4569, %v4657
      %v4659 = vpop.f32.mrf.mxu0
      %v4660 = vadd.f32 %v4571, %v4659
      %4661 = vmatmul.bf16.gmra.mxu0 %v3355
      %v4662 = vpop.f32.mrf.mxu0
      %v4663 = vadd.f32 %v4574, %v4662
      %v4664 = vpop.f32.mrf.mxu0
      %v4665 = vadd.f32 %v4576, %v4664
      %4666 = vmatmul.bf16.gmra.mxu0 %v3356
      %v4667 = vpop.f32.mrf.mxu0
      %v4668 = vadd.f32 %v4579, %v4667
      %v4669 = vpop.f32.mrf.mxu0
      %v4670 = vadd.f32 %v4581, %v4669
      %4671 = vmatmul.bf16.gmra.mxu0 %v3357
      %v4672 = vpop.f32.mrf.mxu0
      %v4673 = vadd.f32 %v4584, %v4672
      %v4674 = vpop.f32.mrf.mxu0
      %v4675 = vadd.f32 %v4586, %v4674
      %4676 = vmatmul.bf16.gmra.mxu0 %v3358
      %v4677 = vpop.f32.mrf.mxu0
      %v4678 = vadd.f32 %v4589, %v4677
      %v4679 = vpop.f32.mrf.mxu0
      %v4680 = vadd.f32 %v4591, %v4679
      %4681 = vmatmul.bf16.gmra.mxu0 %v3359
      %v4682 = vpop.f32.mrf.mxu0
      %v4683 = vadd.f32 %v4594, %v4682
      %v4684 = vpop.f32.mrf.mxu0
      %v4685 = vadd.f32 %v4596, %v4684
      %4686 = vmatmul.bf16.gmra.mxu0 %v3360
      %v4687 = vpop.f32.mrf.mxu0
      %v4688 = vadd.f32 %v4599, %v4687
      %v4689 = vpop.f32.mrf.mxu0
      %v4690 = vadd.f32 %v4601, %v4689
      %4691 = vmatmul.bf16.gmra.mxu0 %v3361
      %v4692 = vpop.f32.mrf.mxu0
      %v4693 = vadd.f32 %v4604, %v4692
      %v4694 = vpop.f32.mrf.mxu0
      %v4695 = vadd.f32 %v4606, %v4694
      %4696 = vmatmul.bf16.gmra.mxu0 %v3362
      %v4697 = vpop.f32.mrf.mxu0
      %v4698 = vadd.f32 %v4609, %v4697
      %v4699 = vpop.f32.mrf.mxu0
      %v4700 = vadd.f32 %v4611, %v4699
      %4701 = vmatmul.bf16.gmra.mxu0 %v3363
      %v4702 = vpop.f32.mrf.mxu0
      %v4703 = vadd.f32 %v4614, %v4702
      %v4704 = vpop.f32.mrf.mxu0
      %v4705 = vadd.f32 %v4616, %v4704
      %4706 = vmatmul.bf16.gmra.mxu0 %v3364
      %v4707 = vpop.f32.mrf.mxu0
      %v4708 = vadd.f32 %v4619, %v4707
      %v4709 = vpop.f32.mrf.mxu0
      %v4710 = vadd.f32 %v4621, %v4709
      %4711 = vdwg.mxu0
      %4712 = vmatpush.bf16.msra.mxu0 %v4008
      %4713 = vmatpush.bf16.msra.mxu0 %v4007
      %4714 = vmatpush.bf16.msra.mxu0 %v4006
      %4715 = vmatpush.bf16.msra.mxu0 %v4005
      %4716 = vmatpush.bf16.msra.mxu0 %v4004
      %4717 = vmatpush.bf16.msra.mxu0 %v4003
      %4718 = vmatpush.bf16.msra.mxu0 %v4002
      %4719 = vmatpush.bf16.msra.mxu0 %v4001
      %4720 = vmatmul.bf16.gmra.mxu0 %v3413
      %v4721 = vpop.f32.mrf.mxu0
      %v4722 = vadd.f32 %v4633, %v4721
      %v4723 = vpop.f32.mrf.mxu0
      %v4724 = vadd.f32 %v4635, %v4723
      %4725 = vmatmul.bf16.gmra.mxu0 %v3414
      %v4726 = vpop.f32.mrf.mxu0
      %v4727 = vadd.f32 %v4638, %v4726
      %v4728 = vpop.f32.mrf.mxu0
      %v4729 = vadd.f32 %v4640, %v4728
      %4730 = vmatmul.bf16.gmra.mxu0 %v3415
      %v4731 = vpop.f32.mrf.mxu0
      %v4732 = vadd.f32 %v4643, %v4731
      %v4733 = vpop.f32.mrf.mxu0
      %v4734 = vadd.f32 %v4645, %v4733
      %4735 = vmatmul.bf16.gmra.mxu0 %v3416
      %v4736 = vpop.f32.mrf.mxu0
      %v4737 = vadd.f32 %v4648, %v4736
      %v4738 = vpop.f32.mrf.mxu0
      %v4739 = vadd.f32 %v4650, %v4738
      %4740 = vmatmul.bf16.gmra.mxu0 %v3417
      %v4741 = vpop.f32.mrf.mxu0
      %v4742 = vadd.f32 %v4653, %v4741
      %v4743 = vpop.f32.mrf.mxu0
      %v4744 = vadd.f32 %v4655, %v4743
      %4745 = vmatmul.bf16.gmra.mxu0 %v3418
      %v4746 = vpop.f32.mrf.mxu0
      %v4747 = vadd.f32 %v4658, %v4746
      %v4748 = vpop.f32.mrf.mxu0
      %v4749 = vadd.f32 %v4660, %v4748
      %4750 = vmatmul.bf16.gmra.mxu0 %v3419
      %v4751 = vpop.f32.mrf.mxu0
      %v4752 = vadd.f32 %v4663, %v4751
      %v4753 = vpop.f32.mrf.mxu0
      %v4754 = vadd.f32 %v4665, %v4753
      %4755 = vmatmul.bf16.gmra.mxu0 %v3420
      %v4756 = vpop.f32.mrf.mxu0
      %v4757 = vadd.f32 %v4668, %v4756
      %v4758 = vpop.f32.mrf.mxu0
      %v4759 = vadd.f32 %v4670, %v4758
      %4760 = vmatmul.bf16.gmra.mxu0 %v3421
      %v4761 = vpop.f32.mrf.mxu0
      %v4762 = vadd.f32 %v4673, %v4761
      %v4763 = vpop.f32.mrf.mxu0
      %v4764 = vadd.f32 %v4675, %v4763
      %4765 = vmatmul.bf16.gmra.mxu0 %v3422
      %v4766 = vpop.f32.mrf.mxu0
      %v4767 = vadd.f32 %v4678, %v4766
      %v4768 = vpop.f32.mrf.mxu0
      %v4769 = vadd.f32 %v4680, %v4768
      %4770 = vmatmul.bf16.gmra.mxu0 %v3423
      %v4771 = vpop.f32.mrf.mxu0
      %v4772 = vadd.f32 %v4683, %v4771
      %v4773 = vpop.f32.mrf.mxu0
      %v4774 = vadd.f32 %v4685, %v4773
      %4775 = vmatmul.bf16.gmra.mxu0 %v3424
      %v4776 = vpop.f32.mrf.mxu0
      %v4777 = vadd.f32 %v4688, %v4776
      %v4778 = vpop.f32.mrf.mxu0
      %v4779 = vadd.f32 %v4690, %v4778
      %4780 = vmatmul.bf16.gmra.mxu0 %v3425
      %v4781 = vpop.f32.mrf.mxu0
      %v4782 = vadd.f32 %v4693, %v4781
      %v4783 = vpop.f32.mrf.mxu0
      %v4784 = vadd.f32 %v4695, %v4783
      %4785 = vmatmul.bf16.gmra.mxu0 %v3426
      %v4786 = vpop.f32.mrf.mxu0
      %v4787 = vadd.f32 %v4698, %v4786
      %v4788 = vpop.f32.mrf.mxu0
      %v4789 = vadd.f32 %v4700, %v4788
      %4790 = vmatmul.bf16.gmra.mxu0 %v3427
      %v4791 = vpop.f32.mrf.mxu0
      %v4792 = vadd.f32 %v4703, %v4791
      %v4793 = vpop.f32.mrf.mxu0
      %v4794 = vadd.f32 %v4705, %v4793
      %4795 = vmatmul.bf16.gmra.mxu0 %v3428
      %v4796 = vpop.f32.mrf.mxu0
      %v4797 = vadd.f32 %v4708, %v4796
      %v4798 = vpop.f32.mrf.mxu0
      %v4799 = vadd.f32 %v4710, %v4798
      %4800 = vdwg.mxu0
      %4801 = vmatpush.bf16.msra.mxu0 %v4016
      %4802 = vmatpush.bf16.msra.mxu0 %v4015
      %4803 = vmatpush.bf16.msra.mxu0 %v4014
      %4804 = vmatpush.bf16.msra.mxu0 %v4013
      %4805 = vmatpush.bf16.msra.mxu0 %v4012
      %4806 = vmatpush.bf16.msra.mxu0 %v4011
      %4807 = vmatpush.bf16.msra.mxu0 %v4010
      %4808 = vmatpush.bf16.msra.mxu0 %v4009
      %4809 = vmatmul.bf16.gmra.mxu0 %v3477
      %v4810 = vpop.f32.mrf.mxu0
      %v4811 = vadd.f32 %v4722, %v4810
      %v4812 = vpop.f32.mrf.mxu0
      %v4813 = vadd.f32 %v4724, %v4812
      %4814 = vmatmul.bf16.gmra.mxu0 %v3478
      %v4815 = vpop.f32.mrf.mxu0
      %v4816 = vadd.f32 %v4727, %v4815
      %v4817 = vpop.f32.mrf.mxu0
      %v4818 = vadd.f32 %v4729, %v4817
      %4819 = vmatmul.bf16.gmra.mxu0 %v3479
      %v4820 = vpop.f32.mrf.mxu0
      %v4821 = vadd.f32 %v4732, %v4820
      %v4822 = vpop.f32.mrf.mxu0
      %v4823 = vadd.f32 %v4734, %v4822
      %4824 = vmatmul.bf16.gmra.mxu0 %v3480
      %v4825 = vpop.f32.mrf.mxu0
      %v4826 = vadd.f32 %v4737, %v4825
      %v4827 = vpop.f32.mrf.mxu0
      %v4828 = vadd.f32 %v4739, %v4827
      %4829 = vmatmul.bf16.gmra.mxu0 %v3481
      %v4830 = vpop.f32.mrf.mxu0
      %v4831 = vadd.f32 %v4742, %v4830
      %v4832 = vpop.f32.mrf.mxu0
      %v4833 = vadd.f32 %v4744, %v4832
      %4834 = vmatmul.bf16.gmra.mxu0 %v3482
      %v4835 = vpop.f32.mrf.mxu0
      %v4836 = vadd.f32 %v4747, %v4835
      %v4837 = vpop.f32.mrf.mxu0
      %v4838 = vadd.f32 %v4749, %v4837
      %4839 = vmatmul.bf16.gmra.mxu0 %v3483
      %v4840 = vpop.f32.mrf.mxu0
      %v4841 = vadd.f32 %v4752, %v4840
      %v4842 = vpop.f32.mrf.mxu0
      %v4843 = vadd.f32 %v4754, %v4842
      %4844 = vmatmul.bf16.gmra.mxu0 %v3484
      %v4845 = vpop.f32.mrf.mxu0
      %v4846 = vadd.f32 %v4757, %v4845
      %v4847 = vpop.f32.mrf.mxu0
      %v4848 = vadd.f32 %v4759, %v4847
      %4849 = vmatmul.bf16.gmra.mxu0 %v3485
      %v4850 = vpop.f32.mrf.mxu0
      %v4851 = vadd.f32 %v4762, %v4850
      %v4852 = vpop.f32.mrf.mxu0
      %v4853 = vadd.f32 %v4764, %v4852
      %4854 = vmatmul.bf16.gmra.mxu0 %v3486
      %v4855 = vpop.f32.mrf.mxu0
      %v4856 = vadd.f32 %v4767, %v4855
      %v4857 = vpop.f32.mrf.mxu0
      %v4858 = vadd.f32 %v4769, %v4857
      %4859 = vmatmul.bf16.gmra.mxu0 %v3487
      %v4860 = vpop.f32.mrf.mxu0
      %v4861 = vadd.f32 %v4772, %v4860
      %v4862 = vpop.f32.mrf.mxu0
      %v4863 = vadd.f32 %v4774, %v4862
      %4864 = vmatmul.bf16.gmra.mxu0 %v3488
      %v4865 = vpop.f32.mrf.mxu0
      %v4866 = vadd.f32 %v4777, %v4865
      %v4867 = vpop.f32.mrf.mxu0
      %v4868 = vadd.f32 %v4779, %v4867
      %4869 = vmatmul.bf16.gmra.mxu0 %v3489
      %v4870 = vpop.f32.mrf.mxu0
      %v4871 = vadd.f32 %v4782, %v4870
      %v4872 = vpop.f32.mrf.mxu0
      %v4873 = vadd.f32 %v4784, %v4872
      %4874 = vmatmul.bf16.gmra.mxu0 %v3490
      %v4875 = vpop.f32.mrf.mxu0
      %v4876 = vadd.f32 %v4787, %v4875
      %v4877 = vpop.f32.mrf.mxu0
      %v4878 = vadd.f32 %v4789, %v4877
      %4879 = vmatmul.bf16.gmra.mxu0 %v3491
      %v4880 = vpop.f32.mrf.mxu0
      %v4881 = vadd.f32 %v4792, %v4880
      %v4882 = vpop.f32.mrf.mxu0
      %v4883 = vadd.f32 %v4794, %v4882
      %4884 = vmatmul.bf16.gmra.mxu0 %v3492
      %v4885 = vpop.f32.mrf.mxu0
      %v4886 = vadd.f32 %v4797, %v4885
      %v4887 = vpop.f32.mrf.mxu0
      %v4888 = vadd.f32 %v4799, %v4887
      %4889 = vdwg.mxu0
      %v4890 = vpack.c.bf16 %v4811, %v4811
      %v4891 = vpack.c.bf16 %v4813, %v4813
      %v4892 = vpack.c.bf16 %v4816, %v4816
      %v4893 = vpack.c.bf16 %v4818, %v4818
      %v4894 = vpack.c.bf16 %v4821, %v4821
      %v4895 = vpack.c.bf16 %v4823, %v4823
      %v4896 = vpack.c.bf16 %v4826, %v4826
      %v4897 = vpack.c.bf16 %v4828, %v4828
      %v4898 = vpack.c.bf16 %v4831, %v4831
      %v4899 = vpack.c.bf16 %v4833, %v4833
      %v4900 = vpack.c.bf16 %v4836, %v4836
      %v4901 = vpack.c.bf16 %v4838, %v4838
      %v4902 = vpack.c.bf16 %v4841, %v4841
      %v4903 = vpack.c.bf16 %v4843, %v4843
      %v4904 = vpack.c.bf16 %v4846, %v4846
      %v4905 = vpack.c.bf16 %v4848, %v4848
      %v4906 = vpack.c.bf16 %v4851, %v4851
      %v4907 = vpack.c.bf16 %v4853, %v4853
      %v4908 = vpack.c.bf16 %v4856, %v4856
      %v4909 = vpack.c.bf16 %v4858, %v4858
      %v4910 = vpack.c.bf16 %v4861, %v4861
      %v4911 = vpack.c.bf16 %v4863, %v4863
      %v4912 = vpack.c.bf16 %v4866, %v4866
      %v4913 = vpack.c.bf16 %v4868, %v4868
      %v4914 = vpack.c.bf16 %v4871, %v4871
      %v4915 = vpack.c.bf16 %v4873, %v4873
      %v4916 = vpack.c.bf16 %v4876, %v4876
      %v4917 = vpack.c.bf16 %v4878, %v4878
      %v4918 = vpack.c.bf16 %v4881, %v4881
      %v4919 = vpack.c.bf16 %v4883, %v4883
      %v4920 = vpack.c.bf16 %v4886, %v4886
      %v4921 = vpack.c.bf16 %v4888, %v4888
      %4922 = vst [vmem:[%s289] sm:$0xf] %v4890
      %4923 = vst [vmem:[%s289 + $0x4] sm:$0xf] %v4891
      %4924 = vst [vmem:[%s289 + $0x8] sm:$0xf] %v4892
      %4925 = vst [vmem:[%s289 + $0xc] sm:$0xf] %v4893
      %4926 = vst [vmem:[%s289 + $0x10] sm:$0xf] %v4894
      %4927 = vst [vmem:[%s289 + $0x14] sm:$0xf] %v4895
      %4928 = vst [vmem:[%s289 + $0x18] sm:$0xf] %v4896
      %4929 = vst [vmem:[%s289 + $0x1c] sm:$0xf] %v4897
      %4930 = vst [vmem:[%s289 + $0x20] sm:$0xf] %v4898
      %4931 = vst [vmem:[%s289 + $0x24] sm:$0xf] %v4899
      %4932 = vst [vmem:[%s289 + $0x28] sm:$0xf] %v4900
      %4933 = vst [vmem:[%s289 + $0x2c] sm:$0xf] %v4901
      %4934 = vst [vmem:[%s289 + $0x30] sm:$0xf] %v4902
      %4935 = vst [vmem:[%s289 + $0x34] sm:$0xf] %v4903
      %4936 = vst [vmem:[%s289 + $0x38] sm:$0xf] %v4904
      %4937 = vst [vmem:[%s289 + $0x3c] sm:$0xf] %v4905
      %4938 = vst [vmem:[%s289 + $0x40] sm:$0xf] %v4906
      %4939 = vst [vmem:[%s289 + $0x44] sm:$0xf] %v4907
      %4940 = vst [vmem:[%s289 + $0x48] sm:$0xf] %v4908
      %4941 = vst [vmem:[%s289 + $0x4c] sm:$0xf] %v4909
      %4942 = vst [vmem:[%s289 + $0x50] sm:$0xf] %v4910
      %4943 = vst [vmem:[%s289 + $0x54] sm:$0xf] %v4911
      %4944 = vst [vmem:[%s289 + $0x58] sm:$0xf] %v4912
      %4945 = vst [vmem:[%s289 + $0x5c] sm:$0xf] %v4913
      %4946 = vst [vmem:[%s289 + $0x60] sm:$0xf] %v4914
      %4947 = vst [vmem:[%s289 + $0x64] sm:$0xf] %v4915
      %4948 = vst [vmem:[%s289 + $0x68] sm:$0xf] %v4916
      %4949 = vst [vmem:[%s289 + $0x6c] sm:$0xf] %v4917
      %4950 = vst [vmem:[%s289 + $0x70] sm:$0xf] %v4918
      %4951 = vst [vmem:[%s289 + $0x74] sm:$0xf] %v4919
      %4952 = vst [vmem:[%s289 + $0x78] sm:$0xf] %v4920
      %4953 = vst [vmem:[%s289 + $0x7c] sm:$0xf] %v4921
      %v4954 = vadd.f32 %v4811, %v4813
      %v4955 = vadd.f32 %v4954, %v4816
      %v4956 = vadd.f32 %v4955, %v4818
      %v4957 = vadd.f32 %v4956, %v4821
      %v4958 = vadd.f32 %v4957, %v4823
      %v4959 = vadd.f32 %v4958, %v4826
      %v4960 = vadd.f32 %v4959, %v4828
      %v4961 = vadd.f32 %v4960, %v4831
      %v4962 = vadd.f32 %v4961, %v4833
      %v4963 = vadd.f32 %v4962, %v4836
      %v4964 = vadd.f32 %v4963, %v4838
      %v4965 = vadd.f32 %v4964, %v4841
      %v4966 = vadd.f32 %v4965, %v4843
      %v4967 = vadd.f32 %v4966, %v4846
      %v4968 = vadd.f32 %v4967, %v4848
      %v4969 = vadd.f32 %v4968, %v4851
      %v4970 = vadd.f32 %v4969, %v4853
      %v4971 = vadd.f32 %v4970, %v4856
      %v4972 = vadd.f32 %v4971, %v4858
      %v4973 = vadd.f32 %v4972, %v4861
      %v4974 = vadd.f32 %v4973, %v4863
      %v4975 = vadd.f32 %v4974, %v4866
      %v4976 = vadd.f32 %v4975, %v4868
      %v4977 = vadd.f32 %v4976, %v4871
      %v4978 = vadd.f32 %v4977, %v4873
      %v4979 = vadd.f32 %v4978, %v4876
      %v4980 = vadd.f32 %v4979, %v4878
      %v4981 = vadd.f32 %v4980, %v4881
      %v4982 = vadd.f32 %v4981, %v4883
      %v4983 = vadd.f32 %v4982, %v4886
      %v4984 = vadd.f32 %v4983, %v4888
      %v4985 = vrot.slane %v4984, 4
      %v4986 = vadd.f32 %v4984, %v4985
      %v4987 = vrot.slane %v4986, 2
      %v4988 = vadd.f32 %v4986, %v4987
      %v4989 = vrot.slane %v4988, 1
      %v4990 = vadd.f32 %v4988, %v4989
      %4991 = vst [vmem:[%s292] sm:$0x1] %v4990
      %v4992 = vmul.f32 %v4811, %v4811
      %v4993 = vmul.f32 %v4813, %v4813
      %v4994 = vmul.f32 %v4816, %v4816
      %v4995 = vmul.f32 %v4818, %v4818
      %v4996 = vmul.f32 %v4821, %v4821
      %v4997 = vmul.f32 %v4823, %v4823
      %v4998 = vmul.f32 %v4826, %v4826
      %v4999 = vmul.f32 %v4828, %v4828
      %v5000 = vmul.f32 %v4831, %v4831
      %v5001 = vmul.f32 %v4833, %v4833
      %v5002 = vmul.f32 %v4836, %v4836
      %v5003 = vmul.f32 %v4838, %v4838
      %v5004 = vmul.f32 %v4841, %v4841
      %v5005 = vmul.f32 %v4843, %v4843
      %v5006 = vmul.f32 %v4846, %v4846
      %v5007 = vmul.f32 %v4848, %v4848
      %v5008 = vmul.f32 %v4851, %v4851
      %v5009 = vmul.f32 %v4853, %v4853
      %v5010 = vmul.f32 %v4856, %v4856
      %v5011 = vmul.f32 %v4858, %v4858
      %v5012 = vmul.f32 %v4861, %v4861
      %v5013 = vmul.f32 %v4863, %v4863
      %v5014 = vmul.f32 %v4866, %v4866
      %v5015 = vmul.f32 %v4868, %v4868
      %v5016 = vmul.f32 %v4871, %v4871
      %v5017 = vmul.f32 %v4873, %v4873
      %v5018 = vmul.f32 %v4876, %v4876
      %v5019 = vmul.f32 %v4878, %v4878
      %v5020 = vmul.f32 %v4881, %v4881
      %v5021 = vmul.f32 %v4883, %v4883
      %v5022 = vmul.f32 %v4886, %v4886
      %v5023 = vmul.f32 %v4888, %v4888
      %v5024 = vadd.f32 %v4992, %v4993
      %v5025 = vadd.f32 %v5024, %v4994
      %v5026 = vadd.f32 %v5025, %v4995
      %v5027 = vadd.f32 %v5026, %v4996
      %v5028 = vadd.f32 %v5027, %v4997
      %v5029 = vadd.f32 %v5028, %v4998
      %v5030 = vadd.f32 %v5029, %v4999
      %v5031 = vadd.f32 %v5030, %v5000
      %v5032 = vadd.f32 %v5031, %v5001
      %v5033 = vadd.f32 %v5032, %v5002
      %v5034 = vadd.f32 %v5033, %v5003
      %v5035 = vadd.f32 %v5034, %v5004
      %v5036 = vadd.f32 %v5035, %v5005
      %v5037 = vadd.f32 %v5036, %v5006
      %v5038 = vadd.f32 %v5037, %v5007
      %v5039 = vadd.f32 %v5038, %v5008
      %v5040 = vadd.f32 %v5039, %v5009
      %v5041 = vadd.f32 %v5040, %v5010
      %v5042 = vadd.f32 %v5041, %v5011
      %v5043 = vadd.f32 %v5042, %v5012
      %v5044 = vadd.f32 %v5043, %v5013
      %v5045 = vadd.f32 %v5044, %v5014
      %v5046 = vadd.f32 %v5045, %v5015
      %v5047 = vadd.f32 %v5046, %v5016
      %v5048 = vadd.f32 %v5047, %v5017
      %v5049 = vadd.f32 %v5048, %v5018
      %v5050 = vadd.f32 %v5049, %v5019
      %v5051 = vadd.f32 %v5050, %v5020
      %v5052 = vadd.f32 %v5051, %v5021
      %v5053 = vadd.f32 %v5052, %v5022
      %v5054 = vadd.f32 %v5053, %v5023
      %v5055 = vrot.slane %v5054, 4
      %v5056 = vadd.f32 %v5054, %v5055
      %v5057 = vrot.slane %v5056, 2
      %v5058 = vadd.f32 %v5056, %v5057
      %v5059 = vrot.slane %v5058, 1
      %v5060 = vadd.f32 %v5058, %v5059
      %5061 = vst [vmem:[%s295] sm:$0x1] %v5060
      %p5062 = scmp.lt.s32.totalorder %s19, 1
      %s5063 = scalar_select %p5062, %s19, 1
      %s5064 = smul.addr %s5063, 32
      %s5065 = smul.addr %s5064, 4
      %s5066 = scalar_lea.vmem %s5, %s5065
      %p5067 = scmp.lt.s32.totalorder %s19, 1
      %s5068 = scalar_select %p5067, %s19, 1
      %s5069 = scalar_lea.vmem %s6, %s5068
      %p5070 = scmp.lt.s32.totalorder %s19, 1
      %s5071 = scalar_select %p5070, %s19, 1
      %s5072 = scalar_lea.vmem %s7, %s5071
      // Predicated region
      $region41: #{up_forward.4} parent=39 // pred_check
        %p5073 = pneg %p147
      $region42: #{up_forward.4} parent=39 // pred_check_branch
        %5075 = sbr.rel (%p5073) target = $region44
      $region43: #{up_forward.4} parent=39 // pred_region
        _
      $region44: #{up_forward.4} parent=39 // pred_fallthru
        _
      // Predicated region
      $region45: #{up_forward.4} parent=39 // pred_check
        %p5076 = pneg %p173
      $region46: #{up_forward.4} parent=39 // pred_check_branch
        %5078 = sbr.rel (%p5076) target = $region48
      $region47: #{up_forward.4} parent=39 // pred_region
        _
      $region48: #{up_forward.4} parent=39 // pred_fallthru
        _
      // Predicated region
      $region49: #{up_forward.4} parent=39 // pred_check
        %p5079 = pneg %p199
      $region50: #{up_forward.4} parent=39 // pred_check_branch
        %5081 = sbr.rel (%p5079) target = $region52
      $region51: #{up_forward.4} parent=39 // pred_region
        _
      $region52: #{up_forward.4} parent=39 // pred_fallthru
        _
    $region40: #{up_forward.4} parent=5 // pred_fallthru
      _
    %p5082 = scmp.le.s32.totalorder 2, %s14
    // Predicated region
    $region53: #{up_forward.4} parent=5 // pred_check
      %p5083 = pneg %p5082
    $region54: #{up_forward.4} parent=5 // pred_check_branch
      %5085 = sbr.rel (%p5083) target = $region56
    $region55: #{up_forward.4} parent=5 // pred_region
      %s5086 = ssub.s32 %s14, 2
      // Predicated region
      $region57: #{up_forward.4} parent=55 // pred_check
        %p5087 = pneg %p153
      $region58: #{up_forward.4} parent=55 // pred_check_branch
        %5089 = sbr.rel (%p5087) target = $region60
      $region59: #{up_forward.4} parent=55 // pred_region
        %p5090 = scmp.lt.s32.totalorder %s20, 1
        %s5091 = scalar_select %p5090, %s20, 1
        %s5092 = smul.addr %s5091, 32
        %s5093 = smul.addr %s5092, 4
        %s5094 = scalar_lea.vmem %s5, %s5093
      $region60: #{up_forward.4} parent=55 // pred_fallthru
        _
      // Predicated region
      $region61: #{up_forward.4} parent=55 // pred_check
        %p5095 = pneg %p179
      $region62: #{up_forward.4} parent=55 // pred_check_branch
        %5097 = sbr.rel (%p5095) target = $region64
      $region63: #{up_forward.4} parent=55 // pred_region
        %p5098 = scmp.lt.s32.totalorder %s20, 1
        %s5099 = scalar_select %p5098, %s20, 1
        %s5100 = scalar_lea.vmem %s6, %s5099
      $region64: #{up_forward.4} parent=55 // pred_fallthru
        _
      // Predicated region
      $region65: #{up_forward.4} parent=55 // pred_check
        %p5101 = pneg %p205
      $region66: #{up_forward.4} parent=55 // pred_check_branch
        %5103 = sbr.rel (%p5101) target = $region68
      $region67: #{up_forward.4} parent=55 // pred_region
        %p5104 = scmp.lt.s32.totalorder %s20, 1
        %s5105 = scalar_select %p5104, %s20, 1
        %s5106 = scalar_lea.vmem %s7, %s5105
      $region68: #{up_forward.4} parent=55 // pred_fallthru
        _
    $region56: #{up_forward.4} parent=5 // pred_fallthru
      _
  $region6: #{up_forward.4} parent=0 // loop_footer
    %s18 = sadd.s32 1, %s14
  $region7: #{up_forward.4} parent=0 // loop_footer_branch
    %13 = sbr.rel target = $region3
  $region8: #{up_forward.4} parent=0 // loop_exit
    _

// kernel: up_forward.3
$region0: #{up_forward.3}
  #allocation0 [shape = 'u32[]', space=smem, size = 0x4, offset = 0x4, fixed_abs, tag = 'smem constant byte address 0x4 - core index']
  #allocation1 [shape = 'u32[72,128]{1,0:T(1,128)}', space=vmem, size = 0x9000, scoped, tag = 'internal scratch']
  #allocation2 [shape = 'bf16[18,18,256]{2,1,0:T(8,128)(2,1)}', space=vmem, size = 0x36000, scoped, tag = 'scratch operand']
  %s0 = inlined_call_operand.vmem [shape: bf16[2,16,16,128], index: 0, kind: input, shape index: {}]
  %s1 = inlined_call_operand.vmem [shape: bf16[2,16,16,128], index: 1, kind: input, shape index: {}]
  %s2 = inlined_call_operand.vmem [shape: bf16[2304,128], index: 2, kind: input, shape index: {}]
  %s3 = inlined_call_operand.vmem [shape: f32[1,128], index: 3, kind: input, shape index: {}]
  %s4 = inlined_call_operand.vmem [shape: bf16[2,16,16,128], index: 4, kind: output, shape index: {0}]
  %s5 = inlined_call_operand.vmem [shape: f32[2,1,128], index: 5, kind: output, shape index: {1}]
  %s6 = inlined_call_operand.vmem [shape: f32[2,1,128], index: 6, kind: output, shape index: {2}]
  %7 = xla_tuple %s4, %s5, %s6
  %s8 = sld [smem:[#allocation0]]
  $region65: #{up_forward.3} parent=0
    _
  %s10 = ssub.s32 1, %s8
  %s11 = scalar_select 0, %s10, %s8
  loop: start=0, step=1, limit=4
  $region2: #{up_forward.3} parent=0 // loop_pre_header
    _
  $region3: #{up_forward.3} parent=0 // loop_header
    %s13 = sphi 0, %s17
    %p14 = scmp.ge.s32.totalorder %s13, 4
    %s23 = sphi 0, %s25
    %s26 = sphi 0, %s23
    %s27 = sphi 0, %s26
    %s43 = sphi 0, %s27
    %s49 = sphi 0, %s51
    %s52 = sphi 0, %s49
    %s53 = sphi 0, %s52
    %s69 = sphi 0, %s53
    %s73 = sphi 0, %s73
    %s75 = sphi 0, %s73
    %s76 = sphi 0, %s75
    %s90 = sphi 0, %s76
    %s94 = sphi 0, %s94
    %s96 = sphi 0, %s94
    %s97 = sphi 0, %s96
    %s111 = sphi 0, %s97
    %s117 = sphi 0, %s119
    %s120 = sphi 0, %s117
    %s121 = sphi 0, %s120
    %s137 = sphi 0, %s121
    %s143 = sphi 0, %s145
    %s146 = sphi 0, %s143
    %s147 = sphi 0, %s146
    %s163 = sphi 0, %s147
    %s169 = sphi 0, %s171
    %s172 = sphi 0, %s169
    %s173 = sphi 0, %s172
    %s189 = sphi 0, %s173
  $region4: #{up_forward.3} parent=0 // loop_header_branch
    %16 = sbr.rel (%p14) target = $region8
  $region5: #{up_forward.3} parent=0 // loop_body
    %s18 = ssub.s32 %s13, 1
    %s19 = ssub.s32 %s13, 2
    %s20 = sadd.s32 %s13, 1
    %s21 = ssub.s32 %s13, %s20
    %p22 = scmp.eq.s32.totalorder %s21, 0
    %s24 = sadd.s32 %s23, 1
    %s25 = scalar_select %p22, %s23, %s24
    %p28 = pneg %p22
    %p29 = scmp.eq.s32.totalorder %s13, 1
    %p30 = por %p28, %p29
    %p31 = scmp.ne.s32.totalorder %s23, %s26
    %p32 = scmp.eq.s32.totalorder %s13, 0
    %p33 = por %p31, %p32
    %p34 = scmp.ne.s32.totalorder %s23, %s26
    %p35 = scmp.eq.s32.totalorder %s18, 1
    %p36 = por %p34, %p35
    %p37 = scmp.ne.s32.totalorder %s26, %s27
    %p38 = scmp.eq.s32.totalorder %s18, 0
    %p39 = por %p37, %p38
    %p40 = scmp.ne.s32.totalorder %s26, %s27
    %p41 = scmp.eq.s32.totalorder %s19, 1
    %p42 = por %p40, %p41
    %p44 = scmp.ne.s32.totalorder %s27, %s43
    %p45 = scmp.eq.s32.totalorder %s19, 0
    %p46 = por %p44, %p45
    %s47 = ssub.s32 %s13, %s20
    %p48 = scmp.eq.s32.totalorder %s47, 0
    %s50 = sadd.s32 %s49, 1
    %s51 = scalar_select %p48, %s49, %s50
    %p54 = pneg %p48
    %p55 = scmp.eq.s32.totalorder %s13, 1
    %p56 = por %p54, %p55
    %p57 = scmp.ne.s32.totalorder %s49, %s52
    %p58 = scmp.eq.s32.totalorder %s13, 0
    %p59 = por %p57, %p58
    %p60 = scmp.ne.s32.totalorder %s49, %s52
    %p61 = scmp.eq.s32.totalorder %s18, 1
    %p62 = por %p60, %p61
    %p63 = scmp.ne.s32.totalorder %s52, %s53
    %p64 = scmp.eq.s32.totalorder %s18, 0
    %p65 = por %p63, %p64
    %p66 = scmp.ne.s32.totalorder %s52, %s53
    %p67 = scmp.eq.s32.totalorder %s19, 1
    %p68 = por %p66, %p67
    %p70 = scmp.ne.s32.totalorder %s53, %s69
    %p71 = scmp.eq.s32.totalorder %s19, 0
    %p72 = por %p70, %p71
    %s74 = sadd.s32 %s73, 1
    %p77 = scmp.eq.s32.totalorder %s13, 1
    %p78 = scmp.ne.s32.totalorder %s73, %s75
    %p79 = scmp.eq.s32.totalorder %s13, 0
    %p80 = por %p78, %p79
    %p81 = scmp.ne.s32.totalorder %s73, %s75
    %p82 = scmp.eq.s32.totalorder %s18, 1
    %p83 = por %p81, %p82
    %p84 = scmp.ne.s32.totalorder %s75, %s76
    %p85 = scmp.eq.s32.totalorder %s18, 0
    %p86 = por %p84, %p85
    %p87 = scmp.ne.s32.totalorder %s75, %s76
    %p88 = scmp.eq.s32.totalorder %s19, 1
    %p89 = por %p87, %p88
    %p91 = scmp.ne.s32.totalorder %s76, %s90
    %p92 = scmp.eq.s32.totalorder %s19, 0
    %p93 = por %p91, %p92
    %s95 = sadd.s32 %s94, 1
    %p98 = scmp.eq.s32.totalorder %s13, 1
    %p99 = scmp.ne.s32.totalorder %s94, %s96
    %p100 = scmp.eq.s32.totalorder %s13, 0
    %p101 = por %p99, %p100
    %p102 = scmp.ne.s32.totalorder %s94, %s96
    %p103 = scmp.eq.s32.totalorder %s18, 1
    %p104 = por %p102, %p103
    %p105 = scmp.ne.s32.totalorder %s96, %s97
    %p106 = scmp.eq.s32.totalorder %s18, 0
    %p107 = por %p105, %p106
    %p108 = scmp.ne.s32.totalorder %s96, %s97
    %p109 = scmp.eq.s32.totalorder %s19, 1
    %p110 = por %p108, %p109
    %p112 = scmp.ne.s32.totalorder %s97, %s111
    %p113 = scmp.eq.s32.totalorder %s19, 0
    %p114 = por %p112, %p113
    %s115 = ssub.s32 %s13, %s20
    %p116 = scmp.eq.s32.totalorder %s115, 0
    %s118 = sadd.s32 %s117, 1
    %s119 = scalar_select %p116, %s117, %s118
    %p122 = pneg %p116
    %p123 = scmp.eq.s32.totalorder %s13, 1
    %p124 = por %p122, %p123
    %p125 = scmp.ne.s32.totalorder %s117, %s120
    %p126 = scmp.eq.s32.totalorder %s13, 0
    %p127 = por %p125, %p126
    %p128 = scmp.ne.s32.totalorder %s117, %s120
    %p129 = scmp.eq.s32.totalorder %s18, 1
    %p130 = por %p128, %p129
    %p131 = scmp.ne.s32.totalorder %s120, %s121
    %p132 = scmp.eq.s32.totalorder %s18, 0
    %p133 = por %p131, %p132
    %p134 = scmp.ne.s32.totalorder %s120, %s121
    %p135 = scmp.eq.s32.totalorder %s19, 1
    %p136 = por %p134, %p135
    %p138 = scmp.ne.s32.totalorder %s121, %s137
    %p139 = scmp.eq.s32.totalorder %s19, 0
    %p140 = por %p138, %p139
    %s141 = ssub.s32 %s13, %s20
    %p142 = scmp.eq.s32.totalorder %s141, 0
    %s144 = sadd.s32 %s143, 1
    %s145 = scalar_select %p142, %s143, %s144
    %p148 = pneg %p142
    %p149 = scmp.eq.s32.totalorder %s13, 1
    %p150 = por %p148, %p149
    %p151 = scmp.ne.s32.totalorder %s143, %s146
    %p152 = scmp.eq.s32.totalorder %s13, 0
    %p153 = por %p151, %p152
    %p154 = scmp.ne.s32.totalorder %s143, %s146
    %p155 = scmp.eq.s32.totalorder %s18, 1
    %p156 = por %p154, %p155
    %p157 = scmp.ne.s32.totalorder %s146, %s147
    %p158 = scmp.eq.s32.totalorder %s18, 0
    %p159 = por %p157, %p158
    %p160 = scmp.ne.s32.totalorder %s146, %s147
    %p161 = scmp.eq.s32.totalorder %s19, 1
    %p162 = por %p160, %p161
    %p164 = scmp.ne.s32.totalorder %s147, %s163
    %p165 = scmp.eq.s32.totalorder %s19, 0
    %p166 = por %p164, %p165
    %s167 = ssub.s32 %s13, %s20
    %p168 = scmp.eq.s32.totalorder %s167, 0
    %s170 = sadd.s32 %s169, 1
    %s171 = scalar_select %p168, %s169, %s170
    %p174 = pneg %p168
    %p175 = scmp.eq.s32.totalorder %s13, 1
    %p176 = por %p174, %p175
    %p177 = scmp.ne.s32.totalorder %s169, %s172
    %p178 = scmp.eq.s32.totalorder %s13, 0
    %p179 = por %p177, %p178
    %p180 = scmp.ne.s32.totalorder %s169, %s172
    %p181 = scmp.eq.s32.totalorder %s18, 1
    %p182 = por %p180, %p181
    %p183 = scmp.ne.s32.totalorder %s172, %s173
    %p184 = scmp.eq.s32.totalorder %s18, 0
    %p185 = por %p183, %p184
    %p186 = scmp.ne.s32.totalorder %s172, %s173
    %p187 = scmp.eq.s32.totalorder %s19, 1
    %p188 = por %p186, %p187
    %p190 = scmp.ne.s32.totalorder %s173, %s189
    %p191 = scmp.eq.s32.totalorder %s19, 0
    %p192 = por %p190, %p191
    %p193 = scmp.le.s32.totalorder 1, %s13
    %p194 = scmp.lt.s32.totalorder %s13, 3
    %p195 = pnand %p193, %p194
    %p196 = pneg %p195
    // Predicated region
    $region9: #{up_forward.3} parent=5 // pred_check
      _
    $region10: #{up_forward.3} parent=5 // pred_check_branch
      %198 = sbr.rel (%p195) target = $region12
    $region11: #{up_forward.3} parent=5 // pred_region
      %s199 = ssub.s32 %s13, 1
      // Predicated region
      $region13: #{up_forward.3} parent=11 // pred_check
        %p200 = pneg %p86
      $region14: #{up_forward.3} parent=11 // pred_check_branch
        %202 = sbr.rel (%p200) target = $region16
      $region15: #{up_forward.3} parent=11 // pred_region
        _
      $region16: #{up_forward.3} parent=11 // pred_fallthru
        _
      // Predicated region
      $region17: #{up_forward.3} parent=11 // pred_check
        %p203 = pneg %p107
      $region18: #{up_forward.3} parent=11 // pred_check_branch
        %205 = sbr.rel (%p203) target = $region20
      $region19: #{up_forward.3} parent=11 // pred_region
        _
      $region20: #{up_forward.3} parent=11 // pred_fallthru
        _
    $region12: #{up_forward.3} parent=5 // pred_fallthru
      _
    %p206 = scmp.lt.s32.totalorder %s13, 2
    // Predicated region
    $region21: #{up_forward.3} parent=5 // pred_check
      %p207 = pneg %p206
    $region22: #{up_forward.3} parent=5 // pred_check_branch
      %209 = sbr.rel (%p207) target = $region24
    $region23: #{up_forward.3} parent=5 // pred_region
      // Predicated region
      $region25: #{up_forward.3} parent=23 // pred_check
        %p210 = pneg %p33
      $region26: #{up_forward.3} parent=23 // pred_check_branch
        %212 = sbr.rel (%p210) target = $region28
      $region27: #{up_forward.3} parent=23 // pred_region
        %p213 = scmp.lt.s32.totalorder %s13, 1
        %s214 = scalar_select %p213, %s13, 1
        %s215 = smul.addr %s214, 32
        %s216 = smul.addr %s215, 4
        %s217 = scalar_lea.vmem %s0, %s216
      $region28: #{up_forward.3} parent=23 // pred_fallthru
        _
      // Predicated region
      $region29: #{up_forward.3} parent=23 // pred_check
        %p218 = pneg %p59
      $region30: #{up_forward.3} parent=23 // pred_check_branch
        %220 = sbr.rel (%p218) target = $region32
      $region31: #{up_forward.3} parent=23 // pred_region
        %p221 = scmp.lt.s32.totalorder %s13, 1
        %s222 = scalar_select %p221, %s13, 1
        %s223 = smul.addr %s222, 32
        %s224 = smul.addr %s223, 4
        %s225 = scalar_lea.vmem %s1, %s224
      $region32: #{up_forward.3} parent=23 // pred_fallthru
        _
    $region24: #{up_forward.3} parent=5 // pred_fallthru
      _
    %p226 = scmp.le.s32.totalorder 1, %s13
    %p227 = scmp.lt.s32.totalorder %s13, 3
    %p228 = pnand %p226, %p227
    %p229 = pneg %p228
    // Predicated region
    $region33: #{up_forward.3} parent=5 // pred_check
      _
    $region34: #{up_forward.3} parent=5 // pred_check_branch
      %231 = sbr.rel (%p228) target = $region36
    $region35: #{up_forward.3} parent=5 // pred_region
      %s232 = ssub.s32 %s13, 1
      %p233 = scmp.lt.s32.totalorder %s18, 1
      %s234 = scalar_select %p233, %s18, 1
      %s235 = smul.addr %s234, 32
      %s236 = smul.addr %s235, 4
      %s237 = scalar_lea.vmem %s0, %s236
      %p238 = pneg %p39
      %p239 = pneg %p36
      %p240 = scmp.lt.s32.totalorder %s18, 1
      %s241 = scalar_select %p240, %s18, 1
      %s242 = smul.addr %s241, 32
      %s243 = smul.addr %s242, 4
      %s244 = scalar_lea.vmem %s1, %s243
      %p245 = pneg %p65
      %p246 = pneg %p62
      %p247 = pneg %p86
      %p248 = pneg %p83
      %p249 = pneg %p107
      %p250 = pneg %p104
      %p251 = pneg %p133
      %p252 = pneg %p130
      %p253 = scmp.lt.s32.totalorder %s18, 1
      %s254 = scalar_select %p253, %s18, 1
      %s255 = smul.addr %s254, 32
      %s256 = smul.addr %s255, 4
      %s257 = scalar_lea.vmem %s4, %s256
      %p258 = pneg %p159
      %p259 = pneg %p156
      %p260 = scmp.lt.s32.totalorder %s18, 1
      %s261 = scalar_select %p260, %s18, 1
      %s262 = scalar_lea.vmem %s5, %s261
      %p263 = pneg %p185
      %p264 = pneg %p182
      %p265 = scmp.lt.s32.totalorder %s18, 1
      %s266 = scalar_select %p265, %s18, 1
      %s267 = scalar_lea.vmem %s6, %s266
      %p268 = scmp.lt.s32.totalorder %s18, 1
      %s269 = scalar_select %p268, %s18, 1
      %s270 = smul.addr %s269, 32
      %s271 = smul.addr %s270, 4
      %s272 = scalar_lea.vmem %s0, %s271
      %p273 = scmp.lt.s32.totalorder %s18, 1
      %s274 = scalar_select %p273, %s18, 1
      %s275 = smul.addr %s274, 32
      %s276 = smul.addr %s275, 4
      %s277 = scalar_lea.vmem %s1, %s276
      %p278 = scmp.lt.s32.totalorder %s18, 1
      %s279 = scalar_select %p278, %s18, 1
      %s280 = smul.addr %s279, 32
      %s281 = smul.addr %s280, 4
      %s282 = scalar_lea.vmem %s4, %s281
      %p283 = scmp.lt.s32.totalorder %s18, 1
      %s284 = scalar_select %p283, %s18, 1
      %s285 = scalar_lea.vmem %s5, %s284
      %p286 = scmp.lt.s32.totalorder %s18, 1
      %s287 = scalar_select %p286, %s18, 1
      %s288 = scalar_lea.vmem %s6, %s287
      %290 = vst [vmem:[#allocation2] sm:$0xff] 0
      %291 = vst [vmem:[#allocation2 + $0x8] sm:$0xff] 0
      %292 = vst [vmem:[#allocation2 + $0x10] sm:$0x11] 0
      %s293 = scalar_lea.vmem [#allocation2], 408
      %294 = vst [vmem:[%s293] sm:$0xff] 0
      %295 = vst [vmem:[%s293 + $0x8] sm:$0xff] 0
      %296 = vst [vmem:[%s293 + $0x10] sm:$0x11] 0
      %vm297 = vcmask 1040384
      %vm298 = vsmask.f32 256
      %vm299 = vmand %vm297, %vm298
      %vm300 = vcmask 1044484
      %vm301 = vsmask.f32 4352
      %vm302 = vmand %vm300, %vm301
      %vm303 = vmor %vm302, %vm299
      %v304 = vld [vmem:[#allocation2] sm:$0x11]
      %v305 = vsel %vm303, 0, %v304
      %306 = vst [vmem:[#allocation2] sm:$0x11] %v305
      %v307 = vld [vmem:[#allocation2 + $0x18] sm:$0x11]
      %v308 = vsel %vm303, 0, %v307
      %309 = vst [vmem:[#allocation2 + $0x18] sm:$0x11] %v308
      %v310 = vld [vmem:[#allocation2 + $0x30] sm:$0x11]
      %v311 = vsel %vm303, 0, %v310
      %312 = vst [vmem:[#allocation2 + $0x30] sm:$0x11] %v311
      %v313 = vld [vmem:[#allocation2 + $0x48] sm:$0x11]
      %v314 = vsel %vm303, 0, %v313
      %315 = vst [vmem:[#allocation2 + $0x48] sm:$0x11] %v314
      %v316 = vld [vmem:[#allocation2 + $0x60] sm:$0x11]
      %v317 = vsel %vm303, 0, %v316
      %318 = vst [vmem:[#allocation2 + $0x60] sm:$0x11] %v317
      %v319 = vld [vmem:[#allocation2 + $0x78] sm:$0x11]
      %v320 = vsel %vm303, 0, %v319
      %321 = vst [vmem:[#allocation2 + $0x78] sm:$0x11] %v320
      %v322 = vld [vmem:[#allocation2 + $0x90] sm:$0x11]
      %v323 = vsel %vm303, 0, %v322
      %324 = vst [vmem:[#allocation2 + $0x90] sm:$0x11] %v323
      %v325 = vld [vmem:[#allocation2 + $0xa8] sm:$0x11]
      %v326 = vsel %vm303, 0, %v325
      %327 = vst [vmem:[#allocation2 + $0xa8] sm:$0x11] %v326
      %v328 = vld [vmem:[#allocation2 + $0xc0] sm:$0x11]
      %v329 = vsel %vm303, 0, %v328
      %330 = vst [vmem:[#allocation2 + $0xc0] sm:$0x11] %v329
      %v331 = vld [vmem:[#allocation2 + $0xd8] sm:$0x11]
      %v332 = vsel %vm303, 0, %v331
      %333 = vst [vmem:[#allocation2 + $0xd8] sm:$0x11] %v332
      %v334 = vld [vmem:[#allocation2 + $0xf0] sm:$0x11]
      %v335 = vsel %vm303, 0, %v334
      %336 = vst [vmem:[#allocation2 + $0xf0] sm:$0x11] %v335
      %v337 = vld [vmem:[#allocation2 + $0x108] sm:$0x11]
      %v338 = vsel %vm303, 0, %v337
      %339 = vst [vmem:[#allocation2 + $0x108] sm:$0x11] %v338
      %v340 = vld [vmem:[#allocation2 + $0x120] sm:$0x11]
      %v341 = vsel %vm303, 0, %v340
      %342 = vst [vmem:[#allocation2 + $0x120] sm:$0x11] %v341
      %v343 = vld [vmem:[#allocation2 + $0x138] sm:$0x11]
      %v344 = vsel %vm303, 0, %v343
      %345 = vst [vmem:[#allocation2 + $0x138] sm:$0x11] %v344
      %v346 = vld [vmem:[#allocation2 + $0x150] sm:$0x11]
      %v347 = vsel %vm303, 0, %v346
      %348 = vst [vmem:[#allocation2 + $0x150] sm:$0x11] %v347
      %v349 = vld [vmem:[#allocation2 + $0x168] sm:$0x11]
      %v350 = vsel %vm303, 0, %v349
      %351 = vst [vmem:[#allocation2 + $0x168] sm:$0x11] %v350
      %v352 = vld [vmem:[#allocation2 + $0x180] sm:$0x11]
      %v353 = vsel %vm303, 0, %v352
      %354 = vst [vmem:[#allocation2 + $0x180] sm:$0x11] %v353
      %v355 = vld [vmem:[#allocation2 + $0x198] sm:$0x11]
      %v356 = vsel %vm303, 0, %v355
      %357 = vst [vmem:[#allocation2 + $0x198] sm:$0x11] %v356
      %vm358 = vsmask.f32 7938
      %vm359 = vmand %vm297, %vm358
      %vm360 = vsmask.f32 7954
      %vm361 = vmand %vm300, %vm360
      %vm362 = vmor %vm361, %vm359
      %v363 = vld [vmem:[#allocation2 + $0x10] sm:$0x11]
      %v364 = vsel %vm362, 0, %v363
      %365 = vst [vmem:[#allocation2 + $0x10] sm:$0x11] %v364
      %v366 = vld [vmem:[#allocation2 + $0x28] sm:$0x11]
      %v367 = vsel %vm362, 0, %v366
      %368 = vst [vmem:[#allocation2 + $0x28] sm:$0x11] %v367
      %v369 = vld [vmem:[#allocation2 + $0x40] sm:$0x11]
      %v370 = vsel %vm362, 0, %v369
      %371 = vst [vmem:[#allocation2 + $0x40] sm:$0x11] %v370
      %v372 = vld [vmem:[#allocation2 + $0x58] sm:$0x11]
      %v373 = vsel %vm362, 0, %v372
      %374 = vst [vmem:[#allocation2 + $0x58] sm:$0x11] %v373
      %v375 = vld [vmem:[#allocation2 + $0x70] sm:$0x11]
      %v376 = vsel %vm362, 0, %v375
      %377 = vst [vmem:[#allocation2 + $0x70] sm:$0x11] %v376
      %v378 = vld [vmem:[#allocation2 + $0x88] sm:$0x11]
      %v379 = vsel %vm362, 0, %v378
      %380 = vst [vmem:[#allocation2 + $0x88] sm:$0x11] %v379
      %v381 = vld [vmem:[#allocation2 + $0xa0] sm:$0x11]
      %v382 = vsel %vm362, 0, %v381
      %383 = vst [vmem:[#allocation2 + $0xa0] sm:$0x11] %v382
      %v384 = vld [vmem:[#allocation2 + $0xb8] sm:$0x11]
      %v385 = vsel %vm362, 0, %v384
      %386 = vst [vmem:[#allocation2 + $0xb8] sm:$0x11] %v385
      %v387 = vld [vmem:[#allocation2 + $0xd0] sm:$0x11]
      %v388 = vsel %vm362, 0, %v387
      %389 = vst [vmem:[#allocation2 + $0xd0] sm:$0x11] %v388
      %v390 = vld [vmem:[#allocation2 + $0xe8] sm:$0x11]
      %v391 = vsel %vm362, 0, %v390
      %392 = vst [vmem:[#allocation2 + $0xe8] sm:$0x11] %v391
      %v393 = vld [vmem:[#allocation2 + $0x100] sm:$0x11]
      %v394 = vsel %vm362, 0, %v393
      %395 = vst [vmem:[#allocation2 + $0x100] sm:$0x11] %v394
      %v396 = vld [vmem:[#allocation2 + $0x118] sm:$0x11]
      %v397 = vsel %vm362, 0, %v396
      %398 = vst [vmem:[#allocation2 + $0x118] sm:$0x11] %v397
      %v399 = vld [vmem:[#allocation2 + $0x130] sm:$0x11]
      %v400 = vsel %vm362, 0, %v399
      %401 = vst [vmem:[#allocation2 + $0x130] sm:$0x11] %v400
      %v402 = vld [vmem:[#allocation2 + $0x148] sm:$0x11]
      %v403 = vsel %vm362, 0, %v402
      %404 = vst [vmem:[#allocation2 + $0x148] sm:$0x11] %v403
      %v405 = vld [vmem:[#allocation2 + $0x160] sm:$0x11]
      %v406 = vsel %vm362, 0, %v405
      %407 = vst [vmem:[#allocation2 + $0x160] sm:$0x11] %v406
      %v408 = vld [vmem:[#allocation2 + $0x178] sm:$0x11]
      %v409 = vsel %vm362, 0, %v408
      %410 = vst [vmem:[#allocation2 + $0x178] sm:$0x11] %v409
      %v411 = vld [vmem:[#allocation2 + $0x190] sm:$0x11]
      %v412 = vsel %vm362, 0, %v411
      %413 = vst [vmem:[#allocation2 + $0x190] sm:$0x11] %v412
      %v414 = vld [vmem:[#allocation2 + $0x1a8] sm:$0x11]
      %v415 = vsel %vm362, 0, %v414
      %416 = vst [vmem:[#allocation2 + $0x1a8] sm:$0x11] %v415
      %v417 = vld [vmem:[%s272] sm:$0xf]
      %v418 = vld [vmem:[%s272 + $0x4] sm:$0xf]
      %v419 = vld [vmem:[%s272 + $0x8] sm:$0xf]
      %v420 = vld [vmem:[%s272 + $0xc] sm:$0xf]
      %v421 = vld [vmem:[%s272 + $0x10] sm:$0xf]
      %v422 = vld [vmem:[%s272 + $0x14] sm:$0xf]
      %v423 = vld [vmem:[%s272 + $0x18] sm:$0xf]
      %v424 = vld [vmem:[%s272 + $0x1c] sm:$0xf]
      %v425 = vld [vmem:[%s272 + $0x20] sm:$0xf]
      %v426 = vld [vmem:[%s272 + $0x24] sm:$0xf]
      %v427 = vld [vmem:[%s272 + $0x28] sm:$0xf]
      %v428 = vld [vmem:[%s272 + $0x2c] sm:$0xf]
      %v429 = vld [vmem:[%s272 + $0x30] sm:$0xf]
      %v430 = vld [vmem:[%s272 + $0x34] sm:$0xf]
      %v431 = vld [vmem:[%s272 + $0x38] sm:$0xf]
      %v432 = vld [vmem:[%s272 + $0x3c] sm:$0xf]
      %v433 = vld [vmem:[%s272 + $0x40] sm:$0xf]
      %v434 = vld [vmem:[%s272 + $0x44] sm:$0xf]
      %v435 = vld [vmem:[%s272 + $0x48] sm:$0xf]
      %v436 = vld [vmem:[%s272 + $0x4c] sm:$0xf]
      %v437 = vld [vmem:[%s272 + $0x50] sm:$0xf]
      %v438 = vld [vmem:[%s272 + $0x54] sm:$0xf]
      %v439 = vld [vmem:[%s272 + $0x58] sm:$0xf]
      %v440 = vld [vmem:[%s272 + $0x5c] sm:$0xf]
      %v441 = vld [vmem:[%s272 + $0x60] sm:$0xf]
      %v442 = vld [vmem:[%s272 + $0x64] sm:$0xf]
      %v443 = vld [vmem:[%s272 + $0x68] sm:$0xf]
      %v444 = vld [vmem:[%s272 + $0x6c] sm:$0xf]
      %v445 = vld [vmem:[%s272 + $0x70] sm:$0xf]
      %v446 = vld [vmem:[%s272 + $0x74] sm:$0xf]
      %v447 = vld [vmem:[%s272 + $0x78] sm:$0xf]
      %v448 = vld [vmem:[%s272 + $0x7c] sm:$0xf]
      %vm449 = vsmask.f32 4368
      %vm450 = vmor %vm298, %vm449
      %v452 = vshrl.u32 %v417, 16
      %v454 = vrot.slane %v452, 7
      %v455 = vshll.u32 %v417, 16
      %v457 = vor.u32 %v454, %v455
      %v458 = vrot.slane %v454, 4
      %v460 = vshrl.u32 %v418, 16
      %v462 = vrot.slane %v460, 7
      %v463 = vshll.u32 %v418, 16
      %v465 = vor.u32 %v462, %v463
      %v466 = vsel %vm450, %v458, %v465
      %v467 = vrot.slane %v462, 4
      %v469 = vshrl.u32 %v419, 16
      %v471 = vrot.slane %v469, 7
      %v472 = vshll.u32 %v419, 16
      %v474 = vor.u32 %v471, %v472
      %v475 = vrot.slane %v471, 4
      %v477 = vshrl.u32 %v420, 16
      %v479 = vrot.slane %v477, 7
      %v480 = vshll.u32 %v420, 16
      %v482 = vor.u32 %v479, %v480
      %v483 = vsel %vm450, %v475, %v482
      %v484 = vrot.slane %v479, 4
      %v486 = vshrl.u32 %v421, 16
      %v488 = vrot.slane %v486, 7
      %v489 = vshll.u32 %v421, 16
      %v491 = vor.u32 %v488, %v489
      %v492 = vrot.slane %v488, 4
      %v494 = vshrl.u32 %v422, 16
      %v496 = vrot.slane %v494, 7
      %v497 = vshll.u32 %v422, 16
      %v499 = vor.u32 %v496, %v497
      %v500 = vsel %vm450, %v492, %v499
      %v501 = vrot.slane %v496, 4
      %v503 = vshrl.u32 %v423, 16
      %v505 = vrot.slane %v503, 7
      %v506 = vshll.u32 %v423, 16
      %v508 = vor.u32 %v505, %v506
      %v509 = vrot.slane %v505, 4
      %v511 = vshrl.u32 %v424, 16
      %v513 = vrot.slane %v511, 7
      %v514 = vshll.u32 %v424, 16
      %v516 = vor.u32 %v513, %v514
      %v517 = vsel %vm450, %v509, %v516
      %v518 = vrot.slane %v513, 4
      %v520 = vshrl.u32 %v425, 16
      %v522 = vrot.slane %v520, 7
      %v523 = vshll.u32 %v425, 16
      %v525 = vor.u32 %v522, %v523
      %v526 = vrot.slane %v522, 4
      %v528 = vshrl.u32 %v426, 16
      %v530 = vrot.slane %v528, 7
      %v531 = vshll.u32 %v426, 16
      %v533 = vor.u32 %v530, %v531
      %v534 = vsel %vm450, %v526, %v533
      %v535 = vrot.slane %v530, 4
      %v537 = vshrl.u32 %v427, 16
      %v539 = vrot.slane %v537, 7
      %v540 = vshll.u32 %v427, 16
      %v542 = vor.u32 %v539, %v540
      %v543 = vrot.slane %v539, 4
      %v545 = vshrl.u32 %v428, 16
      %v547 = vrot.slane %v545, 7
      %v548 = vshll.u32 %v428, 16
      %v550 = vor.u32 %v547, %v548
      %v551 = vsel %vm450, %v543, %v550
      %v552 = vrot.slane %v547, 4
      %v554 = vshrl.u32 %v429, 16
      %v556 = vrot.slane %v554, 7
      %v557 = vshll.u32 %v429, 16
      %v559 = vor.u32 %v556, %v557
      %v560 = vrot.slane %v556, 4
      %v562 = vshrl.u32 %v430, 16
      %v564 = vrot.slane %v562, 7
      %v565 = vshll.u32 %v430, 16
      %v567 = vor.u32 %v564, %v565
      %v568 = vsel %vm450, %v560, %v567
      %v569 = vrot.slane %v564, 4
      %v571 = vshrl.u32 %v431, 16
      %v573 = vrot.slane %v571, 7
      %v574 = vshll.u32 %v431, 16
      %v576 = vor.u32 %v573, %v574
      %v577 = vrot.slane %v573, 4
      %v579 = vshrl.u32 %v432, 16
      %v581 = vrot.slane %v579, 7
      %v582 = vshll.u32 %v432, 16
      %v584 = vor.u32 %v581, %v582
      %v585 = vsel %vm450, %v577, %v584
      %v586 = vrot.slane %v581, 4
      %v588 = vshrl.u32 %v433, 16
      %v590 = vrot.slane %v588, 7
      %v591 = vshll.u32 %v433, 16
      %v593 = vor.u32 %v590, %v591
      %v594 = vrot.slane %v590, 4
      %v596 = vshrl.u32 %v434, 16
      %v598 = vrot.slane %v596, 7
      %v599 = vshll.u32 %v434, 16
      %v601 = vor.u32 %v598, %v599
      %v602 = vsel %vm450, %v594, %v601
      %v603 = vrot.slane %v598, 4
      %v605 = vshrl.u32 %v435, 16
      %v607 = vrot.slane %v605, 7
      %v608 = vshll.u32 %v435, 16
      %v610 = vor.u32 %v607, %v608
      %v611 = vrot.slane %v607, 4
      %v613 = vshrl.u32 %v436, 16
      %v615 = vrot.slane %v613, 7
      %v616 = vshll.u32 %v436, 16
      %v618 = vor.u32 %v615, %v616
      %v619 = vsel %vm450, %v611, %v618
      %v620 = vrot.slane %v615, 4
      %v622 = vshrl.u32 %v437, 16
      %v624 = vrot.slane %v622, 7
      %v625 = vshll.u32 %v437, 16
      %v627 = vor.u32 %v624, %v625
      %v628 = vrot.slane %v624, 4
      %v630 = vshrl.u32 %v438, 16
      %v632 = vrot.slane %v630, 7
      %v633 = vshll.u32 %v438, 16
      %v635 = vor.u32 %v632, %v633
      %v636 = vsel %vm450, %v628, %v635
      %v637 = vrot.slane %v632, 4
      %v639 = vshrl.u32 %v439, 16
      %v641 = vrot.slane %v639, 7
      %v642 = vshll.u32 %v439, 16
      %v644 = vor.u32 %v641, %v642
      %v645 = vrot.slane %v641, 4
      %v647 = vshrl.u32 %v440, 16
      %v649 = vrot.slane %v647, 7
      %v650 = vshll.u32 %v440, 16
      %v652 = vor.u32 %v649, %v650
      %v653 = vsel %vm450, %v645, %v652
      %v654 = vrot.slane %v649, 4
      %v656 = vshrl.u32 %v441, 16
      %v658 = vrot.slane %v656, 7
      %v659 = vshll.u32 %v441, 16
      %v661 = vor.u32 %v658, %v659
      %v662 = vrot.slane %v658, 4
      %v664 = vshrl.u32 %v442, 16
      %v666 = vrot.slane %v664, 7
      %v667 = vshll.u32 %v442, 16
      %v669 = vor.u32 %v666, %v667
      %v670 = vsel %vm450, %v662, %v669
      %v671 = vrot.slane %v666, 4
      %v673 = vshrl.u32 %v443, 16
      %v675 = vrot.slane %v673, 7
      %v676 = vshll.u32 %v443, 16
      %v678 = vor.u32 %v675, %v676
      %v679 = vrot.slane %v675, 4
      %v681 = vshrl.u32 %v444, 16
      %v683 = vrot.slane %v681, 7
      %v684 = vshll.u32 %v444, 16
      %v686 = vor.u32 %v683, %v684
      %v687 = vsel %vm450, %v679, %v686
      %v688 = vrot.slane %v683, 4
      %v690 = vshrl.u32 %v445, 16
      %v692 = vrot.slane %v690, 7
      %v693 = vshll.u32 %v445, 16
      %v695 = vor.u32 %v692, %v693
      %v696 = vrot.slane %v692, 4
      %v698 = vshrl.u32 %v446, 16
      %v700 = vrot.slane %v698, 7
      %v701 = vshll.u32 %v446, 16
      %v703 = vor.u32 %v700, %v701
      %v704 = vsel %vm450, %v696, %v703
      %v705 = vrot.slane %v700, 4
      %v707 = vshrl.u32 %v447, 16
      %v709 = vrot.slane %v707, 7
      %v710 = vshll.u32 %v447, 16
      %v712 = vor.u32 %v709, %v710
      %v713 = vrot.slane %v709, 4
      %v715 = vshrl.u32 %v448, 16
      %v717 = vrot.slane %v715, 7
      %v718 = vshll.u32 %v448, 16
      %v720 = vor.u32 %v717, %v718
      %v721 = vsel %vm450, %v713, %v720
      %v722 = vrot.slane %v717, 4
      %s771 = scalar_lea.vmem [#allocation2], 24
      %vm772 = vcmask 1043456
      %vm773 = vmand %vm772, %vm358
      %v774 = vld [vmem:[%s771] sm:$0xf]
      %v775 = vsel %vm773, %v457, %v774
      %776 = vst [vmem:[%s771] sm:$0xf] %v775
      %777 = vst [vmem:[%s771 + $0x8] sm:$0xf] %v466
      %v778 = vld [vmem:[%s771 + $0x10] sm:$0x1]
      %v779 = vsel %vm299, %v467, %v778
      %780 = vst [vmem:[%s771 + $0x10] sm:$0x1] %v779
      %v781 = vld [vmem:[%s771 + $0x18] sm:$0xf]
      %v782 = vsel %vm773, %v474, %v781
      %783 = vst [vmem:[%s771 + $0x18] sm:$0xf] %v782
      %784 = vst [vmem:[%s771 + $0x20] sm:$0xf] %v483
      %v785 = vld [vmem:[%s771 + $0x28] sm:$0x1]
      %v786 = vsel %vm299, %v484, %v785
      %787 = vst [vmem:[%s771 + $0x28] sm:$0x1] %v786
      %v788 = vld [vmem:[%s771 + $0x30] sm:$0xf]
      %v789 = vsel %vm773, %v491, %v788
      %790 = vst [vmem:[%s771 + $0x30] sm:$0xf] %v789
      %791 = vst [vmem:[%s771 + $0x38] sm:$0xf] %v500
      %v792 = vld [vmem:[%s771 + $0x40] sm:$0x1]
      %v793 = vsel %vm299, %v501, %v792
      %794 = vst [vmem:[%s771 + $0x40] sm:$0x1] %v793
      %v795 = vld [vmem:[%s771 + $0x48] sm:$0xf]
      %v796 = vsel %vm773, %v508, %v795
      %797 = vst [vmem:[%s771 + $0x48] sm:$0xf] %v796
      %798 = vst [vmem:[%s771 + $0x50] sm:$0xf] %v517
      %v799 = vld [vmem:[%s771 + $0x58] sm:$0x1]
      %v800 = vsel %vm299, %v518, %v799
      %801 = vst [vmem:[%s771 + $0x58] sm:$0x1] %v800
      %v802 = vld [vmem:[%s771 + $0x60] sm:$0xf]
      %v803 = vsel %vm773, %v525, %v802
      %804 = vst [vmem:[%s771 + $0x60] sm:$0xf] %v803
      %805 = vst [vmem:[%s771 + $0x68] sm:$0xf] %v534
      %v806 = vld [vmem:[%s771 + $0x70] sm:$0x1]
      %v807 = vsel %vm299, %v535, %v806
      %808 = vst [vmem:[%s771 + $0x70] sm:$0x1] %v807
      %v809 = vld [vmem:[%s771 + $0x78] sm:$0xf]
      %v810 = vsel %vm773, %v542, %v809
      %811 = vst [vmem:[%s771 + $0x78] sm:$0xf] %v810
      %812 = vst [vmem:[%s771 + $0x80] sm:$0xf] %v551
      %v813 = vld [vmem:[%s771 + $0x88] sm:$0x1]
      %v814 = vsel %vm299, %v552, %v813
      %815 = vst [vmem:[%s771 + $0x88] sm:$0x1] %v814
      %v816 = vld [vmem:[%s771 + $0x90] sm:$0xf]
      %v817 = vsel %vm773, %v559, %v816
      %818 = vst [vmem:[%s771 + $0x90] sm:$0xf] %v817
      %819 = vst [vmem:[%s771 + $0x98] sm:$0xf] %v568
      %v820 = vld [vmem:[%s771 + $0xa0] sm:$0x1]
      %v821 = vsel %vm299, %v569, %v820
      %822 = vst [vmem:[%s771 + $0xa0] sm:$0x1] %v821
      %v823 = vld [vmem:[%s771 + $0xa8] sm:$0xf]
      %v824 = vsel %vm773, %v576, %v823
      %825 = vst [vmem:[%s771 + $0xa8] sm:$0xf] %v824
      %826 = vst [vmem:[%s771 + $0xb0] sm:$0xf] %v585
      %v827 = vld [vmem:[%s771 + $0xb8] sm:$0x1]
      %v828 = vsel %vm299, %v586, %v827
      %829 = vst [vmem:[%s771 + $0xb8] sm:$0x1] %v828
      %v830 = vld [vmem:[%s771 + $0xc0] sm:$0xf]
      %v831 = vsel %vm773, %v593, %v830
      %832 = vst [vmem:[%s771 + $0xc0] sm:$0xf] %v831
      %833 = vst [vmem:[%s771 + $0xc8] sm:$0xf] %v602
      %v834 = vld [vmem:[%s771 + $0xd0] sm:$0x1]
      %v835 = vsel %vm299, %v603, %v834
      %836 = vst [vmem:[%s771 + $0xd0] sm:$0x1] %v835
      %v837 = vld [vmem:[%s771 + $0xd8] sm:$0xf]
      %v838 = vsel %vm773, %v610, %v837
      %839 = vst [vmem:[%s771 + $0xd8] sm:$0xf] %v838
      %840 = vst [vmem:[%s771 + $0xe0] sm:$0xf] %v619
      %v841 = vld [vmem:[%s771 + $0xe8] sm:$0x1]
      %v842 = vsel %vm299, %v620, %v841
      %843 = vst [vmem:[%s771 + $0xe8] sm:$0x1] %v842
      %v844 = vld [vmem:[%s771 + $0xf0] sm:$0xf]
      %v845 = vsel %vm773, %v627, %v844
      %846 = vst [vmem:[%s771 + $0xf0] sm:$0xf] %v845
      %847 = vst [vmem:[%s771 + $0xf8] sm:$0xf] %v636
      %v848 = vld [vmem:[%s771 + $0x100] sm:$0x1]
      %v849 = vsel %vm299, %v637, %v848
      %850 = vst [vmem:[%s771 + $0x100] sm:$0x1] %v849
      %v851 = vld [vmem:[%s771 + $0x108] sm:$0xf]
      %v852 = vsel %vm773, %v644, %v851
      %853 = vst [vmem:[%s771 + $0x108] sm:$0xf] %v852
      %854 = vst [vmem:[%s771 + $0x110] sm:$0xf] %v653
      %v855 = vld [vmem:[%s771 + $0x118] sm:$0x1]
      %v856 = vsel %vm299, %v654, %v855
      %857 = vst [vmem:[%s771 + $0x118] sm:$0x1] %v856
      %v858 = vld [vmem:[%s771 + $0x120] sm:$0xf]
      %v859 = vsel %vm773, %v661, %v858
      %860 = vst [vmem:[%s771 + $0x120] sm:$0xf] %v859
      %861 = vst [vmem:[%s771 + $0x128] sm:$0xf] %v670
      %v862 = vld [vmem:[%s771 + $0x130] sm:$0x1]
      %v863 = vsel %vm299, %v671, %v862
      %864 = vst [vmem:[%s771 + $0x130] sm:$0x1] %v863
      %v865 = vld [vmem:[%s771 + $0x138] sm:$0xf]
      %v866 = vsel %vm773, %v678, %v865
      %867 = vst [vmem:[%s771 + $0x138] sm:$0xf] %v866
      %868 = vst [vmem:[%s771 + $0x140] sm:$0xf] %v687
      %v869 = vld [vmem:[%s771 + $0x148] sm:$0x1]
      %v870 = vsel %vm299, %v688, %v869
      %871 = vst [vmem:[%s771 + $0x148] sm:$0x1] %v870
      %v872 = vld [vmem:[%s771 + $0x150] sm:$0xf]
      %v873 = vsel %vm773, %v695, %v872
      %874 = vst [vmem:[%s771 + $0x150] sm:$0xf] %v873
      %875 = vst [vmem:[%s771 + $0x158] sm:$0xf] %v704
      %v876 = vld [vmem:[%s771 + $0x160] sm:$0x1]
      %v877 = vsel %vm299, %v705, %v876
      %878 = vst [vmem:[%s771 + $0x160] sm:$0x1] %v877
      %v879 = vld [vmem:[%s771 + $0x168] sm:$0xf]
      %v880 = vsel %vm773, %v712, %v879
      %881 = vst [vmem:[%s771 + $0x168] sm:$0xf] %v880
      %882 = vst [vmem:[%s771 + $0x170] sm:$0xf] %v721
      %v883 = vld [vmem:[%s771 + $0x178] sm:$0x1]
      %v884 = vsel %vm299, %v722, %v883
      %885 = vst [vmem:[%s771 + $0x178] sm:$0x1] %v884
      %v886 = vld [vmem:[%s277] sm:$0xf]
      %v887 = vld [vmem:[%s277 + $0x4] sm:$0xf]
      %v888 = vld [vmem:[%s277 + $0x8] sm:$0xf]
      %v889 = vld [vmem:[%s277 + $0xc] sm:$0xf]
      %v890 = vld [vmem:[%s277 + $0x10] sm:$0xf]
      %v891 = vld [vmem:[%s277 + $0x14] sm:$0xf]
      %v892 = vld [vmem:[%s277 + $0x18] sm:$0xf]
      %v893 = vld [vmem:[%s277 + $0x1c] sm:$0xf]
      %v894 = vld [vmem:[%s277 + $0x20] sm:$0xf]
      %v895 = vld [vmem:[%s277 + $0x24] sm:$0xf]
      %v896 = vld [vmem:[%s277 + $0x28] sm:$0xf]
      %v897 = vld [vmem:[%s277 + $0x2c] sm:$0xf]
      %v898 = vld [vmem:[%s277 + $0x30] sm:$0xf]
      %v899 = vld [vmem:[%s277 + $0x34] sm:$0xf]
      %v900 = vld [vmem:[%s277 + $0x38] sm:$0xf]
      %v901 = vld [vmem:[%s277 + $0x3c] sm:$0xf]
      %v902 = vld [vmem:[%s277 + $0x40] sm:$0xf]
      %v903 = vld [vmem:[%s277 + $0x44] sm:$0xf]
      %v904 = vld [vmem:[%s277 + $0x48] sm:$0xf]
      %v905 = vld [vmem:[%s277 + $0x4c] sm:$0xf]
      %v906 = vld [vmem:[%s277 + $0x50] sm:$0xf]
      %v907 = vld [vmem:[%s277 + $0x54] sm:$0xf]
      %v908 = vld [vmem:[%s277 + $0x58] sm:$0xf]
      %v909 = vld [vmem:[%s277 + $0x5c] sm:$0xf]
      %v910 = vld [vmem:[%s277 + $0x60] sm:$0xf]
      %v911 = vld [vmem:[%s277 + $0x64] sm:$0xf]
      %v912 = vld [vmem:[%s277 + $0x68] sm:$0xf]
      %v913 = vld [vmem:[%s277 + $0x6c] sm:$0xf]
      %v914 = vld [vmem:[%s277 + $0x70] sm:$0xf]
      %v915 = vld [vmem:[%s277 + $0x74] sm:$0xf]
      %v916 = vld [vmem:[%s277 + $0x78] sm:$0xf]
      %v917 = vld [vmem:[%s277 + $0x7c] sm:$0xf]
      %v919 = vshrl.u32 %v886, 16
      %v921 = vrot.slane %v919, 7
      %v922 = vshll.u32 %v886, 16
      %v924 = vor.u32 %v921, %v922
      %v925 = vrot.slane %v921, 4
      %v927 = vshrl.u32 %v887, 16
      %v929 = vrot.slane %v927, 7
      %v930 = vshll.u32 %v887, 16
      %v932 = vor.u32 %v929, %v930
      %v933 = vsel %vm450, %v925, %v932
      %v934 = vrot.slane %v929, 4
      %v936 = vshrl.u32 %v888, 16
      %v938 = vrot.slane %v936, 7
      %v939 = vshll.u32 %v888, 16
      %v941 = vor.u32 %v938, %v939
      %v942 = vrot.slane %v938, 4
      %v944 = vshrl.u32 %v889, 16
      %v946 = vrot.slane %v944, 7
      %v947 = vshll.u32 %v889, 16
      %v949 = vor.u32 %v946, %v947
      %v950 = vsel %vm450, %v942, %v949
      %v951 = vrot.slane %v946, 4
      %v953 = vshrl.u32 %v890, 16
      %v955 = vrot.slane %v953, 7
      %v956 = vshll.u32 %v890, 16
      %v958 = vor.u32 %v955, %v956
      %v959 = vrot.slane %v955, 4
      %v961 = vshrl.u32 %v891, 16
      %v963 = vrot.slane %v961, 7
      %v964 = vshll.u32 %v891, 16
      %v966 = vor.u32 %v963, %v964
      %v967 = vsel %vm450, %v959, %v966
      %v968 = vrot.slane %v963, 4
      %v970 = vshrl.u32 %v892, 16
      %v972 = vrot.slane %v970, 7
      %v973 = vshll.u32 %v892, 16
      %v975 = vor.u32 %v972, %v973
      %v976 = vrot.slane %v972, 4
      %v978 = vshrl.u32 %v893, 16
      %v980 = vrot.slane %v978, 7
      %v981 = vshll.u32 %v893, 16
      %v983 = vor.u32 %v980, %v981
      %v984 = vsel %vm450, %v976, %v983
      %v985 = vrot.slane %v980, 4
      %v987 = vshrl.u32 %v894, 16
      %v989 = vrot.slane %v987, 7
      %v990 = vshll.u32 %v894, 16
      %v992 = vor.u32 %v989, %v990
      %v993 = vrot.slane %v989, 4
      %v995 = vshrl.u32 %v895, 16
      %v997 = vrot.slane %v995, 7
      %v998 = vshll.u32 %v895, 16
      %v1000 = vor.u32 %v997, %v998
      %v1001 = vsel %vm450, %v993, %v1000
      %v1002 = vrot.slane %v997, 4
      %v1004 = vshrl.u32 %v896, 16
      %v1006 = vrot.slane %v1004, 7
      %v1007 = vshll.u32 %v896, 16
      %v1009 = vor.u32 %v1006, %v1007
      %v1010 = vrot.slane %v1006, 4
      %v1012 = vshrl.u32 %v897, 16
      %v1014 = vrot.slane %v1012, 7
      %v1015 = vshll.u32 %v897, 16
      %v1017 = vor.u32 %v1014, %v1015
      %v1018 = vsel %vm450, %v1010, %v1017
      %v1019 = vrot.slane %v1014, 4
      %v1021 = vshrl.u32 %v898, 16
      %v1023 = vrot.slane %v1021, 7
      %v1024 = vshll.u32 %v898, 16
      %v1026 = vor.u32 %v1023, %v1024
      %v1027 = vrot.slane %v1023, 4
      %v1029 = vshrl.u32 %v899, 16
      %v1031 = vrot.slane %v1029, 7
      %v1032 = vshll.u32 %v899, 16
      %v1034 = vor.u32 %v1031, %v1032
      %v1035 = vsel %vm450, %v1027, %v1034
      %v1036 = vrot.slane %v1031, 4
      %v1038 = vshrl.u32 %v900, 16
      %v1040 = vrot.slane %v1038, 7
      %v1041 = vshll.u32 %v900, 16
      %v1043 = vor.u32 %v1040, %v1041
      %v1044 = vrot.slane %v1040, 4
      %v1046 = vshrl.u32 %v901, 16
      %v1048 = vrot.slane %v1046, 7
      %v1049 = vshll.u32 %v901, 16
      %v1051 = vor.u32 %v1048, %v1049
      %v1052 = vsel %vm450, %v1044, %v1051
      %v1053 = vrot.slane %v1048, 4
      %v1055 = vshrl.u32 %v902, 16
      %v1057 = vrot.slane %v1055, 7
      %v1058 = vshll.u32 %v902, 16
      %v1060 = vor.u32 %v1057, %v1058
      %v1061 = vrot.slane %v1057, 4
      %v1063 = vshrl.u32 %v903, 16
      %v1065 = vrot.slane %v1063, 7
      %v1066 = vshll.u32 %v903, 16
      %v1068 = vor.u32 %v1065, %v1066
      %v1069 = vsel %vm450, %v1061, %v1068
      %v1070 = vrot.slane %v1065, 4
      %v1072 = vshrl.u32 %v904, 16
      %v1074 = vrot.slane %v1072, 7
      %v1075 = vshll.u32 %v904, 16
      %v1077 = vor.u32 %v1074, %v1075
      %v1078 = vrot.slane %v1074, 4
      %v1080 = vshrl.u32 %v905, 16
      %v1082 = vrot.slane %v1080, 7
      %v1083 = vshll.u32 %v905, 16
      %v1085 = vor.u32 %v1082, %v1083
      %v1086 = vsel %vm450, %v1078, %v1085
      %v1087 = vrot.slane %v1082, 4
      %v1089 = vshrl.u32 %v906, 16
      %v1091 = vrot.slane %v1089, 7
      %v1092 = vshll.u32 %v906, 16
      %v1094 = vor.u32 %v1091, %v1092
      %v1095 = vrot.slane %v1091, 4
      %v1097 = vshrl.u32 %v907, 16
      %v1099 = vrot.slane %v1097, 7
      %v1100 = vshll.u32 %v907, 16
      %v1102 = vor.u32 %v1099, %v1100
      %v1103 = vsel %vm450, %v1095, %v1102
      %v1104 = vrot.slane %v1099, 4
      %v1106 = vshrl.u32 %v908, 16
      %v1108 = vrot.slane %v1106, 7
      %v1109 = vshll.u32 %v908, 16
      %v1111 = vor.u32 %v1108, %v1109
      %v1112 = vrot.slane %v1108, 4
      %v1114 = vshrl.u32 %v909, 16
      %v1116 = vrot.slane %v1114, 7
      %v1117 = vshll.u32 %v909, 16
      %v1119 = vor.u32 %v1116, %v1117
      %v1120 = vsel %vm450, %v1112, %v1119
      %v1121 = vrot.slane %v1116, 4
      %v1123 = vshrl.u32 %v910, 16
      %v1125 = vrot.slane %v1123, 7
      %v1126 = vshll.u32 %v910, 16
      %v1128 = vor.u32 %v1125, %v1126
      %v1129 = vrot.slane %v1125, 4
      %v1131 = vshrl.u32 %v911, 16
      %v1133 = vrot.slane %v1131, 7
      %v1134 = vshll.u32 %v911, 16
      %v1136 = vor.u32 %v1133, %v1134
      %v1137 = vsel %vm450, %v1129, %v1136
      %v1138 = vrot.slane %v1133, 4
      %v1140 = vshrl.u32 %v912, 16
      %v1142 = vrot.slane %v1140, 7
      %v1143 = vshll.u32 %v912, 16
      %v1145 = vor.u32 %v1142, %v1143
      %v1146 = vrot.slane %v1142, 4
      %v1148 = vshrl.u32 %v913, 16
      %v1150 = vrot.slane %v1148, 7
      %v1151 = vshll.u32 %v913, 16
      %v1153 = vor.u32 %v1150, %v1151
      %v1154 = vsel %vm450, %v1146, %v1153
      %v1155 = vrot.slane %v1150, 4
      %v1157 = vshrl.u32 %v914, 16
      %v1159 = vrot.slane %v1157, 7
      %v1160 = vshll.u32 %v914, 16
      %v1162 = vor.u32 %v1159, %v1160
      %v1163 = vrot.slane %v1159, 4
      %v1165 = vshrl.u32 %v915, 16
      %v1167 = vrot.slane %v1165, 7
      %v1168 = vshll.u32 %v915, 16
      %v1170 = vor.u32 %v1167, %v1168
      %v1171 = vsel %vm450, %v1163, %v1170
      %v1172 = vrot.slane %v1167, 4
      %v1174 = vshrl.u32 %v916, 16
      %v1176 = vrot.slane %v1174, 7
      %v1177 = vshll.u32 %v916, 16
      %v1179 = vor.u32 %v1176, %v1177
      %v1180 = vrot.slane %v1176, 4
      %v1182 = vshrl.u32 %v917, 16
      %v1184 = vrot.slane %v1182, 7
      %v1185 = vshll.u32 %v917, 16
      %v1187 = vor.u32 %v1184, %v1185
      %v1188 = vsel %vm450, %v1180, %v1187
      %v1189 = vrot.slane %v1184, 4
      %v1238 = vld [vmem:[%s771 + $0x4] sm:$0xf]
      %v1239 = vsel %vm773, %v924, %v1238
      %1240 = vst [vmem:[%s771 + $0x4] sm:$0xf] %v1239
      %1241 = vst [vmem:[%s771 + $0xc] sm:$0xf] %v933
      %v1242 = vld [vmem:[%s771 + $0x14] sm:$0x1]
      %v1243 = vsel %vm299, %v934, %v1242
      %1244 = vst [vmem:[%s771 + $0x14] sm:$0x1] %v1243
      %v1245 = vld [vmem:[%s771 + $0x1c] sm:$0xf]
      %v1246 = vsel %vm773, %v941, %v1245
      %1247 = vst [vmem:[%s771 + $0x1c] sm:$0xf] %v1246
      %1248 = vst [vmem:[%s771 + $0x24] sm:$0xf] %v950
      %v1249 = vld [vmem:[%s771 + $0x2c] sm:$0x1]
      %v1250 = vsel %vm299, %v951, %v1249
      %1251 = vst [vmem:[%s771 + $0x2c] sm:$0x1] %v1250
      %v1252 = vld [vmem:[%s771 + $0x34] sm:$0xf]
      %v1253 = vsel %vm773, %v958, %v1252
      %1254 = vst [vmem:[%s771 + $0x34] sm:$0xf] %v1253
      %1255 = vst [vmem:[%s771 + $0x3c] sm:$0xf] %v967
      %v1256 = vld [vmem:[%s771 + $0x44] sm:$0x1]
      %v1257 = vsel %vm299, %v968, %v1256
      %1258 = vst [vmem:[%s771 + $0x44] sm:$0x1] %v1257
      %v1259 = vld [vmem:[%s771 + $0x4c] sm:$0xf]
      %v1260 = vsel %vm773, %v975, %v1259
      %1261 = vst [vmem:[%s771 + $0x4c] sm:$0xf] %v1260
      %1262 = vst [vmem:[%s771 + $0x54] sm:$0xf] %v984
      %v1263 = vld [vmem:[%s771 + $0x5c] sm:$0x1]
      %v1264 = vsel %vm299, %v985, %v1263
      %1265 = vst [vmem:[%s771 + $0x5c] sm:$0x1] %v1264
      %v1266 = vld [vmem:[%s771 + $0x64] sm:$0xf]
      %v1267 = vsel %vm773, %v992, %v1266
      %1268 = vst [vmem:[%s771 + $0x64] sm:$0xf] %v1267
      %1269 = vst [vmem:[%s771 + $0x6c] sm:$0xf] %v1001
      %v1270 = vld [vmem:[%s771 + $0x74] sm:$0x1]
      %v1271 = vsel %vm299, %v1002, %v1270
      %1272 = vst [vmem:[%s771 + $0x74] sm:$0x1] %v1271
      %v1273 = vld [vmem:[%s771 + $0x7c] sm:$0xf]
      %v1274 = vsel %vm773, %v1009, %v1273
      %1275 = vst [vmem:[%s771 + $0x7c] sm:$0xf] %v1274
      %1276 = vst [vmem:[%s771 + $0x84] sm:$0xf] %v1018
      %v1277 = vld [vmem:[%s771 + $0x8c] sm:$0x1]
      %v1278 = vsel %vm299, %v1019, %v1277
      %1279 = vst [vmem:[%s771 + $0x8c] sm:$0x1] %v1278
      %v1280 = vld [vmem:[%s771 + $0x94] sm:$0xf]
      %v1281 = vsel %vm773, %v1026, %v1280
      %1282 = vst [vmem:[%s771 + $0x94] sm:$0xf] %v1281
      %1283 = vst [vmem:[%s771 + $0x9c] sm:$0xf] %v1035
      %v1284 = vld [vmem:[%s771 + $0xa4] sm:$0x1]
      %v1285 = vsel %vm299, %v1036, %v1284
      %1286 = vst [vmem:[%s771 + $0xa4] sm:$0x1] %v1285
      %v1287 = vld [vmem:[%s771 + $0xac] sm:$0xf]
      %v1288 = vsel %vm773, %v1043, %v1287
      %1289 = vst [vmem:[%s771 + $0xac] sm:$0xf] %v1288
      %1290 = vst [vmem:[%s771 + $0xb4] sm:$0xf] %v1052
      %v1291 = vld [vmem:[%s771 + $0xbc] sm:$0x1]
      %v1292 = vsel %vm299, %v1053, %v1291
      %1293 = vst [vmem:[%s771 + $0xbc] sm:$0x1] %v1292
      %v1294 = vld [vmem:[%s771 + $0xc4] sm:$0xf]
      %v1295 = vsel %vm773, %v1060, %v1294
      %1296 = vst [vmem:[%s771 + $0xc4] sm:$0xf] %v1295
      %1297 = vst [vmem:[%s771 + $0xcc] sm:$0xf] %v1069
      %v1298 = vld [vmem:[%s771 + $0xd4] sm:$0x1]
      %v1299 = vsel %vm299, %v1070, %v1298
      %1300 = vst [vmem:[%s771 + $0xd4] sm:$0x1] %v1299
      %v1301 = vld [vmem:[%s771 + $0xdc] sm:$0xf]
      %v1302 = vsel %vm773, %v1077, %v1301
      %1303 = vst [vmem:[%s771 + $0xdc] sm:$0xf] %v1302
      %1304 = vst [vmem:[%s771 + $0xe4] sm:$0xf] %v1086
      %v1305 = vld [vmem:[%s771 + $0xec] sm:$0x1]
      %v1306 = vsel %vm299, %v1087, %v1305
      %1307 = vst [vmem:[%s771 + $0xec] sm:$0x1] %v1306
      %v1308 = vld [vmem:[%s771 + $0xf4] sm:$0xf]
      %v1309 = vsel %vm773, %v1094, %v1308
      %1310 = vst [vmem:[%s771 + $0xf4] sm:$0xf] %v1309
      %1311 = vst [vmem:[%s771 + $0xfc] sm:$0xf] %v1103
      %v1312 = vld [vmem:[%s771 + $0x104] sm:$0x1]
      %v1313 = vsel %vm299, %v1104, %v1312
      %1314 = vst [vmem:[%s771 + $0x104] sm:$0x1] %v1313
      %v1315 = vld [vmem:[%s771 + $0x10c] sm:$0xf]
      %v1316 = vsel %vm773, %v1111, %v1315
      %1317 = vst [vmem:[%s771 + $0x10c] sm:$0xf] %v1316
      %1318 = vst [vmem:[%s771 + $0x114] sm:$0xf] %v1120
      %v1319 = vld [vmem:[%s771 + $0x11c] sm:$0x1]
      %v1320 = vsel %vm299, %v1121, %v1319
      %1321 = vst [vmem:[%s771 + $0x11c] sm:$0x1] %v1320
      %v1322 = vld [vmem:[%s771 + $0x124] sm:$0xf]
      %v1323 = vsel %vm773, %v1128, %v1322
      %1324 = vst [vmem:[%s771 + $0x124] sm:$0xf] %v1323
      %1325 = vst [vmem:[%s771 + $0x12c] sm:$0xf] %v1137
      %v1326 = vld [vmem:[%s771 + $0x134] sm:$0x1]
      %v1327 = vsel %vm299, %v1138, %v1326
      %1328 = vst [vmem:[%s771 + $0x134] sm:$0x1] %v1327
      %v1329 = vld [vmem:[%s771 + $0x13c] sm:$0xf]
      %v1330 = vsel %vm773, %v1145, %v1329
      %1331 = vst [vmem:[%s771 + $0x13c] sm:$0xf] %v1330
      %1332 = vst [vmem:[%s771 + $0x144] sm:$0xf] %v1154
      %v1333 = vld [vmem:[%s771 + $0x14c] sm:$0x1]
      %v1334 = vsel %vm299, %v1155, %v1333
      %1335 = vst [vmem:[%s771 + $0x14c] sm:$0x1] %v1334
      %v1336 = vld [vmem:[%s771 + $0x154] sm:$0xf]
      %v1337 = vsel %vm773, %v1162, %v1336
      %1338 = vst [vmem:[%s771 + $0x154] sm:$0xf] %v1337
      %1339 = vst [vmem:[%s771 + $0x15c] sm:$0xf] %v1171
      %v1340 = vld [vmem:[%s771 + $0x164] sm:$0x1]
      %v1341 = vsel %vm299, %v1172, %v1340
      %1342 = vst [vmem:[%s771 + $0x164] sm:$0x1] %v1341
      %v1343 = vld [vmem:[%s771 + $0x16c] sm:$0xf]
      %v1344 = vsel %vm773, %v1179, %v1343
      %1345 = vst [vmem:[%s771 + $0x16c] sm:$0xf] %v1344
      %1346 = vst [vmem:[%s771 + $0x174] sm:$0xf] %v1188
      %v1347 = vld [vmem:[%s771 + $0x17c] sm:$0x1]
      %v1348 = vsel %vm299, %v1189, %v1347
      %1349 = vst [vmem:[%s771 + $0x17c] sm:$0x1] %v1348
      %v1350 = vld [vmem:[#allocation2] sm:$0xff]
      %v1351 = vld [vmem:[#allocation2 + $0x8] sm:$0xff]
      %v1352 = vld [vmem:[#allocation2 + $0x18] sm:$0xff]
      %v1353 = vld [vmem:[#allocation2 + $0x20] sm:$0xff]
      %v1354 = vld [vmem:[#allocation2 + $0x30] sm:$0xff]
      %v1355 = vld [vmem:[#allocation2 + $0x38] sm:$0xff]
      %v1356 = vld [vmem:[#allocation2 + $0x48] sm:$0xff]
      %v1357 = vld [vmem:[#allocation2 + $0x50] sm:$0xff]
      %v1358 = vld [vmem:[#allocation2 + $0x60] sm:$0xff]
      %v1359 = vld [vmem:[#allocation2 + $0x68] sm:$0xff]
      %v1360 = vld [vmem:[#allocation2 + $0x78] sm:$0xff]
      %v1361 = vld [vmem:[#allocation2 + $0x80] sm:$0xff]
      %v1362 = vld [vmem:[#allocation2 + $0x90] sm:$0xff]
      %v1363 = vld [vmem:[#allocation2 + $0x98] sm:$0xff]
      %v1364 = vld [vmem:[#allocation2 + $0xa8] sm:$0xff]
      %v1365 = vld [vmem:[#allocation2 + $0xb0] sm:$0xff]
      %v1366 = vld [vmem:[#allocation2 + $0xc0] sm:$0xff]
      %v1367 = vld [vmem:[#allocation2 + $0xc8] sm:$0xff]
      %v1368 = vld [vmem:[#allocation2 + $0xd8] sm:$0xff]
      %v1369 = vld [vmem:[#allocation2 + $0xe0] sm:$0xff]
      %v1370 = vld [vmem:[#allocation2 + $0xf0] sm:$0xff]
      %v1371 = vld [vmem:[#allocation2 + $0xf8] sm:$0xff]
      %v1372 = vld [vmem:[#allocation2 + $0x108] sm:$0xff]
      %v1373 = vld [vmem:[#allocation2 + $0x110] sm:$0xff]
      %v1374 = vld [vmem:[#allocation2 + $0x120] sm:$0xff]
      %v1375 = vld [vmem:[#allocation2 + $0x128] sm:$0xff]
      %v1376 = vld [vmem:[#allocation2 + $0x138] sm:$0xff]
      %v1377 = vld [vmem:[#allocation2 + $0x140] sm:$0xff]
      %v1378 = vld [vmem:[#allocation2 + $0x150] sm:$0xff]
      %v1379 = vld [vmem:[#allocation2 + $0x158] sm:$0xff]
      %v1380 = vld [vmem:[#allocation2 + $0x168] sm:$0xff]
      %v1381 = vld [vmem:[#allocation2 + $0x170] sm:$0xff]
      %v1382 = vld [vmem:[#allocation2 + $0x10] sm:$0x11]
      %v1383 = vld [vmem:[#allocation2 + $0x28] sm:$0x11]
      %v1384 = vld [vmem:[#allocation2 + $0x40] sm:$0x11]
      %v1385 = vld [vmem:[#allocation2 + $0x58] sm:$0x11]
      %v1386 = vld [vmem:[#allocation2 + $0x70] sm:$0x11]
      %v1387 = vld [vmem:[#allocation2 + $0x88] sm:$0x11]
      %v1388 = vld [vmem:[#allocation2 + $0xa0] sm:$0x11]
      %v1389 = vld [vmem:[#allocation2 + $0xb8] sm:$0x11]
      %v1390 = vld [vmem:[#allocation2 + $0xd0] sm:$0x11]
      %v1391 = vld [vmem:[#allocation2 + $0xe8] sm:$0x11]
      %v1392 = vld [vmem:[#allocation2 + $0x100] sm:$0x11]
      %v1393 = vld [vmem:[#allocation2 + $0x118] sm:$0x11]
      %v1394 = vld [vmem:[#allocation2 + $0x130] sm:$0x11]
      %v1395 = vld [vmem:[#allocation2 + $0x148] sm:$0x11]
      %v1396 = vld [vmem:[#allocation2 + $0x160] sm:$0x11]
      %v1397 = vld [vmem:[#allocation2 + $0x178] sm:$0x11]
      %vm1398 = vsmask.f32 3328
      %vm1399 = vsmask.f32 7440
      %vm1400 = vmor %vm1398, %vm1399
      %v1402 = vshrl.u32 %v1350, 16
      %v1404 = vrot.slane %v1402, 4
      %v1405 = vshll.u32 %v1350, 16
      %v1407 = vrot.slane %v1405, 5
      %v1408 = vor.u32 %v1404, %v1407
      %v1409 = vrot.slane %v1408, 4
      %v1411 = vshll.u32 %v1351, 16
      %v1413 = vrot.slane %v1411, 5
      %v1414 = vsel %vm1400, %v1409, %v1413
      %v1415 = vshrl.u32 %v1351, 16
      %v1417 = vrot.slane %v1415, 4
      %v1418 = vor.u32 %v1417, %v1413
      %v1419 = vrot.slane %v1418, 4
      %v1421 = vshll.u32 %v1382, 16
      %v1423 = vrot.slane %v1421, 5
      %v1424 = vsel %vm1400, %v1419, %v1423
      %v1426 = vshrl.u32 %v1352, 16
      %v1428 = vrot.slane %v1426, 4
      %v1429 = vshll.u32 %v1352, 16
      %v1431 = vrot.slane %v1429, 5
      %v1432 = vor.u32 %v1428, %v1431
      %v1433 = vrot.slane %v1432, 4
      %v1435 = vshll.u32 %v1353, 16
      %v1437 = vrot.slane %v1435, 5
      %v1438 = vsel %vm1400, %v1433, %v1437
      %v1439 = vshrl.u32 %v1353, 16
      %v1441 = vrot.slane %v1439, 4
      %v1442 = vor.u32 %v1441, %v1437
      %v1443 = vrot.slane %v1442, 4
      %v1445 = vshll.u32 %v1383, 16
      %v1447 = vrot.slane %v1445, 5
      %v1448 = vsel %vm1400, %v1443, %v1447
      %v1450 = vshrl.u32 %v1354, 16
      %v1452 = vrot.slane %v1450, 4
      %v1453 = vshll.u32 %v1354, 16
      %v1455 = vrot.slane %v1453, 5
      %v1456 = vor.u32 %v1452, %v1455
      %v1457 = vrot.slane %v1456, 4
      %v1459 = vshll.u32 %v1355, 16
      %v1461 = vrot.slane %v1459, 5
      %v1462 = vsel %vm1400, %v1457, %v1461
      %v1463 = vshrl.u32 %v1355, 16
      %v1465 = vrot.slane %v1463, 4
      %v1466 = vor.u32 %v1465, %v1461
      %v1467 = vrot.slane %v1466, 4
      %v1469 = vshll.u32 %v1384, 16
      %v1471 = vrot.slane %v1469, 5
      %v1472 = vsel %vm1400, %v1467, %v1471
      %v1474 = vshrl.u32 %v1356, 16
      %v1476 = vrot.slane %v1474, 4
      %v1477 = vshll.u32 %v1356, 16
      %v1479 = vrot.slane %v1477, 5
      %v1480 = vor.u32 %v1476, %v1479
      %v1481 = vrot.slane %v1480, 4
      %v1483 = vshll.u32 %v1357, 16
      %v1485 = vrot.slane %v1483, 5
      %v1486 = vsel %vm1400, %v1481, %v1485
      %v1487 = vshrl.u32 %v1357, 16
      %v1489 = vrot.slane %v1487, 4
      %v1490 = vor.u32 %v1489, %v1485
      %v1491 = vrot.slane %v1490, 4
      %v1493 = vshll.u32 %v1385, 16
      %v1495 = vrot.slane %v1493, 5
      %v1496 = vsel %vm1400, %v1491, %v1495
      %v1498 = vshrl.u32 %v1358, 16
      %v1500 = vrot.slane %v1498, 4
      %v1501 = vshll.u32 %v1358, 16
      %v1503 = vrot.slane %v1501, 5
      %v1504 = vor.u32 %v1500, %v1503
      %v1505 = vrot.slane %v1504, 4
      %v1507 = vshll.u32 %v1359, 16
      %v1509 = vrot.slane %v1507, 5
      %v1510 = vsel %vm1400, %v1505, %v1509
      %v1511 = vshrl.u32 %v1359, 16
      %v1513 = vrot.slane %v1511, 4
      %v1514 = vor.u32 %v1513, %v1509
      %v1515 = vrot.slane %v1514, 4
      %v1517 = vshll.u32 %v1386, 16
      %v1519 = vrot.slane %v1517, 5
      %v1520 = vsel %vm1400, %v1515, %v1519
      %v1522 = vshrl.u32 %v1360, 16
      %v1524 = vrot.slane %v1522, 4
      %v1525 = vshll.u32 %v1360, 16
      %v1527 = vrot.slane %v1525, 5
      %v1528 = vor.u32 %v1524, %v1527
      %v1529 = vrot.slane %v1528, 4
      %v1531 = vshll.u32 %v1361, 16
      %v1533 = vrot.slane %v1531, 5
      %v1534 = vsel %vm1400, %v1529, %v1533
      %v1535 = vshrl.u32 %v1361, 16
      %v1537 = vrot.slane %v1535, 4
      %v1538 = vor.u32 %v1537, %v1533
      %v1539 = vrot.slane %v1538, 4
      %v1541 = vshll.u32 %v1387, 16
      %v1543 = vrot.slane %v1541, 5
      %v1544 = vsel %vm1400, %v1539, %v1543
      %v1546 = vshrl.u32 %v1362, 16
      %v1548 = vrot.slane %v1546, 4
      %v1549 = vshll.u32 %v1362, 16
      %v1551 = vrot.slane %v1549, 5
      %v1552 = vor.u32 %v1548, %v1551
      %v1553 = vrot.slane %v1552, 4
      %v1555 = vshll.u32 %v1363, 16
      %v1557 = vrot.slane %v1555, 5
      %v1558 = vsel %vm1400, %v1553, %v1557
      %v1559 = vshrl.u32 %v1363, 16
      %v1561 = vrot.slane %v1559, 4
      %v1562 = vor.u32 %v1561, %v1557
      %v1563 = vrot.slane %v1562, 4
      %v1565 = vshll.u32 %v1388, 16
      %v1567 = vrot.slane %v1565, 5
      %v1568 = vsel %vm1400, %v1563, %v1567
      %v1570 = vshrl.u32 %v1364, 16
      %v1572 = vrot.slane %v1570, 4
      %v1573 = vshll.u32 %v1364, 16
      %v1575 = vrot.slane %v1573, 5
      %v1576 = vor.u32 %v1572, %v1575
      %v1577 = vrot.slane %v1576, 4
      %v1579 = vshll.u32 %v1365, 16
      %v1581 = vrot.slane %v1579, 5
      %v1582 = vsel %vm1400, %v1577, %v1581
      %v1583 = vshrl.u32 %v1365, 16
      %v1585 = vrot.slane %v1583, 4
      %v1586 = vor.u32 %v1585, %v1581
      %v1587 = vrot.slane %v1586, 4
      %v1589 = vshll.u32 %v1389, 16
      %v1591 = vrot.slane %v1589, 5
      %v1592 = vsel %vm1400, %v1587, %v1591
      %v1594 = vshrl.u32 %v1366, 16
      %v1596 = vrot.slane %v1594, 4
      %v1597 = vshll.u32 %v1366, 16
      %v1599 = vrot.slane %v1597, 5
      %v1600 = vor.u32 %v1596, %v1599
      %v1601 = vrot.slane %v1600, 4
      %v1603 = vshll.u32 %v1367, 16
      %v1605 = vrot.slane %v1603, 5
      %v1606 = vsel %vm1400, %v1601, %v1605
      %v1607 = vshrl.u32 %v1367, 16
      %v1609 = vrot.slane %v1607, 4
      %v1610 = vor.u32 %v1609, %v1605
      %v1611 = vrot.slane %v1610, 4
      %v1613 = vshll.u32 %v1390, 16
      %v1615 = vrot.slane %v1613, 5
      %v1616 = vsel %vm1400, %v1611, %v1615
      %v1618 = vshrl.u32 %v1368, 16
      %v1620 = vrot.slane %v1618, 4
      %v1621 = vshll.u32 %v1368, 16
      %v1623 = vrot.slane %v1621, 5
      %v1624 = vor.u32 %v1620, %v1623
      %v1625 = vrot.slane %v1624, 4
      %v1627 = vshll.u32 %v1369, 16
      %v1629 = vrot.slane %v1627, 5
      %v1630 = vsel %vm1400, %v1625, %v1629
      %v1631 = vshrl.u32 %v1369, 16
      %v1633 = vrot.slane %v1631, 4
      %v1634 = vor.u32 %v1633, %v1629
      %v1635 = vrot.slane %v1634, 4
      %v1637 = vshll.u32 %v1391, 16
      %v1639 = vrot.slane %v1637, 5
      %v1640 = vsel %vm1400, %v1635, %v1639
      %v1642 = vshrl.u32 %v1370, 16
      %v1644 = vrot.slane %v1642, 4
      %v1645 = vshll.u32 %v1370, 16
      %v1647 = vrot.slane %v1645, 5
      %v1648 = vor.u32 %v1644, %v1647
      %v1649 = vrot.slane %v1648, 4
      %v1651 = vshll.u32 %v1371, 16
      %v1653 = vrot.slane %v1651, 5
      %v1654 = vsel %vm1400, %v1649, %v1653
      %v1655 = vshrl.u32 %v1371, 16
      %v1657 = vrot.slane %v1655, 4
      %v1658 = vor.u32 %v1657, %v1653
      %v1659 = vrot.slane %v1658, 4
      %v1661 = vshll.u32 %v1392, 16
      %v1663 = vrot.slane %v1661, 5
      %v1664 = vsel %vm1400, %v1659, %v1663
      %v1666 = vshrl.u32 %v1372, 16
      %v1668 = vrot.slane %v1666, 4
      %v1669 = vshll.u32 %v1372, 16
      %v1671 = vrot.slane %v1669, 5
      %v1672 = vor.u32 %v1668, %v1671
      %v1673 = vrot.slane %v1672, 4
      %v1675 = vshll.u32 %v1373, 16
      %v1677 = vrot.slane %v1675, 5
      %v1678 = vsel %vm1400, %v1673, %v1677
      %v1679 = vshrl.u32 %v1373, 16
      %v1681 = vrot.slane %v1679, 4
      %v1682 = vor.u32 %v1681, %v1677
      %v1683 = vrot.slane %v1682, 4
      %v1685 = vshll.u32 %v1393, 16
      %v1687 = vrot.slane %v1685, 5
      %v1688 = vsel %vm1400, %v1683, %v1687
      %v1690 = vshrl.u32 %v1374, 16
      %v1692 = vrot.slane %v1690, 4
      %v1693 = vshll.u32 %v1374, 16
      %v1695 = vrot.slane %v1693, 5
      %v1696 = vor.u32 %v1692, %v1695
      %v1697 = vrot.slane %v1696, 4
      %v1699 = vshll.u32 %v1375, 16
      %v1701 = vrot.slane %v1699, 5
      %v1702 = vsel %vm1400, %v1697, %v1701
      %v1703 = vshrl.u32 %v1375, 16
      %v1705 = vrot.slane %v1703, 4
      %v1706 = vor.u32 %v1705, %v1701
      %v1707 = vrot.slane %v1706, 4
      %v1709 = vshll.u32 %v1394, 16
      %v1711 = vrot.slane %v1709, 5
      %v1712 = vsel %vm1400, %v1707, %v1711
      %v1714 = vshrl.u32 %v1376, 16
      %v1716 = vrot.slane %v1714, 4
      %v1717 = vshll.u32 %v1376, 16
      %v1719 = vrot.slane %v1717, 5
      %v1720 = vor.u32 %v1716, %v1719
      %v1721 = vrot.slane %v1720, 4
      %v1723 = vshll.u32 %v1377, 16
      %v1725 = vrot.slane %v1723, 5
      %v1726 = vsel %vm1400, %v1721, %v1725
      %v1727 = vshrl.u32 %v1377, 16
      %v1729 = vrot.slane %v1727, 4
      %v1730 = vor.u32 %v1729, %v1725
      %v1731 = vrot.slane %v1730, 4
      %v1733 = vshll.u32 %v1395, 16
      %v1735 = vrot.slane %v1733, 5
      %v1736 = vsel %vm1400, %v1731, %v1735
      %v1738 = vshrl.u32 %v1378, 16
      %v1740 = vrot.slane %v1738, 4
      %v1741 = vshll.u32 %v1378, 16
      %v1743 = vrot.slane %v1741, 5
      %v1744 = vor.u32 %v1740, %v1743
      %v1745 = vrot.slane %v1744, 4
      %v1747 = vshll.u32 %v1379, 16
      %v1749 = vrot.slane %v1747, 5
      %v1750 = vsel %vm1400, %v1745, %v1749
      %v1751 = vshrl.u32 %v1379, 16
      %v1753 = vrot.slane %v1751, 4
      %v1754 = vor.u32 %v1753, %v1749
      %v1755 = vrot.slane %v1754, 4
      %v1757 = vshll.u32 %v1396, 16
      %v1759 = vrot.slane %v1757, 5
      %v1760 = vsel %vm1400, %v1755, %v1759
      %v1762 = vshrl.u32 %v1380, 16
      %v1764 = vrot.slane %v1762, 4
      %v1765 = vshll.u32 %v1380, 16
      %v1767 = vrot.slane %v1765, 5
      %v1768 = vor.u32 %v1764, %v1767
      %v1769 = vrot.slane %v1768, 4
      %v1771 = vshll.u32 %v1381, 16
      %v1773 = vrot.slane %v1771, 5
      %v1774 = vsel %vm1400, %v1769, %v1773
      %v1775 = vshrl.u32 %v1381, 16
      %v1777 = vrot.slane %v1775, 4
      %v1778 = vor.u32 %v1777, %v1773
      %v1779 = vrot.slane %v1778, 4
      %v1781 = vshll.u32 %v1397, 16
      %v1783 = vrot.slane %v1781, 5
      %v1784 = vsel %vm1400, %v1779, %v1783
      %v1785 = vld [vmem:[#allocation2] sm:$0xee]
      %v1786 = vld [vmem:[#allocation2 + $0x18] sm:$0xee]
      %v1787 = vld [vmem:[#allocation2 + $0x30] sm:$0xee]
      %v1788 = vld [vmem:[#allocation2 + $0x48] sm:$0xee]
      %v1789 = vld [vmem:[#allocation2 + $0x60] sm:$0xee]
      %v1790 = vld [vmem:[#allocation2 + $0x78] sm:$0xee]
      %v1791 = vld [vmem:[#allocation2 + $0x90] sm:$0xee]
      %v1792 = vld [vmem:[#allocation2 + $0xa8] sm:$0xee]
      %v1793 = vld [vmem:[#allocation2 + $0xc0] sm:$0xee]
      %v1794 = vld [vmem:[#allocation2 + $0xd8] sm:$0xee]
      %v1795 = vld [vmem:[#allocation2 + $0xf0] sm:$0xee]
      %v1796 = vld [vmem:[#allocation2 + $0x108] sm:$0xee]
      %v1797 = vld [vmem:[#allocation2 + $0x120] sm:$0xee]
      %v1798 = vld [vmem:[#allocation2 + $0x138] sm:$0xee]
      %v1799 = vld [vmem:[#allocation2 + $0x150] sm:$0xee]
      %v1800 = vld [vmem:[#allocation2 + $0x168] sm:$0xee]
      %vm1849 = vcmask 1042432
      %vm1850 = vcmask 1046532
      %vm1851 = vmor %vm1849, %vm1850
      %v1852 = vrot.slane %v1785, 5
      %v1853 = vrot.slane %v1852, 4
      %v1854 = vrot.slane %v1351, 5
      %v1855 = vsel %vm1851, %v1853, %v1854
      %v1856 = vrot.slane %v1854, 4
      %v1857 = vrot.slane %v1382, 5
      %v1858 = vsel %vm1851, %v1856, %v1857
      %v1859 = vrot.slane %v1786, 5
      %v1860 = vrot.slane %v1859, 4
      %v1861 = vrot.slane %v1353, 5
      %v1862 = vsel %vm1851, %v1860, %v1861
      %v1863 = vrot.slane %v1861, 4
      %v1864 = vrot.slane %v1383, 5
      %v1865 = vsel %vm1851, %v1863, %v1864
      %v1866 = vrot.slane %v1787, 5
      %v1867 = vrot.slane %v1866, 4
      %v1868 = vrot.slane %v1355, 5
      %v1869 = vsel %vm1851, %v1867, %v1868
      %v1870 = vrot.slane %v1868, 4
      %v1871 = vrot.slane %v1384, 5
      %v1872 = vsel %vm1851, %v1870, %v1871
      %v1873 = vrot.slane %v1788, 5
      %v1874 = vrot.slane %v1873, 4
      %v1875 = vrot.slane %v1357, 5
      %v1876 = vsel %vm1851, %v1874, %v1875
      %v1877 = vrot.slane %v1875, 4
      %v1878 = vrot.slane %v1385, 5
      %v1879 = vsel %vm1851, %v1877, %v1878
      %v1880 = vrot.slane %v1789, 5
      %v1881 = vrot.slane %v1880, 4
      %v1882 = vrot.slane %v1359, 5
      %v1883 = vsel %vm1851, %v1881, %v1882
      %v1884 = vrot.slane %v1882, 4
      %v1885 = vrot.slane %v1386, 5
      %v1886 = vsel %vm1851, %v1884, %v1885
      %v1887 = vrot.slane %v1790, 5
      %v1888 = vrot.slane %v1887, 4
      %v1889 = vrot.slane %v1361, 5
      %v1890 = vsel %vm1851, %v1888, %v1889
      %v1891 = vrot.slane %v1889, 4
      %v1892 = vrot.slane %v1387, 5
      %v1893 = vsel %vm1851, %v1891, %v1892
      %v1894 = vrot.slane %v1791, 5
      %v1895 = vrot.slane %v1894, 4
      %v1896 = vrot.slane %v1363, 5
      %v1897 = vsel %vm1851, %v1895, %v1896
      %v1898 = vrot.slane %v1896, 4
      %v1899 = vrot.slane %v1388, 5
      %v1900 = vsel %vm1851, %v1898, %v1899
      %v1901 = vrot.slane %v1792, 5
      %v1902 = vrot.slane %v1901, 4
      %v1903 = vrot.slane %v1365, 5
      %v1904 = vsel %vm1851, %v1902, %v1903
      %v1905 = vrot.slane %v1903, 4
      %v1906 = vrot.slane %v1389, 5
      %v1907 = vsel %vm1851, %v1905, %v1906
      %v1908 = vrot.slane %v1793, 5
      %v1909 = vrot.slane %v1908, 4
      %v1910 = vrot.slane %v1367, 5
      %v1911 = vsel %vm1851, %v1909, %v1910
      %v1912 = vrot.slane %v1910, 4
      %v1913 = vrot.slane %v1390, 5
      %v1914 = vsel %vm1851, %v1912, %v1913
      %v1915 = vrot.slane %v1794, 5
      %v1916 = vrot.slane %v1915, 4
      %v1917 = vrot.slane %v1369, 5
      %v1918 = vsel %vm1851, %v1916, %v1917
      %v1919 = vrot.slane %v1917, 4
      %v1920 = vrot.slane %v1391, 5
      %v1921 = vsel %vm1851, %v1919, %v1920
      %v1922 = vrot.slane %v1795, 5
      %v1923 = vrot.slane %v1922, 4
      %v1924 = vrot.slane %v1371, 5
      %v1925 = vsel %vm1851, %v1923, %v1924
      %v1926 = vrot.slane %v1924, 4
      %v1927 = vrot.slane %v1392, 5
      %v1928 = vsel %vm1851, %v1926, %v1927
      %v1929 = vrot.slane %v1796, 5
      %v1930 = vrot.slane %v1929, 4
      %v1931 = vrot.slane %v1373, 5
      %v1932 = vsel %vm1851, %v1930, %v1931
      %v1933 = vrot.slane %v1931, 4
      %v1934 = vrot.slane %v1393, 5
      %v1935 = vsel %vm1851, %v1933, %v1934
      %v1936 = vrot.slane %v1797, 5
      %v1937 = vrot.slane %v1936, 4
      %v1938 = vrot.slane %v1375, 5
      %v1939 = vsel %vm1851, %v1937, %v1938
      %v1940 = vrot.slane %v1938, 4
      %v1941 = vrot.slane %v1394, 5
      %v1942 = vsel %vm1851, %v1940, %v1941
      %v1943 = vrot.slane %v1798, 5
      %v1944 = vrot.slane %v1943, 4
      %v1945 = vrot.slane %v1377, 5
      %v1946 = vsel %vm1851, %v1944, %v1945
      %v1947 = vrot.slane %v1945, 4
      %v1948 = vrot.slane %v1395, 5
      %v1949 = vsel %vm1851, %v1947, %v1948
      %v1950 = vrot.slane %v1799, 5
      %v1951 = vrot.slane %v1950, 4
      %v1952 = vrot.slane %v1379, 5
      %v1953 = vsel %vm1851, %v1951, %v1952
      %v1954 = vrot.slane %v1952, 4
      %v1955 = vrot.slane %v1396, 5
      %v1956 = vsel %vm1851, %v1954, %v1955
      %v1957 = vrot.slane %v1800, 5
      %v1958 = vrot.slane %v1957, 4
      %v1959 = vrot.slane %v1381, 5
      %v1960 = vsel %vm1851, %v1958, %v1959
      %v1961 = vrot.slane %v1959, 4
      %v1962 = vrot.slane %v1397, 5
      %v1963 = vsel %vm1851, %v1961, %v1962
      %v1964 = vld [vmem:[%s771] sm:$0xff]
      %v1965 = vld [vmem:[%s771 + $0x8] sm:$0xff]
      %v1966 = vld [vmem:[%s771 + $0x18] sm:$0xff]
      %v1967 = vld [vmem:[%s771 + $0x20] sm:$0xff]
      %v1968 = vld [vmem:[%s771 + $0x30] sm:$0xff]
      %v1969 = vld [vmem:[%s771 + $0x38] sm:$0xff]
      %v1970 = vld [vmem:[%s771 + $0x48] sm:$0xff]
      %v1971 = vld [vmem:[%s771 + $0x50] sm:$0xff]
      %v1972 = vld [vmem:[%s771 + $0x60] sm:$0xff]
      %v1973 = vld [vmem:[%s771 + $0x68] sm:$0xff]
      %v1974 = vld [vmem:[%s771 + $0x78] sm:$0xff]
      %v1975 = vld [vmem:[%s771 + $0x80] sm:$0xff]
      %v1976 = vld [vmem:[%s771 + $0x90] sm:$0xff]
      %v1977 = vld [vmem:[%s771 + $0x98] sm:$0xff]
      %v1978 = vld [vmem:[%s771 + $0xa8] sm:$0xff]
      %v1979 = vld [vmem:[%s771 + $0xb0] sm:$0xff]
      %v1980 = vld [vmem:[%s771 + $0xc0] sm:$0xff]
      %v1981 = vld [vmem:[%s771 + $0xc8] sm:$0xff]
      %v1982 = vld [vmem:[%s771 + $0xd8] sm:$0xff]
      %v1983 = vld [vmem:[%s771 + $0xe0] sm:$0xff]
      %v1984 = vld [vmem:[%s771 + $0xf0] sm:$0xff]
      %v1985 = vld [vmem:[%s771 + $0xf8] sm:$0xff]
      %v1986 = vld [vmem:[%s771 + $0x108] sm:$0xff]
      %v1987 = vld [vmem:[%s771 + $0x110] sm:$0xff]
      %v1988 = vld [vmem:[%s771 + $0x120] sm:$0xff]
      %v1989 = vld [vmem:[%s771 + $0x128] sm:$0xff]
      %v1990 = vld [vmem:[%s771 + $0x138] sm:$0xff]
      %v1991 = vld [vmem:[%s771 + $0x140] sm:$0xff]
      %v1992 = vld [vmem:[%s771 + $0x150] sm:$0xff]
      %v1993 = vld [vmem:[%s771 + $0x158] sm:$0xff]
      %v1994 = vld [vmem:[%s771 + $0x168] sm:$0xff]
      %v1995 = vld [vmem:[%s771 + $0x170] sm:$0xff]
      %v1996 = vld [vmem:[%s771 + $0x10] sm:$0x11]
      %v1997 = vld [vmem:[%s771 + $0x28] sm:$0x11]
      %v1998 = vld [vmem:[%s771 + $0x40] sm:$0x11]
      %v1999 = vld [vmem:[%s771 + $0x58] sm:$0x11]
      %v2000 = vld [vmem:[%s771 + $0x70] sm:$0x11]
      %v2001 = vld [vmem:[%s771 + $0x88] sm:$0x11]
      %v2002 = vld [vmem:[%s771 + $0xa0] sm:$0x11]
      %v2003 = vld [vmem:[%s771 + $0xb8] sm:$0x11]
      %v2004 = vld [vmem:[%s771 + $0xd0] sm:$0x11]
      %v2005 = vld [vmem:[%s771 + $0xe8] sm:$0x11]
      %v2006 = vld [vmem:[%s771 + $0x100] sm:$0x11]
      %v2007 = vld [vmem:[%s771 + $0x118] sm:$0x11]
      %v2008 = vld [vmem:[%s771 + $0x130] sm:$0x11]
      %v2009 = vld [vmem:[%s771 + $0x148] sm:$0x11]
      %v2010 = vld [vmem:[%s771 + $0x160] sm:$0x11]
      %v2011 = vld [vmem:[%s771 + $0x178] sm:$0x11]
      %v2013 = vshrl.u32 %v1964, 16
      %v2015 = vrot.slane %v2013, 4
      %v2016 = vshll.u32 %v1964, 16
      %v2018 = vrot.slane %v2016, 5
      %v2019 = vor.u32 %v2015, %v2018
      %v2020 = vrot.slane %v2019, 4
      %v2022 = vshll.u32 %v1965, 16
      %v2024 = vrot.slane %v2022, 5
      %v2025 = vsel %vm1400, %v2020, %v2024
      %v2026 = vshrl.u32 %v1965, 16
      %v2028 = vrot.slane %v2026, 4
      %v2029 = vor.u32 %v2028, %v2024
      %v2030 = vrot.slane %v2029, 4
      %v2032 = vshll.u32 %v1996, 16
      %v2034 = vrot.slane %v2032, 5
      %v2035 = vsel %vm1400, %v2030, %v2034
      %v2037 = vshrl.u32 %v1966, 16
      %v2039 = vrot.slane %v2037, 4
      %v2040 = vshll.u32 %v1966, 16
      %v2042 = vrot.slane %v2040, 5
      %v2043 = vor.u32 %v2039, %v2042
      %v2044 = vrot.slane %v2043, 4
      %v2046 = vshll.u32 %v1967, 16
      %v2048 = vrot.slane %v2046, 5
      %v2049 = vsel %vm1400, %v2044, %v2048
      %v2050 = vshrl.u32 %v1967, 16
      %v2052 = vrot.slane %v2050, 4
      %v2053 = vor.u32 %v2052, %v2048
      %v2054 = vrot.slane %v2053, 4
      %v2056 = vshll.u32 %v1997, 16
      %v2058 = vrot.slane %v2056, 5
      %v2059 = vsel %vm1400, %v2054, %v2058
      %v2061 = vshrl.u32 %v1968, 16
      %v2063 = vrot.slane %v2061, 4
      %v2064 = vshll.u32 %v1968, 16
      %v2066 = vrot.slane %v2064, 5
      %v2067 = vor.u32 %v2063, %v2066
      %v2068 = vrot.slane %v2067, 4
      %v2070 = vshll.u32 %v1969, 16
      %v2072 = vrot.slane %v2070, 5
      %v2073 = vsel %vm1400, %v2068, %v2072
      %v2074 = vshrl.u32 %v1969, 16
      %v2076 = vrot.slane %v2074, 4
      %v2077 = vor.u32 %v2076, %v2072
      %v2078 = vrot.slane %v2077, 4
      %v2080 = vshll.u32 %v1998, 16
      %v2082 = vrot.slane %v2080, 5
      %v2083 = vsel %vm1400, %v2078, %v2082
      %v2085 = vshrl.u32 %v1970, 16
      %v2087 = vrot.slane %v2085, 4
      %v2088 = vshll.u32 %v1970, 16
      %v2090 = vrot.slane %v2088, 5
      %v2091 = vor.u32 %v2087, %v2090
      %v2092 = vrot.slane %v2091, 4
      %v2094 = vshll.u32 %v1971, 16
      %v2096 = vrot.slane %v2094, 5
      %v2097 = vsel %vm1400, %v2092, %v2096
      %v2098 = vshrl.u32 %v1971, 16
      %v2100 = vrot.slane %v2098, 4
      %v2101 = vor.u32 %v2100, %v2096
      %v2102 = vrot.slane %v2101, 4
      %v2104 = vshll.u32 %v1999, 16
      %v2106 = vrot.slane %v2104, 5
      %v2107 = vsel %vm1400, %v2102, %v2106
      %v2109 = vshrl.u32 %v1972, 16
      %v2111 = vrot.slane %v2109, 4
      %v2112 = vshll.u32 %v1972, 16
      %v2114 = vrot.slane %v2112, 5
      %v2115 = vor.u32 %v2111, %v2114
      %v2116 = vrot.slane %v2115, 4
      %v2118 = vshll.u32 %v1973, 16
      %v2120 = vrot.slane %v2118, 5
      %v2121 = vsel %vm1400, %v2116, %v2120
      %v2122 = vshrl.u32 %v1973, 16
      %v2124 = vrot.slane %v2122, 4
      %v2125 = vor.u32 %v2124, %v2120
      %v2126 = vrot.slane %v2125, 4
      %v2128 = vshll.u32 %v2000, 16
      %v2130 = vrot.slane %v2128, 5
      %v2131 = vsel %vm1400, %v2126, %v2130
      %v2133 = vshrl.u32 %v1974, 16
      %v2135 = vrot.slane %v2133, 4
      %v2136 = vshll.u32 %v1974, 16
      %v2138 = vrot.slane %v2136, 5
      %v2139 = vor.u32 %v2135, %v2138
      %v2140 = vrot.slane %v2139, 4
      %v2142 = vshll.u32 %v1975, 16
      %v2144 = vrot.slane %v2142, 5
      %v2145 = vsel %vm1400, %v2140, %v2144
      %v2146 = vshrl.u32 %v1975, 16
      %v2148 = vrot.slane %v2146, 4
      %v2149 = vor.u32 %v2148, %v2144
      %v2150 = vrot.slane %v2149, 4
      %v2152 = vshll.u32 %v2001, 16
      %v2154 = vrot.slane %v2152, 5
      %v2155 = vsel %vm1400, %v2150, %v2154
      %v2157 = vshrl.u32 %v1976, 16
      %v2159 = vrot.slane %v2157, 4
      %v2160 = vshll.u32 %v1976, 16
      %v2162 = vrot.slane %v2160, 5
      %v2163 = vor.u32 %v2159, %v2162
      %v2164 = vrot.slane %v2163, 4
      %v2166 = vshll.u32 %v1977, 16
      %v2168 = vrot.slane %v2166, 5
      %v2169 = vsel %vm1400, %v2164, %v2168
      %v2170 = vshrl.u32 %v1977, 16
      %v2172 = vrot.slane %v2170, 4
      %v2173 = vor.u32 %v2172, %v2168
      %v2174 = vrot.slane %v2173, 4
      %v2176 = vshll.u32 %v2002, 16
      %v2178 = vrot.slane %v2176, 5
      %v2179 = vsel %vm1400, %v2174, %v2178
      %v2181 = vshrl.u32 %v1978, 16
      %v2183 = vrot.slane %v2181, 4
      %v2184 = vshll.u32 %v1978, 16
      %v2186 = vrot.slane %v2184, 5
      %v2187 = vor.u32 %v2183, %v2186
      %v2188 = vrot.slane %v2187, 4
      %v2190 = vshll.u32 %v1979, 16
      %v2192 = vrot.slane %v2190, 5
      %v2193 = vsel %vm1400, %v2188, %v2192
      %v2194 = vshrl.u32 %v1979, 16
      %v2196 = vrot.slane %v2194, 4
      %v2197 = vor.u32 %v2196, %v2192
      %v2198 = vrot.slane %v2197, 4
      %v2200 = vshll.u32 %v2003, 16
      %v2202 = vrot.slane %v2200, 5
      %v2203 = vsel %vm1400, %v2198, %v2202
      %v2205 = vshrl.u32 %v1980, 16
      %v2207 = vrot.slane %v2205, 4
      %v2208 = vshll.u32 %v1980, 16
      %v2210 = vrot.slane %v2208, 5
      %v2211 = vor.u32 %v2207, %v2210
      %v2212 = vrot.slane %v2211, 4
      %v2214 = vshll.u32 %v1981, 16
      %v2216 = vrot.slane %v2214, 5
      %v2217 = vsel %vm1400, %v2212, %v2216
      %v2218 = vshrl.u32 %v1981, 16
      %v2220 = vrot.slane %v2218, 4
      %v2221 = vor.u32 %v2220, %v2216
      %v2222 = vrot.slane %v2221, 4
      %v2224 = vshll.u32 %v2004, 16
      %v2226 = vrot.slane %v2224, 5
      %v2227 = vsel %vm1400, %v2222, %v2226
      %v2229 = vshrl.u32 %v1982, 16
      %v2231 = vrot.slane %v2229, 4
      %v2232 = vshll.u32 %v1982, 16
      %v2234 = vrot.slane %v2232, 5
      %v2235 = vor.u32 %v2231, %v2234
      %v2236 = vrot.slane %v2235, 4
      %v2238 = vshll.u32 %v1983, 16
      %v2240 = vrot.slane %v2238, 5
      %v2241 = vsel %vm1400, %v2236, %v2240
      %v2242 = vshrl.u32 %v1983, 16
      %v2244 = vrot.slane %v2242, 4
      %v2245 = vor.u32 %v2244, %v2240
      %v2246 = vrot.slane %v2245, 4
      %v2248 = vshll.u32 %v2005, 16
      %v2250 = vrot.slane %v2248, 5
      %v2251 = vsel %vm1400, %v2246, %v2250
      %v2253 = vshrl.u32 %v1984, 16
      %v2255 = vrot.slane %v2253, 4
      %v2256 = vshll.u32 %v1984, 16
      %v2258 = vrot.slane %v2256, 5
      %v2259 = vor.u32 %v2255, %v2258
      %v2260 = vrot.slane %v2259, 4
      %v2262 = vshll.u32 %v1985, 16
      %v2264 = vrot.slane %v2262, 5
      %v2265 = vsel %vm1400, %v2260, %v2264
      %v2266 = vshrl.u32 %v1985, 16
      %v2268 = vrot.slane %v2266, 4
      %v2269 = vor.u32 %v2268, %v2264
      %v2270 = vrot.slane %v2269, 4
      %v2272 = vshll.u32 %v2006, 16
      %v2274 = vrot.slane %v2272, 5
      %v2275 = vsel %vm1400, %v2270, %v2274
      %v2277 = vshrl.u32 %v1986, 16
      %v2279 = vrot.slane %v2277, 4
      %v2280 = vshll.u32 %v1986, 16
      %v2282 = vrot.slane %v2280, 5
      %v2283 = vor.u32 %v2279, %v2282
      %v2284 = vrot.slane %v2283, 4
      %v2286 = vshll.u32 %v1987, 16
      %v2288 = vrot.slane %v2286, 5
      %v2289 = vsel %vm1400, %v2284, %v2288
      %v2290 = vshrl.u32 %v1987, 16
      %v2292 = vrot.slane %v2290, 4
      %v2293 = vor.u32 %v2292, %v2288
      %v2294 = vrot.slane %v2293, 4
      %v2296 = vshll.u32 %v2007, 16
      %v2298 = vrot.slane %v2296, 5
      %v2299 = vsel %vm1400, %v2294, %v2298
      %v2301 = vshrl.u32 %v1988, 16
      %v2303 = vrot.slane %v2301, 4
      %v2304 = vshll.u32 %v1988, 16
      %v2306 = vrot.slane %v2304, 5
      %v2307 = vor.u32 %v2303, %v2306
      %v2308 = vrot.slane %v2307, 4
      %v2310 = vshll.u32 %v1989, 16
      %v2312 = vrot.slane %v2310, 5
      %v2313 = vsel %vm1400, %v2308, %v2312
      %v2314 = vshrl.u32 %v1989, 16
      %v2316 = vrot.slane %v2314, 4
      %v2317 = vor.u32 %v2316, %v2312
      %v2318 = vrot.slane %v2317, 4
      %v2320 = vshll.u32 %v2008, 16
      %v2322 = vrot.slane %v2320, 5
      %v2323 = vsel %vm1400, %v2318, %v2322
      %v2325 = vshrl.u32 %v1990, 16
      %v2327 = vrot.slane %v2325, 4
      %v2328 = vshll.u32 %v1990, 16
      %v2330 = vrot.slane %v2328, 5
      %v2331 = vor.u32 %v2327, %v2330
      %v2332 = vrot.slane %v2331, 4
      %v2334 = vshll.u32 %v1991, 16
      %v2336 = vrot.slane %v2334, 5
      %v2337 = vsel %vm1400, %v2332, %v2336
      %v2338 = vshrl.u32 %v1991, 16
      %v2340 = vrot.slane %v2338, 4
      %v2341 = vor.u32 %v2340, %v2336
      %v2342 = vrot.slane %v2341, 4
      %v2344 = vshll.u32 %v2009, 16
      %v2346 = vrot.slane %v2344, 5
      %v2347 = vsel %vm1400, %v2342, %v2346
      %v2349 = vshrl.u32 %v1992, 16
      %v2351 = vrot.slane %v2349, 4
      %v2352 = vshll.u32 %v1992, 16
      %v2354 = vrot.slane %v2352, 5
      %v2355 = vor.u32 %v2351, %v2354
      %v2356 = vrot.slane %v2355, 4
      %v2358 = vshll.u32 %v1993, 16
      %v2360 = vrot.slane %v2358, 5
      %v2361 = vsel %vm1400, %v2356, %v2360
      %v2362 = vshrl.u32 %v1993, 16
      %v2364 = vrot.slane %v2362, 4
      %v2365 = vor.u32 %v2364, %v2360
      %v2366 = vrot.slane %v2365, 4
      %v2368 = vshll.u32 %v2010, 16
      %v2370 = vrot.slane %v2368, 5
      %v2371 = vsel %vm1400, %v2366, %v2370
      %v2373 = vshrl.u32 %v1994, 16
      %v2375 = vrot.slane %v2373, 4
      %v2376 = vshll.u32 %v1994, 16
      %v2378 = vrot.slane %v2376, 5
      %v2379 = vor.u32 %v2375, %v2378
      %v2380 = vrot.slane %v2379, 4
      %v2382 = vshll.u32 %v1995, 16
      %v2384 = vrot.slane %v2382, 5
      %v2385 = vsel %vm1400, %v2380, %v2384
      %v2386 = vshrl.u32 %v1995, 16
      %v2388 = vrot.slane %v2386, 4
      %v2389 = vor.u32 %v2388, %v2384
      %v2390 = vrot.slane %v2389, 4
      %v2392 = vshll.u32 %v2011, 16
      %v2394 = vrot.slane %v2392, 5
      %v2395 = vsel %vm1400, %v2390, %v2394
      %v2396 = vld [vmem:[%s771] sm:$0xee]
      %v2397 = vld [vmem:[%s771 + $0x18] sm:$0xee]
      %v2398 = vld [vmem:[%s771 + $0x30] sm:$0xee]
      %v2399 = vld [vmem:[%s771 + $0x48] sm:$0xee]
      %v2400 = vld [vmem:[%s771 + $0x60] sm:$0xee]
      %v2401 = vld [vmem:[%s771 + $0x78] sm:$0xee]
      %v2402 = vld [vmem:[%s771 + $0x90] sm:$0xee]
      %v2403 = vld [vmem:[%s771 + $0xa8] sm:$0xee]
      %v2404 = vld [vmem:[%s771 + $0xc0] sm:$0xee]
      %v2405 = vld [vmem:[%s771 + $0xd8] sm:$0xee]
      %v2406 = vld [vmem:[%s771 + $0xf0] sm:$0xee]
      %v2407 = vld [vmem:[%s771 + $0x108] sm:$0xee]
      %v2408 = vld [vmem:[%s771 + $0x120] sm:$0xee]
      %v2409 = vld [vmem:[%s771 + $0x138] sm:$0xee]
      %v2410 = vld [vmem:[%s771 + $0x150] sm:$0xee]
      %v2411 = vld [vmem:[%s771 + $0x168] sm:$0xee]
      %v2460 = vrot.slane %v2396, 5
      %v2461 = vrot.slane %v2460, 4
      %v2462 = vrot.slane %v1965, 5
      %v2463 = vsel %vm1851, %v2461, %v2462
      %v2464 = vrot.slane %v2462, 4
      %v2465 = vrot.slane %v1996, 5
      %v2466 = vsel %vm1851, %v2464, %v2465
      %v2467 = vrot.slane %v2397, 5
      %v2468 = vrot.slane %v2467, 4
      %v2469 = vrot.slane %v1967, 5
      %v2470 = vsel %vm1851, %v2468, %v2469
      %v2471 = vrot.slane %v2469, 4
      %v2472 = vrot.slane %v1997, 5
      %v2473 = vsel %vm1851, %v2471, %v2472
      %v2474 = vrot.slane %v2398, 5
      %v2475 = vrot.slane %v2474, 4
      %v2476 = vrot.slane %v1969, 5
      %v2477 = vsel %vm1851, %v2475, %v2476
      %v2478 = vrot.slane %v2476, 4
      %v2479 = vrot.slane %v1998, 5
      %v2480 = vsel %vm1851, %v2478, %v2479
      %v2481 = vrot.slane %v2399, 5
      %v2482 = vrot.slane %v2481, 4
      %v2483 = vrot.slane %v1971, 5
      %v2484 = vsel %vm1851, %v2482, %v2483
      %v2485 = vrot.slane %v2483, 4
      %v2486 = vrot.slane %v1999, 5
      %v2487 = vsel %vm1851, %v2485, %v2486
      %v2488 = vrot.slane %v2400, 5
      %v2489 = vrot.slane %v2488, 4
      %v2490 = vrot.slane %v1973, 5
      %v2491 = vsel %vm1851, %v2489, %v2490
      %v2492 = vrot.slane %v2490, 4
      %v2493 = vrot.slane %v2000, 5
      %v2494 = vsel %vm1851, %v2492, %v2493
      %v2495 = vrot.slane %v2401, 5
      %v2496 = vrot.slane %v2495, 4
      %v2497 = vrot.slane %v1975, 5
      %v2498 = vsel %vm1851, %v2496, %v2497
      %v2499 = vrot.slane %v2497, 4
      %v2500 = vrot.slane %v2001, 5
      %v2501 = vsel %vm1851, %v2499, %v2500
      %v2502 = vrot.slane %v2402, 5
      %v2503 = vrot.slane %v2502, 4
      %v2504 = vrot.slane %v1977, 5
      %v2505 = vsel %vm1851, %v2503, %v2504
      %v2506 = vrot.slane %v2504, 4
      %v2507 = vrot.slane %v2002, 5
      %v2508 = vsel %vm1851, %v2506, %v2507
      %v2509 = vrot.slane %v2403, 5
      %v2510 = vrot.slane %v2509, 4
      %v2511 = vrot.slane %v1979, 5
      %v2512 = vsel %vm1851, %v2510, %v2511
      %v2513 = vrot.slane %v2511, 4
      %v2514 = vrot.slane %v2003, 5
      %v2515 = vsel %vm1851, %v2513, %v2514
      %v2516 = vrot.slane %v2404, 5
      %v2517 = vrot.slane %v2516, 4
      %v2518 = vrot.slane %v1981, 5
      %v2519 = vsel %vm1851, %v2517, %v2518
      %v2520 = vrot.slane %v2518, 4
      %v2521 = vrot.slane %v2004, 5
      %v2522 = vsel %vm1851, %v2520, %v2521
      %v2523 = vrot.slane %v2405, 5
      %v2524 = vrot.slane %v2523, 4
      %v2525 = vrot.slane %v1983, 5
      %v2526 = vsel %vm1851, %v2524, %v2525
      %v2527 = vrot.slane %v2525, 4
      %v2528 = vrot.slane %v2005, 5
      %v2529 = vsel %vm1851, %v2527, %v2528
      %v2530 = vrot.slane %v2406, 5
      %v2531 = vrot.slane %v2530, 4
      %v2532 = vrot.slane %v1985, 5
      %v2533 = vsel %vm1851, %v2531, %v2532
      %v2534 = vrot.slane %v2532, 4
      %v2535 = vrot.slane %v2006, 5
      %v2536 = vsel %vm1851, %v2534, %v2535
      %v2537 = vrot.slane %v2407, 5
      %v2538 = vrot.slane %v2537, 4
      %v2539 = vrot.slane %v1987, 5
      %v2540 = vsel %vm1851, %v2538, %v2539
      %v2541 = vrot.slane %v2539, 4
      %v2542 = vrot.slane %v2007, 5
      %v2543 = vsel %vm1851, %v2541, %v2542
      %v2544 = vrot.slane %v2408, 5
      %v2545 = vrot.slane %v2544, 4
      %v2546 = vrot.slane %v1989, 5
      %v2547 = vsel %vm1851, %v2545, %v2546
      %v2548 = vrot.slane %v2546, 4
      %v2549 = vrot.slane %v2008, 5
      %v2550 = vsel %vm1851, %v2548, %v2549
      %v2551 = vrot.slane %v2409, 5
      %v2552 = vrot.slane %v2551, 4
      %v2553 = vrot.slane %v1991, 5
      %v2554 = vsel %vm1851, %v2552, %v2553
      %v2555 = vrot.slane %v2553, 4
      %v2556 = vrot.slane %v2009, 5
      %v2557 = vsel %vm1851, %v2555, %v2556
      %v2558 = vrot.slane %v2410, 5
      %v2559 = vrot.slane %v2558, 4
      %v2560 = vrot.slane %v1993, 5
      %v2561 = vsel %vm1851, %v2559, %v2560
      %v2562 = vrot.slane %v2560, 4
      %v2563 = vrot.slane %v2010, 5
      %v2564 = vsel %vm1851, %v2562, %v2563
      %v2565 = vrot.slane %v2411, 5
      %v2566 = vrot.slane %v2565, 4
      %v2567 = vrot.slane %v1995, 5
      %v2568 = vsel %vm1851, %v2566, %v2567
      %v2569 = vrot.slane %v2567, 4
      %v2570 = vrot.slane %v2011, 5
      %v2571 = vsel %vm1851, %v2569, %v2570
      %s2572 = scalar_lea.vmem [#allocation2], 48
      %v2573 = vld [vmem:[%s2572] sm:$0xff]
      %v2574 = vld [vmem:[%s2572 + $0x8] sm:$0xff]
      %v2575 = vld [vmem:[%s2572 + $0x18] sm:$0xff]
      %v2576 = vld [vmem:[%s2572 + $0x20] sm:$0xff]
      %v2577 = vld [vmem:[%s2572 + $0x30] sm:$0xff]
      %v2578 = vld [vmem:[%s2572 + $0x38] sm:$0xff]
      %v2579 = vld [vmem:[%s2572 + $0x48] sm:$0xff]
      %v2580 = vld [vmem:[%s2572 + $0x50] sm:$0xff]
      %v2581 = vld [vmem:[%s2572 + $0x60] sm:$0xff]
      %v2582 = vld [vmem:[%s2572 + $0x68] sm:$0xff]
      %v2583 = vld [vmem:[%s2572 + $0x78] sm:$0xff]
      %v2584 = vld [vmem:[%s2572 + $0x80] sm:$0xff]
      %v2585 = vld [vmem:[%s2572 + $0x90] sm:$0xff]
      %v2586 = vld [vmem:[%s2572 + $0x98] sm:$0xff]
      %v2587 = vld [vmem:[%s2572 + $0xa8] sm:$0xff]
      %v2588 = vld [vmem:[%s2572 + $0xb0] sm:$0xff]
      %v2589 = vld [vmem:[%s2572 + $0xc0] sm:$0xff]
      %v2590 = vld [vmem:[%s2572 + $0xc8] sm:$0xff]
      %v2591 = vld [vmem:[%s2572 + $0xd8] sm:$0xff]
      %v2592 = vld [vmem:[%s2572 + $0xe0] sm:$0xff]
      %v2593 = vld [vmem:[%s2572 + $0xf0] sm:$0xff]
      %v2594 = vld [vmem:[%s2572 + $0xf8] sm:$0xff]
      %v2595 = vld [vmem:[%s2572 + $0x108] sm:$0xff]
      %v2596 = vld [vmem:[%s2572 + $0x110] sm:$0xff]
      %v2597 = vld [vmem:[%s2572 + $0x120] sm:$0xff]
      %v2598 = vld [vmem:[%s2572 + $0x128] sm:$0xff]
      %v2599 = vld [vmem:[%s2572 + $0x138] sm:$0xff]
      %v2600 = vld [vmem:[%s2572 + $0x140] sm:$0xff]
      %v2601 = vld [vmem:[%s2572 + $0x150] sm:$0xff]
      %v2602 = vld [vmem:[%s2572 + $0x158] sm:$0xff]
      %v2603 = vld [vmem:[%s2572 + $0x168] sm:$0xff]
      %v2604 = vld [vmem:[%s2572 + $0x170] sm:$0xff]
      %v2605 = vld [vmem:[%s2572 + $0x10] sm:$0x11]
      %v2606 = vld [vmem:[%s2572 + $0x28] sm:$0x11]
      %v2607 = vld [vmem:[%s2572 + $0x40] sm:$0x11]
      %v2608 = vld [vmem:[%s2572 + $0x58] sm:$0x11]
      %v2609 = vld [vmem:[%s2572 + $0x70] sm:$0x11]
      %v2610 = vld [vmem:[%s2572 + $0x88] sm:$0x11]
      %v2611 = vld [vmem:[%s2572 + $0xa0] sm:$0x11]
      %v2612 = vld [vmem:[%s2572 + $0xb8] sm:$0x11]
      %v2613 = vld [vmem:[%s2572 + $0xd0] sm:$0x11]
      %v2614 = vld [vmem:[%s2572 + $0xe8] sm:$0x11]
      %v2615 = vld [vmem:[%s2572 + $0x100] sm:$0x11]
      %v2616 = vld [vmem:[%s2572 + $0x118] sm:$0x11]
      %v2617 = vld [vmem:[%s2572 + $0x130] sm:$0x11]
      %v2618 = vld [vmem:[%s2572 + $0x148] sm:$0x11]
      %v2619 = vld [vmem:[%s2572 + $0x160] sm:$0x11]
      %v2620 = vld [vmem:[%s2572 + $0x178] sm:$0x11]
      %v2622 = vshrl.u32 %v2573, 16
      %v2624 = vrot.slane %v2622, 4
      %v2625 = vshll.u32 %v2573, 16
      %v2627 = vrot.slane %v2625, 5
      %v2628 = vor.u32 %v2624, %v2627
      %v2629 = vrot.slane %v2628, 4
      %v2631 = vshll.u32 %v2574, 16
      %v2633 = vrot.slane %v2631, 5
      %v2634 = vsel %vm1400, %v2629, %v2633
      %v2635 = vshrl.u32 %v2574, 16
      %v2637 = vrot.slane %v2635, 4
      %v2638 = vor.u32 %v2637, %v2633
      %v2639 = vrot.slane %v2638, 4
      %v2641 = vshll.u32 %v2605, 16
      %v2643 = vrot.slane %v2641, 5
      %v2644 = vsel %vm1400, %v2639, %v2643
      %v2646 = vshrl.u32 %v2575, 16
      %v2648 = vrot.slane %v2646, 4
      %v2649 = vshll.u32 %v2575, 16
      %v2651 = vrot.slane %v2649, 5
      %v2652 = vor.u32 %v2648, %v2651
      %v2653 = vrot.slane %v2652, 4
      %v2655 = vshll.u32 %v2576, 16
      %v2657 = vrot.slane %v2655, 5
      %v2658 = vsel %vm1400, %v2653, %v2657
      %v2659 = vshrl.u32 %v2576, 16
      %v2661 = vrot.slane %v2659, 4
      %v2662 = vor.u32 %v2661, %v2657
      %v2663 = vrot.slane %v2662, 4
      %v2665 = vshll.u32 %v2606, 16
      %v2667 = vrot.slane %v2665, 5
      %v2668 = vsel %vm1400, %v2663, %v2667
      %v2670 = vshrl.u32 %v2577, 16
      %v2672 = vrot.slane %v2670, 4
      %v2673 = vshll.u32 %v2577, 16
      %v2675 = vrot.slane %v2673, 5
      %v2676 = vor.u32 %v2672, %v2675
      %v2677 = vrot.slane %v2676, 4
      %v2679 = vshll.u32 %v2578, 16
      %v2681 = vrot.slane %v2679, 5
      %v2682 = vsel %vm1400, %v2677, %v2681
      %v2683 = vshrl.u32 %v2578, 16
      %v2685 = vrot.slane %v2683, 4
      %v2686 = vor.u32 %v2685, %v2681
      %v2687 = vrot.slane %v2686, 4
      %v2689 = vshll.u32 %v2607, 16
      %v2691 = vrot.slane %v2689, 5
      %v2692 = vsel %vm1400, %v2687, %v2691
      %v2694 = vshrl.u32 %v2579, 16
      %v2696 = vrot.slane %v2694, 4
      %v2697 = vshll.u32 %v2579, 16
      %v2699 = vrot.slane %v2697, 5
      %v2700 = vor.u32 %v2696, %v2699
      %v2701 = vrot.slane %v2700, 4
      %v2703 = vshll.u32 %v2580, 16
      %v2705 = vrot.slane %v2703, 5
      %v2706 = vsel %vm1400, %v2701, %v2705
      %v2707 = vshrl.u32 %v2580, 16
      %v2709 = vrot.slane %v2707, 4
      %v2710 = vor.u32 %v2709, %v2705
      %v2711 = vrot.slane %v2710, 4
      %v2713 = vshll.u32 %v2608, 16
      %v2715 = vrot.slane %v2713, 5
      %v2716 = vsel %vm1400, %v2711, %v2715
      %v2718 = vshrl.u32 %v2581, 16
      %v2720 = vrot.slane %v2718, 4
      %v2721 = vshll.u32 %v2581, 16
      %v2723 = vrot.slane %v2721, 5
      %v2724 = vor.u32 %v2720, %v2723
      %v2725 = vrot.slane %v2724, 4
      %v2727 = vshll.u32 %v2582, 16
      %v2729 = vrot.slane %v2727, 5
      %v2730 = vsel %vm1400, %v2725, %v2729
      %v2731 = vshrl.u32 %v2582, 16
      %v2733 = vrot.slane %v2731, 4
      %v2734 = vor.u32 %v2733, %v2729
      %v2735 = vrot.slane %v2734, 4
      %v2737 = vshll.u32 %v2609, 16
      %v2739 = vrot.slane %v2737, 5
      %v2740 = vsel %vm1400, %v2735, %v2739
      %v2742 = vshrl.u32 %v2583, 16
      %v2744 = vrot.slane %v2742, 4
      %v2745 = vshll.u32 %v2583, 16
      %v2747 = vrot.slane %v2745, 5
      %v2748 = vor.u32 %v2744, %v2747
      %v2749 = vrot.slane %v2748, 4
      %v2751 = vshll.u32 %v2584, 16
      %v2753 = vrot.slane %v2751, 5
      %v2754 = vsel %vm1400, %v2749, %v2753
      %v2755 = vshrl.u32 %v2584, 16
      %v2757 = vrot.slane %v2755, 4
      %v2758 = vor.u32 %v2757, %v2753
      %v2759 = vrot.slane %v2758, 4
      %v2761 = vshll.u32 %v2610, 16
      %v2763 = vrot.slane %v2761, 5
      %v2764 = vsel %vm1400, %v2759, %v2763
      %v2766 = vshrl.u32 %v2585, 16
      %v2768 = vrot.slane %v2766, 4
      %v2769 = vshll.u32 %v2585, 16
      %v2771 = vrot.slane %v2769, 5
      %v2772 = vor.u32 %v2768, %v2771
      %v2773 = vrot.slane %v2772, 4
      %v2775 = vshll.u32 %v2586, 16
      %v2777 = vrot.slane %v2775, 5
      %v2778 = vsel %vm1400, %v2773, %v2777
      %v2779 = vshrl.u32 %v2586, 16
      %v2781 = vrot.slane %v2779, 4
      %v2782 = vor.u32 %v2781, %v2777
      %v2783 = vrot.slane %v2782, 4
      %v2785 = vshll.u32 %v2611, 16
      %v2787 = vrot.slane %v2785, 5
      %v2788 = vsel %vm1400, %v2783, %v2787
      %v2790 = vshrl.u32 %v2587, 16
      %v2792 = vrot.slane %v2790, 4
      %v2793 = vshll.u32 %v2587, 16
      %v2795 = vrot.slane %v2793, 5
      %v2796 = vor.u32 %v2792, %v2795
      %v2797 = vrot.slane %v2796, 4
      %v2799 = vshll.u32 %v2588, 16
      %v2801 = vrot.slane %v2799, 5
      %v2802 = vsel %vm1400, %v2797, %v2801
      %v2803 = vshrl.u32 %v2588, 16
      %v2805 = vrot.slane %v2803, 4
      %v2806 = vor.u32 %v2805, %v2801
      %v2807 = vrot.slane %v2806, 4
      %v2809 = vshll.u32 %v2612, 16
      %v2811 = vrot.slane %v2809, 5
      %v2812 = vsel %vm1400, %v2807, %v2811
      %v2814 = vshrl.u32 %v2589, 16
      %v2816 = vrot.slane %v2814, 4
      %v2817 = vshll.u32 %v2589, 16
      %v2819 = vrot.slane %v2817, 5
      %v2820 = vor.u32 %v2816, %v2819
      %v2821 = vrot.slane %v2820, 4
      %v2823 = vshll.u32 %v2590, 16
      %v2825 = vrot.slane %v2823, 5
      %v2826 = vsel %vm1400, %v2821, %v2825
      %v2827 = vshrl.u32 %v2590, 16
      %v2829 = vrot.slane %v2827, 4
      %v2830 = vor.u32 %v2829, %v2825
      %v2831 = vrot.slane %v2830, 4
      %v2833 = vshll.u32 %v2613, 16
      %v2835 = vrot.slane %v2833, 5
      %v2836 = vsel %vm1400, %v2831, %v2835
      %v2838 = vshrl.u32 %v2591, 16
      %v2840 = vrot.slane %v2838, 4
      %v2841 = vshll.u32 %v2591, 16
      %v2843 = vrot.slane %v2841, 5
      %v2844 = vor.u32 %v2840, %v2843
      %v2845 = vrot.slane %v2844, 4
      %v2847 = vshll.u32 %v2592, 16
      %v2849 = vrot.slane %v2847, 5
      %v2850 = vsel %vm1400, %v2845, %v2849
      %v2851 = vshrl.u32 %v2592, 16
      %v2853 = vrot.slane %v2851, 4
      %v2854 = vor.u32 %v2853, %v2849
      %v2855 = vrot.slane %v2854, 4
      %v2857 = vshll.u32 %v2614, 16
      %v2859 = vrot.slane %v2857, 5
      %v2860 = vsel %vm1400, %v2855, %v2859
      %v2862 = vshrl.u32 %v2593, 16
      %v2864 = vrot.slane %v2862, 4
      %v2865 = vshll.u32 %v2593, 16
      %v2867 = vrot.slane %v2865, 5
      %v2868 = vor.u32 %v2864, %v2867
      %v2869 = vrot.slane %v2868, 4
      %v2871 = vshll.u32 %v2594, 16
      %v2873 = vrot.slane %v2871, 5
      %v2874 = vsel %vm1400, %v2869, %v2873
      %v2875 = vshrl.u32 %v2594, 16
      %v2877 = vrot.slane %v2875, 4
      %v2878 = vor.u32 %v2877, %v2873
      %v2879 = vrot.slane %v2878, 4
      %v2881 = vshll.u32 %v2615, 16
      %v2883 = vrot.slane %v2881, 5
      %v2884 = vsel %vm1400, %v2879, %v2883
      %v2886 = vshrl.u32 %v2595, 16
      %v2888 = vrot.slane %v2886, 4
      %v2889 = vshll.u32 %v2595, 16
      %v2891 = vrot.slane %v2889, 5
      %v2892 = vor.u32 %v2888, %v2891
      %v2893 = vrot.slane %v2892, 4
      %v2895 = vshll.u32 %v2596, 16
      %v2897 = vrot.slane %v2895, 5
      %v2898 = vsel %vm1400, %v2893, %v2897
      %v2899 = vshrl.u32 %v2596, 16
      %v2901 = vrot.slane %v2899, 4
      %v2902 = vor.u32 %v2901, %v2897
      %v2903 = vrot.slane %v2902, 4
      %v2905 = vshll.u32 %v2616, 16
      %v2907 = vrot.slane %v2905, 5
      %v2908 = vsel %vm1400, %v2903, %v2907
      %v2910 = vshrl.u32 %v2597, 16
      %v2912 = vrot.slane %v2910, 4
      %v2913 = vshll.u32 %v2597, 16
      %v2915 = vrot.slane %v2913, 5
      %v2916 = vor.u32 %v2912, %v2915
      %v2917 = vrot.slane %v2916, 4
      %v2919 = vshll.u32 %v2598, 16
      %v2921 = vrot.slane %v2919, 5
      %v2922 = vsel %vm1400, %v2917, %v2921
      %v2923 = vshrl.u32 %v2598, 16
      %v2925 = vrot.slane %v2923, 4
      %v2926 = vor.u32 %v2925, %v2921
      %v2927 = vrot.slane %v2926, 4
      %v2929 = vshll.u32 %v2617, 16
      %v2931 = vrot.slane %v2929, 5
      %v2932 = vsel %vm1400, %v2927, %v2931
      %v2934 = vshrl.u32 %v2599, 16
      %v2936 = vrot.slane %v2934, 4
      %v2937 = vshll.u32 %v2599, 16
      %v2939 = vrot.slane %v2937, 5
      %v2940 = vor.u32 %v2936, %v2939
      %v2941 = vrot.slane %v2940, 4
      %v2943 = vshll.u32 %v2600, 16
      %v2945 = vrot.slane %v2943, 5
      %v2946 = vsel %vm1400, %v2941, %v2945
      %v2947 = vshrl.u32 %v2600, 16
      %v2949 = vrot.slane %v2947, 4
      %v2950 = vor.u32 %v2949, %v2945
      %v2951 = vrot.slane %v2950, 4
      %v2953 = vshll.u32 %v2618, 16
      %v2955 = vrot.slane %v2953, 5
      %v2956 = vsel %vm1400, %v2951, %v2955
      %v2958 = vshrl.u32 %v2601, 16
      %v2960 = vrot.slane %v2958, 4
      %v2961 = vshll.u32 %v2601, 16
      %v2963 = vrot.slane %v2961, 5
      %v2964 = vor.u32 %v2960, %v2963
      %v2965 = vrot.slane %v2964, 4
      %v2967 = vshll.u32 %v2602, 16
      %v2969 = vrot.slane %v2967, 5
      %v2970 = vsel %vm1400, %v2965, %v2969
      %v2971 = vshrl.u32 %v2602, 16
      %v2973 = vrot.slane %v2971, 4
      %v2974 = vor.u32 %v2973, %v2969
      %v2975 = vrot.slane %v2974, 4
      %v2977 = vshll.u32 %v2619, 16
      %v2979 = vrot.slane %v2977, 5
      %v2980 = vsel %vm1400, %v2975, %v2979
      %v2982 = vshrl.u32 %v2603, 16
      %v2984 = vrot.slane %v2982, 4
      %v2985 = vshll.u32 %v2603, 16
      %v2987 = vrot.slane %v2985, 5
      %v2988 = vor.u32 %v2984, %v2987
      %v2989 = vrot.slane %v2988, 4
      %v2991 = vshll.u32 %v2604, 16
      %v2993 = vrot.slane %v2991, 5
      %v2994 = vsel %vm1400, %v2989, %v2993
      %v2995 = vshrl.u32 %v2604, 16
      %v2997 = vrot.slane %v2995, 4
      %v2998 = vor.u32 %v2997, %v2993
      %v2999 = vrot.slane %v2998, 4
      %v3001 = vshll.u32 %v2620, 16
      %v3003 = vrot.slane %v3001, 5
      %v3004 = vsel %vm1400, %v2999, %v3003
      %v3005 = vld [vmem:[%s2572] sm:$0xee]
      %v3006 = vld [vmem:[%s2572 + $0x18] sm:$0xee]
      %v3007 = vld [vmem:[%s2572 + $0x30] sm:$0xee]
      %v3008 = vld [vmem:[%s2572 + $0x48] sm:$0xee]
      %v3009 = vld [vmem:[%s2572 + $0x60] sm:$0xee]
      %v3010 = vld [vmem:[%s2572 + $0x78] sm:$0xee]
      %v3011 = vld [vmem:[%s2572 + $0x90] sm:$0xee]
      %v3012 = vld [vmem:[%s2572 + $0xa8] sm:$0xee]
      %v3013 = vld [vmem:[%s2572 + $0xc0] sm:$0xee]
      %v3014 = vld [vmem:[%s2572 + $0xd8] sm:$0xee]
      %v3015 = vld [vmem:[%s2572 + $0xf0] sm:$0xee]
      %v3016 = vld [vmem:[%s2572 + $0x108] sm:$0xee]
      %v3017 = vld [vmem:[%s2572 + $0x120] sm:$0xee]
      %v3018 = vld [vmem:[%s2572 + $0x138] sm:$0xee]
      %v3019 = vld [vmem:[%s2572 + $0x150] sm:$0xee]
      %v3020 = vld [vmem:[%s2572 + $0x168] sm:$0xee]
      %v3069 = vrot.slane %v3005, 5
      %v3070 = vrot.slane %v3069, 4
      %v3071 = vrot.slane %v2574, 5
      %v3072 = vsel %vm1851, %v3070, %v3071
      %v3073 = vrot.slane %v3071, 4
      %v3074 = vrot.slane %v2605, 5
      %v3075 = vsel %vm1851, %v3073, %v3074
      %v3076 = vrot.slane %v3006, 5
      %v3077 = vrot.slane %v3076, 4
      %v3078 = vrot.slane %v2576, 5
      %v3079 = vsel %vm1851, %v3077, %v3078
      %v3080 = vrot.slane %v3078, 4
      %v3081 = vrot.slane %v2606, 5
      %v3082 = vsel %vm1851, %v3080, %v3081
      %v3083 = vrot.slane %v3007, 5
      %v3084 = vrot.slane %v3083, 4
      %v3085 = vrot.slane %v2578, 5
      %v3086 = vsel %vm1851, %v3084, %v3085
      %v3087 = vrot.slane %v3085, 4
      %v3088 = vrot.slane %v2607, 5
      %v3089 = vsel %vm1851, %v3087, %v3088
      %v3090 = vrot.slane %v3008, 5
      %v3091 = vrot.slane %v3090, 4
      %v3092 = vrot.slane %v2580, 5
      %v3093 = vsel %vm1851, %v3091, %v3092
      %v3094 = vrot.slane %v3092, 4
      %v3095 = vrot.slane %v2608, 5
      %v3096 = vsel %vm1851, %v3094, %v3095
      %v3097 = vrot.slane %v3009, 5
      %v3098 = vrot.slane %v3097, 4
      %v3099 = vrot.slane %v2582, 5
      %v3100 = vsel %vm1851, %v3098, %v3099
      %v3101 = vrot.slane %v3099, 4
      %v3102 = vrot.slane %v2609, 5
      %v3103 = vsel %vm1851, %v3101, %v3102
      %v3104 = vrot.slane %v3010, 5
      %v3105 = vrot.slane %v3104, 4
      %v3106 = vrot.slane %v2584, 5
      %v3107 = vsel %vm1851, %v3105, %v3106
      %v3108 = vrot.slane %v3106, 4
      %v3109 = vrot.slane %v2610, 5
      %v3110 = vsel %vm1851, %v3108, %v3109
      %v3111 = vrot.slane %v3011, 5
      %v3112 = vrot.slane %v3111, 4
      %v3113 = vrot.slane %v2586, 5
      %v3114 = vsel %vm1851, %v3112, %v3113
      %v3115 = vrot.slane %v3113, 4
      %v3116 = vrot.slane %v2611, 5
      %v3117 = vsel %vm1851, %v3115, %v3116
      %v3118 = vrot.slane %v3012, 5
      %v3119 = vrot.slane %v3118, 4
      %v3120 = vrot.slane %v2588, 5
      %v3121 = vsel %vm1851, %v3119, %v3120
      %v3122 = vrot.slane %v3120, 4
      %v3123 = vrot.slane %v2612, 5
      %v3124 = vsel %vm1851, %v3122, %v3123
      %v3125 = vrot.slane %v3013, 5
      %v3126 = vrot.slane %v3125, 4
      %v3127 = vrot.slane %v2590, 5
      %v3128 = vsel %vm1851, %v3126, %v3127
      %v3129 = vrot.slane %v3127, 4
      %v3130 = vrot.slane %v2613, 5
      %v3131 = vsel %vm1851, %v3129, %v3130
      %v3132 = vrot.slane %v3014, 5
      %v3133 = vrot.slane %v3132, 4
      %v3134 = vrot.slane %v2592, 5
      %v3135 = vsel %vm1851, %v3133, %v3134
      %v3136 = vrot.slane %v3134, 4
      %v3137 = vrot.slane %v2614, 5
      %v3138 = vsel %vm1851, %v3136, %v3137
      %v3139 = vrot.slane %v3015, 5
      %v3140 = vrot.slane %v3139, 4
      %v3141 = vrot.slane %v2594, 5
      %v3142 = vsel %vm1851, %v3140, %v3141
      %v3143 = vrot.slane %v3141, 4
      %v3144 = vrot.slane %v2615, 5
      %v3145 = vsel %vm1851, %v3143, %v3144
      %v3146 = vrot.slane %v3016, 5
      %v3147 = vrot.slane %v3146, 4
      %v3148 = vrot.slane %v2596, 5
      %v3149 = vsel %vm1851, %v3147, %v3148
      %v3150 = vrot.slane %v3148, 4
      %v3151 = vrot.slane %v2616, 5
      %v3152 = vsel %vm1851, %v3150, %v3151
      %v3153 = vrot.slane %v3017, 5
      %v3154 = vrot.slane %v3153, 4
      %v3155 = vrot.slane %v2598, 5
      %v3156 = vsel %vm1851, %v3154, %v3155
      %v3157 = vrot.slane %v3155, 4
      %v3158 = vrot.slane %v2617, 5
      %v3159 = vsel %vm1851, %v3157, %v3158
      %v3160 = vrot.slane %v3018, 5
      %v3161 = vrot.slane %v3160, 4
      %v3162 = vrot.slane %v2600, 5
      %v3163 = vsel %vm1851, %v3161, %v3162
      %v3164 = vrot.slane %v3162, 4
      %v3165 = vrot.slane %v2618, 5
      %v3166 = vsel %vm1851, %v3164, %v3165
      %v3167 = vrot.slane %v3019, 5
      %v3168 = vrot.slane %v3167, 4
      %v3169 = vrot.slane %v2602, 5
      %v3170 = vsel %vm1851, %v3168, %v3169
      %v3171 = vrot.slane %v3169, 4
      %v3172 = vrot.slane %v2619, 5
      %v3173 = vsel %vm1851, %v3171, %v3172
      %v3174 = vrot.slane %v3020, 5
      %v3175 = vrot.slane %v3174, 4
      %v3176 = vrot.slane %v2604, 5
      %v3177 = vsel %vm1851, %v3175, %v3176
      %v3178 = vrot.slane %v3176, 4
      %v3179 = vrot.slane %v2620, 5
      %v3180 = vsel %vm1851, %v3178, %v3179
      %v3197 = vunpack.c.l.b16 %v1350
      %v3198 = vunpack.c.h.b16 %v1350
      %v3199 = vunpack.c.l.b16 %v1351
      %v3200 = vunpack.c.h.b16 %v1351
      %v3201 = vunpack.c.l.b16 %v1352
      %v3202 = vunpack.c.h.b16 %v1352
      %v3203 = vunpack.c.l.b16 %v1353
      %v3204 = vunpack.c.h.b16 %v1353
      %v3205 = vunpack.c.l.b16 %v1354
      %v3206 = vunpack.c.h.b16 %v1354
      %v3207 = vunpack.c.l.b16 %v1355
      %v3208 = vunpack.c.h.b16 %v1355
      %v3209 = vunpack.c.l.b16 %v1356
      %v3210 = vunpack.c.h.b16 %v1356
      %v3211 = vunpack.c.l.b16 %v1357
      %v3212 = vunpack.c.h.b16 %v1357
      %v3213 = vunpack.c.l.b16 %v1358
      %v3214 = vunpack.c.h.b16 %v1358
      %v3215 = vunpack.c.l.b16 %v1359
      %v3216 = vunpack.c.h.b16 %v1359
      %v3217 = vunpack.c.l.b16 %v1360
      %v3218 = vunpack.c.h.b16 %v1360
      %v3219 = vunpack.c.l.b16 %v1361
      %v3220 = vunpack.c.h.b16 %v1361
      %v3221 = vunpack.c.l.b16 %v1362
      %v3222 = vunpack.c.h.b16 %v1362
      %v3223 = vunpack.c.l.b16 %v1363
      %v3224 = vunpack.c.h.b16 %v1363
      %v3225 = vunpack.c.l.b16 %v1364
      %v3226 = vunpack.c.h.b16 %v1364
      %v3227 = vunpack.c.l.b16 %v1365
      %v3228 = vunpack.c.h.b16 %v1365
      %v3229 = vunpack.c.l.b16 %v1366
      %v3230 = vunpack.c.h.b16 %v1366
      %v3231 = vunpack.c.l.b16 %v1367
      %v3232 = vunpack.c.h.b16 %v1367
      %v3233 = vunpack.c.l.b16 %v1368
      %v3234 = vunpack.c.h.b16 %v1368
      %v3235 = vunpack.c.l.b16 %v1369
      %v3236 = vunpack.c.h.b16 %v1369
      %v3237 = vunpack.c.l.b16 %v1370
      %v3238 = vunpack.c.h.b16 %v1370
      %v3239 = vunpack.c.l.b16 %v1371
      %v3240 = vunpack.c.h.b16 %v1371
      %v3241 = vunpack.c.l.b16 %v1372
      %v3242 = vunpack.c.h.b16 %v1372
      %v3243 = vunpack.c.l.b16 %v1373
      %v3244 = vunpack.c.h.b16 %v1373
      %v3245 = vunpack.c.l.b16 %v1374
      %v3246 = vunpack.c.h.b16 %v1374
      %v3247 = vunpack.c.l.b16 %v1375
      %v3248 = vunpack.c.h.b16 %v1375
      %v3249 = vunpack.c.l.b16 %v1376
      %v3250 = vunpack.c.h.b16 %v1376
      %v3251 = vunpack.c.l.b16 %v1377
      %v3252 = vunpack.c.h.b16 %v1377
      %v3253 = vunpack.c.l.b16 %v1378
      %v3254 = vunpack.c.h.b16 %v1378
      %v3255 = vunpack.c.l.b16 %v1379
      %v3256 = vunpack.c.h.b16 %v1379
      %v3257 = vunpack.c.l.b16 %v1380
      %v3258 = vunpack.c.h.b16 %v1380
      %v3259 = vunpack.c.l.b16 %v1381
      %v3260 = vunpack.c.h.b16 %v1381
      %v3261 = vpack.c.b16 %v3199, %v3197
      %v3262 = vpack.c.b16 %v3200, %v3198
      %v3263 = vpack.c.b16 %v3203, %v3201
      %v3264 = vpack.c.b16 %v3204, %v3202
      %v3265 = vpack.c.b16 %v3207, %v3205
      %v3266 = vpack.c.b16 %v3208, %v3206
      %v3267 = vpack.c.b16 %v3211, %v3209
      %v3268 = vpack.c.b16 %v3212, %v3210
      %v3269 = vpack.c.b16 %v3215, %v3213
      %v3270 = vpack.c.b16 %v3216, %v3214
      %v3271 = vpack.c.b16 %v3219, %v3217
      %v3272 = vpack.c.b16 %v3220, %v3218
      %v3273 = vpack.c.b16 %v3223, %v3221
      %v3274 = vpack.c.b16 %v3224, %v3222
      %v3275 = vpack.c.b16 %v3227, %v3225
      %v3276 = vpack.c.b16 %v3228, %v3226
      %v3277 = vpack.c.b16 %v3231, %v3229
      %v3278 = vpack.c.b16 %v3232, %v3230
      %v3279 = vpack.c.b16 %v3235, %v3233
      %v3280 = vpack.c.b16 %v3236, %v3234
      %v3281 = vpack.c.b16 %v3239, %v3237
      %v3282 = vpack.c.b16 %v3240, %v3238
      %v3283 = vpack.c.b16 %v3243, %v3241
      %v3284 = vpack.c.b16 %v3244, %v3242
      %v3285 = vpack.c.b16 %v3247, %v3245
      %v3286 = vpack.c.b16 %v3248, %v3246
      %v3287 = vpack.c.b16 %v3251, %v3249
      %v3288 = vpack.c.b16 %v3252, %v3250
      %v3289 = vpack.c.b16 %v3255, %v3253
      %v3290 = vpack.c.b16 %v3256, %v3254
      %v3291 = vpack.c.b16 %v3259, %v3257
      %v3292 = vpack.c.b16 %v3260, %v3258
      %v3325 = vunpack.c.l.b16 %v1414
      %v3326 = vunpack.c.h.b16 %v1414
      %v3327 = vunpack.c.l.b16 %v1424
      %v3328 = vunpack.c.h.b16 %v1424
      %v3329 = vunpack.c.l.b16 %v1438
      %v3330 = vunpack.c.h.b16 %v1438
      %v3331 = vunpack.c.l.b16 %v1448
      %v3332 = vunpack.c.h.b16 %v1448
      %v3333 = vunpack.c.l.b16 %v1462
      %v3334 = vunpack.c.h.b16 %v1462
      %v3335 = vunpack.c.l.b16 %v1472
      %v3336 = vunpack.c.h.b16 %v1472
      %v3337 = vunpack.c.l.b16 %v1486
      %v3338 = vunpack.c.h.b16 %v1486
      %v3339 = vunpack.c.l.b16 %v1496
      %v3340 = vunpack.c.h.b16 %v1496
      %v3341 = vunpack.c.l.b16 %v1510
      %v3342 = vunpack.c.h.b16 %v1510
      %v3343 = vunpack.c.l.b16 %v1520
      %v3344 = vunpack.c.h.b16 %v1520
      %v3345 = vunpack.c.l.b16 %v1534
      %v3346 = vunpack.c.h.b16 %v1534
      %v3347 = vunpack.c.l.b16 %v1544
      %v3348 = vunpack.c.h.b16 %v1544
      %v3349 = vunpack.c.l.b16 %v1558
      %v3350 = vunpack.c.h.b16 %v1558
      %v3351 = vunpack.c.l.b16 %v1568
      %v3352 = vunpack.c.h.b16 %v1568
      %v3353 = vunpack.c.l.b16 %v1582
      %v3354 = vunpack.c.h.b16 %v1582
      %v3355 = vunpack.c.l.b16 %v1592
      %v3356 = vunpack.c.h.b16 %v1592
      %v3357 = vunpack.c.l.b16 %v1606
      %v3358 = vunpack.c.h.b16 %v1606
      %v3359 = vunpack.c.l.b16 %v1616
      %v3360 = vunpack.c.h.b16 %v1616
      %v3361 = vunpack.c.l.b16 %v1630
      %v3362 = vunpack.c.h.b16 %v1630
      %v3363 = vunpack.c.l.b16 %v1640
      %v3364 = vunpack.c.h.b16 %v1640
      %v3365 = vunpack.c.l.b16 %v1654
      %v3366 = vunpack.c.h.b16 %v1654
      %v3367 = vunpack.c.l.b16 %v1664
      %v3368 = vunpack.c.h.b16 %v1664
      %v3369 = vunpack.c.l.b16 %v1678
      %v3370 = vunpack.c.h.b16 %v1678
      %v3371 = vunpack.c.l.b16 %v1688
      %v3372 = vunpack.c.h.b16 %v1688
      %v3373 = vunpack.c.l.b16 %v1702
      %v3374 = vunpack.c.h.b16 %v1702
      %v3375 = vunpack.c.l.b16 %v1712
      %v3376 = vunpack.c.h.b16 %v1712
      %v3377 = vunpack.c.l.b16 %v1726
      %v3378 = vunpack.c.h.b16 %v1726
      %v3379 = vunpack.c.l.b16 %v1736
      %v3380 = vunpack.c.h.b16 %v1736
      %v3381 = vunpack.c.l.b16 %v1750
      %v3382 = vunpack.c.h.b16 %v1750
      %v3383 = vunpack.c.l.b16 %v1760
      %v3384 = vunpack.c.h.b16 %v1760
      %v3385 = vunpack.c.l.b16 %v1774
      %v3386 = vunpack.c.h.b16 %v1774
      %v3387 = vunpack.c.l.b16 %v1784
      %v3388 = vunpack.c.h.b16 %v1784
      %v3389 = vpack.c.b16 %v3327, %v3325
      %v3390 = vpack.c.b16 %v3328, %v3326
      %v3391 = vpack.c.b16 %v3331, %v3329
      %v3392 = vpack.c.b16 %v3332, %v3330
      %v3393 = vpack.c.b16 %v3335, %v3333
      %v3394 = vpack.c.b16 %v3336, %v3334
      %v3395 = vpack.c.b16 %v3339, %v3337
      %v3396 = vpack.c.b16 %v3340, %v3338
      %v3397 = vpack.c.b16 %v3343, %v3341
      %v3398 = vpack.c.b16 %v3344, %v3342
      %v3399 = vpack.c.b16 %v3347, %v3345
      %v3400 = vpack.c.b16 %v3348, %v3346
      %v3401 = vpack.c.b16 %v3351, %v3349
      %v3402 = vpack.c.b16 %v3352, %v3350
      %v3403 = vpack.c.b16 %v3355, %v3353
      %v3404 = vpack.c.b16 %v3356, %v3354
      %v3405 = vpack.c.b16 %v3359, %v3357
      %v3406 = vpack.c.b16 %v3360, %v3358
      %v3407 = vpack.c.b16 %v3363, %v3361
      %v3408 = vpack.c.b16 %v3364, %v3362
      %v3409 = vpack.c.b16 %v3367, %v3365
      %v3410 = vpack.c.b16 %v3368, %v3366
      %v3411 = vpack.c.b16 %v3371, %v3369
      %v3412 = vpack.c.b16 %v3372, %v3370
      %v3413 = vpack.c.b16 %v3375, %v3373
      %v3414 = vpack.c.b16 %v3376, %v3374
      %v3415 = vpack.c.b16 %v3379, %v3377
      %v3416 = vpack.c.b16 %v3380, %v3378
      %v3417 = vpack.c.b16 %v3383, %v3381
      %v3418 = vpack.c.b16 %v3384, %v3382
      %v3419 = vpack.c.b16 %v3387, %v3385
      %v3420 = vpack.c.b16 %v3388, %v3386
      %v3453 = vunpack.c.l.b16 %v1855
      %v3454 = vunpack.c.h.b16 %v1855
      %v3455 = vunpack.c.l.b16 %v1858
      %v3456 = vunpack.c.h.b16 %v1858
      %v3457 = vunpack.c.l.b16 %v1862
      %v3458 = vunpack.c.h.b16 %v1862
      %v3459 = vunpack.c.l.b16 %v1865
      %v3460 = vunpack.c.h.b16 %v1865
      %v3461 = vunpack.c.l.b16 %v1869
      %v3462 = vunpack.c.h.b16 %v1869
      %v3463 = vunpack.c.l.b16 %v1872
      %v3464 = vunpack.c.h.b16 %v1872
      %v3465 = vunpack.c.l.b16 %v1876
      %v3466 = vunpack.c.h.b16 %v1876
      %v3467 = vunpack.c.l.b16 %v1879
      %v3468 = vunpack.c.h.b16 %v1879
      %v3469 = vunpack.c.l.b16 %v1883
      %v3470 = vunpack.c.h.b16 %v1883
      %v3471 = vunpack.c.l.b16 %v1886
      %v3472 = vunpack.c.h.b16 %v1886
      %v3473 = vunpack.c.l.b16 %v1890
      %v3474 = vunpack.c.h.b16 %v1890
      %v3475 = vunpack.c.l.b16 %v1893
      %v3476 = vunpack.c.h.b16 %v1893
      %v3477 = vunpack.c.l.b16 %v1897
      %v3478 = vunpack.c.h.b16 %v1897
      %v3479 = vunpack.c.l.b16 %v1900
      %v3480 = vunpack.c.h.b16 %v1900
      %v3481 = vunpack.c.l.b16 %v1904
      %v3482 = vunpack.c.h.b16 %v1904
      %v3483 = vunpack.c.l.b16 %v1907
      %v3484 = vunpack.c.h.b16 %v1907
      %v3485 = vunpack.c.l.b16 %v1911
      %v3486 = vunpack.c.h.b16 %v1911
      %v3487 = vunpack.c.l.b16 %v1914
      %v3488 = vunpack.c.h.b16 %v1914
      %v3489 = vunpack.c.l.b16 %v1918
      %v3490 = vunpack.c.h.b16 %v1918
      %v3491 = vunpack.c.l.b16 %v1921
      %v3492 = vunpack.c.h.b16 %v1921
      %v3493 = vunpack.c.l.b16 %v1925
      %v3494 = vunpack.c.h.b16 %v1925
      %v3495 = vunpack.c.l.b16 %v1928
      %v3496 = vunpack.c.h.b16 %v1928
      %v3497 = vunpack.c.l.b16 %v1932
      %v3498 = vunpack.c.h.b16 %v1932
      %v3499 = vunpack.c.l.b16 %v1935
      %v3500 = vunpack.c.h.b16 %v1935
      %v3501 = vunpack.c.l.b16 %v1939
      %v3502 = vunpack.c.h.b16 %v1939
      %v3503 = vunpack.c.l.b16 %v1942
      %v3504 = vunpack.c.h.b16 %v1942
      %v3505 = vunpack.c.l.b16 %v1946
      %v3506 = vunpack.c.h.b16 %v1946
      %v3507 = vunpack.c.l.b16 %v1949
      %v3508 = vunpack.c.h.b16 %v1949
      %v3509 = vunpack.c.l.b16 %v1953
      %v3510 = vunpack.c.h.b16 %v1953
      %v3511 = vunpack.c.l.b16 %v1956
      %v3512 = vunpack.c.h.b16 %v1956
      %v3513 = vunpack.c.l.b16 %v1960
      %v3514 = vunpack.c.h.b16 %v1960
      %v3515 = vunpack.c.l.b16 %v1963
      %v3516 = vunpack.c.h.b16 %v1963
      %v3517 = vpack.c.b16 %v3455, %v3453
      %v3518 = vpack.c.b16 %v3456, %v3454
      %v3519 = vpack.c.b16 %v3459, %v3457
      %v3520 = vpack.c.b16 %v3460, %v3458
      %v3521 = vpack.c.b16 %v3463, %v3461
      %v3522 = vpack.c.b16 %v3464, %v3462
      %v3523 = vpack.c.b16 %v3467, %v3465
      %v3524 = vpack.c.b16 %v3468, %v3466
      %v3525 = vpack.c.b16 %v3471, %v3469
      %v3526 = vpack.c.b16 %v3472, %v3470
      %v3527 = vpack.c.b16 %v3475, %v3473
      %v3528 = vpack.c.b16 %v3476, %v3474
      %v3529 = vpack.c.b16 %v3479, %v3477
      %v3530 = vpack.c.b16 %v3480, %v3478
      %v3531 = vpack.c.b16 %v3483, %v3481
      %v3532 = vpack.c.b16 %v3484, %v3482
      %v3533 = vpack.c.b16 %v3487, %v3485
      %v3534 = vpack.c.b16 %v3488, %v3486
      %v3535 = vpack.c.b16 %v3491, %v3489
      %v3536 = vpack.c.b16 %v3492, %v3490
      %v3537 = vpack.c.b16 %v3495, %v3493
      %v3538 = vpack.c.b16 %v3496, %v3494
      %v3539 = vpack.c.b16 %v3499, %v3497
      %v3540 = vpack.c.b16 %v3500, %v3498
      %v3541 = vpack.c.b16 %v3503, %v3501
      %v3542 = vpack.c.b16 %v3504, %v3502
      %v3543 = vpack.c.b16 %v3507, %v3505
      %v3544 = vpack.c.b16 %v3508, %v3506
      %v3545 = vpack.c.b16 %v3511, %v3509
      %v3546 = vpack.c.b16 %v3512, %v3510
      %v3547 = vpack.c.b16 %v3515, %v3513
      %v3548 = vpack.c.b16 %v3516, %v3514
      %v3597 = vunpack.c.l.b16 %v1964
      %v3598 = vunpack.c.h.b16 %v1964
      %v3599 = vunpack.c.l.b16 %v1965
      %v3600 = vunpack.c.h.b16 %v1965
      %v3601 = vunpack.c.l.b16 %v1966
      %v3602 = vunpack.c.h.b16 %v1966
      %v3603 = vunpack.c.l.b16 %v1967
      %v3604 = vunpack.c.h.b16 %v1967
      %v3605 = vunpack.c.l.b16 %v1968
      %v3606 = vunpack.c.h.b16 %v1968
      %v3607 = vunpack.c.l.b16 %v1969
      %v3608 = vunpack.c.h.b16 %v1969
      %v3609 = vunpack.c.l.b16 %v1970
      %v3610 = vunpack.c.h.b16 %v1970
      %v3611 = vunpack.c.l.b16 %v1971
      %v3612 = vunpack.c.h.b16 %v1971
      %v3613 = vunpack.c.l.b16 %v1972
      %v3614 = vunpack.c.h.b16 %v1972
      %v3615 = vunpack.c.l.b16 %v1973
      %v3616 = vunpack.c.h.b16 %v1973
      %v3617 = vunpack.c.l.b16 %v1974
      %v3618 = vunpack.c.h.b16 %v1974
      %v3619 = vunpack.c.l.b16 %v1975
      %v3620 = vunpack.c.h.b16 %v1975
      %v3621 = vunpack.c.l.b16 %v1976
      %v3622 = vunpack.c.h.b16 %v1976
      %v3623 = vunpack.c.l.b16 %v1977
      %v3624 = vunpack.c.h.b16 %v1977
      %v3625 = vunpack.c.l.b16 %v1978
      %v3626 = vunpack.c.h.b16 %v1978
      %v3627 = vunpack.c.l.b16 %v1979
      %v3628 = vunpack.c.h.b16 %v1979
      %v3629 = vunpack.c.l.b16 %v1980
      %v3630 = vunpack.c.h.b16 %v1980
      %v3631 = vunpack.c.l.b16 %v1981
      %v3632 = vunpack.c.h.b16 %v1981
      %v3633 = vunpack.c.l.b16 %v1982
      %v3634 = vunpack.c.h.b16 %v1982
      %v3635 = vunpack.c.l.b16 %v1983
      %v3636 = vunpack.c.h.b16 %v1983
      %v3637 = vunpack.c.l.b16 %v1984
      %v3638 = vunpack.c.h.b16 %v1984
      %v3639 = vunpack.c.l.b16 %v1985
      %v3640 = vunpack.c.h.b16 %v1985
      %v3641 = vunpack.c.l.b16 %v1986
      %v3642 = vunpack.c.h.b16 %v1986
      %v3643 = vunpack.c.l.b16 %v1987
      %v3644 = vunpack.c.h.b16 %v1987
      %v3645 = vunpack.c.l.b16 %v1988
      %v3646 = vunpack.c.h.b16 %v1988
      %v3647 = vunpack.c.l.b16 %v1989
      %v3648 = vunpack.c.h.b16 %v1989
      %v3649 = vunpack.c.l.b16 %v1990
      %v3650 = vunpack.c.h.b16 %v1990
      %v3651 = vunpack.c.l.b16 %v1991
      %v3652 = vunpack.c.h.b16 %v1991
      %v3653 = vunpack.c.l.b16 %v1992
      %v3654 = vunpack.c.h.b16 %v1992
      %v3655 = vunpack.c.l.b16 %v1993
      %v3656 = vunpack.c.h.b16 %v1993
      %v3657 = vunpack.c.l.b16 %v1994
      %v3658 = vunpack.c.h.b16 %v1994
      %v3659 = vunpack.c.l.b16 %v1995
      %v3660 = vunpack.c.h.b16 %v1995
      %v3661 = vpack.c.b16 %v3599, %v3597
      %v3662 = vpack.c.b16 %v3600, %v3598
      %v3663 = vpack.c.b16 %v3603, %v3601
      %v3664 = vpack.c.b16 %v3604, %v3602
      %v3665 = vpack.c.b16 %v3607, %v3605
      %v3666 = vpack.c.b16 %v3608, %v3606
      %v3667 = vpack.c.b16 %v3611, %v3609
      %v3668 = vpack.c.b16 %v3612, %v3610
      %v3669 = vpack.c.b16 %v3615, %v3613
      %v3670 = vpack.c.b16 %v3616, %v3614
      %v3671 = vpack.c.b16 %v3619, %v3617
      %v3672 = vpack.c.b16 %v3620, %v3618
      %v3673 = vpack.c.b16 %v3623, %v3621
      %v3674 = vpack.c.b16 %v3624, %v3622
      %v3675 = vpack.c.b16 %v3627, %v3625
      %v3676 = vpack.c.b16 %v3628, %v3626
      %v3677 = vpack.c.b16 %v3631, %v3629
      %v3678 = vpack.c.b16 %v3632, %v3630
      %v3679 = vpack.c.b16 %v3635, %v3633
      %v3680 = vpack.c.b16 %v3636, %v3634
      %v3681 = vpack.c.b16 %v3639, %v3637
      %v3682 = vpack.c.b16 %v3640, %v3638
      %v3683 = vpack.c.b16 %v3643, %v3641
      %v3684 = vpack.c.b16 %v3644, %v3642
      %v3685 = vpack.c.b16 %v3647, %v3645
      %v3686 = vpack.c.b16 %v3648, %v3646
      %v3687 = vpack.c.b16 %v3651, %v3649
      %v3688 = vpack.c.b16 %v3652, %v3650
      %v3689 = vpack.c.b16 %v3655, %v3653
      %v3690 = vpack.c.b16 %v3656, %v3654
      %v3691 = vpack.c.b16 %v3659, %v3657
      %v3692 = vpack.c.b16 %v3660, %v3658
      %v3725 = vunpack.c.l.b16 %v2025
      %v3726 = vunpack.c.h.b16 %v2025
      %v3727 = vunpack.c.l.b16 %v2035
      %v3728 = vunpack.c.h.b16 %v2035
      %v3729 = vunpack.c.l.b16 %v2049
      %v3730 = vunpack.c.h.b16 %v2049
      %v3731 = vunpack.c.l.b16 %v2059
      %v3732 = vunpack.c.h.b16 %v2059
      %v3733 = vunpack.c.l.b16 %v2073
      %v3734 = vunpack.c.h.b16 %v2073
      %v3735 = vunpack.c.l.b16 %v2083
      %v3736 = vunpack.c.h.b16 %v2083
      %v3737 = vunpack.c.l.b16 %v2097
      %v3738 = vunpack.c.h.b16 %v2097
      %v3739 = vunpack.c.l.b16 %v2107
      %v3740 = vunpack.c.h.b16 %v2107
      %v3741 = vunpack.c.l.b16 %v2121
      %v3742 = vunpack.c.h.b16 %v2121
      %v3743 = vunpack.c.l.b16 %v2131
      %v3744 = vunpack.c.h.b16 %v2131
      %v3745 = vunpack.c.l.b16 %v2145
      %v3746 = vunpack.c.h.b16 %v2145
      %v3747 = vunpack.c.l.b16 %v2155
      %v3748 = vunpack.c.h.b16 %v2155
      %v3749 = vunpack.c.l.b16 %v2169
      %v3750 = vunpack.c.h.b16 %v2169
      %v3751 = vunpack.c.l.b16 %v2179
      %v3752 = vunpack.c.h.b16 %v2179
      %v3753 = vunpack.c.l.b16 %v2193
      %v3754 = vunpack.c.h.b16 %v2193
      %v3755 = vunpack.c.l.b16 %v2203
      %v3756 = vunpack.c.h.b16 %v2203
      %v3757 = vunpack.c.l.b16 %v2217
      %v3758 = vunpack.c.h.b16 %v2217
      %v3759 = vunpack.c.l.b16 %v2227
      %v3760 = vunpack.c.h.b16 %v2227
      %v3761 = vunpack.c.l.b16 %v2241
      %v3762 = vunpack.c.h.b16 %v2241
      %v3763 = vunpack.c.l.b16 %v2251
      %v3764 = vunpack.c.h.b16 %v2251
      %v3765 = vunpack.c.l.b16 %v2265
      %v3766 = vunpack.c.h.b16 %v2265
      %v3767 = vunpack.c.l.b16 %v2275
      %v3768 = vunpack.c.h.b16 %v2275
      %v3769 = vunpack.c.l.b16 %v2289
      %v3770 = vunpack.c.h.b16 %v2289
      %v3771 = vunpack.c.l.b16 %v2299
      %v3772 = vunpack.c.h.b16 %v2299
      %v3773 = vunpack.c.l.b16 %v2313
      %v3774 = vunpack.c.h.b16 %v2313
      %v3775 = vunpack.c.l.b16 %v2323
      %v3776 = vunpack.c.h.b16 %v2323
      %v3777 = vunpack.c.l.b16 %v2337
      %v3778 = vunpack.c.h.b16 %v2337
      %v3779 = vunpack.c.l.b16 %v2347
      %v3780 = vunpack.c.h.b16 %v2347
      %v3781 = vunpack.c.l.b16 %v2361
      %v3782 = vunpack.c.h.b16 %v2361
      %v3783 = vunpack.c.l.b16 %v2371
      %v3784 = vunpack.c.h.b16 %v2371
      %v3785 = vunpack.c.l.b16 %v2385
      %v3786 = vunpack.c.h.b16 %v2385
      %v3787 = vunpack.c.l.b16 %v2395
      %v3788 = vunpack.c.h.b16 %v2395
      %v3789 = vpack.c.b16 %v3727, %v3725
      %v3790 = vpack.c.b16 %v3728, %v3726
      %v3791 = vpack.c.b16 %v3731, %v3729
      %v3792 = vpack.c.b16 %v3732, %v3730
      %v3793 = vpack.c.b16 %v3735, %v3733
      %v3794 = vpack.c.b16 %v3736, %v3734
      %v3795 = vpack.c.b16 %v3739, %v3737
      %v3796 = vpack.c.b16 %v3740, %v3738
      %v3797 = vpack.c.b16 %v3743, %v3741
      %v3798 = vpack.c.b16 %v3744, %v3742
      %v3799 = vpack.c.b16 %v3747, %v3745
      %v3800 = vpack.c.b16 %v3748, %v3746
      %v3801 = vpack.c.b16 %v3751, %v3749
      %v3802 = vpack.c.b16 %v3752, %v3750
      %v3803 = vpack.c.b16 %v3755, %v3753
      %v3804 = vpack.c.b16 %v3756, %v3754
      %v3805 = vpack.c.b16 %v3759, %v3757
      %v3806 = vpack.c.b16 %v3760, %v3758
      %v3807 = vpack.c.b16 %v3763, %v3761
      %v3808 = vpack.c.b16 %v3764, %v3762
      %v3809 = vpack.c.b16 %v3767, %v3765
      %v3810 = vpack.c.b16 %v3768, %v3766
      %v3811 = vpack.c.b16 %v3771, %v3769
      %v3812 = vpack.c.b16 %v3772, %v3770
      %v3813 = vpack.c.b16 %v3775, %v3773
      %v3814 = vpack.c.b16 %v3776, %v3774
      %v3815 = vpack.c.b16 %v3779, %v3777
      %v3816 = vpack.c.b16 %v3780, %v3778
      %v3817 = vpack.c.b16 %v3783, %v3781
      %v3818 = vpack.c.b16 %v3784, %v3782
      %v3819 = vpack.c.b16 %v3787, %v3785
      %v3820 = vpack.c.b16 %v3788, %v3786
      %v3853 = vunpack.c.l.b16 %v2463
      %v3854 = vunpack.c.h.b16 %v2463
      %v3855 = vunpack.c.l.b16 %v2466
      %v3856 = vunpack.c.h.b16 %v2466
      %v3857 = vunpack.c.l.b16 %v2470
      %v3858 = vunpack.c.h.b16 %v2470
      %v3859 = vunpack.c.l.b16 %v2473
      %v3860 = vunpack.c.h.b16 %v2473
      %v3861 = vunpack.c.l.b16 %v2477
      %v3862 = vunpack.c.h.b16 %v2477
      %v3863 = vunpack.c.l.b16 %v2480
      %v3864 = vunpack.c.h.b16 %v2480
      %v3865 = vunpack.c.l.b16 %v2484
      %v3866 = vunpack.c.h.b16 %v2484
      %v3867 = vunpack.c.l.b16 %v2487
      %v3868 = vunpack.c.h.b16 %v2487
      %v3869 = vunpack.c.l.b16 %v2491
      %v3870 = vunpack.c.h.b16 %v2491
      %v3871 = vunpack.c.l.b16 %v2494
      %v3872 = vunpack.c.h.b16 %v2494
      %v3873 = vunpack.c.l.b16 %v2498
      %v3874 = vunpack.c.h.b16 %v2498
      %v3875 = vunpack.c.l.b16 %v2501
      %v3876 = vunpack.c.h.b16 %v2501
      %v3877 = vunpack.c.l.b16 %v2505
      %v3878 = vunpack.c.h.b16 %v2505
      %v3879 = vunpack.c.l.b16 %v2508
      %v3880 = vunpack.c.h.b16 %v2508
      %v3881 = vunpack.c.l.b16 %v2512
      %v3882 = vunpack.c.h.b16 %v2512
      %v3883 = vunpack.c.l.b16 %v2515
      %v3884 = vunpack.c.h.b16 %v2515
      %v3885 = vunpack.c.l.b16 %v2519
      %v3886 = vunpack.c.h.b16 %v2519
      %v3887 = vunpack.c.l.b16 %v2522
      %v3888 = vunpack.c.h.b16 %v2522
      %v3889 = vunpack.c.l.b16 %v2526
      %v3890 = vunpack.c.h.b16 %v2526
      %v3891 = vunpack.c.l.b16 %v2529
      %v3892 = vunpack.c.h.b16 %v2529
      %v3893 = vunpack.c.l.b16 %v2533
      %v3894 = vunpack.c.h.b16 %v2533
      %v3895 = vunpack.c.l.b16 %v2536
      %v3896 = vunpack.c.h.b16 %v2536
      %v3897 = vunpack.c.l.b16 %v2540
      %v3898 = vunpack.c.h.b16 %v2540
      %v3899 = vunpack.c.l.b16 %v2543
      %v3900 = vunpack.c.h.b16 %v2543
      %v3901 = vunpack.c.l.b16 %v2547
      %v3902 = vunpack.c.h.b16 %v2547
      %v3903 = vunpack.c.l.b16 %v2550
      %v3904 = vunpack.c.h.b16 %v2550
      %v3905 = vunpack.c.l.b16 %v2554
      %v3906 = vunpack.c.h.b16 %v2554
      %v3907 = vunpack.c.l.b16 %v2557
      %v3908 = vunpack.c.h.b16 %v2557
      %v3909 = vunpack.c.l.b16 %v2561
      %v3910 = vunpack.c.h.b16 %v2561
      %v3911 = vunpack.c.l.b16 %v2564
      %v3912 = vunpack.c.h.b16 %v2564
      %v3913 = vunpack.c.l.b16 %v2568
      %v3914 = vunpack.c.h.b16 %v2568
      %v3915 = vunpack.c.l.b16 %v2571
      %v3916 = vunpack.c.h.b16 %v2571
      %v3917 = vpack.c.b16 %v3855, %v3853
      %v3918 = vpack.c.b16 %v3856, %v3854
      %v3919 = vpack.c.b16 %v3859, %v3857
      %v3920 = vpack.c.b16 %v3860, %v3858
      %v3921 = vpack.c.b16 %v3863, %v3861
      %v3922 = vpack.c.b16 %v3864, %v3862
      %v3923 = vpack.c.b16 %v3867, %v3865
      %v3924 = vpack.c.b16 %v3868, %v3866
      %v3925 = vpack.c.b16 %v3871, %v3869
      %v3926 = vpack.c.b16 %v3872, %v3870
      %v3927 = vpack.c.b16 %v3875, %v3873
      %v3928 = vpack.c.b16 %v3876, %v3874
      %v3929 = vpack.c.b16 %v3879, %v3877
      %v3930 = vpack.c.b16 %v3880, %v3878
      %v3931 = vpack.c.b16 %v3883, %v3881
      %v3932 = vpack.c.b16 %v3884, %v3882
      %v3933 = vpack.c.b16 %v3887, %v3885
      %v3934 = vpack.c.b16 %v3888, %v3886
      %v3935 = vpack.c.b16 %v3891, %v3889
      %v3936 = vpack.c.b16 %v3892, %v3890
      %v3937 = vpack.c.b16 %v3895, %v3893
      %v3938 = vpack.c.b16 %v3896, %v3894
      %v3939 = vpack.c.b16 %v3899, %v3897
      %v3940 = vpack.c.b16 %v3900, %v3898
      %v3941 = vpack.c.b16 %v3903, %v3901
      %v3942 = vpack.c.b16 %v3904, %v3902
      %v3943 = vpack.c.b16 %v3907, %v3905
      %v3944 = vpack.c.b16 %v3908, %v3906
      %v3945 = vpack.c.b16 %v3911, %v3909
      %v3946 = vpack.c.b16 %v3912, %v3910
      %v3947 = vpack.c.b16 %v3915, %v3913
      %v3948 = vpack.c.b16 %v3916, %v3914
      %v3997 = vunpack.c.l.b16 %v2573
      %v3998 = vunpack.c.h.b16 %v2573
      %v3999 = vunpack.c.l.b16 %v2574
      %v4000 = vunpack.c.h.b16 %v2574
      %v4001 = vunpack.c.l.b16 %v2575
      %v4002 = vunpack.c.h.b16 %v2575
      %v4003 = vunpack.c.l.b16 %v2576
      %v4004 = vunpack.c.h.b16 %v2576
      %v4005 = vunpack.c.l.b16 %v2577
      %v4006 = vunpack.c.h.b16 %v2577
      %v4007 = vunpack.c.l.b16 %v2578
      %v4008 = vunpack.c.h.b16 %v2578
      %v4009 = vunpack.c.l.b16 %v2579
      %v4010 = vunpack.c.h.b16 %v2579
      %v4011 = vunpack.c.l.b16 %v2580
      %v4012 = vunpack.c.h.b16 %v2580
      %v4013 = vunpack.c.l.b16 %v2581
      %v4014 = vunpack.c.h.b16 %v2581
      %v4015 = vunpack.c.l.b16 %v2582
      %v4016 = vunpack.c.h.b16 %v2582
      %v4017 = vunpack.c.l.b16 %v2583
      %v4018 = vunpack.c.h.b16 %v2583
      %v4019 = vunpack.c.l.b16 %v2584
      %v4020 = vunpack.c.h.b16 %v2584
      %v4021 = vunpack.c.l.b16 %v2585
      %v4022 = vunpack.c.h.b16 %v2585
      %v4023 = vunpack.c.l.b16 %v2586
      %v4024 = vunpack.c.h.b16 %v2586
      %v4025 = vunpack.c.l.b16 %v2587
      %v4026 = vunpack.c.h.b16 %v2587
      %v4027 = vunpack.c.l.b16 %v2588
      %v4028 = vunpack.c.h.b16 %v2588
      %v4029 = vunpack.c.l.b16 %v2589
      %v4030 = vunpack.c.h.b16 %v2589
      %v4031 = vunpack.c.l.b16 %v2590
      %v4032 = vunpack.c.h.b16 %v2590
      %v4033 = vunpack.c.l.b16 %v2591
      %v4034 = vunpack.c.h.b16 %v2591
      %v4035 = vunpack.c.l.b16 %v2592
      %v4036 = vunpack.c.h.b16 %v2592
      %v4037 = vunpack.c.l.b16 %v2593
      %v4038 = vunpack.c.h.b16 %v2593
      %v4039 = vunpack.c.l.b16 %v2594
      %v4040 = vunpack.c.h.b16 %v2594
      %v4041 = vunpack.c.l.b16 %v2595
      %v4042 = vunpack.c.h.b16 %v2595
      %v4043 = vunpack.c.l.b16 %v2596
      %v4044 = vunpack.c.h.b16 %v2596
      %v4045 = vunpack.c.l.b16 %v2597
      %v4046 = vunpack.c.h.b16 %v2597
      %v4047 = vunpack.c.l.b16 %v2598
      %v4048 = vunpack.c.h.b16 %v2598
      %v4049 = vunpack.c.l.b16 %v2599
      %v4050 = vunpack.c.h.b16 %v2599
      %v4051 = vunpack.c.l.b16 %v2600
      %v4052 = vunpack.c.h.b16 %v2600
      %v4053 = vunpack.c.l.b16 %v2601
      %v4054 = vunpack.c.h.b16 %v2601
      %v4055 = vunpack.c.l.b16 %v2602
      %v4056 = vunpack.c.h.b16 %v2602
      %v4057 = vunpack.c.l.b16 %v2603
      %v4058 = vunpack.c.h.b16 %v2603
      %v4059 = vunpack.c.l.b16 %v2604
      %v4060 = vunpack.c.h.b16 %v2604
      %v4061 = vpack.c.b16 %v3999, %v3997
      %v4062 = vpack.c.b16 %v4000, %v3998
      %v4063 = vpack.c.b16 %v4003, %v4001
      %v4064 = vpack.c.b16 %v4004, %v4002
      %v4065 = vpack.c.b16 %v4007, %v4005
      %v4066 = vpack.c.b16 %v4008, %v4006
      %v4067 = vpack.c.b16 %v4011, %v4009
      %v4068 = vpack.c.b16 %v4012, %v4010
      %v4069 = vpack.c.b16 %v4015, %v4013
      %v4070 = vpack.c.b16 %v4016, %v4014
      %v4071 = vpack.c.b16 %v4019, %v4017
      %v4072 = vpack.c.b16 %v4020, %v4018
      %v4073 = vpack.c.b16 %v4023, %v4021
      %v4074 = vpack.c.b16 %v4024, %v4022
      %v4075 = vpack.c.b16 %v4027, %v4025
      %v4076 = vpack.c.b16 %v4028, %v4026
      %v4077 = vpack.c.b16 %v4031, %v4029
      %v4078 = vpack.c.b16 %v4032, %v4030
      %v4079 = vpack.c.b16 %v4035, %v4033
      %v4080 = vpack.c.b16 %v4036, %v4034
      %v4081 = vpack.c.b16 %v4039, %v4037
      %v4082 = vpack.c.b16 %v4040, %v4038
      %v4083 = vpack.c.b16 %v4043, %v4041
      %v4084 = vpack.c.b16 %v4044, %v4042
      %v4085 = vpack.c.b16 %v4047, %v4045
      %v4086 = vpack.c.b16 %v4048, %v4046
      %v4087 = vpack.c.b16 %v4051, %v4049
      %v4088 = vpack.c.b16 %v4052, %v4050
      %v4089 = vpack.c.b16 %v4055, %v4053
      %v4090 = vpack.c.b16 %v4056, %v4054
      %v4091 = vpack.c.b16 %v4059, %v4057
      %v4092 = vpack.c.b16 %v4060, %v4058
      %v4125 = vunpack.c.l.b16 %v2634
      %v4126 = vunpack.c.h.b16 %v2634
      %v4127 = vunpack.c.l.b16 %v2644
      %v4128 = vunpack.c.h.b16 %v2644
      %v4129 = vunpack.c.l.b16 %v2658
      %v4130 = vunpack.c.h.b16 %v2658
      %v4131 = vunpack.c.l.b16 %v2668
      %v4132 = vunpack.c.h.b16 %v2668
      %v4133 = vunpack.c.l.b16 %v2682
      %v4134 = vunpack.c.h.b16 %v2682
      %v4135 = vunpack.c.l.b16 %v2692
      %v4136 = vunpack.c.h.b16 %v2692
      %v4137 = vunpack.c.l.b16 %v2706
      %v4138 = vunpack.c.h.b16 %v2706
      %v4139 = vunpack.c.l.b16 %v2716
      %v4140 = vunpack.c.h.b16 %v2716
      %v4141 = vunpack.c.l.b16 %v2730
      %v4142 = vunpack.c.h.b16 %v2730
      %v4143 = vunpack.c.l.b16 %v2740
      %v4144 = vunpack.c.h.b16 %v2740
      %v4145 = vunpack.c.l.b16 %v2754
      %v4146 = vunpack.c.h.b16 %v2754
      %v4147 = vunpack.c.l.b16 %v2764
      %v4148 = vunpack.c.h.b16 %v2764
      %v4149 = vunpack.c.l.b16 %v2778
      %v4150 = vunpack.c.h.b16 %v2778
      %v4151 = vunpack.c.l.b16 %v2788
      %v4152 = vunpack.c.h.b16 %v2788
      %v4153 = vunpack.c.l.b16 %v2802
      %v4154 = vunpack.c.h.b16 %v2802
      %v4155 = vunpack.c.l.b16 %v2812
      %v4156 = vunpack.c.h.b16 %v2812
      %v4157 = vunpack.c.l.b16 %v2826
      %v4158 = vunpack.c.h.b16 %v2826
      %v4159 = vunpack.c.l.b16 %v2836
      %v4160 = vunpack.c.h.b16 %v2836
      %v4161 = vunpack.c.l.b16 %v2850
      %v4162 = vunpack.c.h.b16 %v2850
      %v4163 = vunpack.c.l.b16 %v2860
      %v4164 = vunpack.c.h.b16 %v2860
      %v4165 = vunpack.c.l.b16 %v2874
      %v4166 = vunpack.c.h.b16 %v2874
      %v4167 = vunpack.c.l.b16 %v2884
      %v4168 = vunpack.c.h.b16 %v2884
      %v4169 = vunpack.c.l.b16 %v2898
      %v4170 = vunpack.c.h.b16 %v2898
      %v4171 = vunpack.c.l.b16 %v2908
      %v4172 = vunpack.c.h.b16 %v2908
      %v4173 = vunpack.c.l.b16 %v2922
      %v4174 = vunpack.c.h.b16 %v2922
      %v4175 = vunpack.c.l.b16 %v2932
      %v4176 = vunpack.c.h.b16 %v2932
      %v4177 = vunpack.c.l.b16 %v2946
      %v4178 = vunpack.c.h.b16 %v2946
      %v4179 = vunpack.c.l.b16 %v2956
      %v4180 = vunpack.c.h.b16 %v2956
      %v4181 = vunpack.c.l.b16 %v2970
      %v4182 = vunpack.c.h.b16 %v2970
      %v4183 = vunpack.c.l.b16 %v2980
      %v4184 = vunpack.c.h.b16 %v2980
      %v4185 = vunpack.c.l.b16 %v2994
      %v4186 = vunpack.c.h.b16 %v2994
      %v4187 = vunpack.c.l.b16 %v3004
      %v4188 = vunpack.c.h.b16 %v3004
      %v4189 = vpack.c.b16 %v4127, %v4125
      %v4190 = vpack.c.b16 %v4128, %v4126
      %v4191 = vpack.c.b16 %v4131, %v4129
      %v4192 = vpack.c.b16 %v4132, %v4130
      %v4193 = vpack.c.b16 %v4135, %v4133
      %v4194 = vpack.c.b16 %v4136, %v4134
      %v4195 = vpack.c.b16 %v4139, %v4137
      %v4196 = vpack.c.b16 %v4140, %v4138
      %v4197 = vpack.c.b16 %v4143, %v4141
      %v4198 = vpack.c.b16 %v4144, %v4142
      %v4199 = vpack.c.b16 %v4147, %v4145
      %v4200 = vpack.c.b16 %v4148, %v4146
      %v4201 = vpack.c.b16 %v4151, %v4149
      %v4202 = vpack.c.b16 %v4152, %v4150
      %v4203 = vpack.c.b16 %v4155, %v4153
      %v4204 = vpack.c.b16 %v4156, %v4154
      %v4205 = vpack.c.b16 %v4159, %v4157
      %v4206 = vpack.c.b16 %v4160, %v4158
      %v4207 = vpack.c.b16 %v4163, %v4161
      %v4208 = vpack.c.b16 %v4164, %v4162
      %v4209 = vpack.c.b16 %v4167, %v4165
      %v4210 = vpack.c.b16 %v4168, %v4166
      %v4211 = vpack.c.b16 %v4171, %v4169
      %v4212 = vpack.c.b16 %v4172, %v4170
      %v4213 = vpack.c.b16 %v4175, %v4173
      %v4214 = vpack.c.b16 %v4176, %v4174
      %v4215 = vpack.c.b16 %v4179, %v4177
      %v4216 = vpack.c.b16 %v4180, %v4178
      %v4217 = vpack.c.b16 %v4183, %v4181
      %v4218 = vpack.c.b16 %v4184, %v4182
      %v4219 = vpack.c.b16 %v4187, %v4185
      %v4220 = vpack.c.b16 %v4188, %v4186
      %v4253 = vunpack.c.l.b16 %v3072
      %v4254 = vunpack.c.h.b16 %v3072
      %v4255 = vunpack.c.l.b16 %v3075
      %v4256 = vunpack.c.h.b16 %v3075
      %v4257 = vunpack.c.l.b16 %v3079
      %v4258 = vunpack.c.h.b16 %v3079
      %v4259 = vunpack.c.l.b16 %v3082
      %v4260 = vunpack.c.h.b16 %v3082
      %v4261 = vunpack.c.l.b16 %v3086
      %v4262 = vunpack.c.h.b16 %v3086
      %v4263 = vunpack.c.l.b16 %v3089
      %v4264 = vunpack.c.h.b16 %v3089
      %v4265 = vunpack.c.l.b16 %v3093
      %v4266 = vunpack.c.h.b16 %v3093
      %v4267 = vunpack.c.l.b16 %v3096
      %v4268 = vunpack.c.h.b16 %v3096
      %v4269 = vunpack.c.l.b16 %v3100
      %v4270 = vunpack.c.h.b16 %v3100
      %v4271 = vunpack.c.l.b16 %v3103
      %v4272 = vunpack.c.h.b16 %v3103
      %v4273 = vunpack.c.l.b16 %v3107
      %v4274 = vunpack.c.h.b16 %v3107
      %v4275 = vunpack.c.l.b16 %v3110
      %v4276 = vunpack.c.h.b16 %v3110
      %v4277 = vunpack.c.l.b16 %v3114
      %v4278 = vunpack.c.h.b16 %v3114
      %v4279 = vunpack.c.l.b16 %v3117
      %v4280 = vunpack.c.h.b16 %v3117
      %v4281 = vunpack.c.l.b16 %v3121
      %v4282 = vunpack.c.h.b16 %v3121
      %v4283 = vunpack.c.l.b16 %v3124
      %v4284 = vunpack.c.h.b16 %v3124
      %v4285 = vunpack.c.l.b16 %v3128
      %v4286 = vunpack.c.h.b16 %v3128
      %v4287 = vunpack.c.l.b16 %v3131
      %v4288 = vunpack.c.h.b16 %v3131
      %v4289 = vunpack.c.l.b16 %v3135
      %v4290 = vunpack.c.h.b16 %v3135
      %v4291 = vunpack.c.l.b16 %v3138
      %v4292 = vunpack.c.h.b16 %v3138
      %v4293 = vunpack.c.l.b16 %v3142
      %v4294 = vunpack.c.h.b16 %v3142
      %v4295 = vunpack.c.l.b16 %v3145
      %v4296 = vunpack.c.h.b16 %v3145
      %v4297 = vunpack.c.l.b16 %v3149
      %v4298 = vunpack.c.h.b16 %v3149
      %v4299 = vunpack.c.l.b16 %v3152
      %v4300 = vunpack.c.h.b16 %v3152
      %v4301 = vunpack.c.l.b16 %v3156
      %v4302 = vunpack.c.h.b16 %v3156
      %v4303 = vunpack.c.l.b16 %v3159
      %v4304 = vunpack.c.h.b16 %v3159
      %v4305 = vunpack.c.l.b16 %v3163
      %v4306 = vunpack.c.h.b16 %v3163
      %v4307 = vunpack.c.l.b16 %v3166
      %v4308 = vunpack.c.h.b16 %v3166
      %v4309 = vunpack.c.l.b16 %v3170
      %v4310 = vunpack.c.h.b16 %v3170
      %v4311 = vunpack.c.l.b16 %v3173
      %v4312 = vunpack.c.h.b16 %v3173
      %v4313 = vunpack.c.l.b16 %v3177
      %v4314 = vunpack.c.h.b16 %v3177
      %v4315 = vunpack.c.l.b16 %v3180
      %v4316 = vunpack.c.h.b16 %v3180
      %v4317 = vpack.c.b16 %v4255, %v4253
      %v4318 = vpack.c.b16 %v4256, %v4254
      %v4319 = vpack.c.b16 %v4259, %v4257
      %v4320 = vpack.c.b16 %v4260, %v4258
      %v4321 = vpack.c.b16 %v4263, %v4261
      %v4322 = vpack.c.b16 %v4264, %v4262
      %v4323 = vpack.c.b16 %v4267, %v4265
      %v4324 = vpack.c.b16 %v4268, %v4266
      %v4325 = vpack.c.b16 %v4271, %v4269
      %v4326 = vpack.c.b16 %v4272, %v4270
      %v4327 = vpack.c.b16 %v4275, %v4273
      %v4328 = vpack.c.b16 %v4276, %v4274
      %v4329 = vpack.c.b16 %v4279, %v4277
      %v4330 = vpack.c.b16 %v4280, %v4278
      %v4331 = vpack.c.b16 %v4283, %v4281
      %v4332 = vpack.c.b16 %v4284, %v4282
      %v4333 = vpack.c.b16 %v4287, %v4285
      %v4334 = vpack.c.b16 %v4288, %v4286
      %v4335 = vpack.c.b16 %v4291, %v4289
      %v4336 = vpack.c.b16 %v4292, %v4290
      %v4337 = vpack.c.b16 %v4295, %v4293
      %v4338 = vpack.c.b16 %v4296, %v4294
      %v4339 = vpack.c.b16 %v4299, %v4297
      %v4340 = vpack.c.b16 %v4300, %v4298
      %v4341 = vpack.c.b16 %v4303, %v4301
      %v4342 = vpack.c.b16 %v4304, %v4302
      %v4343 = vpack.c.b16 %v4307, %v4305
      %v4344 = vpack.c.b16 %v4308, %v4306
      %v4345 = vpack.c.b16 %v4311, %v4309
      %v4346 = vpack.c.b16 %v4312, %v4310
      %v4347 = vpack.c.b16 %v4315, %v4313
      %v4348 = vpack.c.b16 %v4316, %v4314
      %v4381 = vld [vmem:[%s2] sm:$0xf]
      %v4382 = vld [vmem:[%s2 + $0x4] sm:$0xf]
      %v4383 = vld [vmem:[%s2 + $0x8] sm:$0xf]
      %v4384 = vld [vmem:[%s2 + $0xc] sm:$0xf]
      %v4385 = vld [vmem:[%s2 + $0x10] sm:$0xf]
      %v4386 = vld [vmem:[%s2 + $0x14] sm:$0xf]
      %v4387 = vld [vmem:[%s2 + $0x18] sm:$0xf]
      %v4388 = vld [vmem:[%s2 + $0x1c] sm:$0xf]
      %v4389 = vld [vmem:[%s2 + $0x20] sm:$0xf]
      %v4390 = vld [vmem:[%s2 + $0x24] sm:$0xf]
      %v4391 = vld [vmem:[%s2 + $0x28] sm:$0xf]
      %v4392 = vld [vmem:[%s2 + $0x2c] sm:$0xf]
      %v4393 = vld [vmem:[%s2 + $0x30] sm:$0xf]
      %v4394 = vld [vmem:[%s2 + $0x34] sm:$0xf]
      %v4395 = vld [vmem:[%s2 + $0x38] sm:$0xf]
      %v4396 = vld [vmem:[%s2 + $0x3c] sm:$0xf]
      %v4397 = vld [vmem:[%s2 + $0x40] sm:$0xf]
      %v4398 = vld [vmem:[%s2 + $0x44] sm:$0xf]
      %v4399 = vld [vmem:[%s2 + $0x48] sm:$0xf]
      %v4400 = vld [vmem:[%s2 + $0x4c] sm:$0xf]
      %v4401 = vld [vmem:[%s2 + $0x50] sm:$0xf]
      %v4402 = vld [vmem:[%s2 + $0x54] sm:$0xf]
      %v4403 = vld [vmem:[%s2 + $0x58] sm:$0xf]
      %v4404 = vld [vmem:[%s2 + $0x5c] sm:$0xf]
      %v4405 = vld [vmem:[%s2 + $0x60] sm:$0xf]
      %v4406 = vld [vmem:[%s2 + $0x64] sm:$0xf]
      %v4407 = vld [vmem:[%s2 + $0x68] sm:$0xf]
      %v4408 = vld [vmem:[%s2 + $0x6c] sm:$0xf]
      %v4409 = vld [vmem:[%s2 + $0x70] sm:$0xf]
      %v4410 = vld [vmem:[%s2 + $0x74] sm:$0xf]
      %v4411 = vld [vmem:[%s2 + $0x78] sm:$0xf]
      %v4412 = vld [vmem:[%s2 + $0x7c] sm:$0xf]
      %v4413 = vld [vmem:[%s2 + $0x80] sm:$0xf]
      %v4414 = vld [vmem:[%s2 + $0x84] sm:$0xf]
      %v4415 = vld [vmem:[%s2 + $0x88] sm:$0xf]
      %v4416 = vld [vmem:[%s2 + $0x8c] sm:$0xf]
      %v4417 = vld [vmem:[%s2 + $0x90] sm:$0xf]
      %v4418 = vld [vmem:[%s2 + $0x94] sm:$0xf]
      %v4419 = vld [vmem:[%s2 + $0x98] sm:$0xf]
      %v4420 = vld [vmem:[%s2 + $0x9c] sm:$0xf]
      %v4421 = vld [vmem:[%s2 + $0xa0] sm:$0xf]
      %v4422 = vld [vmem:[%s2 + $0xa4] sm:$0xf]
      %v4423 = vld [vmem:[%s2 + $0xa8] sm:$0xf]
      %v4424 = vld [vmem:[%s2 + $0xac] sm:$0xf]
      %v4425 = vld [vmem:[%s2 + $0xb0] sm:$0xf]
      %v4426 = vld [vmem:[%s2 + $0xb4] sm:$0xf]
      %v4427 = vld [vmem:[%s2 + $0xb8] sm:$0xf]
      %v4428 = vld [vmem:[%s2 + $0xbc] sm:$0xf]
      %v4429 = vld [vmem:[%s2 + $0xc0] sm:$0xf]
      %v4430 = vld [vmem:[%s2 + $0xc4] sm:$0xf]
      %v4431 = vld [vmem:[%s2 + $0xc8] sm:$0xf]
      %v4432 = vld [vmem:[%s2 + $0xcc] sm:$0xf]
      %v4433 = vld [vmem:[%s2 + $0xd0] sm:$0xf]
      %v4434 = vld [vmem:[%s2 + $0xd4] sm:$0xf]
      %v4435 = vld [vmem:[%s2 + $0xd8] sm:$0xf]
      %v4436 = vld [vmem:[%s2 + $0xdc] sm:$0xf]
      %v4437 = vld [vmem:[%s2 + $0xe0] sm:$0xf]
      %v4438 = vld [vmem:[%s2 + $0xe4] sm:$0xf]
      %v4439 = vld [vmem:[%s2 + $0xe8] sm:$0xf]
      %v4440 = vld [vmem:[%s2 + $0xec] sm:$0xf]
      %v4441 = vld [vmem:[%s2 + $0xf0] sm:$0xf]
      %v4442 = vld [vmem:[%s2 + $0xf4] sm:$0xf]
      %v4443 = vld [vmem:[%s2 + $0xf8] sm:$0xf]
      %v4444 = vld [vmem:[%s2 + $0xfc] sm:$0xf]
      %v4445 = vld [vmem:[%s2 + $0x100] sm:$0xf]
      %v4446 = vld [vmem:[%s2 + $0x104] sm:$0xf]
      %v4447 = vld [vmem:[%s2 + $0x108] sm:$0xf]
      %v4448 = vld [vmem:[%s2 + $0x10c] sm:$0xf]
      %v4449 = vld [vmem:[%s2 + $0x110] sm:$0xf]
      %v4450 = vld [vmem:[%s2 + $0x114] sm:$0xf]
      %v4451 = vld [vmem:[%s2 + $0x118] sm:$0xf]
      %v4452 = vld [vmem:[%s2 + $0x11c] sm:$0xf]
      %v4453 = vld [vmem:[%s2 + $0x120] sm:$0xf]
      %v4454 = vld [vmem:[%s2 + $0x124] sm:$0xf]
      %v4455 = vld [vmem:[%s2 + $0x128] sm:$0xf]
      %v4456 = vld [vmem:[%s2 + $0x12c] sm:$0xf]
      %v4457 = vld [vmem:[%s2 + $0x130] sm:$0xf]
      %v4458 = vld [vmem:[%s2 + $0x134] sm:$0xf]
      %v4459 = vld [vmem:[%s2 + $0x138] sm:$0xf]
      %v4460 = vld [vmem:[%s2 + $0x13c] sm:$0xf]
      %v4461 = vld [vmem:[%s2 + $0x140] sm:$0xf]
      %v4462 = vld [vmem:[%s2 + $0x144] sm:$0xf]
      %v4463 = vld [vmem:[%s2 + $0x148] sm:$0xf]
      %v4464 = vld [vmem:[%s2 + $0x14c] sm:$0xf]
      %v4465 = vld [vmem:[%s2 + $0x150] sm:$0xf]
      %v4466 = vld [vmem:[%s2 + $0x154] sm:$0xf]
      %v4467 = vld [vmem:[%s2 + $0x158] sm:$0xf]
      %v4468 = vld [vmem:[%s2 + $0x15c] sm:$0xf]
      %v4469 = vld [vmem:[%s2 + $0x160] sm:$0xf]
      %v4470 = vld [vmem:[%s2 + $0x164] sm:$0xf]
      %v4471 = vld [vmem:[%s2 + $0x168] sm:$0xf]
      %v4472 = vld [vmem:[%s2 + $0x16c] sm:$0xf]
      %v4473 = vld [vmem:[%s2 + $0x170] sm:$0xf]
      %v4474 = vld [vmem:[%s2 + $0x174] sm:$0xf]
      %v4475 = vld [vmem:[%s2 + $0x178] sm:$0xf]
      %v4476 = vld [vmem:[%s2 + $0x17c] sm:$0xf]
      %v4477 = vld [vmem:[%s2 + $0x180] sm:$0xf]
      %v4478 = vld [vmem:[%s2 + $0x184] sm:$0xf]
      %v4479 = vld [vmem:[%s2 + $0x188] sm:$0xf]
      %v4480 = vld [vmem:[%s2 + $0x18c] sm:$0xf]
      %v4481 = vld [vmem:[%s2 + $0x190] sm:$0xf]
      %v4482 = vld [vmem:[%s2 + $0x194] sm:$0xf]
      %v4483 = vld [vmem:[%s2 + $0x198] sm:$0xf]
      %v4484 = vld [vmem:[%s2 + $0x19c] sm:$0xf]
      %v4485 = vld [vmem:[%s2 + $0x1a0] sm:$0xf]
      %v4486 = vld [vmem:[%s2 + $0x1a4] sm:$0xf]
      %v4487 = vld [vmem:[%s2 + $0x1a8] sm:$0xf]
      %v4488 = vld [vmem:[%s2 + $0x1ac] sm:$0xf]
      %v4489 = vld [vmem:[%s2 + $0x1b0] sm:$0xf]
      %v4490 = vld [vmem:[%s2 + $0x1b4] sm:$0xf]
      %v4491 = vld [vmem:[%s2 + $0x1b8] sm:$0xf]
      %v4492 = vld [vmem:[%s2 + $0x1bc] sm:$0xf]
      %v4493 = vld [vmem:[%s2 + $0x1c0] sm:$0xf]
      %v4494 = vld [vmem:[%s2 + $0x1c4] sm:$0xf]
      %v4495 = vld [vmem:[%s2 + $0x1c8] sm:$0xf]
      %v4496 = vld [vmem:[%s2 + $0x1cc] sm:$0xf]
      %v4497 = vld [vmem:[%s2 + $0x1d0] sm:$0xf]
      %v4498 = vld [vmem:[%s2 + $0x1d4] sm:$0xf]
      %v4499 = vld [vmem:[%s2 + $0x1d8] sm:$0xf]
      %v4500 = vld [vmem:[%s2 + $0x1dc] sm:$0xf]
      %v4501 = vld [vmem:[%s2 + $0x1e0] sm:$0xf]
      %v4502 = vld [vmem:[%s2 + $0x1e4] sm:$0xf]
      %v4503 = vld [vmem:[%s2 + $0x1e8] sm:$0xf]
      %v4504 = vld [vmem:[%s2 + $0x1ec] sm:$0xf]
      %v4505 = vld [vmem:[%s2 + $0x1f0] sm:$0xf]
      %v4506 = vld [vmem:[%s2 + $0x1f4] sm:$0xf]
      %v4507 = vld [vmem:[%s2 + $0x1f8] sm:$0xf]
      %v4508 = vld [vmem:[%s2 + $0x1fc] sm:$0xf]
      %v4509 = vld [vmem:[%s2 + $0x200] sm:$0xf]
      %v4510 = vld [vmem:[%s2 + $0x204] sm:$0xf]
      %v4511 = vld [vmem:[%s2 + $0x208] sm:$0xf]
      %v4512 = vld [vmem:[%s2 + $0x20c] sm:$0xf]
      %v4513 = vld [vmem:[%s2 + $0x210] sm:$0xf]
      %v4514 = vld [vmem:[%s2 + $0x214] sm:$0xf]
      %v4515 = vld [vmem:[%s2 + $0x218] sm:$0xf]
      %v4516 = vld [vmem:[%s2 + $0x21c] sm:$0xf]
      %v4517 = vld [vmem:[%s2 + $0x220] sm:$0xf]
      %v4518 = vld [vmem:[%s2 + $0x224] sm:$0xf]
      %v4519 = vld [vmem:[%s2 + $0x228] sm:$0xf]
      %v4520 = vld [vmem:[%s2 + $0x22c] sm:$0xf]
      %v4521 = vld [vmem:[%s2 + $0x230] sm:$0xf]
      %v4522 = vld [vmem:[%s2 + $0x234] sm:$0xf]
      %v4523 = vld [vmem:[%s2 + $0x238] sm:$0xf]
      %v4524 = vld [vmem:[%s2 + $0x23c] sm:$0xf]
      %v4525 = vld [vmem:[%s2 + $0x240] sm:$0xf]
      %v4526 = vld [vmem:[%s2 + $0x244] sm:$0xf]
      %v4527 = vld [vmem:[%s2 + $0x248] sm:$0xf]
      %v4528 = vld [vmem:[%s2 + $0x24c] sm:$0xf]
      %v4529 = vld [vmem:[%s2 + $0x250] sm:$0xf]
      %v4530 = vld [vmem:[%s2 + $0x254] sm:$0xf]
      %v4531 = vld [vmem:[%s2 + $0x258] sm:$0xf]
      %v4532 = vld [vmem:[%s2 + $0x25c] sm:$0xf]
      %v4533 = vld [vmem:[%s2 + $0x260] sm:$0xf]
      %v4534 = vld [vmem:[%s2 + $0x264] sm:$0xf]
      %v4535 = vld [vmem:[%s2 + $0x268] sm:$0xf]
      %v4536 = vld [vmem:[%s2 + $0x26c] sm:$0xf]
      %v4537 = vld [vmem:[%s2 + $0x270] sm:$0xf]
      %v4538 = vld [vmem:[%s2 + $0x274] sm:$0xf]
      %v4539 = vld [vmem:[%s2 + $0x278] sm:$0xf]
      %v4540 = vld [vmem:[%s2 + $0x27c] sm:$0xf]
      %v4541 = vld [vmem:[%s2 + $0x280] sm:$0xf]
      %v4542 = vld [vmem:[%s2 + $0x284] sm:$0xf]
      %v4543 = vld [vmem:[%s2 + $0x288] sm:$0xf]
      %v4544 = vld [vmem:[%s2 + $0x28c] sm:$0xf]
      %v4545 = vld [vmem:[%s2 + $0x290] sm:$0xf]
      %v4546 = vld [vmem:[%s2 + $0x294] sm:$0xf]
      %v4547 = vld [vmem:[%s2 + $0x298] sm:$0xf]
      %v4548 = vld [vmem:[%s2 + $0x29c] sm:$0xf]
      %v4549 = vld [vmem:[%s2 + $0x2a0] sm:$0xf]
      %v4550 = vld [vmem:[%s2 + $0x2a4] sm:$0xf]
      %v4551 = vld [vmem:[%s2 + $0x2a8] sm:$0xf]
      %v4552 = vld [vmem:[%s2 + $0x2ac] sm:$0xf]
      %v4553 = vld [vmem:[%s2 + $0x2b0] sm:$0xf]
      %v4554 = vld [vmem:[%s2 + $0x2b4] sm:$0xf]
      %v4555 = vld [vmem:[%s2 + $0x2b8] sm:$0xf]
      %v4556 = vld [vmem:[%s2 + $0x2bc] sm:$0xf]
      %v4557 = vld [vmem:[%s2 + $0x2c0] sm:$0xf]
      %v4558 = vld [vmem:[%s2 + $0x2c4] sm:$0xf]
      %v4559 = vld [vmem:[%s2 + $0x2c8] sm:$0xf]
      %v4560 = vld [vmem:[%s2 + $0x2cc] sm:$0xf]
      %v4561 = vld [vmem:[%s2 + $0x2d0] sm:$0xf]
      %v4562 = vld [vmem:[%s2 + $0x2d4] sm:$0xf]
      %v4563 = vld [vmem:[%s2 + $0x2d8] sm:$0xf]
      %v4564 = vld [vmem:[%s2 + $0x2dc] sm:$0xf]
      %v4565 = vld [vmem:[%s2 + $0x2e0] sm:$0xf]
      %v4566 = vld [vmem:[%s2 + $0x2e4] sm:$0xf]
      %v4567 = vld [vmem:[%s2 + $0x2e8] sm:$0xf]
      %v4568 = vld [vmem:[%s2 + $0x2ec] sm:$0xf]
      %v4569 = vld [vmem:[%s2 + $0x2f0] sm:$0xf]
      %v4570 = vld [vmem:[%s2 + $0x2f4] sm:$0xf]
      %v4571 = vld [vmem:[%s2 + $0x2f8] sm:$0xf]
      %v4572 = vld [vmem:[%s2 + $0x2fc] sm:$0xf]
      %v4573 = vld [vmem:[%s2 + $0x300] sm:$0xf]
      %v4574 = vld [vmem:[%s2 + $0x304] sm:$0xf]
      %v4575 = vld [vmem:[%s2 + $0x308] sm:$0xf]
      %v4576 = vld [vmem:[%s2 + $0x30c] sm:$0xf]
      %v4577 = vld [vmem:[%s2 + $0x310] sm:$0xf]
      %v4578 = vld [vmem:[%s2 + $0x314] sm:$0xf]
      %v4579 = vld [vmem:[%s2 + $0x318] sm:$0xf]
      %v4580 = vld [vmem:[%s2 + $0x31c] sm:$0xf]
      %v4581 = vld [vmem:[%s2 + $0x320] sm:$0xf]
      %v4582 = vld [vmem:[%s2 + $0x324] sm:$0xf]
      %v4583 = vld [vmem:[%s2 + $0x328] sm:$0xf]
      %v4584 = vld [vmem:[%s2 + $0x32c] sm:$0xf]
      %v4585 = vld [vmem:[%s2 + $0x330] sm:$0xf]
      %v4586 = vld [vmem:[%s2 + $0x334] sm:$0xf]
      %v4587 = vld [vmem:[%s2 + $0x338] sm:$0xf]
      %v4588 = vld [vmem:[%s2 + $0x33c] sm:$0xf]
      %v4589 = vld [vmem:[%s2 + $0x340] sm:$0xf]
      %v4590 = vld [vmem:[%s2 + $0x344] sm:$0xf]
      %v4591 = vld [vmem:[%s2 + $0x348] sm:$0xf]
      %v4592 = vld [vmem:[%s2 + $0x34c] sm:$0xf]
      %v4593 = vld [vmem:[%s2 + $0x350] sm:$0xf]
      %v4594 = vld [vmem:[%s2 + $0x354] sm:$0xf]
      %v4595 = vld [vmem:[%s2 + $0x358] sm:$0xf]
      %v4596 = vld [vmem:[%s2 + $0x35c] sm:$0xf]
      %v4597 = vld [vmem:[%s2 + $0x360] sm:$0xf]
      %v4598 = vld [vmem:[%s2 + $0x364] sm:$0xf]
      %v4599 = vld [vmem:[%s2 + $0x368] sm:$0xf]
      %v4600 = vld [vmem:[%s2 + $0x36c] sm:$0xf]
      %v4601 = vld [vmem:[%s2 + $0x370] sm:$0xf]
      %v4602 = vld [vmem:[%s2 + $0x374] sm:$0xf]
      %v4603 = vld [vmem:[%s2 + $0x378] sm:$0xf]
      %v4604 = vld [vmem:[%s2 + $0x37c] sm:$0xf]
      %v4605 = vld [vmem:[%s2 + $0x380] sm:$0xf]
      %v4606 = vld [vmem:[%s2 + $0x384] sm:$0xf]
      %v4607 = vld [vmem:[%s2 + $0x388] sm:$0xf]
      %v4608 = vld [vmem:[%s2 + $0x38c] sm:$0xf]
      %v4609 = vld [vmem:[%s2 + $0x390] sm:$0xf]
      %v4610 = vld [vmem:[%s2 + $0x394] sm:$0xf]
      %v4611 = vld [vmem:[%s2 + $0x398] sm:$0xf]
      %v4612 = vld [vmem:[%s2 + $0x39c] sm:$0xf]
      %v4613 = vld [vmem:[%s2 + $0x3a0] sm:$0xf]
      %v4614 = vld [vmem:[%s2 + $0x3a4] sm:$0xf]
      %v4615 = vld [vmem:[%s2 + $0x3a8] sm:$0xf]
      %v4616 = vld [vmem:[%s2 + $0x3ac] sm:$0xf]
      %v4617 = vld [vmem:[%s2 + $0x3b0] sm:$0xf]
      %v4618 = vld [vmem:[%s2 + $0x3b4] sm:$0xf]
      %v4619 = vld [vmem:[%s2 + $0x3b8] sm:$0xf]
      %v4620 = vld [vmem:[%s2 + $0x3bc] sm:$0xf]
      %v4621 = vld [vmem:[%s2 + $0x3c0] sm:$0xf]
      %v4622 = vld [vmem:[%s2 + $0x3c4] sm:$0xf]
      %v4623 = vld [vmem:[%s2 + $0x3c8] sm:$0xf]
      %v4624 = vld [vmem:[%s2 + $0x3cc] sm:$0xf]
      %v4625 = vld [vmem:[%s2 + $0x3d0] sm:$0xf]
      %v4626 = vld [vmem:[%s2 + $0x3d4] sm:$0xf]
      %v4627 = vld [vmem:[%s2 + $0x3d8] sm:$0xf]
      %v4628 = vld [vmem:[%s2 + $0x3dc] sm:$0xf]
      %v4629 = vld [vmem:[%s2 + $0x3e0] sm:$0xf]
      %v4630 = vld [vmem:[%s2 + $0x3e4] sm:$0xf]
      %v4631 = vld [vmem:[%s2 + $0x3e8] sm:$0xf]
      %v4632 = vld [vmem:[%s2 + $0x3ec] sm:$0xf]
      %v4633 = vld [vmem:[%s2 + $0x3f0] sm:$0xf]
      %v4634 = vld [vmem:[%s2 + $0x3f4] sm:$0xf]
      %v4635 = vld [vmem:[%s2 + $0x3f8] sm:$0xf]
      %v4636 = vld [vmem:[%s2 + $0x3fc] sm:$0xf]
      %v4637 = vld [vmem:[%s2 + $0x400] sm:$0xf]
      %v4638 = vld [vmem:[%s2 + $0x404] sm:$0xf]
      %v4639 = vld [vmem:[%s2 + $0x408] sm:$0xf]
      %v4640 = vld [vmem:[%s2 + $0x40c] sm:$0xf]
      %v4641 = vld [vmem:[%s2 + $0x410] sm:$0xf]
      %v4642 = vld [vmem:[%s2 + $0x414] sm:$0xf]
      %v4643 = vld [vmem:[%s2 + $0x418] sm:$0xf]
      %v4644 = vld [vmem:[%s2 + $0x41c] sm:$0xf]
      %v4645 = vld [vmem:[%s2 + $0x420] sm:$0xf]
      %v4646 = vld [vmem:[%s2 + $0x424] sm:$0xf]
      %v4647 = vld [vmem:[%s2 + $0x428] sm:$0xf]
      %v4648 = vld [vmem:[%s2 + $0x42c] sm:$0xf]
      %v4649 = vld [vmem:[%s2 + $0x430] sm:$0xf]
      %v4650 = vld [vmem:[%s2 + $0x434] sm:$0xf]
      %v4651 = vld [vmem:[%s2 + $0x438] sm:$0xf]
      %v4652 = vld [vmem:[%s2 + $0x43c] sm:$0xf]
      %v4653 = vld [vmem:[%s2 + $0x440] sm:$0xf]
      %v4654 = vld [vmem:[%s2 + $0x444] sm:$0xf]
      %v4655 = vld [vmem:[%s2 + $0x448] sm:$0xf]
      %v4656 = vld [vmem:[%s2 + $0x44c] sm:$0xf]
      %v4657 = vld [vmem:[%s2 + $0x450] sm:$0xf]
      %v4658 = vld [vmem:[%s2 + $0x454] sm:$0xf]
      %v4659 = vld [vmem:[%s2 + $0x458] sm:$0xf]
      %v4660 = vld [vmem:[%s2 + $0x45c] sm:$0xf]
      %v4661 = vld [vmem:[%s2 + $0x460] sm:$0xf]
      %v4662 = vld [vmem:[%s2 + $0x464] sm:$0xf]
      %v4663 = vld [vmem:[%s2 + $0x468] sm:$0xf]
      %v4664 = vld [vmem:[%s2 + $0x46c] sm:$0xf]
      %v4665 = vld [vmem:[%s2 + $0x470] sm:$0xf]
      %v4666 = vld [vmem:[%s2 + $0x474] sm:$0xf]
      %v4667 = vld [vmem:[%s2 + $0x478] sm:$0xf]
      %v4668 = vld [vmem:[%s2 + $0x47c] sm:$0xf]
      %v4669 = vld [vmem:[%s3] sm:$0x1]
      %v4671 = vperm.slane %v4669, 0
      %v4961 = vunpack.c.l.b16 %v4381
      %v4962 = vunpack.c.l.b16 %v4382
      %v4963 = vunpack.c.l.b16 %v4383
      %v4964 = vunpack.c.l.b16 %v4384
      %v4965 = vunpack.c.l.b16 %v4385
      %v4966 = vunpack.c.l.b16 %v4386
      %v4967 = vunpack.c.l.b16 %v4387
      %v4968 = vunpack.c.l.b16 %v4388
      %v4969 = vunpack.c.l.b16 %v4389
      %v4970 = vunpack.c.l.b16 %v4390
      %v4971 = vunpack.c.l.b16 %v4391
      %v4972 = vunpack.c.l.b16 %v4392
      %v4973 = vunpack.c.l.b16 %v4393
      %v4974 = vunpack.c.l.b16 %v4394
      %v4975 = vunpack.c.l.b16 %v4395
      %v4976 = vunpack.c.l.b16 %v4396
      %v4977 = vunpack.c.l.b16 %v4397
      %v4978 = vunpack.c.l.b16 %v4398
      %v4979 = vunpack.c.l.b16 %v4399
      %v4980 = vunpack.c.l.b16 %v4400
      %v4981 = vunpack.c.l.b16 %v4401
      %v4982 = vunpack.c.l.b16 %v4402
      %v4983 = vunpack.c.l.b16 %v4403
      %v4984 = vunpack.c.l.b16 %v4404
      %v4985 = vunpack.c.l.b16 %v4405
      %v4986 = vunpack.c.l.b16 %v4406
      %v4987 = vunpack.c.l.b16 %v4407
      %v4988 = vunpack.c.l.b16 %v4408
      %v4989 = vunpack.c.l.b16 %v4409
      %v4990 = vunpack.c.l.b16 %v4410
      %v4991 = vunpack.c.l.b16 %v4411
      %v4992 = vunpack.c.l.b16 %v4412
      %v4993 = vunpack.c.l.b16 %v4413
      %v4994 = vunpack.c.l.b16 %v4414
      %v4995 = vunpack.c.l.b16 %v4415
      %v4996 = vunpack.c.l.b16 %v4416
      %v4997 = vunpack.c.l.b16 %v4417
      %v4998 = vunpack.c.l.b16 %v4418
      %v4999 = vunpack.c.l.b16 %v4419
      %v5000 = vunpack.c.l.b16 %v4420
      %v5001 = vunpack.c.l.b16 %v4421
      %v5002 = vunpack.c.l.b16 %v4422
      %v5003 = vunpack.c.l.b16 %v4423
      %v5004 = vunpack.c.l.b16 %v4424
      %v5005 = vunpack.c.l.b16 %v4425
      %v5006 = vunpack.c.l.b16 %v4426
      %v5007 = vunpack.c.l.b16 %v4427
      %v5008 = vunpack.c.l.b16 %v4428
      %v5009 = vunpack.c.l.b16 %v4429
      %v5010 = vunpack.c.l.b16 %v4430
      %v5011 = vunpack.c.l.b16 %v4431
      %v5012 = vunpack.c.l.b16 %v4432
      %v5013 = vunpack.c.l.b16 %v4433
      %v5014 = vunpack.c.l.b16 %v4434
      %v5015 = vunpack.c.l.b16 %v4435
      %v5016 = vunpack.c.l.b16 %v4436
      %v5017 = vunpack.c.l.b16 %v4437
      %v5018 = vunpack.c.l.b16 %v4438
      %v5019 = vunpack.c.l.b16 %v4439
      %v5020 = vunpack.c.l.b16 %v4440
      %v5021 = vunpack.c.l.b16 %v4441
      %v5022 = vunpack.c.l.b16 %v4442
      %v5023 = vunpack.c.l.b16 %v4443
      %v5024 = vunpack.c.l.b16 %v4444
      %v5025 = vunpack.c.l.b16 %v4445
      %v5026 = vunpack.c.l.b16 %v4446
      %v5027 = vunpack.c.l.b16 %v4447
      %v5028 = vunpack.c.l.b16 %v4448
      %v5029 = vunpack.c.l.b16 %v4449
      %v5030 = vunpack.c.l.b16 %v4450
      %v5031 = vunpack.c.l.b16 %v4451
      %v5032 = vunpack.c.l.b16 %v4452
      %v5033 = vunpack.c.l.b16 %v4453
      %v5034 = vunpack.c.l.b16 %v4454
      %v5035 = vunpack.c.l.b16 %v4455
      %v5036 = vunpack.c.l.b16 %v4456
      %v5037 = vunpack.c.l.b16 %v4457
      %v5038 = vunpack.c.l.b16 %v4458
      %v5039 = vunpack.c.l.b16 %v4459
      %v5040 = vunpack.c.l.b16 %v4460
      %v5041 = vunpack.c.l.b16 %v4461
      %v5042 = vunpack.c.l.b16 %v4462
      %v5043 = vunpack.c.l.b16 %v4463
      %v5044 = vunpack.c.l.b16 %v4464
      %v5045 = vunpack.c.l.b16 %v4465
      %v5046 = vunpack.c.l.b16 %v4466
      %v5047 = vunpack.c.l.b16 %v4467
      %v5048 = vunpack.c.l.b16 %v4468
      %v5049 = vunpack.c.l.b16 %v4469
      %v5050 = vunpack.c.l.b16 %v4470
      %v5051 = vunpack.c.l.b16 %v4471
      %v5052 = vunpack.c.l.b16 %v4472
      %v5053 = vunpack.c.l.b16 %v4473
      %v5054 = vunpack.c.l.b16 %v4474
      %v5055 = vunpack.c.l.b16 %v4475
      %v5056 = vunpack.c.l.b16 %v4476
      %v5057 = vunpack.c.l.b16 %v4477
      %v5058 = vunpack.c.l.b16 %v4478
      %v5059 = vunpack.c.l.b16 %v4479
      %v5060 = vunpack.c.l.b16 %v4480
      %v5061 = vunpack.c.l.b16 %v4481
      %v5062 = vunpack.c.l.b16 %v4482
      %v5063 = vunpack.c.l.b16 %v4483
      %v5064 = vunpack.c.l.b16 %v4484
      %v5065 = vunpack.c.l.b16 %v4485
      %v5066 = vunpack.c.l.b16 %v4486
      %v5067 = vunpack.c.l.b16 %v4487
      %v5068 = vunpack.c.l.b16 %v4488
      %v5069 = vunpack.c.l.b16 %v4489
      %v5070 = vunpack.c.l.b16 %v4490
      %v5071 = vunpack.c.l.b16 %v4491
      %v5072 = vunpack.c.l.b16 %v4492
      %v5073 = vunpack.c.l.b16 %v4493
      %v5074 = vunpack.c.l.b16 %v4494
      %v5075 = vunpack.c.l.b16 %v4495
      %v5076 = vunpack.c.l.b16 %v4496
      %v5077 = vunpack.c.l.b16 %v4497
      %v5078 = vunpack.c.l.b16 %v4498
      %v5079 = vunpack.c.l.b16 %v4499
      %v5080 = vunpack.c.l.b16 %v4500
      %v5081 = vunpack.c.l.b16 %v4501
      %v5082 = vunpack.c.l.b16 %v4502
      %v5083 = vunpack.c.l.b16 %v4503
      %v5084 = vunpack.c.l.b16 %v4504
      %v5085 = vunpack.c.l.b16 %v4505
      %v5086 = vunpack.c.l.b16 %v4506
      %v5087 = vunpack.c.l.b16 %v4507
      %v5088 = vunpack.c.l.b16 %v4508
      %v5089 = vunpack.c.l.b16 %v4509
      %v5090 = vunpack.c.l.b16 %v4510
      %v5091 = vunpack.c.l.b16 %v4511
      %v5092 = vunpack.c.l.b16 %v4512
      %v5093 = vunpack.c.l.b16 %v4513
      %v5094 = vunpack.c.l.b16 %v4514
      %v5095 = vunpack.c.l.b16 %v4515
      %v5096 = vunpack.c.l.b16 %v4516
      %v5097 = vunpack.c.l.b16 %v4517
      %v5098 = vunpack.c.l.b16 %v4518
      %v5099 = vunpack.c.l.b16 %v4519
      %v5100 = vunpack.c.l.b16 %v4520
      %v5101 = vunpack.c.l.b16 %v4521
      %v5102 = vunpack.c.l.b16 %v4522
      %v5103 = vunpack.c.l.b16 %v4523
      %v5104 = vunpack.c.l.b16 %v4524
      %v5105 = vunpack.c.l.b16 %v4525
      %v5106 = vunpack.c.l.b16 %v4526
      %v5107 = vunpack.c.l.b16 %v4527
      %v5108 = vunpack.c.l.b16 %v4528
      %v5109 = vunpack.c.l.b16 %v4529
      %v5110 = vunpack.c.l.b16 %v4530
      %v5111 = vunpack.c.l.b16 %v4531
      %v5112 = vunpack.c.l.b16 %v4532
      %v5113 = vunpack.c.l.b16 %v4533
      %v5114 = vunpack.c.l.b16 %v4534
      %v5115 = vunpack.c.l.b16 %v4535
      %v5116 = vunpack.c.l.b16 %v4536
      %v5117 = vunpack.c.l.b16 %v4537
      %v5118 = vunpack.c.l.b16 %v4538
      %v5119 = vunpack.c.l.b16 %v4539
      %v5120 = vunpack.c.l.b16 %v4540
      %v5121 = vunpack.c.l.b16 %v4541
      %v5122 = vunpack.c.l.b16 %v4542
      %v5123 = vunpack.c.l.b16 %v4543
      %v5124 = vunpack.c.l.b16 %v4544
      %v5125 = vunpack.c.l.b16 %v4545
      %v5126 = vunpack.c.l.b16 %v4546
      %v5127 = vunpack.c.l.b16 %v4547
      %v5128 = vunpack.c.l.b16 %v4548
      %v5129 = vunpack.c.l.b16 %v4549
      %v5130 = vunpack.c.l.b16 %v4550
      %v5131 = vunpack.c.l.b16 %v4551
      %v5132 = vunpack.c.l.b16 %v4552
      %v5133 = vunpack.c.l.b16 %v4553
      %v5134 = vunpack.c.l.b16 %v4554
      %v5135 = vunpack.c.l.b16 %v4555
      %v5136 = vunpack.c.l.b16 %v4556
      %v5137 = vunpack.c.l.b16 %v4557
      %v5138 = vunpack.c.l.b16 %v4558
      %v5139 = vunpack.c.l.b16 %v4559
      %v5140 = vunpack.c.l.b16 %v4560
      %v5141 = vunpack.c.l.b16 %v4561
      %v5142 = vunpack.c.l.b16 %v4562
      %v5143 = vunpack.c.l.b16 %v4563
      %v5144 = vunpack.c.l.b16 %v4564
      %v5145 = vunpack.c.l.b16 %v4565
      %v5146 = vunpack.c.l.b16 %v4566
      %v5147 = vunpack.c.l.b16 %v4567
      %v5148 = vunpack.c.l.b16 %v4568
      %v5149 = vunpack.c.l.b16 %v4569
      %v5150 = vunpack.c.l.b16 %v4570
      %v5151 = vunpack.c.l.b16 %v4571
      %v5152 = vunpack.c.l.b16 %v4572
      %v5153 = vunpack.c.l.b16 %v4573
      %v5154 = vunpack.c.l.b16 %v4574
      %v5155 = vunpack.c.l.b16 %v4575
      %v5156 = vunpack.c.l.b16 %v4576
      %v5157 = vunpack.c.l.b16 %v4577
      %v5158 = vunpack.c.l.b16 %v4578
      %v5159 = vunpack.c.l.b16 %v4579
      %v5160 = vunpack.c.l.b16 %v4580
      %v5161 = vunpack.c.l.b16 %v4581
      %v5162 = vunpack.c.l.b16 %v4582
      %v5163 = vunpack.c.l.b16 %v4583
      %v5164 = vunpack.c.l.b16 %v4584
      %v5165 = vunpack.c.l.b16 %v4585
      %v5166 = vunpack.c.l.b16 %v4586
      %v5167 = vunpack.c.l.b16 %v4587
      %v5168 = vunpack.c.l.b16 %v4588
      %v5169 = vunpack.c.l.b16 %v4589
      %v5170 = vunpack.c.l.b16 %v4590
      %v5171 = vunpack.c.l.b16 %v4591
      %v5172 = vunpack.c.l.b16 %v4592
      %v5173 = vunpack.c.l.b16 %v4593
      %v5174 = vunpack.c.l.b16 %v4594
      %v5175 = vunpack.c.l.b16 %v4595
      %v5176 = vunpack.c.l.b16 %v4596
      %v5177 = vunpack.c.l.b16 %v4597
      %v5178 = vunpack.c.l.b16 %v4598
      %v5179 = vunpack.c.l.b16 %v4599
      %v5180 = vunpack.c.l.b16 %v4600
      %v5181 = vunpack.c.l.b16 %v4601
      %v5182 = vunpack.c.l.b16 %v4602
      %v5183 = vunpack.c.l.b16 %v4603
      %v5184 = vunpack.c.l.b16 %v4604
      %v5185 = vunpack.c.l.b16 %v4605
      %v5186 = vunpack.c.l.b16 %v4606
      %v5187 = vunpack.c.l.b16 %v4607
      %v5188 = vunpack.c.l.b16 %v4608
      %v5189 = vunpack.c.l.b16 %v4609
      %v5190 = vunpack.c.l.b16 %v4610
      %v5191 = vunpack.c.l.b16 %v4611
      %v5192 = vunpack.c.l.b16 %v4612
      %v5193 = vunpack.c.l.b16 %v4613
      %v5194 = vunpack.c.l.b16 %v4614
      %v5195 = vunpack.c.l.b16 %v4615
      %v5196 = vunpack.c.l.b16 %v4616
      %v5197 = vunpack.c.l.b16 %v4617
      %v5198 = vunpack.c.l.b16 %v4618
      %v5199 = vunpack.c.l.b16 %v4619
      %v5200 = vunpack.c.l.b16 %v4620
      %v5201 = vunpack.c.l.b16 %v4621
      %v5202 = vunpack.c.l.b16 %v4622
      %v5203 = vunpack.c.l.b16 %v4623
      %v5204 = vunpack.c.l.b16 %v4624
      %v5205 = vunpack.c.l.b16 %v4625
      %v5206 = vunpack.c.l.b16 %v4626
      %v5207 = vunpack.c.l.b16 %v4627
      %v5208 = vunpack.c.l.b16 %v4628
      %v5209 = vunpack.c.l.b16 %v4629
      %v5210 = vunpack.c.l.b16 %v4630
      %v5211 = vunpack.c.l.b16 %v4631
      %v5212 = vunpack.c.l.b16 %v4632
      %v5213 = vunpack.c.l.b16 %v4633
      %v5214 = vunpack.c.l.b16 %v4634
      %v5215 = vunpack.c.l.b16 %v4635
      %v5216 = vunpack.c.l.b16 %v4636
      %v5217 = vunpack.c.l.b16 %v4637
      %v5218 = vunpack.c.l.b16 %v4638
      %v5219 = vunpack.c.l.b16 %v4639
      %v5220 = vunpack.c.l.b16 %v4640
      %v5221 = vunpack.c.l.b16 %v4641
      %v5222 = vunpack.c.l.b16 %v4642
      %v5223 = vunpack.c.l.b16 %v4643
      %v5224 = vunpack.c.l.b16 %v4644
      %v5225 = vunpack.c.l.b16 %v4645
      %v5226 = vunpack.c.l.b16 %v4646
      %v5227 = vunpack.c.l.b16 %v4647
      %v5228 = vunpack.c.l.b16 %v4648
      %v5229 = vunpack.c.l.b16 %v4649
      %v5230 = vunpack.c.l.b16 %v4650
      %v5231 = vunpack.c.l.b16 %v4651
      %v5232 = vunpack.c.l.b16 %v4652
      %v5233 = vunpack.c.l.b16 %v4653
      %v5234 = vunpack.c.l.b16 %v4654
      %v5235 = vunpack.c.l.b16 %v4655
      %v5236 = vunpack.c.l.b16 %v4656
      %v5237 = vunpack.c.l.b16 %v4657
      %v5238 = vunpack.c.l.b16 %v4658
      %v5239 = vunpack.c.l.b16 %v4659
      %v5240 = vunpack.c.l.b16 %v4660
      %v5241 = vunpack.c.l.b16 %v4661
      %v5242 = vunpack.c.l.b16 %v4662
      %v5243 = vunpack.c.l.b16 %v4663
      %v5244 = vunpack.c.l.b16 %v4664
      %v5245 = vunpack.c.l.b16 %v4665
      %v5246 = vunpack.c.l.b16 %v4666
      %v5247 = vunpack.c.l.b16 %v4667
      %v5248 = vunpack.c.l.b16 %v4668
      %v5249 = vpack.c.b16 %v4962, %v4961
      %v5250 = vpack.c.b16 %v4964, %v4963
      %v5251 = vpack.c.b16 %v4966, %v4965
      %v5252 = vpack.c.b16 %v4968, %v4967
      %v5253 = vpack.c.b16 %v4970, %v4969
      %v5254 = vpack.c.b16 %v4972, %v4971
      %v5255 = vpack.c.b16 %v4974, %v4973
      %v5256 = vpack.c.b16 %v4976, %v4975
      %v5257 = vpack.c.b16 %v4978, %v4977
      %v5258 = vpack.c.b16 %v4980, %v4979
      %v5259 = vpack.c.b16 %v4982, %v4981
      %v5260 = vpack.c.b16 %v4984, %v4983
      %v5261 = vpack.c.b16 %v4986, %v4985
      %v5262 = vpack.c.b16 %v4988, %v4987
      %v5263 = vpack.c.b16 %v4990, %v4989
      %v5264 = vpack.c.b16 %v4992, %v4991
      %v5265 = vpack.c.b16 %v4994, %v4993
      %v5266 = vpack.c.b16 %v4996, %v4995
      %v5267 = vpack.c.b16 %v4998, %v4997
      %v5268 = vpack.c.b16 %v5000, %v4999
      %v5269 = vpack.c.b16 %v5002, %v5001
      %v5270 = vpack.c.b16 %v5004, %v5003
      %v5271 = vpack.c.b16 %v5006, %v5005
      %v5272 = vpack.c.b16 %v5008, %v5007
      %v5273 = vpack.c.b16 %v5010, %v5009
      %v5274 = vpack.c.b16 %v5012, %v5011
      %v5275 = vpack.c.b16 %v5014, %v5013
      %v5276 = vpack.c.b16 %v5016, %v5015
      %v5277 = vpack.c.b16 %v5018, %v5017
      %v5278 = vpack.c.b16 %v5020, %v5019
      %v5279 = vpack.c.b16 %v5022, %v5021
      %v5280 = vpack.c.b16 %v5024, %v5023
      %v5281 = vpack.c.b16 %v5026, %v5025
      %v5282 = vpack.c.b16 %v5028, %v5027
      %v5283 = vpack.c.b16 %v5030, %v5029
      %v5284 = vpack.c.b16 %v5032, %v5031
      %v5285 = vpack.c.b16 %v5034, %v5033
      %v5286 = vpack.c.b16 %v5036, %v5035
      %v5287 = vpack.c.b16 %v5038, %v5037
      %v5288 = vpack.c.b16 %v5040, %v5039
      %v5289 = vpack.c.b16 %v5042, %v5041
      %v5290 = vpack.c.b16 %v5044, %v5043
      %v5291 = vpack.c.b16 %v5046, %v5045
      %v5292 = vpack.c.b16 %v5048, %v5047
      %v5293 = vpack.c.b16 %v5050, %v5049
      %v5294 = vpack.c.b16 %v5052, %v5051
      %v5295 = vpack.c.b16 %v5054, %v5053
      %v5296 = vpack.c.b16 %v5056, %v5055
      %v5297 = vpack.c.b16 %v5058, %v5057
      %v5298 = vpack.c.b16 %v5060, %v5059
      %v5299 = vpack.c.b16 %v5062, %v5061
      %v5300 = vpack.c.b16 %v5064, %v5063
      %v5301 = vpack.c.b16 %v5066, %v5065
      %v5302 = vpack.c.b16 %v5068, %v5067
      %v5303 = vpack.c.b16 %v5070, %v5069
      %v5304 = vpack.c.b16 %v5072, %v5071
      %v5305 = vpack.c.b16 %v5074, %v5073
      %v5306 = vpack.c.b16 %v5076, %v5075
      %v5307 = vpack.c.b16 %v5078, %v5077
      %v5308 = vpack.c.b16 %v5080, %v5079
      %v5309 = vpack.c.b16 %v5082, %v5081
      %v5310 = vpack.c.b16 %v5084, %v5083
      %v5311 = vpack.c.b16 %v5086, %v5085
      %v5312 = vpack.c.b16 %v5088, %v5087
      %v5313 = vpack.c.b16 %v5090, %v5089
      %v5314 = vpack.c.b16 %v5092, %v5091
      %v5315 = vpack.c.b16 %v5094, %v5093
      %v5316 = vpack.c.b16 %v5096, %v5095
      %v5317 = vpack.c.b16 %v5098, %v5097
      %v5318 = vpack.c.b16 %v5100, %v5099
      %v5319 = vpack.c.b16 %v5102, %v5101
      %v5320 = vpack.c.b16 %v5104, %v5103
      %v5321 = vpack.c.b16 %v5106, %v5105
      %v5322 = vpack.c.b16 %v5108, %v5107
      %v5323 = vpack.c.b16 %v5110, %v5109
      %v5324 = vpack.c.b16 %v5112, %v5111
      %v5325 = vpack.c.b16 %v5114, %v5113
      %v5326 = vpack.c.b16 %v5116, %v5115
      %v5327 = vpack.c.b16 %v5118, %v5117
      %v5328 = vpack.c.b16 %v5120, %v5119
      %v5329 = vpack.c.b16 %v5122, %v5121
      %v5330 = vpack.c.b16 %v5124, %v5123
      %v5331 = vpack.c.b16 %v5126, %v5125
      %v5332 = vpack.c.b16 %v5128, %v5127
      %v5333 = vpack.c.b16 %v5130, %v5129
      %v5334 = vpack.c.b16 %v5132, %v5131
      %v5335 = vpack.c.b16 %v5134, %v5133
      %v5336 = vpack.c.b16 %v5136, %v5135
      %v5337 = vpack.c.b16 %v5138, %v5137
      %v5338 = vpack.c.b16 %v5140, %v5139
      %v5339 = vpack.c.b16 %v5142, %v5141
      %v5340 = vpack.c.b16 %v5144, %v5143
      %v5341 = vpack.c.b16 %v5146, %v5145
      %v5342 = vpack.c.b16 %v5148, %v5147
      %v5343 = vpack.c.b16 %v5150, %v5149
      %v5344 = vpack.c.b16 %v5152, %v5151
      %v5345 = vpack.c.b16 %v5154, %v5153
      %v5346 = vpack.c.b16 %v5156, %v5155
      %v5347 = vpack.c.b16 %v5158, %v5157
      %v5348 = vpack.c.b16 %v5160, %v5159
      %v5349 = vpack.c.b16 %v5162, %v5161
      %v5350 = vpack.c.b16 %v5164, %v5163
      %v5351 = vpack.c.b16 %v5166, %v5165
      %v5352 = vpack.c.b16 %v5168, %v5167
      %v5353 = vpack.c.b16 %v5170, %v5169
      %v5354 = vpack.c.b16 %v5172, %v5171
      %v5355 = vpack.c.b16 %v5174, %v5173
      %v5356 = vpack.c.b16 %v5176, %v5175
      %v5357 = vpack.c.b16 %v5178, %v5177
      %v5358 = vpack.c.b16 %v5180, %v5179
      %v5359 = vpack.c.b16 %v5182, %v5181
      %v5360 = vpack.c.b16 %v5184, %v5183
      %v5361 = vpack.c.b16 %v5186, %v5185
      %v5362 = vpack.c.b16 %v5188, %v5187
      %v5363 = vpack.c.b16 %v5190, %v5189
      %v5364 = vpack.c.b16 %v5192, %v5191
      %v5365 = vpack.c.b16 %v5194, %v5193
      %v5366 = vpack.c.b16 %v5196, %v5195
      %v5367 = vpack.c.b16 %v5198, %v5197
      %v5368 = vpack.c.b16 %v5200, %v5199
      %v5369 = vpack.c.b16 %v5202, %v5201
      %v5370 = vpack.c.b16 %v5204, %v5203
      %v5371 = vpack.c.b16 %v5206, %v5205
      %v5372 = vpack.c.b16 %v5208, %v5207
      %v5373 = vpack.c.b16 %v5210, %v5209
      %v5374 = vpack.c.b16 %v5212, %v5211
      %v5375 = vpack.c.b16 %v5214, %v5213
      %v5376 = vpack.c.b16 %v5216, %v5215
      %v5377 = vpack.c.b16 %v5218, %v5217
      %v5378 = vpack.c.b16 %v5220, %v5219
      %v5379 = vpack.c.b16 %v5222, %v5221
      %v5380 = vpack.c.b16 %v5224, %v5223
      %v5381 = vpack.c.b16 %v5226, %v5225
      %v5382 = vpack.c.b16 %v5228, %v5227
      %v5383 = vpack.c.b16 %v5230, %v5229
      %v5384 = vpack.c.b16 %v5232, %v5231
      %v5385 = vpack.c.b16 %v5234, %v5233
      %v5386 = vpack.c.b16 %v5236, %v5235
      %v5387 = vpack.c.b16 %v5238, %v5237
      %v5388 = vpack.c.b16 %v5240, %v5239
      %v5389 = vpack.c.b16 %v5242, %v5241
      %v5390 = vpack.c.b16 %v5244, %v5243
      %v5391 = vpack.c.b16 %v5246, %v5245
      %v5392 = vpack.c.b16 %v5248, %v5247
      %5537 = vmatpush.bf16.msra.mxu0 %v5256
      %5538 = vmatpush.bf16.msra.mxu0 %v5255
      %5539 = vmatpush.bf16.msra.mxu0 %v5254
      %5540 = vmatpush.bf16.msra.mxu0 %v5253
      %5541 = vmatpush.bf16.msra.mxu0 %v5252
      %5542 = vmatpush.bf16.msra.mxu0 %v5251
      %5543 = vmatpush.bf16.msra.mxu0 %v5250
      %5544 = vmatpush.bf16.msra.mxu0 %v5249
      %5545 = vmatmul.bf16.gmra.mxu0 %v3261
      %v5546 = vpop.f32.mrf.mxu0
      %v5547 = vadd.f32 %v4671, %v5546
      %v5548 = vpop.f32.mrf.mxu0
      %v5549 = vadd.f32 %v4671, %v5548
      %5550 = vmatmul.bf16.gmra.mxu0 %v3263
      %v5551 = vpop.f32.mrf.mxu0
      %v5552 = vadd.f32 %v4671, %v5551
      %v5553 = vpop.f32.mrf.mxu0
      %v5554 = vadd.f32 %v4671, %v5553
      %5555 = vmatmul.bf16.gmra.mxu0 %v3265
      %v5556 = vpop.f32.mrf.mxu0
      %v5557 = vadd.f32 %v4671, %v5556
      %v5558 = vpop.f32.mrf.mxu0
      %v5559 = vadd.f32 %v4671, %v5558
      %5560 = vmatmul.bf16.gmra.mxu0 %v3267
      %v5561 = vpop.f32.mrf.mxu0
      %v5562 = vadd.f32 %v4671, %v5561
      %v5563 = vpop.f32.mrf.mxu0
      %v5564 = vadd.f32 %v4671, %v5563
      %5565 = vmatmul.bf16.gmra.mxu0 %v3269
      %v5566 = vpop.f32.mrf.mxu0
      %v5567 = vadd.f32 %v4671, %v5566
      %v5568 = vpop.f32.mrf.mxu0
      %v5569 = vadd.f32 %v4671, %v5568
      %5570 = vmatmul.bf16.gmra.mxu0 %v3271
      %v5571 = vpop.f32.mrf.mxu0
      %v5572 = vadd.f32 %v4671, %v5571
      %v5573 = vpop.f32.mrf.mxu0
      %v5574 = vadd.f32 %v4671, %v5573
      %5575 = vmatmul.bf16.gmra.mxu0 %v3273
      %v5576 = vpop.f32.mrf.mxu0
      %v5577 = vadd.f32 %v4671, %v5576
      %v5578 = vpop.f32.mrf.mxu0
      %v5579 = vadd.f32 %v4671, %v5578
      %5580 = vmatmul.bf16.gmra.mxu0 %v3275
      %v5581 = vpop.f32.mrf.mxu0
      %v5582 = vadd.f32 %v4671, %v5581
      %v5583 = vpop.f32.mrf.mxu0
      %v5584 = vadd.f32 %v4671, %v5583
      %5585 = vmatmul.bf16.gmra.mxu0 %v3277
      %v5586 = vpop.f32.mrf.mxu0
      %v5587 = vadd.f32 %v4671, %v5586
      %v5588 = vpop.f32.mrf.mxu0
      %v5589 = vadd.f32 %v4671, %v5588
      %5590 = vmatmul.bf16.gmra.mxu0 %v3279
      %v5591 = vpop.f32.mrf.mxu0
      %v5592 = vadd.f32 %v4671, %v5591
      %v5593 = vpop.f32.mrf.mxu0
      %v5594 = vadd.f32 %v4671, %v5593
      %5595 = vmatmul.bf16.gmra.mxu0 %v3281
      %v5596 = vpop.f32.mrf.mxu0
      %v5597 = vadd.f32 %v4671, %v5596
      %v5598 = vpop.f32.mrf.mxu0
      %v5599 = vadd.f32 %v4671, %v5598
      %5600 = vmatmul.bf16.gmra.mxu0 %v3283
      %v5601 = vpop.f32.mrf.mxu0
      %v5602 = vadd.f32 %v4671, %v5601
      %v5603 = vpop.f32.mrf.mxu0
      %v5604 = vadd.f32 %v4671, %v5603
      %5605 = vmatmul.bf16.gmra.mxu0 %v3285
      %v5606 = vpop.f32.mrf.mxu0
      %v5607 = vadd.f32 %v4671, %v5606
      %v5608 = vpop.f32.mrf.mxu0
      %v5609 = vadd.f32 %v4671, %v5608
      %5610 = vmatmul.bf16.gmra.mxu0 %v3287
      %v5611 = vpop.f32.mrf.mxu0
      %v5612 = vadd.f32 %v4671, %v5611
      %v5613 = vpop.f32.mrf.mxu0
      %v5614 = vadd.f32 %v4671, %v5613
      %5615 = vmatmul.bf16.gmra.mxu0 %v3289
      %v5616 = vpop.f32.mrf.mxu0
      %v5617 = vadd.f32 %v4671, %v5616
      %v5618 = vpop.f32.mrf.mxu0
      %v5619 = vadd.f32 %v4671, %v5618
      %5620 = vmatmul.bf16.gmra.mxu0 %v3291
      %v5621 = vpop.f32.mrf.mxu0
      %v5622 = vadd.f32 %v4671, %v5621
      %v5623 = vpop.f32.mrf.mxu0
      %v5624 = vadd.f32 %v4671, %v5623
      %5625 = vdwg.mxu0
      %5626 = vmatpush.bf16.msra.mxu0 %v5264
      %5627 = vmatpush.bf16.msra.mxu0 %v5263
      %5628 = vmatpush.bf16.msra.mxu0 %v5262
      %5629 = vmatpush.bf16.msra.mxu0 %v5261
      %5630 = vmatpush.bf16.msra.mxu0 %v5260
      %5631 = vmatpush.bf16.msra.mxu0 %v5259
      %5632 = vmatpush.bf16.msra.mxu0 %v5258
      %5633 = vmatpush.bf16.msra.mxu0 %v5257
      %5634 = vmatmul.bf16.gmra.mxu0 %v3262
      %v5635 = vpop.f32.mrf.mxu0
      %v5636 = vadd.f32 %v5547, %v5635
      %v5637 = vpop.f32.mrf.mxu0
      %v5638 = vadd.f32 %v5549, %v5637
      %5639 = vmatmul.bf16.gmra.mxu0 %v3264
      %v5640 = vpop.f32.mrf.mxu0
      %v5641 = vadd.f32 %v5552, %v5640
      %v5642 = vpop.f32.mrf.mxu0
      %v5643 = vadd.f32 %v5554, %v5642
      %5644 = vmatmul.bf16.gmra.mxu0 %v3266
      %v5645 = vpop.f32.mrf.mxu0
      %v5646 = vadd.f32 %v5557, %v5645
      %v5647 = vpop.f32.mrf.mxu0
      %v5648 = vadd.f32 %v5559, %v5647
      %5649 = vmatmul.bf16.gmra.mxu0 %v3268
      %v5650 = vpop.f32.mrf.mxu0
      %v5651 = vadd.f32 %v5562, %v5650
      %v5652 = vpop.f32.mrf.mxu0
      %v5653 = vadd.f32 %v5564, %v5652
      %5654 = vmatmul.bf16.gmra.mxu0 %v3270
      %v5655 = vpop.f32.mrf.mxu0
      %v5656 = vadd.f32 %v5567, %v5655
      %v5657 = vpop.f32.mrf.mxu0
      %v5658 = vadd.f32 %v5569, %v5657
      %5659 = vmatmul.bf16.gmra.mxu0 %v3272
      %v5660 = vpop.f32.mrf.mxu0
      %v5661 = vadd.f32 %v5572, %v5660
      %v5662 = vpop.f32.mrf.mxu0
      %v5663 = vadd.f32 %v5574, %v5662
      %5664 = vmatmul.bf16.gmra.mxu0 %v3274
      %v5665 = vpop.f32.mrf.mxu0
      %v5666 = vadd.f32 %v5577, %v5665
      %v5667 = vpop.f32.mrf.mxu0
      %v5668 = vadd.f32 %v5579, %v5667
      %5669 = vmatmul.bf16.gmra.mxu0 %v3276
      %v5670 = vpop.f32.mrf.mxu0
      %v5671 = vadd.f32 %v5582, %v5670
      %v5672 = vpop.f32.mrf.mxu0
      %v5673 = vadd.f32 %v5584, %v5672
      %5674 = vmatmul.bf16.gmra.mxu0 %v3278
      %v5675 = vpop.f32.mrf.mxu0
      %v5676 = vadd.f32 %v5587, %v5675
      %v5677 = vpop.f32.mrf.mxu0
      %v5678 = vadd.f32 %v5589, %v5677
      %5679 = vmatmul.bf16.gmra.mxu0 %v3280
      %v5680 = vpop.f32.mrf.mxu0
      %v5681 = vadd.f32 %v5592, %v5680
      %v5682 = vpop.f32.mrf.mxu0
      %v5683 = vadd.f32 %v5594, %v5682
      %5684 = vmatmul.bf16.gmra.mxu0 %v3282
      %v5685 = vpop.f32.mrf.mxu0
      %v5686 = vadd.f32 %v5597, %v5685
      %v5687 = vpop.f32.mrf.mxu0
      %v5688 = vadd.f32 %v5599, %v5687
      %5689 = vmatmul.bf16.gmra.mxu0 %v3284
      %v5690 = vpop.f32.mrf.mxu0
      %v5691 = vadd.f32 %v5602, %v5690
      %v5692 = vpop.f32.mrf.mxu0
      %v5693 = vadd.f32 %v5604, %v5692
      %5694 = vmatmul.bf16.gmra.mxu0 %v3286
      %v5695 = vpop.f32.mrf.mxu0
      %v5696 = vadd.f32 %v5607, %v5695
      %v5697 = vpop.f32.mrf.mxu0
      %v5698 = vadd.f32 %v5609, %v5697
      %5699 = vmatmul.bf16.gmra.mxu0 %v3288
      %v5700 = vpop.f32.mrf.mxu0
      %v5701 = vadd.f32 %v5612, %v5700
      %v5702 = vpop.f32.mrf.mxu0
      %v5703 = vadd.f32 %v5614, %v5702
      %5704 = vmatmul.bf16.gmra.mxu0 %v3290
      %v5705 = vpop.f32.mrf.mxu0
      %v5706 = vadd.f32 %v5617, %v5705
      %v5707 = vpop.f32.mrf.mxu0
      %v5708 = vadd.f32 %v5619, %v5707
      %5709 = vmatmul.bf16.gmra.mxu0 %v3292
      %v5710 = vpop.f32.mrf.mxu0
      %v5711 = vadd.f32 %v5622, %v5710
      %v5712 = vpop.f32.mrf.mxu0
      %v5713 = vadd.f32 %v5624, %v5712
      %5714 = vdwg.mxu0
      %5715 = vmatpush.bf16.msra.mxu0 %v5272
      %5716 = vmatpush.bf16.msra.mxu0 %v5271
      %5717 = vmatpush.bf16.msra.mxu0 %v5270
      %5718 = vmatpush.bf16.msra.mxu0 %v5269
      %5719 = vmatpush.bf16.msra.mxu0 %v5268
      %5720 = vmatpush.bf16.msra.mxu0 %v5267
      %5721 = vmatpush.bf16.msra.mxu0 %v5266
      %5722 = vmatpush.bf16.msra.mxu0 %v5265
      %5723 = vmatmul.bf16.gmra.mxu0 %v3389
      %v5724 = vpop.f32.mrf.mxu0
      %v5725 = vadd.f32 %v5636, %v5724
      %v5726 = vpop.f32.mrf.mxu0
      %v5727 = vadd.f32 %v5638, %v5726
      %5728 = vmatmul.bf16.gmra.mxu0 %v3391
      %v5729 = vpop.f32.mrf.mxu0
      %v5730 = vadd.f32 %v5641, %v5729
      %v5731 = vpop.f32.mrf.mxu0
      %v5732 = vadd.f32 %v5643, %v5731
      %5733 = vmatmul.bf16.gmra.mxu0 %v3393
      %v5734 = vpop.f32.mrf.mxu0
      %v5735 = vadd.f32 %v5646, %v5734
      %v5736 = vpop.f32.mrf.mxu0
      %v5737 = vadd.f32 %v5648, %v5736
      %5738 = vmatmul.bf16.gmra.mxu0 %v3395
      %v5739 = vpop.f32.mrf.mxu0
      %v5740 = vadd.f32 %v5651, %v5739
      %v5741 = vpop.f32.mrf.mxu0
      %v5742 = vadd.f32 %v5653, %v5741
      %5743 = vmatmul.bf16.gmra.mxu0 %v3397
      %v5744 = vpop.f32.mrf.mxu0
      %v5745 = vadd.f32 %v5656, %v5744
      %v5746 = vpop.f32.mrf.mxu0
      %v5747 = vadd.f32 %v5658, %v5746
      %5748 = vmatmul.bf16.gmra.mxu0 %v3399
      %v5749 = vpop.f32.mrf.mxu0
      %v5750 = vadd.f32 %v5661, %v5749
      %v5751 = vpop.f32.mrf.mxu0
      %v5752 = vadd.f32 %v5663, %v5751
      %5753 = vmatmul.bf16.gmra.mxu0 %v3401
      %v5754 = vpop.f32.mrf.mxu0
      %v5755 = vadd.f32 %v5666, %v5754
      %v5756 = vpop.f32.mrf.mxu0
      %v5757 = vadd.f32 %v5668, %v5756
      %5758 = vmatmul.bf16.gmra.mxu0 %v3403
      %v5759 = vpop.f32.mrf.mxu0
      %v5760 = vadd.f32 %v5671, %v5759
      %v5761 = vpop.f32.mrf.mxu0
      %v5762 = vadd.f32 %v5673, %v5761
      %5763 = vmatmul.bf16.gmra.mxu0 %v3405
      %v5764 = vpop.f32.mrf.mxu0
      %v5765 = vadd.f32 %v5676, %v5764
      %v5766 = vpop.f32.mrf.mxu0
      %v5767 = vadd.f32 %v5678, %v5766
      %5768 = vmatmul.bf16.gmra.mxu0 %v3407
      %v5769 = vpop.f32.mrf.mxu0
      %v5770 = vadd.f32 %v5681, %v5769
      %v5771 = vpop.f32.mrf.mxu0
      %v5772 = vadd.f32 %v5683, %v5771
      %5773 = vmatmul.bf16.gmra.mxu0 %v3409
      %v5774 = vpop.f32.mrf.mxu0
      %v5775 = vadd.f32 %v5686, %v5774
      %v5776 = vpop.f32.mrf.mxu0
      %v5777 = vadd.f32 %v5688, %v5776
      %5778 = vmatmul.bf16.gmra.mxu0 %v3411
      %v5779 = vpop.f32.mrf.mxu0
      %v5780 = vadd.f32 %v5691, %v5779
      %v5781 = vpop.f32.mrf.mxu0
      %v5782 = vadd.f32 %v5693, %v5781
      %5783 = vmatmul.bf16.gmra.mxu0 %v3413
      %v5784 = vpop.f32.mrf.mxu0
      %v5785 = vadd.f32 %v5696, %v5784
      %v5786 = vpop.f32.mrf.mxu0
      %v5787 = vadd.f32 %v5698, %v5786
      %5788 = vmatmul.bf16.gmra.mxu0 %v3415
      %v5789 = vpop.f32.mrf.mxu0
      %v5790 = vadd.f32 %v5701, %v5789
      %v5791 = vpop.f32.mrf.mxu0
      %v5792 = vadd.f32 %v5703, %v5791
      %5793 = vmatmul.bf16.gmra.mxu0 %v3417
      %v5794 = vpop.f32.mrf.mxu0
      %v5795 = vadd.f32 %v5706, %v5794
      %v5796 = vpop.f32.mrf.mxu0
      %v5797 = vadd.f32 %v5708, %v5796
      %5798 = vmatmul.bf16.gmra.mxu0 %v3419
      %v5799 = vpop.f32.mrf.mxu0
      %v5800 = vadd.f32 %v5711, %v5799
      %v5801 = vpop.f32.mrf.mxu0
      %v5802 = vadd.f32 %v5713, %v5801
      %5803 = vdwg.mxu0
      %5804 = vmatpush.bf16.msra.mxu0 %v5280
      %5805 = vmatpush.bf16.msra.mxu0 %v5279
      %5806 = vmatpush.bf16.msra.mxu0 %v5278
      %5807 = vmatpush.bf16.msra.mxu0 %v5277
      %5808 = vmatpush.bf16.msra.mxu0 %v5276
      %5809 = vmatpush.bf16.msra.mxu0 %v5275
      %5810 = vmatpush.bf16.msra.mxu0 %v5274
      %5811 = vmatpush.bf16.msra.mxu0 %v5273
      %5812 = vmatmul.bf16.gmra.mxu0 %v3390
      %v5813 = vpop.f32.mrf.mxu0
      %v5814 = vadd.f32 %v5725, %v5813
      %v5815 = vpop.f32.mrf.mxu0
      %v5816 = vadd.f32 %v5727, %v5815
      %5817 = vmatmul.bf16.gmra.mxu0 %v3392
      %v5818 = vpop.f32.mrf.mxu0
      %v5819 = vadd.f32 %v5730, %v5818
      %v5820 = vpop.f32.mrf.mxu0
      %v5821 = vadd.f32 %v5732, %v5820
      %5822 = vmatmul.bf16.gmra.mxu0 %v3394
      %v5823 = vpop.f32.mrf.mxu0
      %v5824 = vadd.f32 %v5735, %v5823
      %v5825 = vpop.f32.mrf.mxu0
      %v5826 = vadd.f32 %v5737, %v5825
      %5827 = vmatmul.bf16.gmra.mxu0 %v3396
      %v5828 = vpop.f32.mrf.mxu0
      %v5829 = vadd.f32 %v5740, %v5828
      %v5830 = vpop.f32.mrf.mxu0
      %v5831 = vadd.f32 %v5742, %v5830
      %5832 = vmatmul.bf16.gmra.mxu0 %v3398
      %v5833 = vpop.f32.mrf.mxu0
      %v5834 = vadd.f32 %v5745, %v5833
      %v5835 = vpop.f32.mrf.mxu0
      %v5836 = vadd.f32 %v5747, %v5835
      %5837 = vmatmul.bf16.gmra.mxu0 %v3400
      %v5838 = vpop.f32.mrf.mxu0
      %v5839 = vadd.f32 %v5750, %v5838
      %v5840 = vpop.f32.mrf.mxu0
      %v5841 = vadd.f32 %v5752, %v5840
      %5842 = vmatmul.bf16.gmra.mxu0 %v3402
      %v5843 = vpop.f32.mrf.mxu0
      %v5844 = vadd.f32 %v5755, %v5843
      %v5845 = vpop.f32.mrf.mxu0
      %v5846 = vadd.f32 %v5757, %v5845
      %5847 = vmatmul.bf16.gmra.mxu0 %v3404
      %v5848 = vpop.f32.mrf.mxu0
      %v5849 = vadd.f32 %v5760, %v5848
      %v5850 = vpop.f32.mrf.mxu0
      %v5851 = vadd.f32 %v5762, %v5850
      %5852 = vmatmul.bf16.gmra.mxu0 %v3406
      %v5853 = vpop.f32.mrf.mxu0
      %v5854 = vadd.f32 %v5765, %v5853
      %v5855 = vpop.f32.mrf.mxu0
      %v5856 = vadd.f32 %v5767, %v5855
      %5857 = vmatmul.bf16.gmra.mxu0 %v3408
      %v5858 = vpop.f32.mrf.mxu0
      %v5859 = vadd.f32 %v5770, %v5858
      %v5860 = vpop.f32.mrf.mxu0
      %v5861 = vadd.f32 %v5772, %v5860
      %5862 = vmatmul.bf16.gmra.mxu0 %v3410
      %v5863 = vpop.f32.mrf.mxu0
      %v5864 = vadd.f32 %v5775, %v5863
      %v5865 = vpop.f32.mrf.mxu0
      %v5866 = vadd.f32 %v5777, %v5865
      %5867 = vmatmul.bf16.gmra.mxu0 %v3412
      %v5868 = vpop.f32.mrf.mxu0
      %v5869 = vadd.f32 %v5780, %v5868
      %v5870 = vpop.f32.mrf.mxu0
      %v5871 = vadd.f32 %v5782, %v5870
      %5872 = vmatmul.bf16.gmra.mxu0 %v3414
      %v5873 = vpop.f32.mrf.mxu0
      %v5874 = vadd.f32 %v5785, %v5873
      %v5875 = vpop.f32.mrf.mxu0
      %v5876 = vadd.f32 %v5787, %v5875
      %5877 = vmatmul.bf16.gmra.mxu0 %v3416
      %v5878 = vpop.f32.mrf.mxu0
      %v5879 = vadd.f32 %v5790, %v5878
      %v5880 = vpop.f32.mrf.mxu0
      %v5881 = vadd.f32 %v5792, %v5880
      %5882 = vmatmul.bf16.gmra.mxu0 %v3418
      %v5883 = vpop.f32.mrf.mxu0
      %v5884 = vadd.f32 %v5795, %v5883
      %v5885 = vpop.f32.mrf.mxu0
      %v5886 = vadd.f32 %v5797, %v5885
      %5887 = vmatmul.bf16.gmra.mxu0 %v3420
      %v5888 = vpop.f32.mrf.mxu0
      %v5889 = vadd.f32 %v5800, %v5888
      %v5890 = vpop.f32.mrf.mxu0
      %v5891 = vadd.f32 %v5802, %v5890
      %5892 = vdwg.mxu0
      %5893 = vmatpush.bf16.msra.mxu0 %v5288
      %5894 = vmatpush.bf16.msra.mxu0 %v5287
      %5895 = vmatpush.bf16.msra.mxu0 %v5286
      %5896 = vmatpush.bf16.msra.mxu0 %v5285
      %5897 = vmatpush.bf16.msra.mxu0 %v5284
      %5898 = vmatpush.bf16.msra.mxu0 %v5283
      %5899 = vmatpush.bf16.msra.mxu0 %v5282
      %5900 = vmatpush.bf16.msra.mxu0 %v5281
      %5901 = vmatmul.bf16.gmra.mxu0 %v3517
      %v5902 = vpop.f32.mrf.mxu0
      %v5903 = vadd.f32 %v5814, %v5902
      %v5904 = vpop.f32.mrf.mxu0
      %v5905 = vadd.f32 %v5816, %v5904
      %5906 = vmatmul.bf16.gmra.mxu0 %v3519
      %v5907 = vpop.f32.mrf.mxu0
      %v5908 = vadd.f32 %v5819, %v5907
      %v5909 = vpop.f32.mrf.mxu0
      %v5910 = vadd.f32 %v5821, %v5909
      %5911 = vmatmul.bf16.gmra.mxu0 %v3521
      %v5912 = vpop.f32.mrf.mxu0
      %v5913 = vadd.f32 %v5824, %v5912
      %v5914 = vpop.f32.mrf.mxu0
      %v5915 = vadd.f32 %v5826, %v5914
      %5916 = vmatmul.bf16.gmra.mxu0 %v3523
      %v5917 = vpop.f32.mrf.mxu0
      %v5918 = vadd.f32 %v5829, %v5917
      %v5919 = vpop.f32.mrf.mxu0
      %v5920 = vadd.f32 %v5831, %v5919
      %5921 = vmatmul.bf16.gmra.mxu0 %v3525
      %v5922 = vpop.f32.mrf.mxu0
      %v5923 = vadd.f32 %v5834, %v5922
      %v5924 = vpop.f32.mrf.mxu0
      %v5925 = vadd.f32 %v5836, %v5924
      %5926 = vmatmul.bf16.gmra.mxu0 %v3527
      %v5927 = vpop.f32.mrf.mxu0
      %v5928 = vadd.f32 %v5839, %v5927
      %v5929 = vpop.f32.mrf.mxu0
      %v5930 = vadd.f32 %v5841, %v5929
      %5931 = vmatmul.bf16.gmra.mxu0 %v3529
      %v5932 = vpop.f32.mrf.mxu0
      %v5933 = vadd.f32 %v5844, %v5932
      %v5934 = vpop.f32.mrf.mxu0
      %v5935 = vadd.f32 %v5846, %v5934
      %5936 = vmatmul.bf16.gmra.mxu0 %v3531
      %v5937 = vpop.f32.mrf.mxu0
      %v5938 = vadd.f32 %v5849, %v5937
      %v5939 = vpop.f32.mrf.mxu0
      %v5940 = vadd.f32 %v5851, %v5939
      %5941 = vmatmul.bf16.gmra.mxu0 %v3533
      %v5942 = vpop.f32.mrf.mxu0
      %v5943 = vadd.f32 %v5854, %v5942
      %v5944 = vpop.f32.mrf.mxu0
      %v5945 = vadd.f32 %v5856, %v5944
      %5946 = vmatmul.bf16.gmra.mxu0 %v3535
      %v5947 = vpop.f32.mrf.mxu0
      %v5948 = vadd.f32 %v5859, %v5947
      %v5949 = vpop.f32.mrf.mxu0
      %v5950 = vadd.f32 %v5861, %v5949
      %5951 = vmatmul.bf16.gmra.mxu0 %v3537
      %v5952 = vpop.f32.mrf.mxu0
      %v5953 = vadd.f32 %v5864, %v5952
      %v5954 = vpop.f32.mrf.mxu0
      %v5955 = vadd.f32 %v5866, %v5954
      %5956 = vmatmul.bf16.gmra.mxu0 %v3539
      %v5957 = vpop.f32.mrf.mxu0
      %v5958 = vadd.f32 %v5869, %v5957
      %v5959 = vpop.f32.mrf.mxu0
      %v5960 = vadd.f32 %v5871, %v5959
      %5961 = vmatmul.bf16.gmra.mxu0 %v3541
      %v5962 = vpop.f32.mrf.mxu0
      %v5963 = vadd.f32 %v5874, %v5962
      %v5964 = vpop.f32.mrf.mxu0
      %v5965 = vadd.f32 %v5876, %v5964
      %5966 = vmatmul.bf16.gmra.mxu0 %v3543
      %v5967 = vpop.f32.mrf.mxu0
      %v5968 = vadd.f32 %v5879, %v5967
      %v5969 = vpop.f32.mrf.mxu0
      %v5970 = vadd.f32 %v5881, %v5969
      %5971 = vmatmul.bf16.gmra.mxu0 %v3545
      %v5972 = vpop.f32.mrf.mxu0
      %v5973 = vadd.f32 %v5884, %v5972
      %v5974 = vpop.f32.mrf.mxu0
      %v5975 = vadd.f32 %v5886, %v5974
      %5976 = vmatmul.bf16.gmra.mxu0 %v3547
      %v5977 = vpop.f32.mrf.mxu0
      %v5978 = vadd.f32 %v5889, %v5977
      %v5979 = vpop.f32.mrf.mxu0
      %v5980 = vadd.f32 %v5891, %v5979
      %5981 = vdwg.mxu0
      %5982 = vmatpush.bf16.msra.mxu0 %v5296
      %5983 = vmatpush.bf16.msra.mxu0 %v5295
      %5984 = vmatpush.bf16.msra.mxu0 %v5294
      %5985 = vmatpush.bf16.msra.mxu0 %v5293
      %5986 = vmatpush.bf16.msra.mxu0 %v5292
      %5987 = vmatpush.bf16.msra.mxu0 %v5291
      %5988 = vmatpush.bf16.msra.mxu0 %v5290
      %5989 = vmatpush.bf16.msra.mxu0 %v5289
      %5990 = vmatmul.bf16.gmra.mxu0 %v3518
      %v5991 = vpop.f32.mrf.mxu0
      %v5992 = vadd.f32 %v5903, %v5991
      %v5993 = vpop.f32.mrf.mxu0
      %v5994 = vadd.f32 %v5905, %v5993
      %5995 = vmatmul.bf16.gmra.mxu0 %v3520
      %v5996 = vpop.f32.mrf.mxu0
      %v5997 = vadd.f32 %v5908, %v5996
      %v5998 = vpop.f32.mrf.mxu0
      %v5999 = vadd.f32 %v5910, %v5998
      %6000 = vmatmul.bf16.gmra.mxu0 %v3522
      %v6001 = vpop.f32.mrf.mxu0
      %v6002 = vadd.f32 %v5913, %v6001
      %v6003 = vpop.f32.mrf.mxu0
      %v6004 = vadd.f32 %v5915, %v6003
      %6005 = vmatmul.bf16.gmra.mxu0 %v3524
      %v6006 = vpop.f32.mrf.mxu0
      %v6007 = vadd.f32 %v5918, %v6006
      %v6008 = vpop.f32.mrf.mxu0
      %v6009 = vadd.f32 %v5920, %v6008
      %6010 = vmatmul.bf16.gmra.mxu0 %v3526
      %v6011 = vpop.f32.mrf.mxu0
      %v6012 = vadd.f32 %v5923, %v6011
      %v6013 = vpop.f32.mrf.mxu0
      %v6014 = vadd.f32 %v5925, %v6013
      %6015 = vmatmul.bf16.gmra.mxu0 %v3528
      %v6016 = vpop.f32.mrf.mxu0
      %v6017 = vadd.f32 %v5928, %v6016
      %v6018 = vpop.f32.mrf.mxu0
      %v6019 = vadd.f32 %v5930, %v6018
      %6020 = vmatmul.bf16.gmra.mxu0 %v3530
      %v6021 = vpop.f32.mrf.mxu0
      %v6022 = vadd.f32 %v5933, %v6021
      %v6023 = vpop.f32.mrf.mxu0
      %v6024 = vadd.f32 %v5935, %v6023
      %6025 = vmatmul.bf16.gmra.mxu0 %v3532
      %v6026 = vpop.f32.mrf.mxu0
      %v6027 = vadd.f32 %v5938, %v6026
      %v6028 = vpop.f32.mrf.mxu0
      %v6029 = vadd.f32 %v5940, %v6028
      %6030 = vmatmul.bf16.gmra.mxu0 %v3534
      %v6031 = vpop.f32.mrf.mxu0
      %v6032 = vadd.f32 %v5943, %v6031
      %v6033 = vpop.f32.mrf.mxu0
      %v6034 = vadd.f32 %v5945, %v6033
      %6035 = vmatmul.bf16.gmra.mxu0 %v3536
      %v6036 = vpop.f32.mrf.mxu0
      %v6037 = vadd.f32 %v5948, %v6036
      %v6038 = vpop.f32.mrf.mxu0
      %v6039 = vadd.f32 %v5950, %v6038
      %6040 = vmatmul.bf16.gmra.mxu0 %v3538
      %v6041 = vpop.f32.mrf.mxu0
      %v6042 = vadd.f32 %v5953, %v6041
      %v6043 = vpop.f32.mrf.mxu0
      %v6044 = vadd.f32 %v5955, %v6043
      %6045 = vmatmul.bf16.gmra.mxu0 %v3540
      %v6046 = vpop.f32.mrf.mxu0
      %v6047 = vadd.f32 %v5958, %v6046
      %v6048 = vpop.f32.mrf.mxu0
      %v6049 = vadd.f32 %v5960, %v6048
      %6050 = vmatmul.bf16.gmra.mxu0 %v3542
      %v6051 = vpop.f32.mrf.mxu0
      %v6052 = vadd.f32 %v5963, %v6051
      %v6053 = vpop.f32.mrf.mxu0
      %v6054 = vadd.f32 %v5965, %v6053
      %6055 = vmatmul.bf16.gmra.mxu0 %v3544
      %v6056 = vpop.f32.mrf.mxu0
      %v6057 = vadd.f32 %v5968, %v6056
      %v6058 = vpop.f32.mrf.mxu0
      %v6059 = vadd.f32 %v5970, %v6058
      %6060 = vmatmul.bf16.gmra.mxu0 %v3546
      %v6061 = vpop.f32.mrf.mxu0
      %v6062 = vadd.f32 %v5973, %v6061
      %v6063 = vpop.f32.mrf.mxu0
      %v6064 = vadd.f32 %v5975, %v6063
      %6065 = vmatmul.bf16.gmra.mxu0 %v3548
      %v6066 = vpop.f32.mrf.mxu0
      %v6067 = vadd.f32 %v5978, %v6066
      %v6068 = vpop.f32.mrf.mxu0
      %v6069 = vadd.f32 %v5980, %v6068
      %6070 = vdwg.mxu0
      %6071 = vmatpush.bf16.msra.mxu0 %v5304
      %6072 = vmatpush.bf16.msra.mxu0 %v5303
      %6073 = vmatpush.bf16.msra.mxu0 %v5302
      %6074 = vmatpush.bf16.msra.mxu0 %v5301
      %6075 = vmatpush.bf16.msra.mxu0 %v5300
      %6076 = vmatpush.bf16.msra.mxu0 %v5299
      %6077 = vmatpush.bf16.msra.mxu0 %v5298
      %6078 = vmatpush.bf16.msra.mxu0 %v5297
      %6079 = vmatmul.bf16.gmra.mxu0 %v3661
      %v6080 = vpop.f32.mrf.mxu0
      %v6081 = vadd.f32 %v5992, %v6080
      %v6082 = vpop.f32.mrf.mxu0
      %v6083 = vadd.f32 %v5994, %v6082
      %6084 = vmatmul.bf16.gmra.mxu0 %v3663
      %v6085 = vpop.f32.mrf.mxu0
      %v6086 = vadd.f32 %v5997, %v6085
      %v6087 = vpop.f32.mrf.mxu0
      %v6088 = vadd.f32 %v5999, %v6087
      %6089 = vmatmul.bf16.gmra.mxu0 %v3665
      %v6090 = vpop.f32.mrf.mxu0
      %v6091 = vadd.f32 %v6002, %v6090
      %v6092 = vpop.f32.mrf.mxu0
      %v6093 = vadd.f32 %v6004, %v6092
      %6094 = vmatmul.bf16.gmra.mxu0 %v3667
      %v6095 = vpop.f32.mrf.mxu0
      %v6096 = vadd.f32 %v6007, %v6095
      %v6097 = vpop.f32.mrf.mxu0
      %v6098 = vadd.f32 %v6009, %v6097
      %6099 = vmatmul.bf16.gmra.mxu0 %v3669
      %v6100 = vpop.f32.mrf.mxu0
      %v6101 = vadd.f32 %v6012, %v6100
      %v6102 = vpop.f32.mrf.mxu0
      %v6103 = vadd.f32 %v6014, %v6102
      %6104 = vmatmul.bf16.gmra.mxu0 %v3671
      %v6105 = vpop.f32.mrf.mxu0
      %v6106 = vadd.f32 %v6017, %v6105
      %v6107 = vpop.f32.mrf.mxu0
      %v6108 = vadd.f32 %v6019, %v6107
      %6109 = vmatmul.bf16.gmra.mxu0 %v3673
      %v6110 = vpop.f32.mrf.mxu0
      %v6111 = vadd.f32 %v6022, %v6110
      %v6112 = vpop.f32.mrf.mxu0
      %v6113 = vadd.f32 %v6024, %v6112
      %6114 = vmatmul.bf16.gmra.mxu0 %v3675
      %v6115 = vpop.f32.mrf.mxu0
      %v6116 = vadd.f32 %v6027, %v6115
      %v6117 = vpop.f32.mrf.mxu0
      %v6118 = vadd.f32 %v6029, %v6117
      %6119 = vmatmul.bf16.gmra.mxu0 %v3677
      %v6120 = vpop.f32.mrf.mxu0
      %v6121 = vadd.f32 %v6032, %v6120
      %v6122 = vpop.f32.mrf.mxu0
      %v6123 = vadd.f32 %v6034, %v6122
      %6124 = vmatmul.bf16.gmra.mxu0 %v3679
      %v6125 = vpop.f32.mrf.mxu0
      %v6126 = vadd.f32 %v6037, %v6125
      %v6127 = vpop.f32.mrf.mxu0
      %v6128 = vadd.f32 %v6039, %v6127
      %6129 = vmatmul.bf16.gmra.mxu0 %v3681
      %v6130 = vpop.f32.mrf.mxu0
      %v6131 = vadd.f32 %v6042, %v6130
      %v6132 = vpop.f32.mrf.mxu0
      %v6133 = vadd.f32 %v6044, %v6132
      %6134 = vmatmul.bf16.gmra.mxu0 %v3683
      %v6135 = vpop.f32.mrf.mxu0
      %v6136 = vadd.f32 %v6047, %v6135
      %v6137 = vpop.f32.mrf.mxu0
      %v6138 = vadd.f32 %v6049, %v6137
      %6139 = vmatmul.bf16.gmra.mxu0 %v3685
      %v6140 = vpop.f32.mrf.mxu0
      %v6141 = vadd.f32 %v6052, %v6140
      %v6142 = vpop.f32.mrf.mxu0
      %v6143 = vadd.f32 %v6054, %v6142
      %6144 = vmatmul.bf16.gmra.mxu0 %v3687
      %v6145 = vpop.f32.mrf.mxu0
      %v6146 = vadd.f32 %v6057, %v6145
      %v6147 = vpop.f32.mrf.mxu0
      %v6148 = vadd.f32 %v6059, %v6147
      %6149 = vmatmul.bf16.gmra.mxu0 %v3689
      %v6150 = vpop.f32.mrf.mxu0
      %v6151 = vadd.f32 %v6062, %v6150
      %v6152 = vpop.f32.mrf.mxu0
      %v6153 = vadd.f32 %v6064, %v6152
      %6154 = vmatmul.bf16.gmra.mxu0 %v3691
      %v6155 = vpop.f32.mrf.mxu0
      %v6156 = vadd.f32 %v6067, %v6155
      %v6157 = vpop.f32.mrf.mxu0
      %v6158 = vadd.f32 %v6069, %v6157
      %6159 = vdwg.mxu0
      %6160 = vmatpush.bf16.msra.mxu0 %v5312
      %6161 = vmatpush.bf16.msra.mxu0 %v5311
      %6162 = vmatpush.bf16.msra.mxu0 %v5310
      %6163 = vmatpush.bf16.msra.mxu0 %v5309
      %6164 = vmatpush.bf16.msra.mxu0 %v5308
      %6165 = vmatpush.bf16.msra.mxu0 %v5307
      %6166 = vmatpush.bf16.msra.mxu0 %v5306
      %6167 = vmatpush.bf16.msra.mxu0 %v5305
      %6168 = vmatmul.bf16.gmra.mxu0 %v3662
      %v6169 = vpop.f32.mrf.mxu0
      %v6170 = vadd.f32 %v6081, %v6169
      %v6171 = vpop.f32.mrf.mxu0
      %v6172 = vadd.f32 %v6083, %v6171
      %6173 = vmatmul.bf16.gmra.mxu0 %v3664
      %v6174 = vpop.f32.mrf.mxu0
      %v6175 = vadd.f32 %v6086, %v6174
      %v6176 = vpop.f32.mrf.mxu0
      %v6177 = vadd.f32 %v6088, %v6176
      %6178 = vmatmul.bf16.gmra.mxu0 %v3666
      %v6179 = vpop.f32.mrf.mxu0
      %v6180 = vadd.f32 %v6091, %v6179
      %v6181 = vpop.f32.mrf.mxu0
      %v6182 = vadd.f32 %v6093, %v6181
      %6183 = vmatmul.bf16.gmra.mxu0 %v3668
      %v6184 = vpop.f32.mrf.mxu0
      %v6185 = vadd.f32 %v6096, %v6184
      %v6186 = vpop.f32.mrf.mxu0
      %v6187 = vadd.f32 %v6098, %v6186
      %6188 = vmatmul.bf16.gmra.mxu0 %v3670
      %v6189 = vpop.f32.mrf.mxu0
      %v6190 = vadd.f32 %v6101, %v6189
      %v6191 = vpop.f32.mrf.mxu0
      %v6192 = vadd.f32 %v6103, %v6191
      %6193 = vmatmul.bf16.gmra.mxu0 %v3672
      %v6194 = vpop.f32.mrf.mxu0
      %v6195 = vadd.f32 %v6106, %v6194
      %v6196 = vpop.f32.mrf.mxu0
      %v6197 = vadd.f32 %v6108, %v6196
      %6198 = vmatmul.bf16.gmra.mxu0 %v3674
      %v6199 = vpop.f32.mrf.mxu0
      %v6200 = vadd.f32 %v6111, %v6199
      %v6201 = vpop.f32.mrf.mxu0
      %v6202 = vadd.f32 %v6113, %v6201
      %6203 = vmatmul.bf16.gmra.mxu0 %v3676
      %v6204 = vpop.f32.mrf.mxu0
      %v6205 = vadd.f32 %v6116, %v6204
      %v6206 = vpop.f32.mrf.mxu0
      %v6207 = vadd.f32 %v6118, %v6206
      %6208 = vmatmul.bf16.gmra.mxu0 %v3678
      %v6209 = vpop.f32.mrf.mxu0
      %v6210 = vadd.f32 %v6121, %v6209
      %v6211 = vpop.f32.mrf.mxu0
      %v6212 = vadd.f32 %v6123, %v6211
      %6213 = vmatmul.bf16.gmra.mxu0 %v3680
      %v6214 = vpop.f32.mrf.mxu0
      %v6215 = vadd.f32 %v6126, %v6214
      %v6216 = vpop.f32.mrf.mxu0
      %v6217 = vadd.f32 %v6128, %v6216
      %6218 = vmatmul.bf16.gmra.mxu0 %v3682
      %v6219 = vpop.f32.mrf.mxu0
      %v6220 = vadd.f32 %v6131, %v6219
      %v6221 = vpop.f32.mrf.mxu0
      %v6222 = vadd.f32 %v6133, %v6221
      %6223 = vmatmul.bf16.gmra.mxu0 %v3684
      %v6224 = vpop.f32.mrf.mxu0
      %v6225 = vadd.f32 %v6136, %v6224
      %v6226 = vpop.f32.mrf.mxu0
      %v6227 = vadd.f32 %v6138, %v6226
      %6228 = vmatmul.bf16.gmra.mxu0 %v3686
      %v6229 = vpop.f32.mrf.mxu0
      %v6230 = vadd.f32 %v6141, %v6229
      %v6231 = vpop.f32.mrf.mxu0
      %v6232 = vadd.f32 %v6143, %v6231
      %6233 = vmatmul.bf16.gmra.mxu0 %v3688
      %v6234 = vpop.f32.mrf.mxu0
      %v6235 = vadd.f32 %v6146, %v6234
      %v6236 = vpop.f32.mrf.mxu0
      %v6237 = vadd.f32 %v6148, %v6236
      %6238 = vmatmul.bf16.gmra.mxu0 %v3690
      %v6239 = vpop.f32.mrf.mxu0
      %v6240 = vadd.f32 %v6151, %v6239
      %v6241 = vpop.f32.mrf.mxu0
      %v6242 = vadd.f32 %v6153, %v6241
      %6243 = vmatmul.bf16.gmra.mxu0 %v3692
      %v6244 = vpop.f32.mrf.mxu0
      %v6245 = vadd.f32 %v6156, %v6244
      %v6246 = vpop.f32.mrf.mxu0
      %v6247 = vadd.f32 %v6158, %v6246
      %6248 = vdwg.mxu0
      %6249 = vmatpush.bf16.msra.mxu0 %v5320
      %6250 = vmatpush.bf16.msra.mxu0 %v5319
      %6251 = vmatpush.bf16.msra.mxu0 %v5318
      %6252 = vmatpush.bf16.msra.mxu0 %v5317
      %6253 = vmatpush.bf16.msra.mxu0 %v5316
      %6254 = vmatpush.bf16.msra.mxu0 %v5315
      %6255 = vmatpush.bf16.msra.mxu0 %v5314
      %6256 = vmatpush.bf16.msra.mxu0 %v5313
      %6257 = vmatmul.bf16.gmra.mxu0 %v3789
      %v6258 = vpop.f32.mrf.mxu0
      %v6259 = vadd.f32 %v6170, %v6258
      %v6260 = vpop.f32.mrf.mxu0
      %v6261 = vadd.f32 %v6172, %v6260
      %6262 = vmatmul.bf16.gmra.mxu0 %v3791
      %v6263 = vpop.f32.mrf.mxu0
      %v6264 = vadd.f32 %v6175, %v6263
      %v6265 = vpop.f32.mrf.mxu0
      %v6266 = vadd.f32 %v6177, %v6265
      %6267 = vmatmul.bf16.gmra.mxu0 %v3793
      %v6268 = vpop.f32.mrf.mxu0
      %v6269 = vadd.f32 %v6180, %v6268
      %v6270 = vpop.f32.mrf.mxu0
      %v6271 = vadd.f32 %v6182, %v6270
      %6272 = vmatmul.bf16.gmra.mxu0 %v3795
      %v6273 = vpop.f32.mrf.mxu0
      %v6274 = vadd.f32 %v6185, %v6273
      %v6275 = vpop.f32.mrf.mxu0
      %v6276 = vadd.f32 %v6187, %v6275
      %6277 = vmatmul.bf16.gmra.mxu0 %v3797
      %v6278 = vpop.f32.mrf.mxu0
      %v6279 = vadd.f32 %v6190, %v6278
      %v6280 = vpop.f32.mrf.mxu0
      %v6281 = vadd.f32 %v6192, %v6280
      %6282 = vmatmul.bf16.gmra.mxu0 %v3799
      %v6283 = vpop.f32.mrf.mxu0
      %v6284 = vadd.f32 %v6195, %v6283
      %v6285 = vpop.f32.mrf.mxu0
      %v6286 = vadd.f32 %v6197, %v6285
      %6287 = vmatmul.bf16.gmra.mxu0 %v3801
      %v6288 = vpop.f32.mrf.mxu0
      %v6289 = vadd.f32 %v6200, %v6288
      %v6290 = vpop.f32.mrf.mxu0
      %v6291 = vadd.f32 %v6202, %v6290
      %6292 = vmatmul.bf16.gmra.mxu0 %v3803
      %v6293 = vpop.f32.mrf.mxu0
      %v6294 = vadd.f32 %v6205, %v6293
      %v6295 = vpop.f32.mrf.mxu0
      %v6296 = vadd.f32 %v6207, %v6295
      %6297 = vmatmul.bf16.gmra.mxu0 %v3805
      %v6298 = vpop.f32.mrf.mxu0
      %v6299 = vadd.f32 %v6210, %v6298
      %v6300 = vpop.f32.mrf.mxu0
      %v6301 = vadd.f32 %v6212, %v6300
      %6302 = vmatmul.bf16.gmra.mxu0 %v3807
      %v6303 = vpop.f32.mrf.mxu0
      %v6304 = vadd.f32 %v6215, %v6303
      %v6305 = vpop.f32.mrf.mxu0
      %v6306 = vadd.f32 %v6217, %v6305
      %6307 = vmatmul.bf16.gmra.mxu0 %v3809
      %v6308 = vpop.f32.mrf.mxu0
      %v6309 = vadd.f32 %v6220, %v6308
      %v6310 = vpop.f32.mrf.mxu0
      %v6311 = vadd.f32 %v6222, %v6310
      %6312 = vmatmul.bf16.gmra.mxu0 %v3811
      %v6313 = vpop.f32.mrf.mxu0
      %v6314 = vadd.f32 %v6225, %v6313
      %v6315 = vpop.f32.mrf.mxu0
      %v6316 = vadd.f32 %v6227, %v6315
      %6317 = vmatmul.bf16.gmra.mxu0 %v3813
      %v6318 = vpop.f32.mrf.mxu0
      %v6319 = vadd.f32 %v6230, %v6318
      %v6320 = vpop.f32.mrf.mxu0
      %v6321 = vadd.f32 %v6232, %v6320
      %6322 = vmatmul.bf16.gmra.mxu0 %v3815
      %v6323 = vpop.f32.mrf.mxu0
      %v6324 = vadd.f32 %v6235, %v6323
      %v6325 = vpop.f32.mrf.mxu0
      %v6326 = vadd.f32 %v6237, %v6325
      %6327 = vmatmul.bf16.gmra.mxu0 %v3817
      %v6328 = vpop.f32.mrf.mxu0
      %v6329 = vadd.f32 %v6240, %v6328
      %v6330 = vpop.f32.mrf.mxu0
      %v6331 = vadd.f32 %v6242, %v6330
      %6332 = vmatmul.bf16.gmra.mxu0 %v3819
      %v6333 = vpop.f32.mrf.mxu0
      %v6334 = vadd.f32 %v6245, %v6333
      %v6335 = vpop.f32.mrf.mxu0
      %v6336 = vadd.f32 %v6247, %v6335
      %6337 = vdwg.mxu0
      %6338 = vmatpush.bf16.msra.mxu0 %v5328
      %6339 = vmatpush.bf16.msra.mxu0 %v5327
      %6340 = vmatpush.bf16.msra.mxu0 %v5326
      %6341 = vmatpush.bf16.msra.mxu0 %v5325
      %6342 = vmatpush.bf16.msra.mxu0 %v5324
      %6343 = vmatpush.bf16.msra.mxu0 %v5323
      %6344 = vmatpush.bf16.msra.mxu0 %v5322
      %6345 = vmatpush.bf16.msra.mxu0 %v5321
      %6346 = vmatmul.bf16.gmra.mxu0 %v3790
      %v6347 = vpop.f32.mrf.mxu0
      %v6348 = vadd.f32 %v6259, %v6347
      %v6349 = vpop.f32.mrf.mxu0
      %v6350 = vadd.f32 %v6261, %v6349
      %6351 = vmatmul.bf16.gmra.mxu0 %v3792
      %v6352 = vpop.f32.mrf.mxu0
      %v6353 = vadd.f32 %v6264, %v6352
      %v6354 = vpop.f32.mrf.mxu0
      %v6355 = vadd.f32 %v6266, %v6354
      %6356 = vmatmul.bf16.gmra.mxu0 %v3794
      %v6357 = vpop.f32.mrf.mxu0
      %v6358 = vadd.f32 %v6269, %v6357
      %v6359 = vpop.f32.mrf.mxu0
      %v6360 = vadd.f32 %v6271, %v6359
      %6361 = vmatmul.bf16.gmra.mxu0 %v3796
      %v6362 = vpop.f32.mrf.mxu0
      %v6363 = vadd.f32 %v6274, %v6362
      %v6364 = vpop.f32.mrf.mxu0
      %v6365 = vadd.f32 %v6276, %v6364
      %6366 = vmatmul.bf16.gmra.mxu0 %v3798
      %v6367 = vpop.f32.mrf.mxu0
      %v6368 = vadd.f32 %v6279, %v6367
      %v6369 = vpop.f32.mrf.mxu0
      %v6370 = vadd.f32 %v6281, %v6369
      %6371 = vmatmul.bf16.gmra.mxu0 %v3800
      %v6372 = vpop.f32.mrf.mxu0
      %v6373 = vadd.f32 %v6284, %v6372
      %v6374 = vpop.f32.mrf.mxu0
      %v6375 = vadd.f32 %v6286, %v6374
      %6376 = vmatmul.bf16.gmra.mxu0 %v3802
      %v6377 = vpop.f32.mrf.mxu0
      %v6378 = vadd.f32 %v6289, %v6377
      %v6379 = vpop.f32.mrf.mxu0
      %v6380 = vadd.f32 %v6291, %v6379
      %6381 = vmatmul.bf16.gmra.mxu0 %v3804
      %v6382 = vpop.f32.mrf.mxu0
      %v6383 = vadd.f32 %v6294, %v6382
      %v6384 = vpop.f32.mrf.mxu0
      %v6385 = vadd.f32 %v6296, %v6384
      %6386 = vmatmul.bf16.gmra.mxu0 %v3806
      %v6387 = vpop.f32.mrf.mxu0
      %v6388 = vadd.f32 %v6299, %v6387
      %v6389 = vpop.f32.mrf.mxu0
      %v6390 = vadd.f32 %v6301, %v6389
      %6391 = vmatmul.bf16.gmra.mxu0 %v3808
      %v6392 = vpop.f32.mrf.mxu0
      %v6393 = vadd.f32 %v6304, %v6392
      %v6394 = vpop.f32.mrf.mxu0
      %v6395 = vadd.f32 %v6306, %v6394
      %6396 = vmatmul.bf16.gmra.mxu0 %v3810
      %v6397 = vpop.f32.mrf.mxu0
      %v6398 = vadd.f32 %v6309, %v6397
      %v6399 = vpop.f32.mrf.mxu0
      %v6400 = vadd.f32 %v6311, %v6399
      %6401 = vmatmul.bf16.gmra.mxu0 %v3812
      %v6402 = vpop.f32.mrf.mxu0
      %v6403 = vadd.f32 %v6314, %v6402
      %v6404 = vpop.f32.mrf.mxu0
      %v6405 = vadd.f32 %v6316, %v6404
      %6406 = vmatmul.bf16.gmra.mxu0 %v3814
      %v6407 = vpop.f32.mrf.mxu0
      %v6408 = vadd.f32 %v6319, %v6407
      %v6409 = vpop.f32.mrf.mxu0
      %v6410 = vadd.f32 %v6321, %v6409
      %6411 = vmatmul.bf16.gmra.mxu0 %v3816
      %v6412 = vpop.f32.mrf.mxu0
      %v6413 = vadd.f32 %v6324, %v6412
      %v6414 = vpop.f32.mrf.mxu0
      %v6415 = vadd.f32 %v6326, %v6414
      %6416 = vmatmul.bf16.gmra.mxu0 %v3818
      %v6417 = vpop.f32.mrf.mxu0
      %v6418 = vadd.f32 %v6329, %v6417
      %v6419 = vpop.f32.mrf.mxu0
      %v6420 = vadd.f32 %v6331, %v6419
      %6421 = vmatmul.bf16.gmra.mxu0 %v3820
      %v6422 = vpop.f32.mrf.mxu0
      %v6423 = vadd.f32 %v6334, %v6422
      %v6424 = vpop.f32.mrf.mxu0
      %v6425 = vadd.f32 %v6336, %v6424
      %6426 = vdwg.mxu0
      %6427 = vmatpush.bf16.msra.mxu0 %v5336
      %6428 = vmatpush.bf16.msra.mxu0 %v5335
      %6429 = vmatpush.bf16.msra.mxu0 %v5334
      %6430 = vmatpush.bf16.msra.mxu0 %v5333
      %6431 = vmatpush.bf16.msra.mxu0 %v5332
      %6432 = vmatpush.bf16.msra.mxu0 %v5331
      %6433 = vmatpush.bf16.msra.mxu0 %v5330
      %6434 = vmatpush.bf16.msra.mxu0 %v5329
      %6435 = vmatmul.bf16.gmra.mxu0 %v3917
      %v6436 = vpop.f32.mrf.mxu0
      %v6437 = vadd.f32 %v6348, %v6436
      %v6438 = vpop.f32.mrf.mxu0
      %v6439 = vadd.f32 %v6350, %v6438
      %6440 = vmatmul.bf16.gmra.mxu0 %v3919
      %v6441 = vpop.f32.mrf.mxu0
      %v6442 = vadd.f32 %v6353, %v6441
      %v6443 = vpop.f32.mrf.mxu0
      %v6444 = vadd.f32 %v6355, %v6443
      %6445 = vmatmul.bf16.gmra.mxu0 %v3921
      %v6446 = vpop.f32.mrf.mxu0
      %v6447 = vadd.f32 %v6358, %v6446
      %v6448 = vpop.f32.mrf.mxu0
      %v6449 = vadd.f32 %v6360, %v6448
      %6450 = vmatmul.bf16.gmra.mxu0 %v3923
      %v6451 = vpop.f32.mrf.mxu0
      %v6452 = vadd.f32 %v6363, %v6451
      %v6453 = vpop.f32.mrf.mxu0
      %v6454 = vadd.f32 %v6365, %v6453
      %6455 = vmatmul.bf16.gmra.mxu0 %v3925
      %v6456 = vpop.f32.mrf.mxu0
      %v6457 = vadd.f32 %v6368, %v6456
      %v6458 = vpop.f32.mrf.mxu0
      %v6459 = vadd.f32 %v6370, %v6458
      %6460 = vmatmul.bf16.gmra.mxu0 %v3927
      %v6461 = vpop.f32.mrf.mxu0
      %v6462 = vadd.f32 %v6373, %v6461
      %v6463 = vpop.f32.mrf.mxu0
      %v6464 = vadd.f32 %v6375, %v6463
      %6465 = vmatmul.bf16.gmra.mxu0 %v3929
      %v6466 = vpop.f32.mrf.mxu0
      %v6467 = vadd.f32 %v6378, %v6466
      %v6468 = vpop.f32.mrf.mxu0
      %v6469 = vadd.f32 %v6380, %v6468
      %6470 = vmatmul.bf16.gmra.mxu0 %v3931
      %v6471 = vpop.f32.mrf.mxu0
      %v6472 = vadd.f32 %v6383, %v6471
      %v6473 = vpop.f32.mrf.mxu0
      %v6474 = vadd.f32 %v6385, %v6473
      %6475 = vmatmul.bf16.gmra.mxu0 %v3933
      %v6476 = vpop.f32.mrf.mxu0
      %v6477 = vadd.f32 %v6388, %v6476
      %v6478 = vpop.f32.mrf.mxu0
      %v6479 = vadd.f32 %v6390, %v6478
      %6480 = vmatmul.bf16.gmra.mxu0 %v3935
      %v6481 = vpop.f32.mrf.mxu0
      %v6482 = vadd.f32 %v6393, %v6481
      %v6483 = vpop.f32.mrf.mxu0
      %v6484 = vadd.f32 %v6395, %v6483
      %6485 = vmatmul.bf16.gmra.mxu0 %v3937
      %v6486 = vpop.f32.mrf.mxu0
      %v6487 = vadd.f32 %v6398, %v6486
      %v6488 = vpop.f32.mrf.mxu0
      %v6489 = vadd.f32 %v6400, %v6488
      %6490 = vmatmul.bf16.gmra.mxu0 %v3939
      %v6491 = vpop.f32.mrf.mxu0
      %v6492 = vadd.f32 %v6403, %v6491
      %v6493 = vpop.f32.mrf.mxu0
      %v6494 = vadd.f32 %v6405, %v6493
      %6495 = vmatmul.bf16.gmra.mxu0 %v3941
      %v6496 = vpop.f32.mrf.mxu0
      %v6497 = vadd.f32 %v6408, %v6496
      %v6498 = vpop.f32.mrf.mxu0
      %v6499 = vadd.f32 %v6410, %v6498
      %6500 = vmatmul.bf16.gmra.mxu0 %v3943
      %v6501 = vpop.f32.mrf.mxu0
      %v6502 = vadd.f32 %v6413, %v6501
      %v6503 = vpop.f32.mrf.mxu0
      %v6504 = vadd.f32 %v6415, %v6503
      %6505 = vmatmul.bf16.gmra.mxu0 %v3945
      %v6506 = vpop.f32.mrf.mxu0
      %v6507 = vadd.f32 %v6418, %v6506
      %v6508 = vpop.f32.mrf.mxu0
      %v6509 = vadd.f32 %v6420, %v6508
      %6510 = vmatmul.bf16.gmra.mxu0 %v3947
      %v6511 = vpop.f32.mrf.mxu0
      %v6512 = vadd.f32 %v6423, %v6511
      %v6513 = vpop.f32.mrf.mxu0
      %v6514 = vadd.f32 %v6425, %v6513
      %6515 = vdwg.mxu0
      %6516 = vmatpush.bf16.msra.mxu0 %v5344
      %6517 = vmatpush.bf16.msra.mxu0 %v5343
      %6518 = vmatpush.bf16.msra.mxu0 %v5342
      %6519 = vmatpush.bf16.msra.mxu0 %v5341
      %6520 = vmatpush.bf16.msra.mxu0 %v5340
      %6521 = vmatpush.bf16.msra.mxu0 %v5339
      %6522 = vmatpush.bf16.msra.mxu0 %v5338
      %6523 = vmatpush.bf16.msra.mxu0 %v5337
      %6524 = vmatmul.bf16.gmra.mxu0 %v3918
      %v6525 = vpop.f32.mrf.mxu0
      %v6526 = vadd.f32 %v6437, %v6525
      %v6527 = vpop.f32.mrf.mxu0
      %v6528 = vadd.f32 %v6439, %v6527
      %6529 = vmatmul.bf16.gmra.mxu0 %v3920
      %v6530 = vpop.f32.mrf.mxu0
      %v6531 = vadd.f32 %v6442, %v6530
      %v6532 = vpop.f32.mrf.mxu0
      %v6533 = vadd.f32 %v6444, %v6532
      %6534 = vmatmul.bf16.gmra.mxu0 %v3922
      %v6535 = vpop.f32.mrf.mxu0
      %v6536 = vadd.f32 %v6447, %v6535
      %v6537 = vpop.f32.mrf.mxu0
      %v6538 = vadd.f32 %v6449, %v6537
      %6539 = vmatmul.bf16.gmra.mxu0 %v3924
      %v6540 = vpop.f32.mrf.mxu0
      %v6541 = vadd.f32 %v6452, %v6540
      %v6542 = vpop.f32.mrf.mxu0
      %v6543 = vadd.f32 %v6454, %v6542
      %6544 = vmatmul.bf16.gmra.mxu0 %v3926
      %v6545 = vpop.f32.mrf.mxu0
      %v6546 = vadd.f32 %v6457, %v6545
      %v6547 = vpop.f32.mrf.mxu0
      %v6548 = vadd.f32 %v6459, %v6547
      %6549 = vmatmul.bf16.gmra.mxu0 %v3928
      %v6550 = vpop.f32.mrf.mxu0
      %v6551 = vadd.f32 %v6462, %v6550
      %v6552 = vpop.f32.mrf.mxu0
      %v6553 = vadd.f32 %v6464, %v6552
      %6554 = vmatmul.bf16.gmra.mxu0 %v3930
      %v6555 = vpop.f32.mrf.mxu0
      %v6556 = vadd.f32 %v6467, %v6555
      %v6557 = vpop.f32.mrf.mxu0
      %v6558 = vadd.f32 %v6469, %v6557
      %6559 = vmatmul.bf16.gmra.mxu0 %v3932
      %v6560 = vpop.f32.mrf.mxu0
      %v6561 = vadd.f32 %v6472, %v6560
      %v6562 = vpop.f32.mrf.mxu0
      %v6563 = vadd.f32 %v6474, %v6562
      %6564 = vmatmul.bf16.gmra.mxu0 %v3934
      %v6565 = vpop.f32.mrf.mxu0
      %v6566 = vadd.f32 %v6477, %v6565
      %v6567 = vpop.f32.mrf.mxu0
      %v6568 = vadd.f32 %v6479, %v6567
      %6569 = vmatmul.bf16.gmra.mxu0 %v3936
      %v6570 = vpop.f32.mrf.mxu0
      %v6571 = vadd.f32 %v6482, %v6570
      %v6572 = vpop.f32.mrf.mxu0
      %v6573 = vadd.f32 %v6484, %v6572
      %6574 = vmatmul.bf16.gmra.mxu0 %v3938
      %v6575 = vpop.f32.mrf.mxu0
      %v6576 = vadd.f32 %v6487, %v6575
      %v6577 = vpop.f32.mrf.mxu0
      %v6578 = vadd.f32 %v6489, %v6577
      %6579 = vmatmul.bf16.gmra.mxu0 %v3940
      %v6580 = vpop.f32.mrf.mxu0
      %v6581 = vadd.f32 %v6492, %v6580
      %v6582 = vpop.f32.mrf.mxu0
      %v6583 = vadd.f32 %v6494, %v6582
      %6584 = vmatmul.bf16.gmra.mxu0 %v3942
      %v6585 = vpop.f32.mrf.mxu0
      %v6586 = vadd.f32 %v6497, %v6585
      %v6587 = vpop.f32.mrf.mxu0
      %v6588 = vadd.f32 %v6499, %v6587
      %6589 = vmatmul.bf16.gmra.mxu0 %v3944
      %v6590 = vpop.f32.mrf.mxu0
      %v6591 = vadd.f32 %v6502, %v6590
      %v6592 = vpop.f32.mrf.mxu0
      %v6593 = vadd.f32 %v6504, %v6592
      %6594 = vmatmul.bf16.gmra.mxu0 %v3946
      %v6595 = vpop.f32.mrf.mxu0
      %v6596 = vadd.f32 %v6507, %v6595
      %v6597 = vpop.f32.mrf.mxu0
      %v6598 = vadd.f32 %v6509, %v6597
      %6599 = vmatmul.bf16.gmra.mxu0 %v3948
      %v6600 = vpop.f32.mrf.mxu0
      %v6601 = vadd.f32 %v6512, %v6600
      %v6602 = vpop.f32.mrf.mxu0
      %v6603 = vadd.f32 %v6514, %v6602
      %6604 = vdwg.mxu0
      %6605 = vmatpush.bf16.msra.mxu0 %v5352
      %6606 = vmatpush.bf16.msra.mxu0 %v5351
      %6607 = vmatpush.bf16.msra.mxu0 %v5350
      %6608 = vmatpush.bf16.msra.mxu0 %v5349
      %6609 = vmatpush.bf16.msra.mxu0 %v5348
      %6610 = vmatpush.bf16.msra.mxu0 %v5347
      %6611 = vmatpush.bf16.msra.mxu0 %v5346
      %6612 = vmatpush.bf16.msra.mxu0 %v5345
      %6613 = vmatmul.bf16.gmra.mxu0 %v4061
      %v6614 = vpop.f32.mrf.mxu0
      %v6615 = vadd.f32 %v6526, %v6614
      %v6616 = vpop.f32.mrf.mxu0
      %v6617 = vadd.f32 %v6528, %v6616
      %6618 = vmatmul.bf16.gmra.mxu0 %v4063
      %v6619 = vpop.f32.mrf.mxu0
      %v6620 = vadd.f32 %v6531, %v6619
      %v6621 = vpop.f32.mrf.mxu0
      %v6622 = vadd.f32 %v6533, %v6621
      %6623 = vmatmul.bf16.gmra.mxu0 %v4065
      %v6624 = vpop.f32.mrf.mxu0
      %v6625 = vadd.f32 %v6536, %v6624
      %v6626 = vpop.f32.mrf.mxu0
      %v6627 = vadd.f32 %v6538, %v6626
      %6628 = vmatmul.bf16.gmra.mxu0 %v4067
      %v6629 = vpop.f32.mrf.mxu0
      %v6630 = vadd.f32 %v6541, %v6629
      %v6631 = vpop.f32.mrf.mxu0
      %v6632 = vadd.f32 %v6543, %v6631
      %6633 = vmatmul.bf16.gmra.mxu0 %v4069
      %v6634 = vpop.f32.mrf.mxu0
      %v6635 = vadd.f32 %v6546, %v6634
      %v6636 = vpop.f32.mrf.mxu0
      %v6637 = vadd.f32 %v6548, %v6636
      %6638 = vmatmul.bf16.gmra.mxu0 %v4071
      %v6639 = vpop.f32.mrf.mxu0
      %v6640 = vadd.f32 %v6551, %v6639
      %v6641 = vpop.f32.mrf.mxu0
      %v6642 = vadd.f32 %v6553, %v6641
      %6643 = vmatmul.bf16.gmra.mxu0 %v4073
      %v6644 = vpop.f32.mrf.mxu0
      %v6645 = vadd.f32 %v6556, %v6644
      %v6646 = vpop.f32.mrf.mxu0
      %v6647 = vadd.f32 %v6558, %v6646
      %6648 = vmatmul.bf16.gmra.mxu0 %v4075
      %v6649 = vpop.f32.mrf.mxu0
      %v6650 = vadd.f32 %v6561, %v6649
      %v6651 = vpop.f32.mrf.mxu0
      %v6652 = vadd.f32 %v6563, %v6651
      %6653 = vmatmul.bf16.gmra.mxu0 %v4077
      %v6654 = vpop.f32.mrf.mxu0
      %v6655 = vadd.f32 %v6566, %v6654
      %v6656 = vpop.f32.mrf.mxu0
      %v6657 = vadd.f32 %v6568, %v6656
      %6658 = vmatmul.bf16.gmra.mxu0 %v4079
      %v6659 = vpop.f32.mrf.mxu0
      %v6660 = vadd.f32 %v6571, %v6659
      %v6661 = vpop.f32.mrf.mxu0
      %v6662 = vadd.f32 %v6573, %v6661
      %6663 = vmatmul.bf16.gmra.mxu0 %v4081
      %v6664 = vpop.f32.mrf.mxu0
      %v6665 = vadd.f32 %v6576, %v6664
      %v6666 = vpop.f32.mrf.mxu0
      %v6667 = vadd.f32 %v6578, %v6666
      %6668 = vmatmul.bf16.gmra.mxu0 %v4083
      %v6669 = vpop.f32.mrf.mxu0
      %v6670 = vadd.f32 %v6581, %v6669
      %v6671 = vpop.f32.mrf.mxu0
      %v6672 = vadd.f32 %v6583, %v6671
      %6673 = vmatmul.bf16.gmra.mxu0 %v4085
      %v6674 = vpop.f32.mrf.mxu0
      %v6675 = vadd.f32 %v6586, %v6674
      %v6676 = vpop.f32.mrf.mxu0
      %v6677 = vadd.f32 %v6588, %v6676
      %6678 = vmatmul.bf16.gmra.mxu0 %v4087
      %v6679 = vpop.f32.mrf.mxu0
      %v6680 = vadd.f32 %v6591, %v6679
      %v6681 = vpop.f32.mrf.mxu0
      %v6682 = vadd.f32 %v6593, %v6681
      %6683 = vmatmul.bf16.gmra.mxu0 %v4089
      %v6684 = vpop.f32.mrf.mxu0
      %v6685 = vadd.f32 %v6596, %v6684
      %v6686 = vpop.f32.mrf.mxu0
      %v6687 = vadd.f32 %v6598, %v6686
      %6688 = vmatmul.bf16.gmra.mxu0 %v4091
      %v6689 = vpop.f32.mrf.mxu0
      %v6690 = vadd.f32 %v6601, %v6689
      %v6691 = vpop.f32.mrf.mxu0
      %v6692 = vadd.f32 %v6603, %v6691
      %6693 = vdwg.mxu0
      %6694 = vmatpush.bf16.msra.mxu0 %v5360
      %6695 = vmatpush.bf16.msra.mxu0 %v5359
      %6696 = vmatpush.bf16.msra.mxu0 %v5358
      %6697 = vmatpush.bf16.msra.mxu0 %v5357
      %6698 = vmatpush.bf16.msra.mxu0 %v5356
      %6699 = vmatpush.bf16.msra.mxu0 %v5355
      %6700 = vmatpush.bf16.msra.mxu0 %v5354
      %6701 = vmatpush.bf16.msra.mxu0 %v5353
      %6702 = vmatmul.bf16.gmra.mxu0 %v4062
      %v6703 = vpop.f32.mrf.mxu0
      %v6704 = vadd.f32 %v6615, %v6703
      %v6705 = vpop.f32.mrf.mxu0
      %v6706 = vadd.f32 %v6617, %v6705
      %6707 = vmatmul.bf16.gmra.mxu0 %v4064
      %v6708 = vpop.f32.mrf.mxu0
      %v6709 = vadd.f32 %v6620, %v6708
      %v6710 = vpop.f32.mrf.mxu0
      %v6711 = vadd.f32 %v6622, %v6710
      %6712 = vmatmul.bf16.gmra.mxu0 %v4066
      %v6713 = vpop.f32.mrf.mxu0
      %v6714 = vadd.f32 %v6625, %v6713
      %v6715 = vpop.f32.mrf.mxu0
      %v6716 = vadd.f32 %v6627, %v6715
      %6717 = vmatmul.bf16.gmra.mxu0 %v4068
      %v6718 = vpop.f32.mrf.mxu0
      %v6719 = vadd.f32 %v6630, %v6718
      %v6720 = vpop.f32.mrf.mxu0
      %v6721 = vadd.f32 %v6632, %v6720
      %6722 = vmatmul.bf16.gmra.mxu0 %v4070
      %v6723 = vpop.f32.mrf.mxu0
      %v6724 = vadd.f32 %v6635, %v6723
      %v6725 = vpop.f32.mrf.mxu0
      %v6726 = vadd.f32 %v6637, %v6725
      %6727 = vmatmul.bf16.gmra.mxu0 %v4072
      %v6728 = vpop.f32.mrf.mxu0
      %v6729 = vadd.f32 %v6640, %v6728
      %v6730 = vpop.f32.mrf.mxu0
      %v6731 = vadd.f32 %v6642, %v6730
      %6732 = vmatmul.bf16.gmra.mxu0 %v4074
      %v6733 = vpop.f32.mrf.mxu0
      %v6734 = vadd.f32 %v6645, %v6733
      %v6735 = vpop.f32.mrf.mxu0
      %v6736 = vadd.f32 %v6647, %v6735
      %6737 = vmatmul.bf16.gmra.mxu0 %v4076
      %v6738 = vpop.f32.mrf.mxu0
      %v6739 = vadd.f32 %v6650, %v6738
      %v6740 = vpop.f32.mrf.mxu0
      %v6741 = vadd.f32 %v6652, %v6740
      %6742 = vmatmul.bf16.gmra.mxu0 %v4078
      %v6743 = vpop.f32.mrf.mxu0
      %v6744 = vadd.f32 %v6655, %v6743
      %v6745 = vpop.f32.mrf.mxu0
      %v6746 = vadd.f32 %v6657, %v6745
      %6747 = vmatmul.bf16.gmra.mxu0 %v4080
      %v6748 = vpop.f32.mrf.mxu0
      %v6749 = vadd.f32 %v6660, %v6748
      %v6750 = vpop.f32.mrf.mxu0
      %v6751 = vadd.f32 %v6662, %v6750
      %6752 = vmatmul.bf16.gmra.mxu0 %v4082
      %v6753 = vpop.f32.mrf.mxu0
      %v6754 = vadd.f32 %v6665, %v6753
      %v6755 = vpop.f32.mrf.mxu0
      %v6756 = vadd.f32 %v6667, %v6755
      %6757 = vmatmul.bf16.gmra.mxu0 %v4084
      %v6758 = vpop.f32.mrf.mxu0
      %v6759 = vadd.f32 %v6670, %v6758
      %v6760 = vpop.f32.mrf.mxu0
      %v6761 = vadd.f32 %v6672, %v6760
      %6762 = vmatmul.bf16.gmra.mxu0 %v4086
      %v6763 = vpop.f32.mrf.mxu0
      %v6764 = vadd.f32 %v6675, %v6763
      %v6765 = vpop.f32.mrf.mxu0
      %v6766 = vadd.f32 %v6677, %v6765
      %6767 = vmatmul.bf16.gmra.mxu0 %v4088
      %v6768 = vpop.f32.mrf.mxu0
      %v6769 = vadd.f32 %v6680, %v6768
      %v6770 = vpop.f32.mrf.mxu0
      %v6771 = vadd.f32 %v6682, %v6770
      %6772 = vmatmul.bf16.gmra.mxu0 %v4090
      %v6773 = vpop.f32.mrf.mxu0
      %v6774 = vadd.f32 %v6685, %v6773
      %v6775 = vpop.f32.mrf.mxu0
      %v6776 = vadd.f32 %v6687, %v6775
      %6777 = vmatmul.bf16.gmra.mxu0 %v4092
      %v6778 = vpop.f32.mrf.mxu0
      %v6779 = vadd.f32 %v6690, %v6778
      %v6780 = vpop.f32.mrf.mxu0
      %v6781 = vadd.f32 %v6692, %v6780
      %6782 = vdwg.mxu0
      %6783 = vmatpush.bf16.msra.mxu0 %v5368
      %6784 = vmatpush.bf16.msra.mxu0 %v5367
      %6785 = vmatpush.bf16.msra.mxu0 %v5366
      %6786 = vmatpush.bf16.msra.mxu0 %v5365
      %6787 = vmatpush.bf16.msra.mxu0 %v5364
      %6788 = vmatpush.bf16.msra.mxu0 %v5363
      %6789 = vmatpush.bf16.msra.mxu0 %v5362
      %6790 = vmatpush.bf16.msra.mxu0 %v5361
      %6791 = vmatmul.bf16.gmra.mxu0 %v4189
      %v6792 = vpop.f32.mrf.mxu0
      %v6793 = vadd.f32 %v6704, %v6792
      %v6794 = vpop.f32.mrf.mxu0
      %v6795 = vadd.f32 %v6706, %v6794
      %6796 = vmatmul.bf16.gmra.mxu0 %v4191
      %v6797 = vpop.f32.mrf.mxu0
      %v6798 = vadd.f32 %v6709, %v6797
      %v6799 = vpop.f32.mrf.mxu0
      %v6800 = vadd.f32 %v6711, %v6799
      %6801 = vmatmul.bf16.gmra.mxu0 %v4193
      %v6802 = vpop.f32.mrf.mxu0
      %v6803 = vadd.f32 %v6714, %v6802
      %v6804 = vpop.f32.mrf.mxu0
      %v6805 = vadd.f32 %v6716, %v6804
      %6806 = vmatmul.bf16.gmra.mxu0 %v4195
      %v6807 = vpop.f32.mrf.mxu0
      %v6808 = vadd.f32 %v6719, %v6807
      %v6809 = vpop.f32.mrf.mxu0
      %v6810 = vadd.f32 %v6721, %v6809
      %6811 = vmatmul.bf16.gmra.mxu0 %v4197
      %v6812 = vpop.f32.mrf.mxu0
      %v6813 = vadd.f32 %v6724, %v6812
      %v6814 = vpop.f32.mrf.mxu0
      %v6815 = vadd.f32 %v6726, %v6814
      %6816 = vmatmul.bf16.gmra.mxu0 %v4199
      %v6817 = vpop.f32.mrf.mxu0
      %v6818 = vadd.f32 %v6729, %v6817
      %v6819 = vpop.f32.mrf.mxu0
      %v6820 = vadd.f32 %v6731, %v6819
      %6821 = vmatmul.bf16.gmra.mxu0 %v4201
      %v6822 = vpop.f32.mrf.mxu0
      %v6823 = vadd.f32 %v6734, %v6822
      %v6824 = vpop.f32.mrf.mxu0
      %v6825 = vadd.f32 %v6736, %v6824
      %6826 = vmatmul.bf16.gmra.mxu0 %v4203
      %v6827 = vpop.f32.mrf.mxu0
      %v6828 = vadd.f32 %v6739, %v6827
      %v6829 = vpop.f32.mrf.mxu0
      %v6830 = vadd.f32 %v6741, %v6829
      %6831 = vmatmul.bf16.gmra.mxu0 %v4205
      %v6832 = vpop.f32.mrf.mxu0
      %v6833 = vadd.f32 %v6744, %v6832
      %v6834 = vpop.f32.mrf.mxu0
      %v6835 = vadd.f32 %v6746, %v6834
      %6836 = vmatmul.bf16.gmra.mxu0 %v4207
      %v6837 = vpop.f32.mrf.mxu0
      %v6838 = vadd.f32 %v6749, %v6837
      %v6839 = vpop.f32.mrf.mxu0
      %v6840 = vadd.f32 %v6751, %v6839
      %6841 = vmatmul.bf16.gmra.mxu0 %v4209
      %v6842 = vpop.f32.mrf.mxu0
      %v6843 = vadd.f32 %v6754, %v6842
      %v6844 = vpop.f32.mrf.mxu0
      %v6845 = vadd.f32 %v6756, %v6844
      %6846 = vmatmul.bf16.gmra.mxu0 %v4211
      %v6847 = vpop.f32.mrf.mxu0
      %v6848 = vadd.f32 %v6759, %v6847
      %v6849 = vpop.f32.mrf.mxu0
      %v6850 = vadd.f32 %v6761, %v6849
      %6851 = vmatmul.bf16.gmra.mxu0 %v4213
      %v6852 = vpop.f32.mrf.mxu0
      %v6853 = vadd.f32 %v6764, %v6852
      %v6854 = vpop.f32.mrf.mxu0
      %v6855 = vadd.f32 %v6766, %v6854
      %6856 = vmatmul.bf16.gmra.mxu0 %v4215
      %v6857 = vpop.f32.mrf.mxu0
      %v6858 = vadd.f32 %v6769, %v6857
      %v6859 = vpop.f32.mrf.mxu0
      %v6860 = vadd.f32 %v6771, %v6859
      %6861 = vmatmul.bf16.gmra.mxu0 %v4217
      %v6862 = vpop.f32.mrf.mxu0
      %v6863 = vadd.f32 %v6774, %v6862
      %v6864 = vpop.f32.mrf.mxu0
      %v6865 = vadd.f32 %v6776, %v6864
      %6866 = vmatmul.bf16.gmra.mxu0 %v4219
      %v6867 = vpop.f32.mrf.mxu0
      %v6868 = vadd.f32 %v6779, %v6867
      %v6869 = vpop.f32.mrf.mxu0
      %v6870 = vadd.f32 %v6781, %v6869
      %6871 = vdwg.mxu0
      %6872 = vmatpush.bf16.msra.mxu0 %v5376
      %6873 = vmatpush.bf16.msra.mxu0 %v5375
      %6874 = vmatpush.bf16.msra.mxu0 %v5374
      %6875 = vmatpush.bf16.msra.mxu0 %v5373
      %6876 = vmatpush.bf16.msra.mxu0 %v5372
      %6877 = vmatpush.bf16.msra.mxu0 %v5371
      %6878 = vmatpush.bf16.msra.mxu0 %v5370
      %6879 = vmatpush.bf16.msra.mxu0 %v5369
      %6880 = vmatmul.bf16.gmra.mxu0 %v4190
      %v6881 = vpop.f32.mrf.mxu0
      %v6882 = vadd.f32 %v6793, %v6881
      %v6883 = vpop.f32.mrf.mxu0
      %v6884 = vadd.f32 %v6795, %v6883
      %6885 = vmatmul.bf16.gmra.mxu0 %v4192
      %v6886 = vpop.f32.mrf.mxu0
      %v6887 = vadd.f32 %v6798, %v6886
      %v6888 = vpop.f32.mrf.mxu0
      %v6889 = vadd.f32 %v6800, %v6888
      %6890 = vmatmul.bf16.gmra.mxu0 %v4194
      %v6891 = vpop.f32.mrf.mxu0
      %v6892 = vadd.f32 %v6803, %v6891
      %v6893 = vpop.f32.mrf.mxu0
      %v6894 = vadd.f32 %v6805, %v6893
      %6895 = vmatmul.bf16.gmra.mxu0 %v4196
      %v6896 = vpop.f32.mrf.mxu0
      %v6897 = vadd.f32 %v6808, %v6896
      %v6898 = vpop.f32.mrf.mxu0
      %v6899 = vadd.f32 %v6810, %v6898
      %6900 = vmatmul.bf16.gmra.mxu0 %v4198
      %v6901 = vpop.f32.mrf.mxu0
      %v6902 = vadd.f32 %v6813, %v6901
      %v6903 = vpop.f32.mrf.mxu0
      %v6904 = vadd.f32 %v6815, %v6903
      %6905 = vmatmul.bf16.gmra.mxu0 %v4200
      %v6906 = vpop.f32.mrf.mxu0
      %v6907 = vadd.f32 %v6818, %v6906
      %v6908 = vpop.f32.mrf.mxu0
      %v6909 = vadd.f32 %v6820, %v6908
      %6910 = vmatmul.bf16.gmra.mxu0 %v4202
      %v6911 = vpop.f32.mrf.mxu0
      %v6912 = vadd.f32 %v6823, %v6911
      %v6913 = vpop.f32.mrf.mxu0
      %v6914 = vadd.f32 %v6825, %v6913
      %6915 = vmatmul.bf16.gmra.mxu0 %v4204
      %v6916 = vpop.f32.mrf.mxu0
      %v6917 = vadd.f32 %v6828, %v6916
      %v6918 = vpop.f32.mrf.mxu0
      %v6919 = vadd.f32 %v6830, %v6918
      %6920 = vmatmul.bf16.gmra.mxu0 %v4206
      %v6921 = vpop.f32.mrf.mxu0
      %v6922 = vadd.f32 %v6833, %v6921
      %v6923 = vpop.f32.mrf.mxu0
      %v6924 = vadd.f32 %v6835, %v6923
      %6925 = vmatmul.bf16.gmra.mxu0 %v4208
      %v6926 = vpop.f32.mrf.mxu0
      %v6927 = vadd.f32 %v6838, %v6926
      %v6928 = vpop.f32.mrf.mxu0
      %v6929 = vadd.f32 %v6840, %v6928
      %6930 = vmatmul.bf16.gmra.mxu0 %v4210
      %v6931 = vpop.f32.mrf.mxu0
      %v6932 = vadd.f32 %v6843, %v6931
      %v6933 = vpop.f32.mrf.mxu0
      %v6934 = vadd.f32 %v6845, %v6933
      %6935 = vmatmul.bf16.gmra.mxu0 %v4212
      %v6936 = vpop.f32.mrf.mxu0
      %v6937 = vadd.f32 %v6848, %v6936
      %v6938 = vpop.f32.mrf.mxu0
      %v6939 = vadd.f32 %v6850, %v6938
      %6940 = vmatmul.bf16.gmra.mxu0 %v4214
      %v6941 = vpop.f32.mrf.mxu0
      %v6942 = vadd.f32 %v6853, %v6941
      %v6943 = vpop.f32.mrf.mxu0
      %v6944 = vadd.f32 %v6855, %v6943
      %6945 = vmatmul.bf16.gmra.mxu0 %v4216
      %v6946 = vpop.f32.mrf.mxu0
      %v6947 = vadd.f32 %v6858, %v6946
      %v6948 = vpop.f32.mrf.mxu0
      %v6949 = vadd.f32 %v6860, %v6948
      %6950 = vmatmul.bf16.gmra.mxu0 %v4218
      %v6951 = vpop.f32.mrf.mxu0
      %v6952 = vadd.f32 %v6863, %v6951
      %v6953 = vpop.f32.mrf.mxu0
      %v6954 = vadd.f32 %v6865, %v6953
      %6955 = vmatmul.bf16.gmra.mxu0 %v4220
      %v6956 = vpop.f32.mrf.mxu0
      %v6957 = vadd.f32 %v6868, %v6956
      %v6958 = vpop.f32.mrf.mxu0
      %v6959 = vadd.f32 %v6870, %v6958
      %6960 = vdwg.mxu0
      %6961 = vmatpush.bf16.msra.mxu0 %v5384
      %6962 = vmatpush.bf16.msra.mxu0 %v5383
      %6963 = vmatpush.bf16.msra.mxu0 %v5382
      %6964 = vmatpush.bf16.msra.mxu0 %v5381
      %6965 = vmatpush.bf16.msra.mxu0 %v5380
      %6966 = vmatpush.bf16.msra.mxu0 %v5379
      %6967 = vmatpush.bf16.msra.mxu0 %v5378
      %6968 = vmatpush.bf16.msra.mxu0 %v5377
      %6969 = vmatmul.bf16.gmra.mxu0 %v4317
      %v6970 = vpop.f32.mrf.mxu0
      %v6971 = vadd.f32 %v6882, %v6970
      %v6972 = vpop.f32.mrf.mxu0
      %v6973 = vadd.f32 %v6884, %v6972
      %6974 = vmatmul.bf16.gmra.mxu0 %v4319
      %v6975 = vpop.f32.mrf.mxu0
      %v6976 = vadd.f32 %v6887, %v6975
      %v6977 = vpop.f32.mrf.mxu0
      %v6978 = vadd.f32 %v6889, %v6977
      %6979 = vmatmul.bf16.gmra.mxu0 %v4321
      %v6980 = vpop.f32.mrf.mxu0
      %v6981 = vadd.f32 %v6892, %v6980
      %v6982 = vpop.f32.mrf.mxu0
      %v6983 = vadd.f32 %v6894, %v6982
      %6984 = vmatmul.bf16.gmra.mxu0 %v4323
      %v6985 = vpop.f32.mrf.mxu0
      %v6986 = vadd.f32 %v6897, %v6985
      %v6987 = vpop.f32.mrf.mxu0
      %v6988 = vadd.f32 %v6899, %v6987
      %6989 = vmatmul.bf16.gmra.mxu0 %v4325
      %v6990 = vpop.f32.mrf.mxu0
      %v6991 = vadd.f32 %v6902, %v6990
      %v6992 = vpop.f32.mrf.mxu0
      %v6993 = vadd.f32 %v6904, %v6992
      %6994 = vmatmul.bf16.gmra.mxu0 %v4327
      %v6995 = vpop.f32.mrf.mxu0
      %v6996 = vadd.f32 %v6907, %v6995
      %v6997 = vpop.f32.mrf.mxu0
      %v6998 = vadd.f32 %v6909, %v6997
      %6999 = vmatmul.bf16.gmra.mxu0 %v4329
      %v7000 = vpop.f32.mrf.mxu0
      %v7001 = vadd.f32 %v6912, %v7000
      %v7002 = vpop.f32.mrf.mxu0
      %v7003 = vadd.f32 %v6914, %v7002
      %7004 = vmatmul.bf16.gmra.mxu0 %v4331
      %v7005 = vpop.f32.mrf.mxu0
      %v7006 = vadd.f32 %v6917, %v7005
      %v7007 = vpop.f32.mrf.mxu0
      %v7008 = vadd.f32 %v6919, %v7007
      %7009 = vmatmul.bf16.gmra.mxu0 %v4333
      %v7010 = vpop.f32.mrf.mxu0
      %v7011 = vadd.f32 %v6922, %v7010
      %v7012 = vpop.f32.mrf.mxu0
      %v7013 = vadd.f32 %v6924, %v7012
      %7014 = vmatmul.bf16.gmra.mxu0 %v4335
      %v7015 = vpop.f32.mrf.mxu0
      %v7016 = vadd.f32 %v6927, %v7015
      %v7017 = vpop.f32.mrf.mxu0
      %v7018 = vadd.f32 %v6929, %v7017
      %7019 = vmatmul.bf16.gmra.mxu0 %v4337
      %v7020 = vpop.f32.mrf.mxu0
      %v7021 = vadd.f32 %v6932, %v7020
      %v7022 = vpop.f32.mrf.mxu0
      %v7023 = vadd.f32 %v6934, %v7022
      %7024 = vmatmul.bf16.gmra.mxu0 %v4339
      %v7025 = vpop.f32.mrf.mxu0
      %v7026 = vadd.f32 %v6937, %v7025
      %v7027 = vpop.f32.mrf.mxu0
      %v7028 = vadd.f32 %v6939, %v7027
      %7029 = vmatmul.bf16.gmra.mxu0 %v4341
      %v7030 = vpop.f32.mrf.mxu0
      %v7031 = vadd.f32 %v6942, %v7030
      %v7032 = vpop.f32.mrf.mxu0
      %v7033 = vadd.f32 %v6944, %v7032
      %7034 = vmatmul.bf16.gmra.mxu0 %v4343
      %v7035 = vpop.f32.mrf.mxu0
      %v7036 = vadd.f32 %v6947, %v7035
      %v7037 = vpop.f32.mrf.mxu0
      %v7038 = vadd.f32 %v6949, %v7037
      %7039 = vmatmul.bf16.gmra.mxu0 %v4345
      %v7040 = vpop.f32.mrf.mxu0
      %v7041 = vadd.f32 %v6952, %v7040
      %v7042 = vpop.f32.mrf.mxu0
      %v7043 = vadd.f32 %v6954, %v7042
      %7044 = vmatmul.bf16.gmra.mxu0 %v4347
      %v7045 = vpop.f32.mrf.mxu0
      %v7046 = vadd.f32 %v6957, %v7045
      %v7047 = vpop.f32.mrf.mxu0
      %v7048 = vadd.f32 %v6959, %v7047
      %7049 = vdwg.mxu0
      %7050 = vmatpush.bf16.msra.mxu0 %v5392
      %7051 = vmatpush.bf16.msra.mxu0 %v5391
      %7052 = vmatpush.bf16.msra.mxu0 %v5390
      %7053 = vmatpush.bf16.msra.mxu0 %v5389
      %7054 = vmatpush.bf16.msra.mxu0 %v5388
      %7055 = vmatpush.bf16.msra.mxu0 %v5387
      %7056 = vmatpush.bf16.msra.mxu0 %v5386
      %7057 = vmatpush.bf16.msra.mxu0 %v5385
      %7058 = vmatmul.bf16.gmra.mxu0 %v4318
      %v7059 = vpop.f32.mrf.mxu0
      %v7060 = vadd.f32 %v6971, %v7059
      %v7061 = vpop.f32.mrf.mxu0
      %v7062 = vadd.f32 %v6973, %v7061
      %7063 = vmatmul.bf16.gmra.mxu0 %v4320
      %v7064 = vpop.f32.mrf.mxu0
      %v7065 = vadd.f32 %v6976, %v7064
      %v7066 = vpop.f32.mrf.mxu0
      %v7067 = vadd.f32 %v6978, %v7066
      %7068 = vmatmul.bf16.gmra.mxu0 %v4322
      %v7069 = vpop.f32.mrf.mxu0
      %v7070 = vadd.f32 %v6981, %v7069
      %v7071 = vpop.f32.mrf.mxu0
      %v7072 = vadd.f32 %v6983, %v7071
      %7073 = vmatmul.bf16.gmra.mxu0 %v4324
      %v7074 = vpop.f32.mrf.mxu0
      %v7075 = vadd.f32 %v6986, %v7074
      %v7076 = vpop.f32.mrf.mxu0
      %v7077 = vadd.f32 %v6988, %v7076
      %7078 = vmatmul.bf16.gmra.mxu0 %v4326
      %v7079 = vpop.f32.mrf.mxu0
      %v7080 = vadd.f32 %v6991, %v7079
      %v7081 = vpop.f32.mrf.mxu0
      %v7082 = vadd.f32 %v6993, %v7081
      %7083 = vmatmul.bf16.gmra.mxu0 %v4328
      %v7084 = vpop.f32.mrf.mxu0
      %v7085 = vadd.f32 %v6996, %v7084
      %v7086 = vpop.f32.mrf.mxu0
      %v7087 = vadd.f32 %v6998, %v7086
      %7088 = vmatmul.bf16.gmra.mxu0 %v4330
      %v7089 = vpop.f32.mrf.mxu0
      %v7090 = vadd.f32 %v7001, %v7089
      %v7091 = vpop.f32.mrf.mxu0
      %v7092 = vadd.f32 %v7003, %v7091
      %7093 = vmatmul.bf16.gmra.mxu0 %v4332
      %v7094 = vpop.f32.mrf.mxu0
      %v7095 = vadd.f32 %v7006, %v7094
      %v7096 = vpop.f32.mrf.mxu0
      %v7097 = vadd.f32 %v7008, %v7096
      %7098 = vmatmul.bf16.gmra.mxu0 %v4334
      %v7099 = vpop.f32.mrf.mxu0
      %v7100 = vadd.f32 %v7011, %v7099
      %v7101 = vpop.f32.mrf.mxu0
      %v7102 = vadd.f32 %v7013, %v7101
      %7103 = vmatmul.bf16.gmra.mxu0 %v4336
      %v7104 = vpop.f32.mrf.mxu0
      %v7105 = vadd.f32 %v7016, %v7104
      %v7106 = vpop.f32.mrf.mxu0
      %v7107 = vadd.f32 %v7018, %v7106
      %7108 = vmatmul.bf16.gmra.mxu0 %v4338
      %v7109 = vpop.f32.mrf.mxu0
      %v7110 = vadd.f32 %v7021, %v7109
      %v7111 = vpop.f32.mrf.mxu0
      %v7112 = vadd.f32 %v7023, %v7111
      %7113 = vmatmul.bf16.gmra.mxu0 %v4340
      %v7114 = vpop.f32.mrf.mxu0
      %v7115 = vadd.f32 %v7026, %v7114
      %v7116 = vpop.f32.mrf.mxu0
      %v7117 = vadd.f32 %v7028, %v7116
      %7118 = vmatmul.bf16.gmra.mxu0 %v4342
      %v7119 = vpop.f32.mrf.mxu0
      %v7120 = vadd.f32 %v7031, %v7119
      %v7121 = vpop.f32.mrf.mxu0
      %v7122 = vadd.f32 %v7033, %v7121
      %7123 = vmatmul.bf16.gmra.mxu0 %v4344
      %v7124 = vpop.f32.mrf.mxu0
      %v7125 = vadd.f32 %v7036, %v7124
      %v7126 = vpop.f32.mrf.mxu0
      %v7127 = vadd.f32 %v7038, %v7126
      %7128 = vmatmul.bf16.gmra.mxu0 %v4346
      %v7129 = vpop.f32.mrf.mxu0
      %v7130 = vadd.f32 %v7041, %v7129
      %v7131 = vpop.f32.mrf.mxu0
      %v7132 = vadd.f32 %v7043, %v7131
      %7133 = vmatmul.bf16.gmra.mxu0 %v4348
      %v7134 = vpop.f32.mrf.mxu0
      %v7135 = vadd.f32 %v7046, %v7134
      %v7136 = vpop.f32.mrf.mxu0
      %v7137 = vadd.f32 %v7048, %v7136
      %7138 = vdwg.mxu0
      %v7139 = vpack.c.bf16 %v7060, %v7060
      %v7140 = vpack.c.bf16 %v7062, %v7062
      %v7141 = vpack.c.bf16 %v7065, %v7065
      %v7142 = vpack.c.bf16 %v7067, %v7067
      %v7143 = vpack.c.bf16 %v7070, %v7070
      %v7144 = vpack.c.bf16 %v7072, %v7072
      %v7145 = vpack.c.bf16 %v7075, %v7075
      %v7146 = vpack.c.bf16 %v7077, %v7077
      %v7147 = vpack.c.bf16 %v7080, %v7080
      %v7148 = vpack.c.bf16 %v7082, %v7082
      %v7149 = vpack.c.bf16 %v7085, %v7085
      %v7150 = vpack.c.bf16 %v7087, %v7087
      %v7151 = vpack.c.bf16 %v7090, %v7090
      %v7152 = vpack.c.bf16 %v7092, %v7092
      %v7153 = vpack.c.bf16 %v7095, %v7095
      %v7154 = vpack.c.bf16 %v7097, %v7097
      %v7155 = vpack.c.bf16 %v7100, %v7100
      %v7156 = vpack.c.bf16 %v7102, %v7102
      %v7157 = vpack.c.bf16 %v7105, %v7105
      %v7158 = vpack.c.bf16 %v7107, %v7107
      %v7159 = vpack.c.bf16 %v7110, %v7110
      %v7160 = vpack.c.bf16 %v7112, %v7112
      %v7161 = vpack.c.bf16 %v7115, %v7115
      %v7162 = vpack.c.bf16 %v7117, %v7117
      %v7163 = vpack.c.bf16 %v7120, %v7120
      %v7164 = vpack.c.bf16 %v7122, %v7122
      %v7165 = vpack.c.bf16 %v7125, %v7125
      %v7166 = vpack.c.bf16 %v7127, %v7127
      %v7167 = vpack.c.bf16 %v7130, %v7130
      %v7168 = vpack.c.bf16 %v7132, %v7132
      %v7169 = vpack.c.bf16 %v7135, %v7135
      %v7170 = vpack.c.bf16 %v7137, %v7137
      %7171 = vst [vmem:[%s282] sm:$0xf] %v7139
      %7172 = vst [vmem:[%s282 + $0x4] sm:$0xf] %v7140
      %7173 = vst [vmem:[%s282 + $0x8] sm:$0xf] %v7141
      %7174 = vst [vmem:[%s282 + $0xc] sm:$0xf] %v7142
      %7175 = vst [vmem:[%s282 + $0x10] sm:$0xf] %v7143
      %7176 = vst [vmem:[%s282 + $0x14] sm:$0xf] %v7144
      %7177 = vst [vmem:[%s282 + $0x18] sm:$0xf] %v7145
      %7178 = vst [vmem:[%s282 + $0x1c] sm:$0xf] %v7146
      %7179 = vst [vmem:[%s282 + $0x20] sm:$0xf] %v7147
      %7180 = vst [vmem:[%s282 + $0x24] sm:$0xf] %v7148
      %7181 = vst [vmem:[%s282 + $0x28] sm:$0xf] %v7149
      %7182 = vst [vmem:[%s282 + $0x2c] sm:$0xf] %v7150
      %7183 = vst [vmem:[%s282 + $0x30] sm:$0xf] %v7151
      %7184 = vst [vmem:[%s282 + $0x34] sm:$0xf] %v7152
      %7185 = vst [vmem:[%s282 + $0x38] sm:$0xf] %v7153
      %7186 = vst [vmem:[%s282 + $0x3c] sm:$0xf] %v7154
      %7187 = vst [vmem:[%s282 + $0x40] sm:$0xf] %v7155
      %7188 = vst [vmem:[%s282 + $0x44] sm:$0xf] %v7156
      %7189 = vst [vmem:[%s282 + $0x48] sm:$0xf] %v7157
      %7190 = vst [vmem:[%s282 + $0x4c] sm:$0xf] %v7158
      %7191 = vst [vmem:[%s282 + $0x50] sm:$0xf] %v7159
      %7192 = vst [vmem:[%s282 + $0x54] sm:$0xf] %v7160
      %7193 = vst [vmem:[%s282 + $0x58] sm:$0xf] %v7161
      %7194 = vst [vmem:[%s282 + $0x5c] sm:$0xf] %v7162
      %7195 = vst [vmem:[%s282 + $0x60] sm:$0xf] %v7163
      %7196 = vst [vmem:[%s282 + $0x64] sm:$0xf] %v7164
      %7197 = vst [vmem:[%s282 + $0x68] sm:$0xf] %v7165
      %7198 = vst [vmem:[%s282 + $0x6c] sm:$0xf] %v7166
      %7199 = vst [vmem:[%s282 + $0x70] sm:$0xf] %v7167
      %7200 = vst [vmem:[%s282 + $0x74] sm:$0xf] %v7168
      %7201 = vst [vmem:[%s282 + $0x78] sm:$0xf] %v7169
      %7202 = vst [vmem:[%s282 + $0x7c] sm:$0xf] %v7170
      %v7203 = vadd.f32 %v7060, %v7062
      %v7204 = vadd.f32 %v7203, %v7065
      %v7205 = vadd.f32 %v7204, %v7067
      %v7206 = vadd.f32 %v7205, %v7070
      %v7207 = vadd.f32 %v7206, %v7072
      %v7208 = vadd.f32 %v7207, %v7075
      %v7209 = vadd.f32 %v7208, %v7077
      %v7210 = vadd.f32 %v7209, %v7080
      %v7211 = vadd.f32 %v7210, %v7082
      %v7212 = vadd.f32 %v7211, %v7085
      %v7213 = vadd.f32 %v7212, %v7087
      %v7214 = vadd.f32 %v7213, %v7090
      %v7215 = vadd.f32 %v7214, %v7092
      %v7216 = vadd.f32 %v7215, %v7095
      %v7217 = vadd.f32 %v7216, %v7097
      %v7218 = vadd.f32 %v7217, %v7100
      %v7219 = vadd.f32 %v7218, %v7102
      %v7220 = vadd.f32 %v7219, %v7105
      %v7221 = vadd.f32 %v7220, %v7107
      %v7222 = vadd.f32 %v7221, %v7110
      %v7223 = vadd.f32 %v7222, %v7112
      %v7224 = vadd.f32 %v7223, %v7115
      %v7225 = vadd.f32 %v7224, %v7117
      %v7226 = vadd.f32 %v7225, %v7120
      %v7227 = vadd.f32 %v7226, %v7122
      %v7228 = vadd.f32 %v7227, %v7125
      %v7229 = vadd.f32 %v7228, %v7127
      %v7230 = vadd.f32 %v7229, %v7130
      %v7231 = vadd.f32 %v7230, %v7132
      %v7232 = vadd.f32 %v7231, %v7135
      %v7233 = vadd.f32 %v7232, %v7137
      %v7234 = vrot.slane %v7233, 4
      %v7235 = vadd.f32 %v7233, %v7234
      %v7236 = vrot.slane %v7235, 2
      %v7237 = vadd.f32 %v7235, %v7236
      %v7238 = vrot.slane %v7237, 1
      %v7239 = vadd.f32 %v7237, %v7238
      %7240 = vst [vmem:[%s285] sm:$0x1] %v7239
      %v7241 = vmul.f32 %v7060, %v7060
      %v7242 = vmul.f32 %v7062, %v7062
      %v7243 = vmul.f32 %v7065, %v7065
      %v7244 = vmul.f32 %v7067, %v7067
      %v7245 = vmul.f32 %v7070, %v7070
      %v7246 = vmul.f32 %v7072, %v7072
      %v7247 = vmul.f32 %v7075, %v7075
      %v7248 = vmul.f32 %v7077, %v7077
      %v7249 = vmul.f32 %v7080, %v7080
      %v7250 = vmul.f32 %v7082, %v7082
      %v7251 = vmul.f32 %v7085, %v7085
      %v7252 = vmul.f32 %v7087, %v7087
      %v7253 = vmul.f32 %v7090, %v7090
      %v7254 = vmul.f32 %v7092, %v7092
      %v7255 = vmul.f32 %v7095, %v7095
      %v7256 = vmul.f32 %v7097, %v7097
      %v7257 = vmul.f32 %v7100, %v7100
      %v7258 = vmul.f32 %v7102, %v7102
      %v7259 = vmul.f32 %v7105, %v7105
      %v7260 = vmul.f32 %v7107, %v7107
      %v7261 = vmul.f32 %v7110, %v7110
      %v7262 = vmul.f32 %v7112, %v7112
      %v7263 = vmul.f32 %v7115, %v7115
      %v7264 = vmul.f32 %v7117, %v7117
      %v7265 = vmul.f32 %v7120, %v7120
      %v7266 = vmul.f32 %v7122, %v7122
      %v7267 = vmul.f32 %v7125, %v7125
      %v7268 = vmul.f32 %v7127, %v7127
      %v7269 = vmul.f32 %v7130, %v7130
      %v7270 = vmul.f32 %v7132, %v7132
      %v7271 = vmul.f32 %v7135, %v7135
      %v7272 = vmul.f32 %v7137, %v7137
      %v7273 = vadd.f32 %v7241, %v7242
      %v7274 = vadd.f32 %v7273, %v7243
      %v7275 = vadd.f32 %v7274, %v7244
      %v7276 = vadd.f32 %v7275, %v7245
      %v7277 = vadd.f32 %v7276, %v7246
      %v7278 = vadd.f32 %v7277, %v7247
      %v7279 = vadd.f32 %v7278, %v7248
      %v7280 = vadd.f32 %v7279, %v7249
      %v7281 = vadd.f32 %v7280, %v7250
      %v7282 = vadd.f32 %v7281, %v7251
      %v7283 = vadd.f32 %v7282, %v7252
      %v7284 = vadd.f32 %v7283, %v7253
      %v7285 = vadd.f32 %v7284, %v7254
      %v7286 = vadd.f32 %v7285, %v7255
      %v7287 = vadd.f32 %v7286, %v7256
      %v7288 = vadd.f32 %v7287, %v7257
      %v7289 = vadd.f32 %v7288, %v7258
      %v7290 = vadd.f32 %v7289, %v7259
      %v7291 = vadd.f32 %v7290, %v7260
      %v7292 = vadd.f32 %v7291, %v7261
      %v7293 = vadd.f32 %v7292, %v7262
      %v7294 = vadd.f32 %v7293, %v7263
      %v7295 = vadd.f32 %v7294, %v7264
      %v7296 = vadd.f32 %v7295, %v7265
      %v7297 = vadd.f32 %v7296, %v7266
      %v7298 = vadd.f32 %v7297, %v7267
      %v7299 = vadd.f32 %v7298, %v7268
      %v7300 = vadd.f32 %v7299, %v7269
      %v7301 = vadd.f32 %v7300, %v7270
      %v7302 = vadd.f32 %v7301, %v7271
      %v7303 = vadd.f32 %v7302, %v7272
      %v7304 = vrot.slane %v7303, 4
      %v7305 = vadd.f32 %v7303, %v7304
      %v7306 = vrot.slane %v7305, 2
      %v7307 = vadd.f32 %v7305, %v7306
      %v7308 = vrot.slane %v7307, 1
      %v7309 = vadd.f32 %v7307, %v7308
      %7310 = vst [vmem:[%s288] sm:$0x1] %v7309
      %p7311 = scmp.lt.s32.totalorder %s18, 1
      %s7312 = scalar_select %p7311, %s18, 1
      %s7313 = smul.addr %s7312, 32
      %s7314 = smul.addr %s7313, 4
      %s7315 = scalar_lea.vmem %s4, %s7314
      %p7316 = scmp.lt.s32.totalorder %s18, 1
      %s7317 = scalar_select %p7316, %s18, 1
      %s7318 = scalar_lea.vmem %s5, %s7317
      %p7319 = scmp.lt.s32.totalorder %s18, 1
      %s7320 = scalar_select %p7319, %s18, 1
      %s7321 = scalar_lea.vmem %s6, %s7320
      // Predicated region
      $region37: #{up_forward.3} parent=35 // pred_check
        %p7322 = pneg %p130
      $region38: #{up_forward.3} parent=35 // pred_check_branch
        %7324 = sbr.rel (%p7322) target = $region40
      $region39: #{up_forward.3} parent=35 // pred_region
        _
      $region40: #{up_forward.3} parent=35 // pred_fallthru
        _
      // Predicated region
      $region41: #{up_forward.3} parent=35 // pred_check
        %p7325 = pneg %p156
      $region42: #{up_forward.3} parent=35 // pred_check_branch
        %7327 = sbr.rel (%p7325) target = $region44
      $region43: #{up_forward.3} parent=35 // pred_region
        _
      $region44: #{up_forward.3} parent=35 // pred_fallthru
        _
      // Predicated region
      $region45: #{up_forward.3} parent=35 // pred_check
        %p7328 = pneg %p182
      $region46: #{up_forward.3} parent=35 // pred_check_branch
        %7330 = sbr.rel (%p7328) target = $region48
      $region47: #{up_forward.3} parent=35 // pred_region
        _
      $region48: #{up_forward.3} parent=35 // pred_fallthru
        _
    $region36: #{up_forward.3} parent=5 // pred_fallthru
      _
    %p7331 = scmp.le.s32.totalorder 2, %s13
    // Predicated region
    $region49: #{up_forward.3} parent=5 // pred_check
      %p7332 = pneg %p7331
    $region50: #{up_forward.3} parent=5 // pred_check_branch
      %7334 = sbr.rel (%p7332) target = $region52
    $region51: #{up_forward.3} parent=5 // pred_region
      %s7335 = ssub.s32 %s13, 2
      // Predicated region
      $region53: #{up_forward.3} parent=51 // pred_check
        %p7336 = pneg %p136
      $region54: #{up_forward.3} parent=51 // pred_check_branch
        %7338 = sbr.rel (%p7336) target = $region56
      $region55: #{up_forward.3} parent=51 // pred_region
        %p7339 = scmp.lt.s32.totalorder %s19, 1
        %s7340 = scalar_select %p7339, %s19, 1
        %s7341 = smul.addr %s7340, 32
        %s7342 = smul.addr %s7341, 4
        %s7343 = scalar_lea.vmem %s4, %s7342
      $region56: #{up_forward.3} parent=51 // pred_fallthru
        _
      // Predicated region
      $region57: #{up_forward.3} parent=51 // pred_check
        %p7344 = pneg %p162
      $region58: #{up_forward.3} parent=51 // pred_check_branch
        %7346 = sbr.rel (%p7344) target = $region60
      $region59: #{up_forward.3} parent=51 // pred_region
        %p7347 = scmp.lt.s32.totalorder %s19, 1
        %s7348 = scalar_select %p7347, %s19, 1
        %s7349 = scalar_lea.vmem %s5, %s7348
      $region60: #{up_forward.3} parent=51 // pred_fallthru
        _
      // Predicated region
      $region61: #{up_forward.3} parent=51 // pred_check
        %p7350 = pneg %p188
      $region62: #{up_forward.3} parent=51 // pred_check_branch
        %7352 = sbr.rel (%p7350) target = $region64
      $region63: #{up_forward.3} parent=51 // pred_region
        %p7353 = scmp.lt.s32.totalorder %s19, 1
        %s7354 = scalar_select %p7353, %s19, 1
        %s7355 = scalar_lea.vmem %s6, %s7354
      $region64: #{up_forward.3} parent=51 // pred_fallthru
        _
    $region52: #{up_forward.3} parent=5 // pred_fallthru
      _
  $region6: #{up_forward.3} parent=0 // loop_footer
    %s17 = sadd.s32 1, %s13
  $region7: #{up_forward.3} parent=0 // loop_footer_branch
    %12 = sbr.rel target = $region3
  $region8: #{up_forward.3} parent=0 // loop_exit
    _

</llo_original>
